<compile_context>
chip_gen: v5e
topology: v5e:2x2
jax: 0.10.0
libtpu: 0.0.40
codegen_flags: <defaults>
</compile_context>

<pallas_src>
import functools

import jax
import jax.numpy as jnp
from jax import lax
from jax.experimental import pallas as pl
from jax.experimental.pallas import tpu as pltpu


# ----------------------------------------------------------------------------
# Fused kernel.  Per edge tile:
#   one-hot gather h[dst]/h[src] -> lane-packed FJ1 -> edge_mlp -> edge_inf
#   -> transposed-one-hot scatter_sum into the resident [N, 2H] mi accumulator.
# Last grid step epilogue:
#   FJ2(mi, h) -> node_mlp -> residual add -> lane-dense (N, 3H) output.
# ----------------------------------------------------------------------------
def _fused_kernel(dst_c_ref, src_c_ref, dst_r_ref, h_ref,
                  w1_ref, b1_ref, w2_ref, b2_ref, we_ref, be_ref,
                  u1_ref, c1_ref, u2_ref, c2_ref,
                  out_ref, mi_ref, *, precision):
    step = pl.program_id(0)
    n_steps = pl.num_programs(0)

    @pl.when(step == 0)
    def _():
        mi_ref[...] = jnp.zeros_like(mi_ref)

    h = h_ref[...]                                   # [N, H] f32 (resident)
    n_nodes, hid = h.shape
    dst_c = dst_c_ref[...]                           # [TE, 1] int32 (padded rows == N)
    src_c = src_c_ref[...]                           # [TE, 1] int32
    dst_r = dst_r_ref[...]                           # [1, TE] int32 (lane-dense copy of dst)
    te = dst_c.shape[0]

    # --- gather h[dst], h[src] via one-hot matmuls (exact row select, 1 MXU pass) ---
    lane_nodes = lax.broadcasted_iota(jnp.int32, (te, n_nodes), 1)
    oh_dst = (dst_c == lane_nodes).astype(jnp.float32)          # [TE, N] (sentinel rows all-zero)
    oh_src = (src_c == lane_nodes).astype(jnp.float32)
    hi = jnp.dot(oh_dst, h, precision=precision, preferred_element_type=jnp.float32)
    hj = jnp.dot(oh_src, h, precision=precision, preferred_element_type=jnp.float32)
    hh = jnp.concatenate([hi, hj], axis=1)                      # [TE, 2H] lane-packed FJ1

    # --- edge MLP on the lane-packed slab (block-diagonal weights, built in wrapper) ---
    m = jnp.maximum(
        jnp.dot(hh, w1_ref[...], precision=precision,
                preferred_element_type=jnp.float32) + b1_ref[...], 0.0)     # [TE, 2H]
    m = jnp.maximum(
        jnp.dot(m, w2_ref[...], precision=precision,
                preferred_element_type=jnp.float32) + b2_ref[...], 0.0)     # [TE, 2H]

    # --- edge_inf (per-half Linear(H,1)+sigmoid) as VPU multiply + lane reductions ---
    half = (lax.broadcasted_iota(jnp.int32, (1, 2 * hid), 1) < hid).astype(jnp.float32)
    s = m * we_ref[...]                                         # [TE, 2H]
    e0 = jax.nn.sigmoid(jnp.sum(s * half, axis=-1, keepdims=True) + be_ref[...])
    e1 = jax.nn.sigmoid(jnp.sum(s * (1.0 - half), axis=-1, keepdims=True) + be_ref[...])
    e = e0 * half + e1 * (1.0 - half)                           # [TE, 2H] per-half broadcast
    contrib = m * e                                             # [TE, 2H]

    # --- scatter_sum over dst into resident mi: transposed one-hot, standard matmul
    #     orientation (no per-step XLU transpose).  Sentinel columns are all-zero. ---
    subl_nodes = lax.broadcasted_iota(jnp.int32, (n_nodes, te), 0)
    oh_dst_t = (dst_r == subl_nodes).astype(jnp.float32)        # [N, TE]
    mi_ref[...] += jnp.dot(oh_dst_t, contrib, precision=precision,
                           preferred_element_type=jnp.float32)  # [N, 2H]

    # --- epilogue on the last edge tile: FJ2 + node_mlp + residual, lane-dense output ---
    @pl.when(step == n_steps - 1)
    def _():
        a = jnp.concatenate([mi_ref[...], h], axis=1)           # [N, 3H] = [mi0 | mi1 | h]
        t = jnp.maximum(
            jnp.dot(a, u1_ref[...], precision=precision,
                    preferred_element_type=jnp.float32) + c1_ref[...], 0.0)
        r = jnp.dot(t, u2_ref[...], precision=precision,
                    preferred_element_type=jnp.float32) + c2_ref[...]       # [N, 3H]
        out_ref[...] = jnp.concatenate([h, h, h], axis=1) + r   # residual broadcast over rows


# ----------------------------------------------------------------------------
# Wrapper
# ----------------------------------------------------------------------------
@functools.partial(jax.jit,
                   static_argnames=("edge_tile", "precision", "vmem_limit_bytes"))
def en_base_layer_forward(h3, x, edge_index, params, *, edge_tile=512,
                          precision=lax.Precision.DEFAULT, vmem_limit_bytes=None):
    n_nodes, s, hid = h3.shape
    assert s == 1, "residual broadcast in the reference module requires S == 1"
    src = edge_index[0].astype(jnp.int32)
    dst = edge_index[1].astype(jnp.int32)
    n_edges = src.shape[0]

    # Pad the edge list to a tile multiple; sentinel index == N gives an all-zero
    # one-hot row/column -> exact 0 contribution to mi.
    te = int(edge_tile)
    n_tiles = pl.cdiv(n_edges, te)
    e_pad = n_tiles * te
    pad = e_pad - n_edges
    if pad:
        sentinel = jnp.full((pad,), n_nodes, jnp.int32)
        dst = jnp.concatenate([dst, sentinel])
        src = jnp.concatenate([src, sentinel])
    dst_col = dst.reshape(e_pad, 1)     # sublane orientation (gather one-hot build)
    src_col = src.reshape(e_pad, 1)
    dst_row = dst.reshape(1, e_pad)     # lane-dense orientation (scatter one-hot build)

    h2 = h3.reshape(n_nodes, hid).astype(jnp.float32)

    # Lane-packed block-diagonal weights / tiled bias rows, built once outside the grid.
    bd = jax.scipy.linalg.block_diag
    w1, u1 = params["w1"], params["u1"]
    w1bd = bd(w1[:hid, :], w1[hid:, :])                         # [2H, 2H]
    w2bd = bd(params["w2"], params["w2"])                       # [2H, 2H]
    u1bd = bd(u1[:hid, :], u1[:hid, :], u1[hid:, :])            # [3H, 3H]
    u2bd = bd(params["u2"], params["u2"], params["u2"])         # [3H, 3H]
    b1p = jnp.tile(params["b1"].reshape(1, hid), (1, 2))
    b2p = jnp.tile(params["b2"].reshape(1, hid), (1, 2))
    wep = jnp.tile(params["we"].reshape(1, hid), (1, 2))
    bep = params["be"].reshape(1, 1)
    c1p = jnp.tile(params["c1"].reshape(1, hid), (1, 3))
    c2p = jnp.tile(params["c2"].reshape(1, hid), (1, 3))

    full = lambda e: (0, 0)
    kernel = functools.partial(_fused_kernel, precision=precision)
    out = pl.pallas_call(
        kernel,
        out_shape=jax.ShapeDtypeStruct((n_nodes, 3 * hid), jnp.float32),  # lane-dense slab
        grid=(n_tiles,),
        in_specs=[
            pl.BlockSpec((te, 1), lambda e: (e, 0)),            # dst (column form)
            pl.BlockSpec((te, 1), lambda e: (e, 0)),            # src (column form)
            pl.BlockSpec((1, te), lambda e: (0, e)),            # dst (lane-dense row form)
            pl.BlockSpec((n_nodes, hid), full),                 # h (resident)
            pl.BlockSpec((2 * hid, 2 * hid), full),             # edge_mlp W1 blockdiag
            pl.BlockSpec((1, 2 * hid), full),                   # edge_mlp b1 (tiled)
            pl.BlockSpec((2 * hid, 2 * hid), full),             # edge_mlp W2 blockdiag
            pl.BlockSpec((1, 2 * hid), full),                   # edge_mlp b2 (tiled)
            pl.BlockSpec((1, 2 * hid), full),                   # edge_inf W row (tiled)
            pl.BlockSpec((1, 1), full),                         # edge_inf b
            pl.BlockSpec((3 * hid, 3 * hid), full),             # node_mlp U1 blockdiag
            pl.BlockSpec((1, 3 * hid), full),                   # node_mlp c1 (tiled)
            pl.BlockSpec((3 * hid, 3 * hid), full),             # node_mlp U2 blockdiag
            pl.BlockSpec((1, 3 * hid), full),                   # node_mlp c2 (tiled)
        ],
        out_specs=pl.BlockSpec((n_nodes, 3 * hid), full),       # resident, written in epilogue
        scratch_shapes=[pltpu.VMEM((n_nodes, 2 * hid), jnp.float32)],   # mi accumulator
        compiler_params=pltpu.CompilerParams(
            # Edge axis is a reduction into the resident mi / write-once output.
            # TODO(synk): v7x -- add a 2-way "parallel" edge shard across TensorCores
            # with per-core mi partials reduced before the epilogue.
            dimension_semantics=("arbitrary",),
            # Tune per chip: ~100 MiB headroom on v5e/v6e, <= ~56 MiB on v7x (64 MiB VMEM).
            vmem_limit_bytes=vmem_limit_bytes,
        ),
    )(dst_col, src_col, dst_row, h2, w1bd, b1p, w2bd, b2p, wep, bep,
      u1bd, c1p, u2bd, c2p)

    # (N, 3H) -> (N, 3, H) is a free row-major reshape (no transpose round-trip).
    return out.reshape(n_nodes, 3, hid), x


# ----------------------------------------------------------------------------
# Plain-JAX reference (mirrors the PyTorch forward literally, for validation).
# ----------------------------------------------------------------------------
def reference_forward(h3, x, edge_index, params):
    hp = lax.Precision.HIGHEST
    n_nodes, _, hid = h3.shape
    src, dst = edge_index[0], edge_index[1]

    def feature_joint(a, b):
        za = jnp.zeros((a.shape[0], a.shape[1], b.shape[2]), a.dtype)
        zb = jnp.zeros((b.shape[0], b.shape[1], a.shape[2]), b.dtype)
        return jnp.concatenate([jnp.concatenate([a, za], 2),
                                jnp.concatenate([zb, b], 2)], 1)

    hi, hj = h3[dst], h3[src]                                    # [E,1,H]
    j1 = feature_joint(hi, hj)                                   # [E,2,2H]
    m = jax.nn.relu(jnp.matmul(j1, params["w1"], precision=hp) + params["b1"][0])
    m = jax.nn.relu(jnp.matmul(m, params["w2"], precision=hp) + params["b2"][0])
    e = jax.nn.sigmoid(jnp.matmul(m, params["we"], precision=hp) + params["be"][0])
    mi = jnp.zeros((n_nodes, 2, hid), jnp.float32).at[dst].add(m * e)
    j2 = feature_joint(mi, h3)                                   # [N,3,2H]
    t = jax.nn.relu(jnp.matmul(j2, params["u1"], precision=hp) + params["c1"][0])
    nm = jnp.matmul(t, params["u2"], precision=hp) + params["c2"][0]
    return h3 + nm, x


if __name__ == "__main__":
    # Small shapes; E not a tile multiple + edge_tile=256 -> multi-step grid + padding.
    N, H, E = 16, 32, 300

    key = jax.random.PRNGKey(0)
    keys = jax.random.split(key, 12)
    h3 = jax.random.normal(keys[0], (N, 1, H), jnp.float32)
    x = jax.random.normal(keys[1], (N, 3), jnp.float32)
    src = jax.random.randint(keys[2], (E,), 0, N, dtype=jnp.int32)
    dst = jax.random.randint(keys[3], (E,), 0, N, dtype=jnp.int32)
    edge_index = jnp.stack([src, dst], axis=0)

    def lin(k, fan_in, shape):
        return jax.random.normal(k, shape, jnp.float32) / jnp.sqrt(jnp.float32(fan_in))

    params = dict(
        w1=lin(keys[4], 2 * H, (2 * H, H)),   # edge_mlp layer 1 (stored [in, out])
        b1=lin(keys[5], 2 * H, (1, H)),
        w2=lin(keys[6], H, (H, H)),           # edge_mlp layer 2
        b2=lin(keys[7], H, (1, H)),
        we=lin(keys[8], H, (H, 1)),           # edge_inf Linear(H, 1)
        be=lin(keys[9], H, (1, 1)),
        u1=lin(keys[10], 2 * H, (2 * H, H)),  # node_mlp layer 1
        c1=jnp.zeros((1, H), jnp.float32),
        u2=lin(keys[11], H, (H, H)),          # node_mlp layer 2
        c2=jnp.zeros((1, H), jnp.float32),
    )

    h_ref, _ = reference_forward(h3, x, edge_index, params)

    # 1) Exactness check of the fused/lane-packed algorithm at HIGHEST precision.
    h_hi, _ = en_base_layer_forward(h3, x, edge_index, params, edge_tile=256,
                                    precision=lax.Precision.HIGHEST)
    jax.block_until_ready(h_hi)
    err_hi = float(jnp.max(jnp.abs(h_hi - h_ref)))
    assert jnp.allclose(h_hi, h_ref, rtol=1e-3, atol=1e-3), err_hi

    # 2) Production (perf) path: DEFAULT precision = single-pass bf16 MXU matmuls with
    #    f32 accumulation; tolerance sized accordingly (relative to output scale).
    h_out, x_out = en_base_layer_forward(h3, x, edge_index, params, edge_tile=256)
    jax.block_until_ready(h_out)
    assert h_out.shape == (N, 3, H) and x_out.shape == x.shape
    err = float(jnp.max(jnp.abs(h_out - h_ref)))
    scale = float(jnp.max(jnp.abs(h_ref))) + 1e-6
    assert err <= 3e-2 * scale + 3e-2, f"max_abs_err={err} scale={scale}"

    print("KERNEL_OK")
</pallas_src>

<mosaic_0001>
module attributes {stable_mosaic.version = 11 : i64} {
  func.func @_fused_kernel(%arg0: i32, %arg1: memref<256x1xi32, #tpu.memory_space<vmem>>, %arg2: memref<256x1xi32, #tpu.memory_space<vmem>>, %arg3: memref<1x256xi32, #tpu.memory_space<vmem>>, %arg4: memref<16x32xf32, #tpu.memory_space<vmem>>, %arg5: memref<64x64xf32, #tpu.memory_space<vmem>>, %arg6: memref<1x64xf32, #tpu.memory_space<vmem>>, %arg7: memref<64x64xf32, #tpu.memory_space<vmem>>, %arg8: memref<1x64xf32, #tpu.memory_space<vmem>>, %arg9: memref<1x64xf32, #tpu.memory_space<vmem>>, %arg10: memref<1x1xf32, #tpu.memory_space<vmem>>, %arg11: memref<96x96xf32, #tpu.memory_space<vmem>>, %arg12: memref<1x96xf32, #tpu.memory_space<vmem>>, %arg13: memref<96x96xf32, #tpu.memory_space<vmem>>, %arg14: memref<1x96xf32, #tpu.memory_space<vmem>>, %arg15: memref<16x96xf32, #tpu.memory_space<vmem>>, %arg16: memref<16x64xf32, #tpu.memory_space<vmem>>) attributes {dimension_semantics = [#tpu.dimension_semantics<arbitrary>], iteration_bounds = array<i64: 2>, scalar_prefetch = 0 : i64, scratch_operands = 1 : i64, tpu.core_type = #tpu.core_type<tc>, window_params = [{transform_indices = @transform_0, window_bounds = array<i64: 256, 1>}, {transform_indices = @transform_1, window_bounds = array<i64: 256, 1>}, {transform_indices = @transform_2, window_bounds = array<i64: 1, 256>}, {pipeline_mode = #tpu.pipeline_mode<synchronous>, transform_indices = @transform_3, window_bounds = array<i64: 16, 32>}, {pipeline_mode = #tpu.pipeline_mode<synchronous>, transform_indices = @transform_4, window_bounds = array<i64: 64, 64>}, {pipeline_mode = #tpu.pipeline_mode<synchronous>, transform_indices = @transform_5, window_bounds = array<i64: 1, 64>}, {pipeline_mode = #tpu.pipeline_mode<synchronous>, transform_indices = @transform_6, window_bounds = array<i64: 64, 64>}, {pipeline_mode = #tpu.pipeline_mode<synchronous>, transform_indices = @transform_7, window_bounds = array<i64: 1, 64>}, {pipeline_mode = #tpu.pipeline_mode<synchronous>, transform_indices = @transform_8, window_bounds = array<i64: 1, 64>}, {pipeline_mode = #tpu.pipeline_mode<synchronous>, transform_indices = @transform_9, window_bounds = array<i64: 1, 1>}, {pipeline_mode = #tpu.pipeline_mode<synchronous>, transform_indices = @transform_10, window_bounds = array<i64: 96, 96>}, {pipeline_mode = #tpu.pipeline_mode<synchronous>, transform_indices = @transform_11, window_bounds = array<i64: 1, 96>}, {pipeline_mode = #tpu.pipeline_mode<synchronous>, transform_indices = @transform_12, window_bounds = array<i64: 96, 96>}, {pipeline_mode = #tpu.pipeline_mode<synchronous>, transform_indices = @transform_13, window_bounds = array<i64: 1, 96>}, {pipeline_mode = #tpu.pipeline_mode<synchronous>, transform_indices = @transform_14, window_bounds = array<i64: 16, 96>}]} {
    %c0_i32 = arith.constant 0 : i32
    %0 = arith.cmpi eq, %arg0, %c0_i32 : i32
    %1 = arith.extui %0 : i1 to i32
    %c0_i32_0 = arith.constant 0 : i32
    %2 = arith.cmpi ne, %1, %c0_i32_0 : i32
    scf.if %2 {
      %cst_39 = arith.constant 0.000000e+00 : f32
      %89 = vector.broadcast %cst_39 : f32 to vector<16x64xf32>
      %c0_40 = arith.constant 0 : index
      %c0_41 = arith.constant 0 : index
      %90 = vector.load %arg16[%c0_40, %c0_41] : memref<16x64xf32, #tpu.memory_space<vmem>>, vector<16x64xf32>
      tpu.vector_store %arg16[%c0_40, %c0_41], %89 {strides = array<i32>} : memref<16x64xf32, #tpu.memory_space<vmem>>, vector<16x64xf32>,
    } else {
    }
    %c0 = arith.constant 0 : index
    %c0_1 = arith.constant 0 : index
    %3 = vector.load %arg4[%c0, %c0_1] : memref<16x32xf32, #tpu.memory_space<vmem>>, vector<16x32xf32>
    %c0_2 = arith.constant 0 : index
    %c0_3 = arith.constant 0 : index
    %4 = vector.load %arg1[%c0_2, %c0_3] : memref<256x1xi32, #tpu.memory_space<vmem>>, vector<256x1xi32>
    %c0_4 = arith.constant 0 : index
    %c0_5 = arith.constant 0 : index
    %5 = vector.load %arg2[%c0_4, %c0_5] : memref<256x1xi32, #tpu.memory_space<vmem>>, vector<256x1xi32>
    %c0_6 = arith.constant 0 : index
    %c0_7 = arith.constant 0 : index
    %6 = vector.load %arg3[%c0_6, %c0_7] : memref<1x256xi32, #tpu.memory_space<vmem>>, vector<1x256xi32>
    %7 = tpu.iota {dimensions = array<i32: 1>} : vector<256x16xi32>
    %8 = vector.broadcast %4 : vector<256x1xi32> to vector<256x16xi32>
    %9 = arith.cmpi eq, %8, %7 : vector<256x16xi32>
    %10 = arith.extui %9 : vector<256x16xi1> to vector<256x16xi32>
    %11 = arith.sitofp %10 : vector<256x16xi32> to vector<256x16xf32>
    %12 = vector.broadcast %5 : vector<256x1xi32> to vector<256x16xi32>
    %13 = arith.cmpi eq, %12, %7 : vector<256x16xi32>
    %14 = arith.extui %13 : vector<256x16xi1> to vector<256x16xi32>
    %15 = arith.sitofp %14 : vector<256x16xi32> to vector<256x16xf32>
    %cst = arith.constant dense<0.000000e+00> : vector<256x32xf32>
    %16 = tpu.matmul %11, %3, %cst {dimension_numbers = #tpu.dot_dimension_numbers<[1], [0], [0], [1], [0, 0, 1, 1], [], []>, precision = #tpu.contract_precision<fp32>} : vector<256x16xf32>, vector<16x32xf32>, vector<256x32xf32> -> vector<256x32xf32>
    %cst_8 = arith.constant dense<0.000000e+00> : vector<256x32xf32>
    %17 = tpu.matmul %15, %3, %cst_8 {dimension_numbers = #tpu.dot_dimension_numbers<[1], [0], [0], [1], [0, 0, 1, 1], [], []>, precision = #tpu.contract_precision<fp32>} : vector<256x16xf32>, vector<16x32xf32>, vector<256x32xf32> -> vector<256x32xf32>
    %18 = tpu.concatenate %16, %17 in 1 : vector<256x32xf32>, vector<256x32xf32> -> vector<256x64xf32>
    %c0_9 = arith.constant 0 : index
    %c0_10 = arith.constant 0 : index
    %19 = vector.load %arg5[%c0_9, %c0_10] : memref<64x64xf32, #tpu.memory_space<vmem>>, vector<64x64xf32>
    %cst_11 = arith.constant dense<0.000000e+00> : vector<256x64xf32>
    %20 = tpu.matmul %18, %19, %cst_11 {dimension_numbers = #tpu.dot_dimension_numbers<[1], [0], [0], [1], [0, 0, 1, 1], [], []>, precision = #tpu.contract_precision<fp32>} : vector<256x64xf32>, vector<64x64xf32>, vector<256x64xf32> -> vector<256x64xf32>
    %c0_12 = arith.constant 0 : index
    %c0_13 = arith.constant 0 : index
    %21 = vector.load %arg6[%c0_12, %c0_13] : memref<1x64xf32, #tpu.memory_space<vmem>>, vector<1x64xf32>
    %22 = vector.broadcast %21 : vector<1x64xf32> to vector<256x64xf32>
    %23 = arith.addf %20, %22 : vector<256x64xf32>
    %cst_14 = arith.constant 0.000000e+00 : f32
    %24 = vector.broadcast %cst_14 : f32 to vector<256x64xf32>
    %25 = arith.maximumf %23, %24 : vector<256x64xf32>
    %c0_15 = arith.constant 0 : index
    %c0_16 = arith.constant 0 : index
    %26 = vector.load %arg7[%c0_15, %c0_16] : memref<64x64xf32, #tpu.memory_space<vmem>>, vector<64x64xf32>
    %cst_17 = arith.constant dense<0.000000e+00> : vector<256x64xf32>
    %27 = tpu.matmul %25, %26, %cst_17 {dimension_numbers = #tpu.dot_dimension_numbers<[1], [0], [0], [1], [0, 0, 1, 1], [], []>, precision = #tpu.contract_precision<fp32>} : vector<256x64xf32>, vector<64x64xf32>, vector<256x64xf32> -> vector<256x64xf32>
    %c0_18 = arith.constant 0 : index
    %c0_19 = arith.constant 0 : index
    %28 = vector.load %arg8[%c0_18, %c0_19] : memref<1x64xf32, #tpu.memory_space<vmem>>, vector<1x64xf32>
    %29 = vector.broadcast %28 : vector<1x64xf32> to vector<256x64xf32>
    %30 = arith.addf %27, %29 : vector<256x64xf32>
    %cst_20 = arith.constant 0.000000e+00 : f32
    %31 = vector.broadcast %cst_20 : f32 to vector<256x64xf32>
    %32 = arith.maximumf %30, %31 : vector<256x64xf32>
    %33 = tpu.iota {dimensions = array<i32: 1>} : vector<1x64xi32>
    %c32_i32 = arith.constant 32 : i32
    %34 = vector.broadcast %c32_i32 : i32 to vector<1x64xi32>
    %35 = arith.cmpi slt, %33, %34 : vector<1x64xi32>
    %36 = arith.extui %35 : vector<1x64xi1> to vector<1x64xi32>
    %37 = arith.sitofp %36 : vector<1x64xi32> to vector<1x64xf32>
    %c0_21 = arith.constant 0 : index
    %c0_22 = arith.constant 0 : index
    %38 = vector.load %arg9[%c0_21, %c0_22] : memref<1x64xf32, #tpu.memory_space<vmem>>, vector<1x64xf32>
    %39 = vector.broadcast %38 : vector<1x64xf32> to vector<256x64xf32>
    %40 = arith.mulf %32, %39 : vector<256x64xf32>
    %41 = vector.broadcast %37 : vector<1x64xf32> to vector<256x64xf32>
    %42 = arith.mulf %40, %41 : vector<256x64xf32>
    %cst_23 = arith.constant dense<0.000000e+00> : vector<256xf32>
    %43 = vector.multi_reduction <add>, %42, %cst_23 [1] : vector<256x64xf32> to vector<256xf32>
    %44 = vector.shape_cast %43 : vector<256xf32> to vector<256x1xf32>
    %c0_24 = arith.constant 0 : index
    %c0_25 = arith.constant 0 : index
    %45 = vector.load %arg10[%c0_24, %c0_25] : memref<1x1xf32, #tpu.memory_space<vmem>>, vector<1x1xf32>
    %46 = vector.broadcast %45 : vector<1x1xf32> to vector<256x1xf32>
    %47 = arith.addf %44, %46 : vector<256x1xf32>
    %48 = arith.negf %47 : vector<256x1xf32>
    %49 = math.exp %48 : vector<256x1xf32>
    %cst_26 = arith.constant 1.000000e+00 : f32
    %50 = vector.broadcast %cst_26 : f32 to vector<256x1xf32>
    %51 = arith.addf %50, %49 : vector<256x1xf32>
    %52 = arith.divf %50, %51 : vector<256x1xf32>
    %cst_27 = arith.constant 1.000000e+00 : f32
    %53 = vector.broadcast %cst_27 : f32 to vector<1x64xf32>
    %54 = arith.subf %53, %37 : vector<1x64xf32>
    %55 = vector.broadcast %54 : vector<1x64xf32> to vector<256x64xf32>
    %56 = arith.mulf %40, %55 : vector<256x64xf32>
    %cst_28 = arith.constant dense<0.000000e+00> : vector<256xf32>
    %57 = vector.multi_reduction <add>, %56, %cst_28 [1] : vector<256x64xf32> to vector<256xf32>
    %58 = vector.shape_cast %57 : vector<256xf32> to vector<256x1xf32>
    %c0_29 = arith.constant 0 : index
    %c0_30 = arith.constant 0 : index
    %59 = vector.load %arg10[%c0_29, %c0_30] : memref<1x1xf32, #tpu.memory_space<vmem>>, vector<1x1xf32>
    %60 = vector.broadcast %59 : vector<1x1xf32> to vector<256x1xf32>
    %61 = arith.addf %58, %60 : vector<256x1xf32>
    %62 = arith.negf %61 : vector<256x1xf32>
    %63 = math.exp %62 : vector<256x1xf32>
    %cst_31 = arith.constant 1.000000e+00 : f32
    %64 = vector.broadcast %cst_31 : f32 to vector<256x1xf32>
    %65 = arith.addf %64, %63 : vector<256x1xf32>
    %66 = arith.divf %64, %65 : vector<256x1xf32>
    %67 = vector.broadcast %52 : vector<256x1xf32> to vector<256x64xf32>
    %68 = vector.broadcast %37 : vector<1x64xf32> to vector<256x64xf32>
    %69 = arith.mulf %67, %68 : vector<256x64xf32>
    %cst_32 = arith.constant 1.000000e+00 : f32
    %70 = vector.broadcast %cst_32 : f32 to vector<1x64xf32>
    %71 = arith.subf %70, %37 : vector<1x64xf32>
    %72 = vector.broadcast %66 : vector<256x1xf32> to vector<256x64xf32>
    %73 = vector.broadcast %71 : vector<1x64xf32> to vector<256x64xf32>
    %74 = arith.mulf %72, %73 : vector<256x64xf32>
    %75 = arith.addf %69, %74 : vector<256x64xf32>
    %76 = arith.mulf %32, %75 : vector<256x64xf32>
    %77 = tpu.iota {dimensions = array<i32: 0>} : vector<16x256xi32>
    %78 = vector.broadcast %6 : vector<1x256xi32> to vector<16x256xi32>
    %79 = arith.cmpi eq, %78, %77 : vector<16x256xi32>
    %80 = arith.extui %79 : vector<16x256xi1> to vector<16x256xi32>
    %81 = arith.sitofp %80 : vector<16x256xi32> to vector<16x256xf32>
    %c0_33 = arith.constant 0 : index
    %c0_34 = arith.constant 0 : index
    %82 = vector.load %arg16[%c0_33, %c0_34] : memref<16x64xf32, #tpu.memory_space<vmem>>, vector<16x64xf32>
    %cst_35 = arith.constant dense<0.000000e+00> : vector<16x64xf32>
    %83 = tpu.matmul %81, %76, %cst_35 {dimension_numbers = #tpu.dot_dimension_numbers<[1], [0], [0], [1], [0, 0, 1, 1], [], []>, precision = #tpu.contract_precision<fp32>} : vector<16x256xf32>, vector<256x64xf32>, vector<16x64xf32> -> vector<16x64xf32>
    %84 = arith.addf %82, %83 : vector<16x64xf32>
    %c0_36 = arith.constant 0 : index
    %c0_37 = arith.constant 0 : index
    %85 = vector.load %arg16[%c0_36, %c0_37] : memref<16x64xf32, #tpu.memory_space<vmem>>, vector<16x64xf32>
    tpu.vector_store %arg16[%c0_36, %c0_37], %84 {strides = array<i32>} : memref<16x64xf32, #tpu.memory_space<vmem>>, vector<16x64xf32>,
    %c1_i32 = arith.constant 1 : i32
    %86 = arith.cmpi eq, %arg0, %c1_i32 : i32
    %87 = arith.extui %86 : i1 to i32
    %c0_i32_38 = arith.constant 0 : i32
    %88 = arith.cmpi ne, %87, %c0_i32_38 : i32
    scf.if %88 {
      %c0_39 = arith.constant 0 : index
      %c0_40 = arith.constant 0 : index
      %89 = vector.load %arg16[%c0_39, %c0_40] : memref<16x64xf32, #tpu.memory_space<vmem>>, vector<16x64xf32>
      %90 = tpu.concatenate %89, %3 in 1 : vector<16x64xf32>, vector<16x32xf32> -> vector<16x96xf32>
      %c0_41 = arith.constant 0 : index
      %c0_42 = arith.constant 0 : index
      %91 = vector.load %arg11[%c0_41, %c0_42] : memref<96x96xf32, #tpu.memory_space<vmem>>, vector<96x96xf32>
      %cst_43 = arith.constant dense<0.000000e+00> : vector<16x96xf32>
      %92 = tpu.matmul %90, %91, %cst_43 {dimension_numbers = #tpu.dot_dimension_numbers<[1], [0], [0], [1], [0, 0, 1, 1], [], []>, precision = #tpu.contract_precision<fp32>} : vector<16x96xf32>, vector<96x96xf32>, vector<16x96xf32> -> vector<16x96xf32>
      %c0_44 = arith.constant 0 : index
      %c0_45 = arith.constant 0 : index
      %93 = vector.load %arg12[%c0_44, %c0_45] : memref<1x96xf32, #tpu.memory_space<vmem>>, vector<1x96xf32>
      %94 = vector.broadcast %93 : vector<1x96xf32> to vector<16x96xf32>
      %95 = arith.addf %92, %94 : vector<16x96xf32>
      %cst_46 = arith.constant 0.000000e+00 : f32
      %96 = vector.broadcast %cst_46 : f32 to vector<16x96xf32>
      %97 = arith.maximumf %95, %96 : vector<16x96xf32>
      %c0_47 = arith.constant 0 : index
      %c0_48 = arith.constant 0 : index
      %98 = vector.load %arg13[%c0_47, %c0_48] : memref<96x96xf32, #tpu.memory_space<vmem>>, vector<96x96xf32>
      %cst_49 = arith.constant dense<0.000000e+00> : vector<16x96xf32>
      %99 = tpu.matmul %97, %98, %cst_49 {dimension_numbers = #tpu.dot_dimension_numbers<[1], [0], [0], [1], [0, 0, 1, 1], [], []>, precision = #tpu.contract_precision<fp32>} : vector<16x96xf32>, vector<96x96xf32>, vector<16x96xf32> -> vector<16x96xf32>
      %c0_50 = arith.constant 0 : index
      %c0_51 = arith.constant 0 : index
      %100 = vector.load %arg14[%c0_50, %c0_51] : memref<1x96xf32, #tpu.memory_space<vmem>>, vector<1x96xf32>
      %101 = vector.broadcast %100 : vector<1x96xf32> to vector<16x96xf32>
      %102 = arith.addf %99, %101 : vector<16x96xf32>
      %103 = tpu.concatenate %3, %3, %3 in 1 : vector<16x32xf32>, vector<16x32xf32>, vector<16x32xf32> -> vector<16x96xf32>
      %104 = arith.addf %103, %102 : vector<16x96xf32>
      %c0_52 = arith.constant 0 : index
      %c0_53 = arith.constant 0 : index
      %105 = vector.load %arg15[%c0_52, %c0_53] : memref<16x96xf32, #tpu.memory_space<vmem>>, vector<16x96xf32>
      tpu.vector_store %arg15[%c0_52, %c0_53], %104 {strides = array<i32>} : memref<16x96xf32, #tpu.memory_space<vmem>>, vector<16x96xf32>,
    } else {
    }
    return
  }
  func.func @transform_0(%arg0: i32) -> (i32, i32) {
    %c0_i32 = arith.constant 0 : i32
    %c0_i32_0 = arith.constant 0 : i32
    return %arg0, %c0_i32 : i32, i32
  }
  func.func @transform_1(%arg0: i32) -> (i32, i32) {
    %c0_i32 = arith.constant 0 : i32
    %c0_i32_0 = arith.constant 0 : i32
    return %arg0, %c0_i32 : i32, i32
  }
  func.func @transform_2(%arg0: i32) -> (i32, i32) {
    %c0_i32 = arith.constant 0 : i32
    %c0_i32_0 = arith.constant 0 : i32
    return %c0_i32, %arg0 : i32, i32
  }
  func.func @transform_3(%arg0: i32) -> (i32, i32) {
    %c0_i32 = arith.constant 0 : i32
    %c0_i32_0 = arith.constant 0 : i32
    %c0_i32_1 = arith.constant 0 : i32
    return %c0_i32, %c0_i32_0 : i32, i32
  }
  func.func @transform_4(%arg0: i32) -> (i32, i32) {
    %c0_i32 = arith.constant 0 : i32
    %c0_i32_0 = arith.constant 0 : i32
    %c0_i32_1 = arith.constant 0 : i32
    return %c0_i32, %c0_i32_0 : i32, i32
  }
  func.func @transform_5(%arg0: i32) -> (i32, i32) {
    %c0_i32 = arith.constant 0 : i32
    %c0_i32_0 = arith.constant 0 : i32
    %c0_i32_1 = arith.constant 0 : i32
    return %c0_i32, %c0_i32_0 : i32, i32
  }
  func.func @transform_6(%arg0: i32) -> (i32, i32) {
    %c0_i32 = arith.constant 0 : i32
    %c0_i32_0 = arith.constant 0 : i32
    %c0_i32_1 = arith.constant 0 : i32
    return %c0_i32, %c0_i32_0 : i32, i32
  }
  func.func @transform_7(%arg0: i32) -> (i32, i32) {
    %c0_i32 = arith.constant 0 : i32
    %c0_i32_0 = arith.constant 0 : i32
    %c0_i32_1 = arith.constant 0 : i32
    return %c0_i32, %c0_i32_0 : i32, i32
  }
  func.func @transform_8(%arg0: i32) -> (i32, i32) {
    %c0_i32 = arith.constant 0 : i32
    %c0_i32_0 = arith.constant 0 : i32
    %c0_i32_1 = arith.constant 0 : i32
    return %c0_i32, %c0_i32_0 : i32, i32
  }
  func.func @transform_9(%arg0: i32) -> (i32, i32) {
    %c0_i32 = arith.constant 0 : i32
    %c0_i32_0 = arith.constant 0 : i32
    %c0_i32_1 = arith.constant 0 : i32
    return %c0_i32, %c0_i32_0 : i32, i32
  }
  func.func @transform_10(%arg0: i32) -> (i32, i32) {
    %c0_i32 = arith.constant 0 : i32
    %c0_i32_0 = arith.constant 0 : i32
    %c0_i32_1 = arith.constant 0 : i32
    return %c0_i32, %c0_i32_0 : i32, i32
  }
  func.func @transform_11(%arg0: i32) -> (i32, i32) {
    %c0_i32 = arith.constant 0 : i32
    %c0_i32_0 = arith.constant 0 : i32
    %c0_i32_1 = arith.constant 0 : i32
    return %c0_i32, %c0_i32_0 : i32, i32
  }
  func.func @transform_12(%arg0: i32) -> (i32, i32) {
    %c0_i32 = arith.constant 0 : i32
    %c0_i32_0 = arith.constant 0 : i32
    %c0_i32_1 = arith.constant 0 : i32
    return %c0_i32, %c0_i32_0 : i32, i32
  }
  func.func @transform_13(%arg0: i32) -> (i32, i32) {
    %c0_i32 = arith.constant 0 : i32
    %c0_i32_0 = arith.constant 0 : i32
    %c0_i32_1 = arith.constant 0 : i32
    return %c0_i32, %c0_i32_0 : i32, i32
  }
  func.func @transform_14(%arg0: i32) -> (i32, i32) {
    %c0_i32 = arith.constant 0 : i32
    %c0_i32_0 = arith.constant 0 : i32
    %c0_i32_1 = arith.constant 0 : i32
    return %c0_i32, %c0_i32_0 : i32, i32
  }
}

</mosaic_0001>

<llo_original>
// kernel: en_base_layer_forward.1
$region0: #{en_base_layer_forward.1}
  #allocation0 [shape = 'u32[]', space=smem, size = 0x4, offset = 0x4, fixed_abs, tag = 'smem constant byte address 0x4 - core index']
  #allocation1 [shape = 'u32[72,128]{1,0:T(1,128)}', space=vmem, size = 0x9000, scoped, tag = 'internal scratch']
  #allocation2 [shape = 'f32[16,64]{1,0:T(8,128)}', space=vmem, size = 0x2000, scoped, tag = 'scratch operand']
  #allocation3 [shape = 'f32[1,1]{1,0:T(1,128)S(1)}', space=vmem, size = 0x200, scoped, tag = 'scoped memory for en_base_layer_forward.1']
  %s0 = inlined_call_operand.vmem [shape: s32[512,1], index: 0, kind: input, shape index: {}]
  %s1 = inlined_call_operand.vmem [shape: s32[512,1], index: 1, kind: input, shape index: {}]
  %s2 = inlined_call_operand.vmem [shape: s32[1,512], index: 2, kind: input, shape index: {}]
  %s3 = inlined_call_operand.vmem [shape: f32[16,32], index: 3, kind: input, shape index: {}]
  %s4 = inlined_call_operand.vmem [shape: f32[64,64], index: 4, kind: input, shape index: {}]
  %s5 = inlined_call_operand.vmem [shape: f32[1,64], index: 5, kind: input, shape index: {}]
  %s6 = inlined_call_operand.vmem [shape: f32[64,64], index: 6, kind: input, shape index: {}]
  %s7 = inlined_call_operand.vmem [shape: f32[1,64], index: 7, kind: input, shape index: {}]
  %s8 = inlined_call_operand.vmem [shape: f32[1,64], index: 8, kind: input, shape index: {}]
  %s9 = inlined_call_operand.<no memory space> [shape: f32[1,1], index: 9, kind: input, shape index: {}]
  %s10 = inlined_call_operand.vmem [shape: f32[96,96], index: 10, kind: input, shape index: {}]
  %s11 = inlined_call_operand.vmem [shape: f32[1,96], index: 11, kind: input, shape index: {}]
  %s12 = inlined_call_operand.vmem [shape: f32[96,96], index: 12, kind: input, shape index: {}]
  %s13 = inlined_call_operand.vmem [shape: f32[1,96], index: 13, kind: input, shape index: {}]
  %s14 = inlined_call_operand.vmem [shape: f32[16,96], index: 14, kind: output, shape index: {}]
  %s15 = sld [smem:[#allocation0]]
  $region97: #{en_base_layer_forward.1} parent=0
    _
  %s17 = ssub.s32 1, %s15
  %s18 = scalar_select 0, %s17, %s15
  %v19 = vstv %s9
  %20 = vst [vmem:[#allocation3] sm:$0x1] %v19
  loop: start=0, step=1, limit=4
  $region2: #{en_base_layer_forward.1} parent=0 // loop_pre_header
    _
  $region3: #{en_base_layer_forward.1} parent=0 // loop_header
    %s22 = sphi 0, %s26
    %p23 = scmp.ge.s32.totalorder %s22, 4
    %s32 = sphi 0, %s34
    %s35 = sphi 0, %s32
    %s36 = sphi 0, %s35
    %s52 = sphi 0, %s36
    %s58 = sphi 0, %s60
    %s61 = sphi 0, %s58
    %s62 = sphi 0, %s61
    %s78 = sphi 0, %s62
    %s84 = sphi 0, %s86
    %s87 = sphi 0, %s84
    %s88 = sphi 0, %s87
    %s104 = sphi 0, %s88
    %s108 = sphi 0, %s108
    %s110 = sphi 0, %s108
    %s111 = sphi 0, %s110
    %s125 = sphi 0, %s111
    %s129 = sphi 0, %s129
    %s131 = sphi 0, %s129
    %s132 = sphi 0, %s131
    %s146 = sphi 0, %s132
    %s150 = sphi 0, %s150
    %s152 = sphi 0, %s150
    %s153 = sphi 0, %s152
    %s167 = sphi 0, %s153
    %s171 = sphi 0, %s171
    %s173 = sphi 0, %s171
    %s174 = sphi 0, %s173
    %s188 = sphi 0, %s174
    %s192 = sphi 0, %s192
    %s194 = sphi 0, %s192
    %s195 = sphi 0, %s194
    %s209 = sphi 0, %s195
    %s213 = sphi 0, %s213
    %s215 = sphi 0, %s213
    %s216 = sphi 0, %s215
    %s230 = sphi 0, %s216
    %s234 = sphi 0, %s234
    %s236 = sphi 0, %s234
    %s237 = sphi 0, %s236
    %s251 = sphi 0, %s237
    %s255 = sphi 0, %s255
    %s257 = sphi 0, %s255
    %s258 = sphi 0, %s257
    %s272 = sphi 0, %s258
    %s276 = sphi 0, %s276
    %s278 = sphi 0, %s276
    %s279 = sphi 0, %s278
    %s293 = sphi 0, %s279
    %s297 = sphi 0, %s297
    %s299 = sphi 0, %s297
    %s300 = sphi 0, %s299
    %s314 = sphi 0, %s300
    %s318 = sphi 0, %s318
    %s320 = sphi 0, %s318
    %s321 = sphi 0, %s320
    %s335 = sphi 0, %s321
    %s339 = sphi 0, %s339
    %s341 = sphi 0, %s339
    %s342 = sphi 0, %s341
    %s356 = sphi 0, %s342
  $region4: #{en_base_layer_forward.1} parent=0 // loop_header_branch
    %25 = sbr.rel (%p23) target = $region8
  $region5: #{en_base_layer_forward.1} parent=0 // loop_body
    %s27 = ssub.s32 %s22, 1
    %s28 = ssub.s32 %s22, 2
    %s29 = sadd.s32 %s22, 1
    %s30 = ssub.s32 %s22, %s29
    %p31 = scmp.eq.s32.totalorder %s30, 0
    %s33 = sadd.s32 %s32, 1
    %s34 = scalar_select %p31, %s32, %s33
    %p37 = pneg %p31
    %p38 = scmp.eq.s32.totalorder %s22, 1
    %p39 = por %p37, %p38
    %p40 = scmp.ne.s32.totalorder %s32, %s35
    %p41 = scmp.eq.s32.totalorder %s22, 0
    %p42 = por %p40, %p41
    %p43 = scmp.ne.s32.totalorder %s32, %s35
    %p44 = scmp.eq.s32.totalorder %s27, 1
    %p45 = por %p43, %p44
    %p46 = scmp.ne.s32.totalorder %s35, %s36
    %p47 = scmp.eq.s32.totalorder %s27, 0
    %p48 = por %p46, %p47
    %p49 = scmp.ne.s32.totalorder %s35, %s36
    %p50 = scmp.eq.s32.totalorder %s28, 1
    %p51 = por %p49, %p50
    %p53 = scmp.ne.s32.totalorder %s36, %s52
    %p54 = scmp.eq.s32.totalorder %s28, 0
    %p55 = por %p53, %p54
    %s56 = ssub.s32 %s22, %s29
    %p57 = scmp.eq.s32.totalorder %s56, 0
    %s59 = sadd.s32 %s58, 1
    %s60 = scalar_select %p57, %s58, %s59
    %p63 = pneg %p57
    %p64 = scmp.eq.s32.totalorder %s22, 1
    %p65 = por %p63, %p64
    %p66 = scmp.ne.s32.totalorder %s58, %s61
    %p67 = scmp.eq.s32.totalorder %s22, 0
    %p68 = por %p66, %p67
    %p69 = scmp.ne.s32.totalorder %s58, %s61
    %p70 = scmp.eq.s32.totalorder %s27, 1
    %p71 = por %p69, %p70
    %p72 = scmp.ne.s32.totalorder %s61, %s62
    %p73 = scmp.eq.s32.totalorder %s27, 0
    %p74 = por %p72, %p73
    %p75 = scmp.ne.s32.totalorder %s61, %s62
    %p76 = scmp.eq.s32.totalorder %s28, 1
    %p77 = por %p75, %p76
    %p79 = scmp.ne.s32.totalorder %s62, %s78
    %p80 = scmp.eq.s32.totalorder %s28, 0
    %p81 = por %p79, %p80
    %s82 = ssub.s32 %s22, %s29
    %p83 = scmp.eq.s32.totalorder %s82, 0
    %s85 = sadd.s32 %s84, 1
    %s86 = scalar_select %p83, %s84, %s85
    %p89 = pneg %p83
    %p90 = scmp.eq.s32.totalorder %s22, 1
    %p91 = por %p89, %p90
    %p92 = scmp.ne.s32.totalorder %s84, %s87
    %p93 = scmp.eq.s32.totalorder %s22, 0
    %p94 = por %p92, %p93
    %p95 = scmp.ne.s32.totalorder %s84, %s87
    %p96 = scmp.eq.s32.totalorder %s27, 1
    %p97 = por %p95, %p96
    %p98 = scmp.ne.s32.totalorder %s87, %s88
    %p99 = scmp.eq.s32.totalorder %s27, 0
    %p100 = por %p98, %p99
    %p101 = scmp.ne.s32.totalorder %s87, %s88
    %p102 = scmp.eq.s32.totalorder %s28, 1
    %p103 = por %p101, %p102
    %p105 = scmp.ne.s32.totalorder %s88, %s104
    %p106 = scmp.eq.s32.totalorder %s28, 0
    %p107 = por %p105, %p106
    %s109 = sadd.s32 %s108, 1
    %p112 = scmp.eq.s32.totalorder %s22, 1
    %p113 = scmp.ne.s32.totalorder %s108, %s110
    %p114 = scmp.eq.s32.totalorder %s22, 0
    %p115 = por %p113, %p114
    %p116 = scmp.ne.s32.totalorder %s108, %s110
    %p117 = scmp.eq.s32.totalorder %s27, 1
    %p118 = por %p116, %p117
    %p119 = scmp.ne.s32.totalorder %s110, %s111
    %p120 = scmp.eq.s32.totalorder %s27, 0
    %p121 = por %p119, %p120
    %p122 = scmp.ne.s32.totalorder %s110, %s111
    %p123 = scmp.eq.s32.totalorder %s28, 1
    %p124 = por %p122, %p123
    %p126 = scmp.ne.s32.totalorder %s111, %s125
    %p127 = scmp.eq.s32.totalorder %s28, 0
    %p128 = por %p126, %p127
    %s130 = sadd.s32 %s129, 1
    %p133 = scmp.eq.s32.totalorder %s22, 1
    %p134 = scmp.ne.s32.totalorder %s129, %s131
    %p135 = scmp.eq.s32.totalorder %s22, 0
    %p136 = por %p134, %p135
    %p137 = scmp.ne.s32.totalorder %s129, %s131
    %p138 = scmp.eq.s32.totalorder %s27, 1
    %p139 = por %p137, %p138
    %p140 = scmp.ne.s32.totalorder %s131, %s132
    %p141 = scmp.eq.s32.totalorder %s27, 0
    %p142 = por %p140, %p141
    %p143 = scmp.ne.s32.totalorder %s131, %s132
    %p144 = scmp.eq.s32.totalorder %s28, 1
    %p145 = por %p143, %p144
    %p147 = scmp.ne.s32.totalorder %s132, %s146
    %p148 = scmp.eq.s32.totalorder %s28, 0
    %p149 = por %p147, %p148
    %s151 = sadd.s32 %s150, 1
    %p154 = scmp.eq.s32.totalorder %s22, 1
    %p155 = scmp.ne.s32.totalorder %s150, %s152
    %p156 = scmp.eq.s32.totalorder %s22, 0
    %p157 = por %p155, %p156
    %p158 = scmp.ne.s32.totalorder %s150, %s152
    %p159 = scmp.eq.s32.totalorder %s27, 1
    %p160 = por %p158, %p159
    %p161 = scmp.ne.s32.totalorder %s152, %s153
    %p162 = scmp.eq.s32.totalorder %s27, 0
    %p163 = por %p161, %p162
    %p164 = scmp.ne.s32.totalorder %s152, %s153
    %p165 = scmp.eq.s32.totalorder %s28, 1
    %p166 = por %p164, %p165
    %p168 = scmp.ne.s32.totalorder %s153, %s167
    %p169 = scmp.eq.s32.totalorder %s28, 0
    %p170 = por %p168, %p169
    %s172 = sadd.s32 %s171, 1
    %p175 = scmp.eq.s32.totalorder %s22, 1
    %p176 = scmp.ne.s32.totalorder %s171, %s173
    %p177 = scmp.eq.s32.totalorder %s22, 0
    %p178 = por %p176, %p177
    %p179 = scmp.ne.s32.totalorder %s171, %s173
    %p180 = scmp.eq.s32.totalorder %s27, 1
    %p181 = por %p179, %p180
    %p182 = scmp.ne.s32.totalorder %s173, %s174
    %p183 = scmp.eq.s32.totalorder %s27, 0
    %p184 = por %p182, %p183
    %p185 = scmp.ne.s32.totalorder %s173, %s174
    %p186 = scmp.eq.s32.totalorder %s28, 1
    %p187 = por %p185, %p186
    %p189 = scmp.ne.s32.totalorder %s174, %s188
    %p190 = scmp.eq.s32.totalorder %s28, 0
    %p191 = por %p189, %p190
    %s193 = sadd.s32 %s192, 1
    %p196 = scmp.eq.s32.totalorder %s22, 1
    %p197 = scmp.ne.s32.totalorder %s192, %s194
    %p198 = scmp.eq.s32.totalorder %s22, 0
    %p199 = por %p197, %p198
    %p200 = scmp.ne.s32.totalorder %s192, %s194
    %p201 = scmp.eq.s32.totalorder %s27, 1
    %p202 = por %p200, %p201
    %p203 = scmp.ne.s32.totalorder %s194, %s195
    %p204 = scmp.eq.s32.totalorder %s27, 0
    %p205 = por %p203, %p204
    %p206 = scmp.ne.s32.totalorder %s194, %s195
    %p207 = scmp.eq.s32.totalorder %s28, 1
    %p208 = por %p206, %p207
    %p210 = scmp.ne.s32.totalorder %s195, %s209
    %p211 = scmp.eq.s32.totalorder %s28, 0
    %p212 = por %p210, %p211
    %s214 = sadd.s32 %s213, 1
    %p217 = scmp.eq.s32.totalorder %s22, 1
    %p218 = scmp.ne.s32.totalorder %s213, %s215
    %p219 = scmp.eq.s32.totalorder %s22, 0
    %p220 = por %p218, %p219
    %p221 = scmp.ne.s32.totalorder %s213, %s215
    %p222 = scmp.eq.s32.totalorder %s27, 1
    %p223 = por %p221, %p222
    %p224 = scmp.ne.s32.totalorder %s215, %s216
    %p225 = scmp.eq.s32.totalorder %s27, 0
    %p226 = por %p224, %p225
    %p227 = scmp.ne.s32.totalorder %s215, %s216
    %p228 = scmp.eq.s32.totalorder %s28, 1
    %p229 = por %p227, %p228
    %p231 = scmp.ne.s32.totalorder %s216, %s230
    %p232 = scmp.eq.s32.totalorder %s28, 0
    %p233 = por %p231, %p232
    %s235 = sadd.s32 %s234, 1
    %p238 = scmp.eq.s32.totalorder %s22, 1
    %p239 = scmp.ne.s32.totalorder %s234, %s236
    %p240 = scmp.eq.s32.totalorder %s22, 0
    %p241 = por %p239, %p240
    %p242 = scmp.ne.s32.totalorder %s234, %s236
    %p243 = scmp.eq.s32.totalorder %s27, 1
    %p244 = por %p242, %p243
    %p245 = scmp.ne.s32.totalorder %s236, %s237
    %p246 = scmp.eq.s32.totalorder %s27, 0
    %p247 = por %p245, %p246
    %p248 = scmp.ne.s32.totalorder %s236, %s237
    %p249 = scmp.eq.s32.totalorder %s28, 1
    %p250 = por %p248, %p249
    %p252 = scmp.ne.s32.totalorder %s237, %s251
    %p253 = scmp.eq.s32.totalorder %s28, 0
    %p254 = por %p252, %p253
    %s256 = sadd.s32 %s255, 1
    %p259 = scmp.eq.s32.totalorder %s22, 1
    %p260 = scmp.ne.s32.totalorder %s255, %s257
    %p261 = scmp.eq.s32.totalorder %s22, 0
    %p262 = por %p260, %p261
    %p263 = scmp.ne.s32.totalorder %s255, %s257
    %p264 = scmp.eq.s32.totalorder %s27, 1
    %p265 = por %p263, %p264
    %p266 = scmp.ne.s32.totalorder %s257, %s258
    %p267 = scmp.eq.s32.totalorder %s27, 0
    %p268 = por %p266, %p267
    %p269 = scmp.ne.s32.totalorder %s257, %s258
    %p270 = scmp.eq.s32.totalorder %s28, 1
    %p271 = por %p269, %p270
    %p273 = scmp.ne.s32.totalorder %s258, %s272
    %p274 = scmp.eq.s32.totalorder %s28, 0
    %p275 = por %p273, %p274
    %s277 = sadd.s32 %s276, 1
    %p280 = scmp.eq.s32.totalorder %s22, 1
    %p281 = scmp.ne.s32.totalorder %s276, %s278
    %p282 = scmp.eq.s32.totalorder %s22, 0
    %p283 = por %p281, %p282
    %p284 = scmp.ne.s32.totalorder %s276, %s278
    %p285 = scmp.eq.s32.totalorder %s27, 1
    %p286 = por %p284, %p285
    %p287 = scmp.ne.s32.totalorder %s278, %s279
    %p288 = scmp.eq.s32.totalorder %s27, 0
    %p289 = por %p287, %p288
    %p290 = scmp.ne.s32.totalorder %s278, %s279
    %p291 = scmp.eq.s32.totalorder %s28, 1
    %p292 = por %p290, %p291
    %p294 = scmp.ne.s32.totalorder %s279, %s293
    %p295 = scmp.eq.s32.totalorder %s28, 0
    %p296 = por %p294, %p295
    %s298 = sadd.s32 %s297, 1
    %p301 = scmp.eq.s32.totalorder %s22, 1
    %p302 = scmp.ne.s32.totalorder %s297, %s299
    %p303 = scmp.eq.s32.totalorder %s22, 0
    %p304 = por %p302, %p303
    %p305 = scmp.ne.s32.totalorder %s297, %s299
    %p306 = scmp.eq.s32.totalorder %s27, 1
    %p307 = por %p305, %p306
    %p308 = scmp.ne.s32.totalorder %s299, %s300
    %p309 = scmp.eq.s32.totalorder %s27, 0
    %p310 = por %p308, %p309
    %p311 = scmp.ne.s32.totalorder %s299, %s300
    %p312 = scmp.eq.s32.totalorder %s28, 1
    %p313 = por %p311, %p312
    %p315 = scmp.ne.s32.totalorder %s300, %s314
    %p316 = scmp.eq.s32.totalorder %s28, 0
    %p317 = por %p315, %p316
    %s319 = sadd.s32 %s318, 1
    %p322 = scmp.eq.s32.totalorder %s22, 1
    %p323 = scmp.ne.s32.totalorder %s318, %s320
    %p324 = scmp.eq.s32.totalorder %s22, 0
    %p325 = por %p323, %p324
    %p326 = scmp.ne.s32.totalorder %s318, %s320
    %p327 = scmp.eq.s32.totalorder %s27, 1
    %p328 = por %p326, %p327
    %p329 = scmp.ne.s32.totalorder %s320, %s321
    %p330 = scmp.eq.s32.totalorder %s27, 0
    %p331 = por %p329, %p330
    %p332 = scmp.ne.s32.totalorder %s320, %s321
    %p333 = scmp.eq.s32.totalorder %s28, 1
    %p334 = por %p332, %p333
    %p336 = scmp.ne.s32.totalorder %s321, %s335
    %p337 = scmp.eq.s32.totalorder %s28, 0
    %p338 = por %p336, %p337
    %s340 = sadd.s32 %s339, 1
    %p343 = scmp.eq.s32.totalorder %s22, 1
    %p344 = scmp.ne.s32.totalorder %s339, %s341
    %p345 = scmp.eq.s32.totalorder %s22, 0
    %p346 = por %p344, %p345
    %p347 = scmp.ne.s32.totalorder %s339, %s341
    %p348 = scmp.eq.s32.totalorder %s27, 1
    %p349 = por %p347, %p348
    %p350 = scmp.ne.s32.totalorder %s341, %s342
    %p351 = scmp.eq.s32.totalorder %s27, 0
    %p352 = por %p350, %p351
    %p353 = scmp.ne.s32.totalorder %s341, %s342
    %p354 = scmp.eq.s32.totalorder %s28, 1
    %p355 = por %p353, %p354
    %p357 = scmp.ne.s32.totalorder %s342, %s356
    %p358 = scmp.eq.s32.totalorder %s28, 0
    %p359 = por %p357, %p358
    %p360 = scmp.le.s32.totalorder 1, %s22
    %p361 = scmp.lt.s32.totalorder %s22, 3
    %p362 = pnand %p360, %p361
    %p363 = pneg %p362
    // Predicated region
    $region9: #{en_base_layer_forward.1} parent=5 // pred_check
      _
    $region10: #{en_base_layer_forward.1} parent=5 // pred_check_branch
      %365 = sbr.rel (%p362) target = $region12
    $region11: #{en_base_layer_forward.1} parent=5 // pred_region
      %s366 = ssub.s32 %s22, 1
      // Predicated region
      $region13: #{en_base_layer_forward.1} parent=11 // pred_check
        %p367 = pneg %p121
      $region14: #{en_base_layer_forward.1} parent=11 // pred_check_branch
        %369 = sbr.rel (%p367) target = $region16
      $region15: #{en_base_layer_forward.1} parent=11 // pred_region
        _
      $region16: #{en_base_layer_forward.1} parent=11 // pred_fallthru
        _
      // Predicated region
      $region17: #{en_base_layer_forward.1} parent=11 // pred_check
        %p370 = pneg %p142
      $region18: #{en_base_layer_forward.1} parent=11 // pred_check_branch
        %372 = sbr.rel (%p370) target = $region20
      $region19: #{en_base_layer_forward.1} parent=11 // pred_region
        _
      $region20: #{en_base_layer_forward.1} parent=11 // pred_fallthru
        _
      // Predicated region
      $region21: #{en_base_layer_forward.1} parent=11 // pred_check
        %p373 = pneg %p163
      $region22: #{en_base_layer_forward.1} parent=11 // pred_check_branch
        %375 = sbr.rel (%p373) target = $region24
      $region23: #{en_base_layer_forward.1} parent=11 // pred_region
        _
      $region24: #{en_base_layer_forward.1} parent=11 // pred_fallthru
        _
      // Predicated region
      $region25: #{en_base_layer_forward.1} parent=11 // pred_check
        %p376 = pneg %p184
      $region26: #{en_base_layer_forward.1} parent=11 // pred_check_branch
        %378 = sbr.rel (%p376) target = $region28
      $region27: #{en_base_layer_forward.1} parent=11 // pred_region
        _
      $region28: #{en_base_layer_forward.1} parent=11 // pred_fallthru
        _
      // Predicated region
      $region29: #{en_base_layer_forward.1} parent=11 // pred_check
        %p379 = pneg %p205
      $region30: #{en_base_layer_forward.1} parent=11 // pred_check_branch
        %381 = sbr.rel (%p379) target = $region32
      $region31: #{en_base_layer_forward.1} parent=11 // pred_region
        _
      $region32: #{en_base_layer_forward.1} parent=11 // pred_fallthru
        _
      // Predicated region
      $region33: #{en_base_layer_forward.1} parent=11 // pred_check
        %p382 = pneg %p226
      $region34: #{en_base_layer_forward.1} parent=11 // pred_check_branch
        %384 = sbr.rel (%p382) target = $region36
      $region35: #{en_base_layer_forward.1} parent=11 // pred_region
        _
      $region36: #{en_base_layer_forward.1} parent=11 // pred_fallthru
        _
      // Predicated region
      $region37: #{en_base_layer_forward.1} parent=11 // pred_check
        %p385 = pneg %p247
      $region38: #{en_base_layer_forward.1} parent=11 // pred_check_branch
        %387 = sbr.rel (%p385) target = $region40
      $region39: #{en_base_layer_forward.1} parent=11 // pred_region
        _
      $region40: #{en_base_layer_forward.1} parent=11 // pred_fallthru
        _
      // Predicated region
      $region41: #{en_base_layer_forward.1} parent=11 // pred_check
        %p388 = pneg %p268
      $region42: #{en_base_layer_forward.1} parent=11 // pred_check_branch
        %390 = sbr.rel (%p388) target = $region44
      $region43: #{en_base_layer_forward.1} parent=11 // pred_region
        _
      $region44: #{en_base_layer_forward.1} parent=11 // pred_fallthru
        _
      // Predicated region
      $region45: #{en_base_layer_forward.1} parent=11 // pred_check
        %p391 = pneg %p289
      $region46: #{en_base_layer_forward.1} parent=11 // pred_check_branch
        %393 = sbr.rel (%p391) target = $region48
      $region47: #{en_base_layer_forward.1} parent=11 // pred_region
        _
      $region48: #{en_base_layer_forward.1} parent=11 // pred_fallthru
        _
      // Predicated region
      $region49: #{en_base_layer_forward.1} parent=11 // pred_check
        %p394 = pneg %p310
      $region50: #{en_base_layer_forward.1} parent=11 // pred_check_branch
        %396 = sbr.rel (%p394) target = $region52
      $region51: #{en_base_layer_forward.1} parent=11 // pred_region
        _
      $region52: #{en_base_layer_forward.1} parent=11 // pred_fallthru
        _
      // Predicated region
      $region53: #{en_base_layer_forward.1} parent=11 // pred_check
        %p397 = pneg %p331
      $region54: #{en_base_layer_forward.1} parent=11 // pred_check_branch
        %399 = sbr.rel (%p397) target = $region56
      $region55: #{en_base_layer_forward.1} parent=11 // pred_region
        _
      $region56: #{en_base_layer_forward.1} parent=11 // pred_fallthru
        _
    $region12: #{en_base_layer_forward.1} parent=5 // pred_fallthru
      _
    %p400 = scmp.lt.s32.totalorder %s22, 2
    // Predicated region
    $region57: #{en_base_layer_forward.1} parent=5 // pred_check
      %p401 = pneg %p400
    $region58: #{en_base_layer_forward.1} parent=5 // pred_check_branch
      %403 = sbr.rel (%p401) target = $region60
    $region59: #{en_base_layer_forward.1} parent=5 // pred_region
      // Predicated region
      $region61: #{en_base_layer_forward.1} parent=59 // pred_check
        %p404 = pneg %p42
      $region62: #{en_base_layer_forward.1} parent=59 // pred_check_branch
        %406 = sbr.rel (%p404) target = $region64
      $region63: #{en_base_layer_forward.1} parent=59 // pred_region
        %s407 = smul.u32 32, %s22
        %p408 = scmp.lt.s32.totalorder %s407, 63
        %s409 = scalar_select %p408, %s407, 63
        %s410 = smul.addr %s409, 8
        %s411 = scalar_lea.vmem %s0, %s410
        %s412 = smul.u32 32, %s22
      $region64: #{en_base_layer_forward.1} parent=59 // pred_fallthru
        _
      // Predicated region
      $region65: #{en_base_layer_forward.1} parent=59 // pred_check
        %p413 = pneg %p68
      $region66: #{en_base_layer_forward.1} parent=59 // pred_check_branch
        %415 = sbr.rel (%p413) target = $region68
      $region67: #{en_base_layer_forward.1} parent=59 // pred_region
        %s416 = smul.u32 32, %s22
        %p417 = scmp.lt.s32.totalorder %s416, 63
        %s418 = scalar_select %p417, %s416, 63
        %s419 = smul.addr %s418, 8
        %s420 = scalar_lea.vmem %s1, %s419
        %s421 = smul.u32 32, %s22
      $region68: #{en_base_layer_forward.1} parent=59 // pred_fallthru
        _
      // Predicated region
      $region69: #{en_base_layer_forward.1} parent=59 // pred_check
        %p422 = pneg %p94
      $region70: #{en_base_layer_forward.1} parent=59 // pred_check_branch
        %424 = sbr.rel (%p422) target = $region72
      $region71: #{en_base_layer_forward.1} parent=59 // pred_region
        %s425 = smul.u32 2, %s22
        %p426 = scmp.lt.s32.totalorder %s425, 3
        %s427 = scalar_select %p426, %s425, 3
        %s428 = scalar_lea.vmem %s2, %s427
        %s429 = smul.u32 2, %s22
      $region72: #{en_base_layer_forward.1} parent=59 // pred_fallthru
        _
    $region60: #{en_base_layer_forward.1} parent=5 // pred_fallthru
      _
    %p430 = scmp.le.s32.totalorder 1, %s22
    %p431 = scmp.lt.s32.totalorder %s22, 3
    %p432 = pnand %p430, %p431
    %p433 = pneg %p432
    // Predicated region
    $region73: #{en_base_layer_forward.1} parent=5 // pred_check
      _
    $region74: #{en_base_layer_forward.1} parent=5 // pred_check_branch
      %435 = sbr.rel (%p432) target = $region76
    $region75: #{en_base_layer_forward.1} parent=5 // pred_region
      %s436 = ssub.s32 %s22, 1
      %s437 = smul.u32 32, %s27
      %p438 = scmp.lt.s32.totalorder %s437, 63
      %s439 = scalar_select %p438, %s437, 63
      %s440 = smul.addr %s439, 8
      %s441 = scalar_lea.vmem %s0, %s440
      %p442 = pneg %p48
      %p443 = pneg %p45
      %s444 = smul.u32 32, %s27
      %p445 = scmp.lt.s32.totalorder %s444, 63
      %s446 = scalar_select %p445, %s444, 63
      %s447 = smul.addr %s446, 8
      %s448 = scalar_lea.vmem %s1, %s447
      %p449 = pneg %p74
      %p450 = pneg %p71
      %s451 = smul.u32 2, %s27
      %p452 = scmp.lt.s32.totalorder %s451, 3
      %s453 = scalar_select %p452, %s451, 3
      %s454 = scalar_lea.vmem %s2, %s453
      %p455 = pneg %p100
      %p456 = pneg %p97
      %p457 = pneg %p121
      %p458 = pneg %p118
      %p459 = pneg %p142
      %p460 = pneg %p139
      %p461 = pneg %p163
      %p462 = pneg %p160
      %p463 = pneg %p184
      %p464 = pneg %p181
      %p465 = pneg %p205
      %p466 = pneg %p202
      %p467 = pneg %p226
      %p468 = pneg %p223
      %p469 = pneg %p247
      %p470 = pneg %p244
      %p471 = pneg %p268
      %p472 = pneg %p265
      %p473 = pneg %p289
      %p474 = pneg %p286
      %p475 = pneg %p310
      %p476 = pneg %p307
      %p477 = pneg %p331
      %p478 = pneg %p328
      %p479 = pneg %p352
      %p480 = pneg %p349
      %s481 = smul.u32 32, %s27
      %p482 = scmp.lt.s32.totalorder %s481, 63
      %s483 = scalar_select %p482, %s481, 63
      %s484 = smul.addr %s483, 8
      %s485 = scalar_lea.vmem %s0, %s484
      %s486 = smul.u32 32, %s27
      %s487 = smul.u32 32, %s27
      %p488 = scmp.lt.s32.totalorder %s487, 63
      %s489 = scalar_select %p488, %s487, 63
      %s490 = smul.addr %s489, 8
      %s491 = scalar_lea.vmem %s1, %s490
      %s492 = smul.u32 32, %s27
      %s493 = smul.u32 2, %s27
      %p494 = scmp.lt.s32.totalorder %s493, 3
      %s495 = scalar_select %p494, %s493, 3
      %s496 = scalar_lea.vmem %s2, %s495
      %s497 = smul.u32 2, %s27
      %p498 = scmp.eq.s32.totalorder %s27, 0
      // Predicated region
      $region77: #{en_base_layer_forward.1} parent=75 // pred_check
        %p499 = pneg %p498
      $region78: #{en_base_layer_forward.1} parent=75 // pred_check_branch
        %501 = sbr.rel (%p499) target = $region80
      $region79: #{en_base_layer_forward.1} parent=75 // pred_region
        %vm502 = vcmask 523264
        %503 = vst.msk [vmem:[#allocation2] sm:$0xff] %vm502, 0.0
        %504 = vst.msk [vmem:[#allocation2 + $0x8] sm:$0xff] %vm502, 0.0
      $region80: #{en_base_layer_forward.1} parent=75 // pred_fallthru
        _
      %v505 = vld [vmem:[%s3] sm:$0xff]
      %v506 = vld [vmem:[%s3 + $0x8] sm:$0xff]
      %v507 = vld [vmem:[%s485] sm:$0xff]
      %v508 = vld [vmem:[%s485 + $0x8] sm:$0xff]
      %v509 = vld [vmem:[%s485 + $0x10] sm:$0xff]
      %v510 = vld [vmem:[%s485 + $0x18] sm:$0xff]
      %v511 = vld [vmem:[%s485 + $0x20] sm:$0xff]
      %v512 = vld [vmem:[%s485 + $0x28] sm:$0xff]
      %v513 = vld [vmem:[%s485 + $0x30] sm:$0xff]
      %v514 = vld [vmem:[%s485 + $0x38] sm:$0xff]
      %v515 = vld [vmem:[%s485 + $0x40] sm:$0xff]
      %v516 = vld [vmem:[%s485 + $0x48] sm:$0xff]
      %v517 = vld [vmem:[%s485 + $0x50] sm:$0xff]
      %v518 = vld [vmem:[%s485 + $0x58] sm:$0xff]
      %v519 = vld [vmem:[%s485 + $0x60] sm:$0xff]
      %v520 = vld [vmem:[%s485 + $0x68] sm:$0xff]
      %v521 = vld [vmem:[%s485 + $0x70] sm:$0xff]
      %v522 = vld [vmem:[%s485 + $0x78] sm:$0xff]
      %v523 = vld [vmem:[%s485 + $0x80] sm:$0xff]
      %v524 = vld [vmem:[%s485 + $0x88] sm:$0xff]
      %v525 = vld [vmem:[%s485 + $0x90] sm:$0xff]
      %v526 = vld [vmem:[%s485 + $0x98] sm:$0xff]
      %v527 = vld [vmem:[%s485 + $0xa0] sm:$0xff]
      %v528 = vld [vmem:[%s485 + $0xa8] sm:$0xff]
      %v529 = vld [vmem:[%s485 + $0xb0] sm:$0xff]
      %v530 = vld [vmem:[%s485 + $0xb8] sm:$0xff]
      %v531 = vld [vmem:[%s485 + $0xc0] sm:$0xff]
      %v532 = vld [vmem:[%s485 + $0xc8] sm:$0xff]
      %v533 = vld [vmem:[%s485 + $0xd0] sm:$0xff]
      %v534 = vld [vmem:[%s485 + $0xd8] sm:$0xff]
      %v535 = vld [vmem:[%s485 + $0xe0] sm:$0xff]
      %v536 = vld [vmem:[%s485 + $0xe8] sm:$0xff]
      %v537 = vld [vmem:[%s485 + $0xf0] sm:$0xff]
      %v538 = vld [vmem:[%s485 + $0xf8] sm:$0xff]
      %v539 = vld [vmem:[%s491] sm:$0xff]
      %v540 = vld [vmem:[%s491 + $0x8] sm:$0xff]
      %v541 = vld [vmem:[%s491 + $0x10] sm:$0xff]
      %v542 = vld [vmem:[%s491 + $0x18] sm:$0xff]
      %v543 = vld [vmem:[%s491 + $0x20] sm:$0xff]
      %v544 = vld [vmem:[%s491 + $0x28] sm:$0xff]
      %v545 = vld [vmem:[%s491 + $0x30] sm:$0xff]
      %v546 = vld [vmem:[%s491 + $0x38] sm:$0xff]
      %v547 = vld [vmem:[%s491 + $0x40] sm:$0xff]
      %v548 = vld [vmem:[%s491 + $0x48] sm:$0xff]
      %v549 = vld [vmem:[%s491 + $0x50] sm:$0xff]
      %v550 = vld [vmem:[%s491 + $0x58] sm:$0xff]
      %v551 = vld [vmem:[%s491 + $0x60] sm:$0xff]
      %v552 = vld [vmem:[%s491 + $0x68] sm:$0xff]
      %v553 = vld [vmem:[%s491 + $0x70] sm:$0xff]
      %v554 = vld [vmem:[%s491 + $0x78] sm:$0xff]
      %v555 = vld [vmem:[%s491 + $0x80] sm:$0xff]
      %v556 = vld [vmem:[%s491 + $0x88] sm:$0xff]
      %v557 = vld [vmem:[%s491 + $0x90] sm:$0xff]
      %v558 = vld [vmem:[%s491 + $0x98] sm:$0xff]
      %v559 = vld [vmem:[%s491 + $0xa0] sm:$0xff]
      %v560 = vld [vmem:[%s491 + $0xa8] sm:$0xff]
      %v561 = vld [vmem:[%s491 + $0xb0] sm:$0xff]
      %v562 = vld [vmem:[%s491 + $0xb8] sm:$0xff]
      %v563 = vld [vmem:[%s491 + $0xc0] sm:$0xff]
      %v564 = vld [vmem:[%s491 + $0xc8] sm:$0xff]
      %v565 = vld [vmem:[%s491 + $0xd0] sm:$0xff]
      %v566 = vld [vmem:[%s491 + $0xd8] sm:$0xff]
      %v567 = vld [vmem:[%s491 + $0xe0] sm:$0xff]
      %v568 = vld [vmem:[%s491 + $0xe8] sm:$0xff]
      %v569 = vld [vmem:[%s491 + $0xf0] sm:$0xff]
      %v570 = vld [vmem:[%s491 + $0xf8] sm:$0xff]
      %v571 = vld [vmem:[%s496] sm:$0x3]
      %v572 = vlaneseq
      %v573 = vand.u32 %v572, 127
      %574 = vset.pattern.permute.xlu0 0
      %575 = vperm.xlu0 %574, %v507
      %v576 = vpop.permute.xlu0 %575
      %577 = vset.pattern.permute.xlu0 0
      %578 = vperm.xlu0 %577, %v508
      %v579 = vpop.permute.xlu0 %578
      %580 = vset.pattern.permute.xlu0 0
      %581 = vperm.xlu0 %580, %v509
      %v582 = vpop.permute.xlu0 %581
      %583 = vset.pattern.permute.xlu0 0
      %584 = vperm.xlu0 %583, %v510
      %v585 = vpop.permute.xlu0 %584
      %586 = vset.pattern.permute.xlu0 0
      %587 = vperm.xlu0 %586, %v511
      %v588 = vpop.permute.xlu0 %587
      %589 = vset.pattern.permute.xlu0 0
      %590 = vperm.xlu0 %589, %v512
      %v591 = vpop.permute.xlu0 %590
      %592 = vset.pattern.permute.xlu0 0
      %593 = vperm.xlu0 %592, %v513
      %v594 = vpop.permute.xlu0 %593
      %595 = vset.pattern.permute.xlu0 0
      %596 = vperm.xlu0 %595, %v514
      %v597 = vpop.permute.xlu0 %596
      %598 = vset.pattern.permute.xlu0 0
      %599 = vperm.xlu0 %598, %v515
      %v600 = vpop.permute.xlu0 %599
      %601 = vset.pattern.permute.xlu0 0
      %602 = vperm.xlu0 %601, %v516
      %v603 = vpop.permute.xlu0 %602
      %604 = vset.pattern.permute.xlu0 0
      %605 = vperm.xlu0 %604, %v517
      %v606 = vpop.permute.xlu0 %605
      %607 = vset.pattern.permute.xlu0 0
      %608 = vperm.xlu0 %607, %v518
      %v609 = vpop.permute.xlu0 %608
      %610 = vset.pattern.permute.xlu0 0
      %611 = vperm.xlu0 %610, %v519
      %v612 = vpop.permute.xlu0 %611
      %613 = vset.pattern.permute.xlu0 0
      %614 = vperm.xlu0 %613, %v520
      %v615 = vpop.permute.xlu0 %614
      %616 = vset.pattern.permute.xlu0 0
      %617 = vperm.xlu0 %616, %v521
      %v618 = vpop.permute.xlu0 %617
      %619 = vset.pattern.permute.xlu0 0
      %620 = vperm.xlu0 %619, %v522
      %v621 = vpop.permute.xlu0 %620
      %622 = vset.pattern.permute.xlu0 0
      %623 = vperm.xlu0 %622, %v523
      %v624 = vpop.permute.xlu0 %623
      %625 = vset.pattern.permute.xlu0 0
      %626 = vperm.xlu0 %625, %v524
      %v627 = vpop.permute.xlu0 %626
      %628 = vset.pattern.permute.xlu0 0
      %629 = vperm.xlu0 %628, %v525
      %v630 = vpop.permute.xlu0 %629
      %631 = vset.pattern.permute.xlu0 0
      %632 = vperm.xlu0 %631, %v526
      %v633 = vpop.permute.xlu0 %632
      %634 = vset.pattern.permute.xlu0 0
      %635 = vperm.xlu0 %634, %v527
      %v636 = vpop.permute.xlu0 %635
      %637 = vset.pattern.permute.xlu0 0
      %638 = vperm.xlu0 %637, %v528
      %v639 = vpop.permute.xlu0 %638
      %640 = vset.pattern.permute.xlu0 0
      %641 = vperm.xlu0 %640, %v529
      %v642 = vpop.permute.xlu0 %641
      %643 = vset.pattern.permute.xlu0 0
      %644 = vperm.xlu0 %643, %v530
      %v645 = vpop.permute.xlu0 %644
      %646 = vset.pattern.permute.xlu0 0
      %647 = vperm.xlu0 %646, %v531
      %v648 = vpop.permute.xlu0 %647
      %649 = vset.pattern.permute.xlu0 0
      %650 = vperm.xlu0 %649, %v532
      %v651 = vpop.permute.xlu0 %650
      %652 = vset.pattern.permute.xlu0 0
      %653 = vperm.xlu0 %652, %v533
      %v654 = vpop.permute.xlu0 %653
      %655 = vset.pattern.permute.xlu0 0
      %656 = vperm.xlu0 %655, %v534
      %v657 = vpop.permute.xlu0 %656
      %658 = vset.pattern.permute.xlu0 0
      %659 = vperm.xlu0 %658, %v535
      %v660 = vpop.permute.xlu0 %659
      %661 = vset.pattern.permute.xlu0 0
      %662 = vperm.xlu0 %661, %v536
      %v663 = vpop.permute.xlu0 %662
      %664 = vset.pattern.permute.xlu0 0
      %665 = vperm.xlu0 %664, %v537
      %v666 = vpop.permute.xlu0 %665
      %667 = vset.pattern.permute.xlu0 0
      %668 = vperm.xlu0 %667, %v538
      %v669 = vpop.permute.xlu0 %668
      %vm670 = vcmp.eq.s32.totalorder %v576, %v573
      %vm671 = vcmp.eq.s32.totalorder %v579, %v573
      %vm672 = vcmp.eq.s32.totalorder %v582, %v573
      %vm673 = vcmp.eq.s32.totalorder %v585, %v573
      %vm674 = vcmp.eq.s32.totalorder %v588, %v573
      %vm675 = vcmp.eq.s32.totalorder %v591, %v573
      %vm676 = vcmp.eq.s32.totalorder %v594, %v573
      %vm677 = vcmp.eq.s32.totalorder %v597, %v573
      %vm678 = vcmp.eq.s32.totalorder %v600, %v573
      %vm679 = vcmp.eq.s32.totalorder %v603, %v573
      %vm680 = vcmp.eq.s32.totalorder %v606, %v573
      %vm681 = vcmp.eq.s32.totalorder %v609, %v573
      %vm682 = vcmp.eq.s32.totalorder %v612, %v573
      %vm683 = vcmp.eq.s32.totalorder %v615, %v573
      %vm684 = vcmp.eq.s32.totalorder %v618, %v573
      %vm685 = vcmp.eq.s32.totalorder %v621, %v573
      %vm686 = vcmp.eq.s32.totalorder %v624, %v573
      %vm687 = vcmp.eq.s32.totalorder %v627, %v573
      %vm688 = vcmp.eq.s32.totalorder %v630, %v573
      %vm689 = vcmp.eq.s32.totalorder %v633, %v573
      %vm690 = vcmp.eq.s32.totalorder %v636, %v573
      %vm691 = vcmp.eq.s32.totalorder %v639, %v573
      %vm692 = vcmp.eq.s32.totalorder %v642, %v573
      %vm693 = vcmp.eq.s32.totalorder %v645, %v573
      %vm694 = vcmp.eq.s32.totalorder %v648, %v573
      %vm695 = vcmp.eq.s32.totalorder %v651, %v573
      %vm696 = vcmp.eq.s32.totalorder %v654, %v573
      %vm697 = vcmp.eq.s32.totalorder %v657, %v573
      %vm698 = vcmp.eq.s32.totalorder %v660, %v573
      %vm699 = vcmp.eq.s32.totalorder %v663, %v573
      %vm700 = vcmp.eq.s32.totalorder %v666, %v573
      %vm701 = vcmp.eq.s32.totalorder %v669, %v573
      %v702 = vsel %vm670, 1, 0
      %v703 = vsel %vm671, 1, 0
      %v704 = vsel %vm672, 1, 0
      %v705 = vsel %vm673, 1, 0
      %v706 = vsel %vm674, 1, 0
      %v707 = vsel %vm675, 1, 0
      %v708 = vsel %vm676, 1, 0
      %v709 = vsel %vm677, 1, 0
      %v710 = vsel %vm678, 1, 0
      %v711 = vsel %vm679, 1, 0
      %v712 = vsel %vm680, 1, 0
      %v713 = vsel %vm681, 1, 0
      %v714 = vsel %vm682, 1, 0
      %v715 = vsel %vm683, 1, 0
      %v716 = vsel %vm684, 1, 0
      %v717 = vsel %vm685, 1, 0
      %v718 = vsel %vm686, 1, 0
      %v719 = vsel %vm687, 1, 0
      %v720 = vsel %vm688, 1, 0
      %v721 = vsel %vm689, 1, 0
      %v722 = vsel %vm690, 1, 0
      %v723 = vsel %vm691, 1, 0
      %v724 = vsel %vm692, 1, 0
      %v725 = vsel %vm693, 1, 0
      %v726 = vsel %vm694, 1, 0
      %v727 = vsel %vm695, 1, 0
      %v728 = vsel %vm696, 1, 0
      %v729 = vsel %vm697, 1, 0
      %v730 = vsel %vm698, 1, 0
      %v731 = vsel %vm699, 1, 0
      %v732 = vsel %vm700, 1, 0
      %v733 = vsel %vm701, 1, 0
      %v734 = vcvt.s32.f32 %v702
      %v735 = vcvt.s32.f32 %v703
      %v736 = vcvt.s32.f32 %v704
      %v737 = vcvt.s32.f32 %v705
      %v738 = vcvt.s32.f32 %v706
      %v739 = vcvt.s32.f32 %v707
      %v740 = vcvt.s32.f32 %v708
      %v741 = vcvt.s32.f32 %v709
      %v742 = vcvt.s32.f32 %v710
      %v743 = vcvt.s32.f32 %v711
      %v744 = vcvt.s32.f32 %v712
      %v745 = vcvt.s32.f32 %v713
      %v746 = vcvt.s32.f32 %v714
      %v747 = vcvt.s32.f32 %v715
      %v748 = vcvt.s32.f32 %v716
      %v749 = vcvt.s32.f32 %v717
      %v750 = vcvt.s32.f32 %v718
      %v751 = vcvt.s32.f32 %v719
      %v752 = vcvt.s32.f32 %v720
      %v753 = vcvt.s32.f32 %v721
      %v754 = vcvt.s32.f32 %v722
      %v755 = vcvt.s32.f32 %v723
      %v756 = vcvt.s32.f32 %v724
      %v757 = vcvt.s32.f32 %v725
      %v758 = vcvt.s32.f32 %v726
      %v759 = vcvt.s32.f32 %v727
      %v760 = vcvt.s32.f32 %v728
      %v761 = vcvt.s32.f32 %v729
      %v762 = vcvt.s32.f32 %v730
      %v763 = vcvt.s32.f32 %v731
      %v764 = vcvt.s32.f32 %v732
      %v765 = vcvt.s32.f32 %v733
      %766 = vset.pattern.permute.xlu0 0
      %767 = vperm.xlu0 %766, %v539
      %v768 = vpop.permute.xlu0 %767
      %769 = vset.pattern.permute.xlu0 0
      %770 = vperm.xlu0 %769, %v540
      %v771 = vpop.permute.xlu0 %770
      %772 = vset.pattern.permute.xlu0 0
      %773 = vperm.xlu0 %772, %v541
      %v774 = vpop.permute.xlu0 %773
      %775 = vset.pattern.permute.xlu0 0
      %776 = vperm.xlu0 %775, %v542
      %v777 = vpop.permute.xlu0 %776
      %778 = vset.pattern.permute.xlu0 0
      %779 = vperm.xlu0 %778, %v543
      %v780 = vpop.permute.xlu0 %779
      %781 = vset.pattern.permute.xlu0 0
      %782 = vperm.xlu0 %781, %v544
      %v783 = vpop.permute.xlu0 %782
      %784 = vset.pattern.permute.xlu0 0
      %785 = vperm.xlu0 %784, %v545
      %v786 = vpop.permute.xlu0 %785
      %787 = vset.pattern.permute.xlu0 0
      %788 = vperm.xlu0 %787, %v546
      %v789 = vpop.permute.xlu0 %788
      %790 = vset.pattern.permute.xlu0 0
      %791 = vperm.xlu0 %790, %v547
      %v792 = vpop.permute.xlu0 %791
      %793 = vset.pattern.permute.xlu0 0
      %794 = vperm.xlu0 %793, %v548
      %v795 = vpop.permute.xlu0 %794
      %796 = vset.pattern.permute.xlu0 0
      %797 = vperm.xlu0 %796, %v549
      %v798 = vpop.permute.xlu0 %797
      %799 = vset.pattern.permute.xlu0 0
      %800 = vperm.xlu0 %799, %v550
      %v801 = vpop.permute.xlu0 %800
      %802 = vset.pattern.permute.xlu0 0
      %803 = vperm.xlu0 %802, %v551
      %v804 = vpop.permute.xlu0 %803
      %805 = vset.pattern.permute.xlu0 0
      %806 = vperm.xlu0 %805, %v552
      %v807 = vpop.permute.xlu0 %806
      %808 = vset.pattern.permute.xlu0 0
      %809 = vperm.xlu0 %808, %v553
      %v810 = vpop.permute.xlu0 %809
      %811 = vset.pattern.permute.xlu0 0
      %812 = vperm.xlu0 %811, %v554
      %v813 = vpop.permute.xlu0 %812
      %814 = vset.pattern.permute.xlu0 0
      %815 = vperm.xlu0 %814, %v555
      %v816 = vpop.permute.xlu0 %815
      %817 = vset.pattern.permute.xlu0 0
      %818 = vperm.xlu0 %817, %v556
      %v819 = vpop.permute.xlu0 %818
      %820 = vset.pattern.permute.xlu0 0
      %821 = vperm.xlu0 %820, %v557
      %v822 = vpop.permute.xlu0 %821
      %823 = vset.pattern.permute.xlu0 0
      %824 = vperm.xlu0 %823, %v558
      %v825 = vpop.permute.xlu0 %824
      %826 = vset.pattern.permute.xlu0 0
      %827 = vperm.xlu0 %826, %v559
      %v828 = vpop.permute.xlu0 %827
      %829 = vset.pattern.permute.xlu0 0
      %830 = vperm.xlu0 %829, %v560
      %v831 = vpop.permute.xlu0 %830
      %832 = vset.pattern.permute.xlu0 0
      %833 = vperm.xlu0 %832, %v561
      %v834 = vpop.permute.xlu0 %833
      %835 = vset.pattern.permute.xlu0 0
      %836 = vperm.xlu0 %835, %v562
      %v837 = vpop.permute.xlu0 %836
      %838 = vset.pattern.permute.xlu0 0
      %839 = vperm.xlu0 %838, %v563
      %v840 = vpop.permute.xlu0 %839
      %841 = vset.pattern.permute.xlu0 0
      %842 = vperm.xlu0 %841, %v564
      %v843 = vpop.permute.xlu0 %842
      %844 = vset.pattern.permute.xlu0 0
      %845 = vperm.xlu0 %844, %v565
      %v846 = vpop.permute.xlu0 %845
      %847 = vset.pattern.permute.xlu0 0
      %848 = vperm.xlu0 %847, %v566
      %v849 = vpop.permute.xlu0 %848
      %850 = vset.pattern.permute.xlu0 0
      %851 = vperm.xlu0 %850, %v567
      %v852 = vpop.permute.xlu0 %851
      %853 = vset.pattern.permute.xlu0 0
      %854 = vperm.xlu0 %853, %v568
      %v855 = vpop.permute.xlu0 %854
      %856 = vset.pattern.permute.xlu0 0
      %857 = vperm.xlu0 %856, %v569
      %v858 = vpop.permute.xlu0 %857
      %859 = vset.pattern.permute.xlu0 0
      %860 = vperm.xlu0 %859, %v570
      %v861 = vpop.permute.xlu0 %860
      %vm862 = vcmp.eq.s32.totalorder %v768, %v573
      %vm863 = vcmp.eq.s32.totalorder %v771, %v573
      %vm864 = vcmp.eq.s32.totalorder %v774, %v573
      %vm865 = vcmp.eq.s32.totalorder %v777, %v573
      %vm866 = vcmp.eq.s32.totalorder %v780, %v573
      %vm867 = vcmp.eq.s32.totalorder %v783, %v573
      %vm868 = vcmp.eq.s32.totalorder %v786, %v573
      %vm869 = vcmp.eq.s32.totalorder %v789, %v573
      %vm870 = vcmp.eq.s32.totalorder %v792, %v573
      %vm871 = vcmp.eq.s32.totalorder %v795, %v573
      %vm872 = vcmp.eq.s32.totalorder %v798, %v573
      %vm873 = vcmp.eq.s32.totalorder %v801, %v573
      %vm874 = vcmp.eq.s32.totalorder %v804, %v573
      %vm875 = vcmp.eq.s32.totalorder %v807, %v573
      %vm876 = vcmp.eq.s32.totalorder %v810, %v573
      %vm877 = vcmp.eq.s32.totalorder %v813, %v573
      %vm878 = vcmp.eq.s32.totalorder %v816, %v573
      %vm879 = vcmp.eq.s32.totalorder %v819, %v573
      %vm880 = vcmp.eq.s32.totalorder %v822, %v573
      %vm881 = vcmp.eq.s32.totalorder %v825, %v573
      %vm882 = vcmp.eq.s32.totalorder %v828, %v573
      %vm883 = vcmp.eq.s32.totalorder %v831, %v573
      %vm884 = vcmp.eq.s32.totalorder %v834, %v573
      %vm885 = vcmp.eq.s32.totalorder %v837, %v573
      %vm886 = vcmp.eq.s32.totalorder %v840, %v573
      %vm887 = vcmp.eq.s32.totalorder %v843, %v573
      %vm888 = vcmp.eq.s32.totalorder %v846, %v573
      %vm889 = vcmp.eq.s32.totalorder %v849, %v573
      %vm890 = vcmp.eq.s32.totalorder %v852, %v573
      %vm891 = vcmp.eq.s32.totalorder %v855, %v573
      %vm892 = vcmp.eq.s32.totalorder %v858, %v573
      %vm893 = vcmp.eq.s32.totalorder %v861, %v573
      %v894 = vsel %vm862, 1, 0
      %v895 = vsel %vm863, 1, 0
      %v896 = vsel %vm864, 1, 0
      %v897 = vsel %vm865, 1, 0
      %v898 = vsel %vm866, 1, 0
      %v899 = vsel %vm867, 1, 0
      %v900 = vsel %vm868, 1, 0
      %v901 = vsel %vm869, 1, 0
      %v902 = vsel %vm870, 1, 0
      %v903 = vsel %vm871, 1, 0
      %v904 = vsel %vm872, 1, 0
      %v905 = vsel %vm873, 1, 0
      %v906 = vsel %vm874, 1, 0
      %v907 = vsel %vm875, 1, 0
      %v908 = vsel %vm876, 1, 0
      %v909 = vsel %vm877, 1, 0
      %v910 = vsel %vm878, 1, 0
      %v911 = vsel %vm879, 1, 0
      %v912 = vsel %vm880, 1, 0
      %v913 = vsel %vm881, 1, 0
      %v914 = vsel %vm882, 1, 0
      %v915 = vsel %vm883, 1, 0
      %v916 = vsel %vm884, 1, 0
      %v917 = vsel %vm885, 1, 0
      %v918 = vsel %vm886, 1, 0
      %v919 = vsel %vm887, 1, 0
      %v920 = vsel %vm888, 1, 0
      %v921 = vsel %vm889, 1, 0
      %v922 = vsel %vm890, 1, 0
      %v923 = vsel %vm891, 1, 0
      %v924 = vsel %vm892, 1, 0
      %v925 = vsel %vm893, 1, 0
      %v926 = vcvt.s32.f32 %v894
      %v927 = vcvt.s32.f32 %v895
      %v928 = vcvt.s32.f32 %v896
      %v929 = vcvt.s32.f32 %v897
      %v930 = vcvt.s32.f32 %v898
      %v931 = vcvt.s32.f32 %v899
      %v932 = vcvt.s32.f32 %v900
      %v933 = vcvt.s32.f32 %v901
      %v934 = vcvt.s32.f32 %v902
      %v935 = vcvt.s32.f32 %v903
      %v936 = vcvt.s32.f32 %v904
      %v937 = vcvt.s32.f32 %v905
      %v938 = vcvt.s32.f32 %v906
      %v939 = vcvt.s32.f32 %v907
      %v940 = vcvt.s32.f32 %v908
      %v941 = vcvt.s32.f32 %v909
      %v942 = vcvt.s32.f32 %v910
      %v943 = vcvt.s32.f32 %v911
      %v944 = vcvt.s32.f32 %v912
      %v945 = vcvt.s32.f32 %v913
      %v946 = vcvt.s32.f32 %v914
      %v947 = vcvt.s32.f32 %v915
      %v948 = vcvt.s32.f32 %v916
      %v949 = vcvt.s32.f32 %v917
      %v950 = vcvt.s32.f32 %v918
      %v951 = vcvt.s32.f32 %v919
      %v952 = vcvt.s32.f32 %v920
      %v953 = vcvt.s32.f32 %v921
      %v954 = vcvt.s32.f32 %v922
      %v955 = vcvt.s32.f32 %v923
      %v956 = vcvt.s32.f32 %v924
      %v957 = vcvt.s32.f32 %v925
      %vm958 = vcmask 130048
      %v960 = vsel %vm958, %v734, 0
      %v963 = vsel %vm958, %v735, 0
      %v966 = vsel %vm958, %v736, 0
      %v969 = vsel %vm958, %v737, 0
      %v972 = vsel %vm958, %v738, 0
      %v975 = vsel %vm958, %v739, 0
      %v978 = vsel %vm958, %v740, 0
      %v981 = vsel %vm958, %v741, 0
      %v984 = vsel %vm958, %v742, 0
      %v987 = vsel %vm958, %v743, 0
      %v990 = vsel %vm958, %v744, 0
      %v993 = vsel %vm958, %v745, 0
      %v996 = vsel %vm958, %v746, 0
      %v999 = vsel %vm958, %v747, 0
      %v1002 = vsel %vm958, %v748, 0
      %v1005 = vsel %vm958, %v749, 0
      %v1008 = vsel %vm958, %v750, 0
      %v1011 = vsel %vm958, %v751, 0
      %v1014 = vsel %vm958, %v752, 0
      %v1017 = vsel %vm958, %v753, 0
      %v1020 = vsel %vm958, %v754, 0
      %v1023 = vsel %vm958, %v755, 0
      %v1026 = vsel %vm958, %v756, 0
      %v1029 = vsel %vm958, %v757, 0
      %v1032 = vsel %vm958, %v758, 0
      %v1035 = vsel %vm958, %v759, 0
      %v1038 = vsel %vm958, %v760, 0
      %v1041 = vsel %vm958, %v761, 0
      %v1044 = vsel %vm958, %v762, 0
      %v1047 = vsel %vm958, %v763, 0
      %v1050 = vsel %vm958, %v764, 0
      %v1053 = vsel %vm958, %v765, 0
      %1055 = vmatpush.msra.mxu0 0.0
      %1056 = vmatpush.msra.mxu0 0.0
      %1057 = vmatpush.msra.mxu0 0.0
      %1058 = vmatpush.msra.mxu0 0.0
      %1059 = vmatpush.msra.mxu0 0.0
      %1060 = vmatpush.msra.mxu0 0.0
      %1061 = vmatpush.msra.mxu0 0.0
      %1062 = vmatpush.msra.mxu0 0.0
      %1063 = vmatpush.msra.mxu0 0.0
      %1064 = vmatpush.msra.mxu0 0.0
      %1065 = vmatpush.msra.mxu0 0.0
      %1066 = vmatpush.msra.mxu0 0.0
      %1067 = vmatpush.msra.mxu0 0.0
      %1068 = vmatpush.msra.mxu0 0.0
      %v1069 = vand.u32 %v506, 4294901760
      %1070 = vmatpush.msra.mxu0 %v1069
      %v1071 = vand.u32 %v505, 4294901760
      %1072 = vmatpush.msra.mxu0 %v1071
      %v1073 = vand.u32 %v960, 4294901760
      %v1074 = vsub.f32 %v960, %v1073
      %v1075 = vand.u32 %v1074, 4294901760
      %v1076 = vsub.f32 %v1074, %v1075
      %v1077 = vand.u32 %v1076, 4294901760
      %1078 = vmatmul.f32.gmra.mxu0 %v1077
      %v1079 = vpop.f32.mrf.mxu0
      %v1080 = vadd.f32 0.0, %v1079
      %v1081 = vand.u32 %v963, 4294901760
      %v1082 = vsub.f32 %v963, %v1081
      %v1083 = vand.u32 %v1082, 4294901760
      %v1084 = vsub.f32 %v1082, %v1083
      %v1085 = vand.u32 %v1084, 4294901760
      %1086 = vmatmul.f32.gmra.mxu0 %v1085
      %v1087 = vpop.f32.mrf.mxu0
      %v1088 = vadd.f32 0.0, %v1087
      %v1089 = vand.u32 %v966, 4294901760
      %v1090 = vsub.f32 %v966, %v1089
      %v1091 = vand.u32 %v1090, 4294901760
      %v1092 = vsub.f32 %v1090, %v1091
      %v1093 = vand.u32 %v1092, 4294901760
      %1094 = vmatmul.f32.gmra.mxu0 %v1093
      %v1095 = vpop.f32.mrf.mxu0
      %v1096 = vadd.f32 0.0, %v1095
      %v1097 = vand.u32 %v969, 4294901760
      %v1098 = vsub.f32 %v969, %v1097
      %v1099 = vand.u32 %v1098, 4294901760
      %v1100 = vsub.f32 %v1098, %v1099
      %v1101 = vand.u32 %v1100, 4294901760
      %1102 = vmatmul.f32.gmra.mxu0 %v1101
      %v1103 = vpop.f32.mrf.mxu0
      %v1104 = vadd.f32 0.0, %v1103
      %v1105 = vand.u32 %v972, 4294901760
      %v1106 = vsub.f32 %v972, %v1105
      %v1107 = vand.u32 %v1106, 4294901760
      %v1108 = vsub.f32 %v1106, %v1107
      %v1109 = vand.u32 %v1108, 4294901760
      %1110 = vmatmul.f32.gmra.mxu0 %v1109
      %v1111 = vpop.f32.mrf.mxu0
      %v1112 = vadd.f32 0.0, %v1111
      %v1113 = vand.u32 %v975, 4294901760
      %v1114 = vsub.f32 %v975, %v1113
      %v1115 = vand.u32 %v1114, 4294901760
      %v1116 = vsub.f32 %v1114, %v1115
      %v1117 = vand.u32 %v1116, 4294901760
      %1118 = vmatmul.f32.gmra.mxu0 %v1117
      %v1119 = vpop.f32.mrf.mxu0
      %v1120 = vadd.f32 0.0, %v1119
      %v1121 = vand.u32 %v978, 4294901760
      %v1122 = vsub.f32 %v978, %v1121
      %v1123 = vand.u32 %v1122, 4294901760
      %v1124 = vsub.f32 %v1122, %v1123
      %v1125 = vand.u32 %v1124, 4294901760
      %1126 = vmatmul.f32.gmra.mxu0 %v1125
      %v1127 = vpop.f32.mrf.mxu0
      %v1128 = vadd.f32 0.0, %v1127
      %v1129 = vand.u32 %v981, 4294901760
      %v1130 = vsub.f32 %v981, %v1129
      %v1131 = vand.u32 %v1130, 4294901760
      %v1132 = vsub.f32 %v1130, %v1131
      %v1133 = vand.u32 %v1132, 4294901760
      %1134 = vmatmul.f32.gmra.mxu0 %v1133
      %v1135 = vpop.f32.mrf.mxu0
      %v1136 = vadd.f32 0.0, %v1135
      %v1137 = vand.u32 %v984, 4294901760
      %v1138 = vsub.f32 %v984, %v1137
      %v1139 = vand.u32 %v1138, 4294901760
      %v1140 = vsub.f32 %v1138, %v1139
      %v1141 = vand.u32 %v1140, 4294901760
      %1142 = vmatmul.f32.gmra.mxu0 %v1141
      %v1143 = vpop.f32.mrf.mxu0
      %v1144 = vadd.f32 0.0, %v1143
      %v1145 = vand.u32 %v987, 4294901760
      %v1146 = vsub.f32 %v987, %v1145
      %v1147 = vand.u32 %v1146, 4294901760
      %v1148 = vsub.f32 %v1146, %v1147
      %v1149 = vand.u32 %v1148, 4294901760
      %1150 = vmatmul.f32.gmra.mxu0 %v1149
      %v1151 = vpop.f32.mrf.mxu0
      %v1152 = vadd.f32 0.0, %v1151
      %v1153 = vand.u32 %v990, 4294901760
      %v1154 = vsub.f32 %v990, %v1153
      %v1155 = vand.u32 %v1154, 4294901760
      %v1156 = vsub.f32 %v1154, %v1155
      %v1157 = vand.u32 %v1156, 4294901760
      %1158 = vmatmul.f32.gmra.mxu0 %v1157
      %v1159 = vpop.f32.mrf.mxu0
      %v1160 = vadd.f32 0.0, %v1159
      %v1161 = vand.u32 %v993, 4294901760
      %v1162 = vsub.f32 %v993, %v1161
      %v1163 = vand.u32 %v1162, 4294901760
      %v1164 = vsub.f32 %v1162, %v1163
      %v1165 = vand.u32 %v1164, 4294901760
      %1166 = vmatmul.f32.gmra.mxu0 %v1165
      %v1167 = vpop.f32.mrf.mxu0
      %v1168 = vadd.f32 0.0, %v1167
      %v1169 = vand.u32 %v996, 4294901760
      %v1170 = vsub.f32 %v996, %v1169
      %v1171 = vand.u32 %v1170, 4294901760
      %v1172 = vsub.f32 %v1170, %v1171
      %v1173 = vand.u32 %v1172, 4294901760
      %1174 = vmatmul.f32.gmra.mxu0 %v1173
      %v1175 = vpop.f32.mrf.mxu0
      %v1176 = vadd.f32 0.0, %v1175
      %v1177 = vand.u32 %v999, 4294901760
      %v1178 = vsub.f32 %v999, %v1177
      %v1179 = vand.u32 %v1178, 4294901760
      %v1180 = vsub.f32 %v1178, %v1179
      %v1181 = vand.u32 %v1180, 4294901760
      %1182 = vmatmul.f32.gmra.mxu0 %v1181
      %v1183 = vpop.f32.mrf.mxu0
      %v1184 = vadd.f32 0.0, %v1183
      %v1185 = vand.u32 %v1002, 4294901760
      %v1186 = vsub.f32 %v1002, %v1185
      %v1187 = vand.u32 %v1186, 4294901760
      %v1188 = vsub.f32 %v1186, %v1187
      %v1189 = vand.u32 %v1188, 4294901760
      %1190 = vmatmul.f32.gmra.mxu0 %v1189
      %v1191 = vpop.f32.mrf.mxu0
      %v1192 = vadd.f32 0.0, %v1191
      %v1193 = vand.u32 %v1005, 4294901760
      %v1194 = vsub.f32 %v1005, %v1193
      %v1195 = vand.u32 %v1194, 4294901760
      %v1196 = vsub.f32 %v1194, %v1195
      %v1197 = vand.u32 %v1196, 4294901760
      %1198 = vmatmul.f32.gmra.mxu0 %v1197
      %v1199 = vpop.f32.mrf.mxu0
      %v1200 = vadd.f32 0.0, %v1199
      %v1201 = vand.u32 %v1008, 4294901760
      %v1202 = vsub.f32 %v1008, %v1201
      %v1203 = vand.u32 %v1202, 4294901760
      %v1204 = vsub.f32 %v1202, %v1203
      %v1205 = vand.u32 %v1204, 4294901760
      %1206 = vmatmul.f32.gmra.mxu0 %v1205
      %v1207 = vpop.f32.mrf.mxu0
      %v1208 = vadd.f32 0.0, %v1207
      %v1209 = vand.u32 %v1011, 4294901760
      %v1210 = vsub.f32 %v1011, %v1209
      %v1211 = vand.u32 %v1210, 4294901760
      %v1212 = vsub.f32 %v1210, %v1211
      %v1213 = vand.u32 %v1212, 4294901760
      %1214 = vmatmul.f32.gmra.mxu0 %v1213
      %v1215 = vpop.f32.mrf.mxu0
      %v1216 = vadd.f32 0.0, %v1215
      %v1217 = vand.u32 %v1014, 4294901760
      %v1218 = vsub.f32 %v1014, %v1217
      %v1219 = vand.u32 %v1218, 4294901760
      %v1220 = vsub.f32 %v1218, %v1219
      %v1221 = vand.u32 %v1220, 4294901760
      %1222 = vmatmul.f32.gmra.mxu0 %v1221
      %v1223 = vpop.f32.mrf.mxu0
      %v1224 = vadd.f32 0.0, %v1223
      %v1225 = vand.u32 %v1017, 4294901760
      %v1226 = vsub.f32 %v1017, %v1225
      %v1227 = vand.u32 %v1226, 4294901760
      %v1228 = vsub.f32 %v1226, %v1227
      %v1229 = vand.u32 %v1228, 4294901760
      %1230 = vmatmul.f32.gmra.mxu0 %v1229
      %v1231 = vpop.f32.mrf.mxu0
      %v1232 = vadd.f32 0.0, %v1231
      %v1233 = vand.u32 %v1020, 4294901760
      %v1234 = vsub.f32 %v1020, %v1233
      %v1235 = vand.u32 %v1234, 4294901760
      %v1236 = vsub.f32 %v1234, %v1235
      %v1237 = vand.u32 %v1236, 4294901760
      %1238 = vmatmul.f32.gmra.mxu0 %v1237
      %v1239 = vpop.f32.mrf.mxu0
      %v1240 = vadd.f32 0.0, %v1239
      %v1241 = vand.u32 %v1023, 4294901760
      %v1242 = vsub.f32 %v1023, %v1241
      %v1243 = vand.u32 %v1242, 4294901760
      %v1244 = vsub.f32 %v1242, %v1243
      %v1245 = vand.u32 %v1244, 4294901760
      %1246 = vmatmul.f32.gmra.mxu0 %v1245
      %v1247 = vpop.f32.mrf.mxu0
      %v1248 = vadd.f32 0.0, %v1247
      %v1249 = vand.u32 %v1026, 4294901760
      %v1250 = vsub.f32 %v1026, %v1249
      %v1251 = vand.u32 %v1250, 4294901760
      %v1252 = vsub.f32 %v1250, %v1251
      %v1253 = vand.u32 %v1252, 4294901760
      %1254 = vmatmul.f32.gmra.mxu0 %v1253
      %v1255 = vpop.f32.mrf.mxu0
      %v1256 = vadd.f32 0.0, %v1255
      %v1257 = vand.u32 %v1029, 4294901760
      %v1258 = vsub.f32 %v1029, %v1257
      %v1259 = vand.u32 %v1258, 4294901760
      %v1260 = vsub.f32 %v1258, %v1259
      %v1261 = vand.u32 %v1260, 4294901760
      %1262 = vmatmul.f32.gmra.mxu0 %v1261
      %v1263 = vpop.f32.mrf.mxu0
      %v1264 = vadd.f32 0.0, %v1263
      %v1265 = vand.u32 %v1032, 4294901760
      %v1266 = vsub.f32 %v1032, %v1265
      %v1267 = vand.u32 %v1266, 4294901760
      %v1268 = vsub.f32 %v1266, %v1267
      %v1269 = vand.u32 %v1268, 4294901760
      %1270 = vmatmul.f32.gmra.mxu0 %v1269
      %v1271 = vpop.f32.mrf.mxu0
      %v1272 = vadd.f32 0.0, %v1271
      %v1273 = vand.u32 %v1035, 4294901760
      %v1274 = vsub.f32 %v1035, %v1273
      %v1275 = vand.u32 %v1274, 4294901760
      %v1276 = vsub.f32 %v1274, %v1275
      %v1277 = vand.u32 %v1276, 4294901760
      %1278 = vmatmul.f32.gmra.mxu0 %v1277
      %v1279 = vpop.f32.mrf.mxu0
      %v1280 = vadd.f32 0.0, %v1279
      %v1281 = vand.u32 %v1038, 4294901760
      %v1282 = vsub.f32 %v1038, %v1281
      %v1283 = vand.u32 %v1282, 4294901760
      %v1284 = vsub.f32 %v1282, %v1283
      %v1285 = vand.u32 %v1284, 4294901760
      %1286 = vmatmul.f32.gmra.mxu0 %v1285
      %v1287 = vpop.f32.mrf.mxu0
      %v1288 = vadd.f32 0.0, %v1287
      %v1289 = vand.u32 %v1041, 4294901760
      %v1290 = vsub.f32 %v1041, %v1289
      %v1291 = vand.u32 %v1290, 4294901760
      %v1292 = vsub.f32 %v1290, %v1291
      %v1293 = vand.u32 %v1292, 4294901760
      %1294 = vmatmul.f32.gmra.mxu0 %v1293
      %v1295 = vpop.f32.mrf.mxu0
      %v1296 = vadd.f32 0.0, %v1295
      %v1297 = vand.u32 %v1044, 4294901760
      %v1298 = vsub.f32 %v1044, %v1297
      %v1299 = vand.u32 %v1298, 4294901760
      %v1300 = vsub.f32 %v1298, %v1299
      %v1301 = vand.u32 %v1300, 4294901760
      %1302 = vmatmul.f32.gmra.mxu0 %v1301
      %v1303 = vpop.f32.mrf.mxu0
      %v1304 = vadd.f32 0.0, %v1303
      %v1305 = vand.u32 %v1047, 4294901760
      %v1306 = vsub.f32 %v1047, %v1305
      %v1307 = vand.u32 %v1306, 4294901760
      %v1308 = vsub.f32 %v1306, %v1307
      %v1309 = vand.u32 %v1308, 4294901760
      %1310 = vmatmul.f32.gmra.mxu0 %v1309
      %v1311 = vpop.f32.mrf.mxu0
      %v1312 = vadd.f32 0.0, %v1311
      %v1313 = vand.u32 %v1050, 4294901760
      %v1314 = vsub.f32 %v1050, %v1313
      %v1315 = vand.u32 %v1314, 4294901760
      %v1316 = vsub.f32 %v1314, %v1315
      %v1317 = vand.u32 %v1316, 4294901760
      %1318 = vmatmul.f32.gmra.mxu0 %v1317
      %v1319 = vpop.f32.mrf.mxu0
      %v1320 = vadd.f32 0.0, %v1319
      %v1321 = vand.u32 %v1053, 4294901760
      %v1322 = vsub.f32 %v1053, %v1321
      %v1323 = vand.u32 %v1322, 4294901760
      %v1324 = vsub.f32 %v1322, %v1323
      %v1325 = vand.u32 %v1324, 4294901760
      %1326 = vmatmul.f32.gmra.mxu0 %v1325
      %v1327 = vpop.f32.mrf.mxu0
      %v1328 = vadd.f32 0.0, %v1327
      %1329 = vdwg.mxu0
      %1330 = vmatpush.msra.mxu0 0.0
      %1331 = vmatpush.msra.mxu0 0.0
      %1332 = vmatpush.msra.mxu0 0.0
      %1333 = vmatpush.msra.mxu0 0.0
      %1334 = vmatpush.msra.mxu0 0.0
      %1335 = vmatpush.msra.mxu0 0.0
      %1336 = vmatpush.msra.mxu0 0.0
      %1337 = vmatpush.msra.mxu0 0.0
      %1338 = vmatpush.msra.mxu0 0.0
      %1339 = vmatpush.msra.mxu0 0.0
      %1340 = vmatpush.msra.mxu0 0.0
      %1341 = vmatpush.msra.mxu0 0.0
      %1342 = vmatpush.msra.mxu0 0.0
      %1343 = vmatpush.msra.mxu0 0.0
      %v1344 = vand.u32 %v506, 4294901760
      %v1345 = vsub.f32 %v506, %v1344
      %v1346 = vand.u32 %v1345, 4294901760
      %v1347 = vsub.f32 %v1345, %v1346
      %v1348 = vand.u32 %v1347, 4294901760
      %1349 = vmatpush.msra.mxu0 %v1348
      %v1350 = vand.u32 %v505, 4294901760
      %v1351 = vsub.f32 %v505, %v1350
      %v1352 = vand.u32 %v1351, 4294901760
      %v1353 = vsub.f32 %v1351, %v1352
      %v1354 = vand.u32 %v1353, 4294901760
      %1355 = vmatpush.msra.mxu0 %v1354
      %v1356 = vand.u32 %v960, 4294901760
      %1357 = vmatmul.f32.gmra.mxu0 %v1356
      %v1358 = vpop.f32.mrf.mxu0
      %v1359 = vadd.f32 %v1080, %v1358
      %v1360 = vand.u32 %v963, 4294901760
      %1361 = vmatmul.f32.gmra.mxu0 %v1360
      %v1362 = vpop.f32.mrf.mxu0
      %v1363 = vadd.f32 %v1088, %v1362
      %v1364 = vand.u32 %v966, 4294901760
      %1365 = vmatmul.f32.gmra.mxu0 %v1364
      %v1366 = vpop.f32.mrf.mxu0
      %v1367 = vadd.f32 %v1096, %v1366
      %v1368 = vand.u32 %v969, 4294901760
      %1369 = vmatmul.f32.gmra.mxu0 %v1368
      %v1370 = vpop.f32.mrf.mxu0
      %v1371 = vadd.f32 %v1104, %v1370
      %v1372 = vand.u32 %v972, 4294901760
      %1373 = vmatmul.f32.gmra.mxu0 %v1372
      %v1374 = vpop.f32.mrf.mxu0
      %v1375 = vadd.f32 %v1112, %v1374
      %v1376 = vand.u32 %v975, 4294901760
      %1377 = vmatmul.f32.gmra.mxu0 %v1376
      %v1378 = vpop.f32.mrf.mxu0
      %v1379 = vadd.f32 %v1120, %v1378
      %v1380 = vand.u32 %v978, 4294901760
      %1381 = vmatmul.f32.gmra.mxu0 %v1380
      %v1382 = vpop.f32.mrf.mxu0
      %v1383 = vadd.f32 %v1128, %v1382
      %v1384 = vand.u32 %v981, 4294901760
      %1385 = vmatmul.f32.gmra.mxu0 %v1384
      %v1386 = vpop.f32.mrf.mxu0
      %v1387 = vadd.f32 %v1136, %v1386
      %v1388 = vand.u32 %v984, 4294901760
      %1389 = vmatmul.f32.gmra.mxu0 %v1388
      %v1390 = vpop.f32.mrf.mxu0
      %v1391 = vadd.f32 %v1144, %v1390
      %v1392 = vand.u32 %v987, 4294901760
      %1393 = vmatmul.f32.gmra.mxu0 %v1392
      %v1394 = vpop.f32.mrf.mxu0
      %v1395 = vadd.f32 %v1152, %v1394
      %v1396 = vand.u32 %v990, 4294901760
      %1397 = vmatmul.f32.gmra.mxu0 %v1396
      %v1398 = vpop.f32.mrf.mxu0
      %v1399 = vadd.f32 %v1160, %v1398
      %v1400 = vand.u32 %v993, 4294901760
      %1401 = vmatmul.f32.gmra.mxu0 %v1400
      %v1402 = vpop.f32.mrf.mxu0
      %v1403 = vadd.f32 %v1168, %v1402
      %v1404 = vand.u32 %v996, 4294901760
      %1405 = vmatmul.f32.gmra.mxu0 %v1404
      %v1406 = vpop.f32.mrf.mxu0
      %v1407 = vadd.f32 %v1176, %v1406
      %v1408 = vand.u32 %v999, 4294901760
      %1409 = vmatmul.f32.gmra.mxu0 %v1408
      %v1410 = vpop.f32.mrf.mxu0
      %v1411 = vadd.f32 %v1184, %v1410
      %v1412 = vand.u32 %v1002, 4294901760
      %1413 = vmatmul.f32.gmra.mxu0 %v1412
      %v1414 = vpop.f32.mrf.mxu0
      %v1415 = vadd.f32 %v1192, %v1414
      %v1416 = vand.u32 %v1005, 4294901760
      %1417 = vmatmul.f32.gmra.mxu0 %v1416
      %v1418 = vpop.f32.mrf.mxu0
      %v1419 = vadd.f32 %v1200, %v1418
      %v1420 = vand.u32 %v1008, 4294901760
      %1421 = vmatmul.f32.gmra.mxu0 %v1420
      %v1422 = vpop.f32.mrf.mxu0
      %v1423 = vadd.f32 %v1208, %v1422
      %v1424 = vand.u32 %v1011, 4294901760
      %1425 = vmatmul.f32.gmra.mxu0 %v1424
      %v1426 = vpop.f32.mrf.mxu0
      %v1427 = vadd.f32 %v1216, %v1426
      %v1428 = vand.u32 %v1014, 4294901760
      %1429 = vmatmul.f32.gmra.mxu0 %v1428
      %v1430 = vpop.f32.mrf.mxu0
      %v1431 = vadd.f32 %v1224, %v1430
      %v1432 = vand.u32 %v1017, 4294901760
      %1433 = vmatmul.f32.gmra.mxu0 %v1432
      %v1434 = vpop.f32.mrf.mxu0
      %v1435 = vadd.f32 %v1232, %v1434
      %v1436 = vand.u32 %v1020, 4294901760
      %1437 = vmatmul.f32.gmra.mxu0 %v1436
      %v1438 = vpop.f32.mrf.mxu0
      %v1439 = vadd.f32 %v1240, %v1438
      %v1440 = vand.u32 %v1023, 4294901760
      %1441 = vmatmul.f32.gmra.mxu0 %v1440
      %v1442 = vpop.f32.mrf.mxu0
      %v1443 = vadd.f32 %v1248, %v1442
      %v1444 = vand.u32 %v1026, 4294901760
      %1445 = vmatmul.f32.gmra.mxu0 %v1444
      %v1446 = vpop.f32.mrf.mxu0
      %v1447 = vadd.f32 %v1256, %v1446
      %v1448 = vand.u32 %v1029, 4294901760
      %1449 = vmatmul.f32.gmra.mxu0 %v1448
      %v1450 = vpop.f32.mrf.mxu0
      %v1451 = vadd.f32 %v1264, %v1450
      %v1452 = vand.u32 %v1032, 4294901760
      %1453 = vmatmul.f32.gmra.mxu0 %v1452
      %v1454 = vpop.f32.mrf.mxu0
      %v1455 = vadd.f32 %v1272, %v1454
      %v1456 = vand.u32 %v1035, 4294901760
      %1457 = vmatmul.f32.gmra.mxu0 %v1456
      %v1458 = vpop.f32.mrf.mxu0
      %v1459 = vadd.f32 %v1280, %v1458
      %v1460 = vand.u32 %v1038, 4294901760
      %1461 = vmatmul.f32.gmra.mxu0 %v1460
      %v1462 = vpop.f32.mrf.mxu0
      %v1463 = vadd.f32 %v1288, %v1462
      %v1464 = vand.u32 %v1041, 4294901760
      %1465 = vmatmul.f32.gmra.mxu0 %v1464
      %v1466 = vpop.f32.mrf.mxu0
      %v1467 = vadd.f32 %v1296, %v1466
      %v1468 = vand.u32 %v1044, 4294901760
      %1469 = vmatmul.f32.gmra.mxu0 %v1468
      %v1470 = vpop.f32.mrf.mxu0
      %v1471 = vadd.f32 %v1304, %v1470
      %v1472 = vand.u32 %v1047, 4294901760
      %1473 = vmatmul.f32.gmra.mxu0 %v1472
      %v1474 = vpop.f32.mrf.mxu0
      %v1475 = vadd.f32 %v1312, %v1474
      %v1476 = vand.u32 %v1050, 4294901760
      %1477 = vmatmul.f32.gmra.mxu0 %v1476
      %v1478 = vpop.f32.mrf.mxu0
      %v1479 = vadd.f32 %v1320, %v1478
      %v1480 = vand.u32 %v1053, 4294901760
      %1481 = vmatmul.f32.gmra.mxu0 %v1480
      %v1482 = vpop.f32.mrf.mxu0
      %v1483 = vadd.f32 %v1328, %v1482
      %1484 = vdwg.mxu0
      %1485 = vmatpush.msra.mxu0 0.0
      %1486 = vmatpush.msra.mxu0 0.0
      %1487 = vmatpush.msra.mxu0 0.0
      %1488 = vmatpush.msra.mxu0 0.0
      %1489 = vmatpush.msra.mxu0 0.0
      %1490 = vmatpush.msra.mxu0 0.0
      %1491 = vmatpush.msra.mxu0 0.0
      %1492 = vmatpush.msra.mxu0 0.0
      %1493 = vmatpush.msra.mxu0 0.0
      %1494 = vmatpush.msra.mxu0 0.0
      %1495 = vmatpush.msra.mxu0 0.0
      %1496 = vmatpush.msra.mxu0 0.0
      %1497 = vmatpush.msra.mxu0 0.0
      %1498 = vmatpush.msra.mxu0 0.0
      %v1499 = vand.u32 %v506, 4294901760
      %v1500 = vsub.f32 %v506, %v1499
      %1501 = vmatpush.msra.mxu0 %v1500
      %v1502 = vand.u32 %v505, 4294901760
      %v1503 = vsub.f32 %v505, %v1502
      %1504 = vmatpush.msra.mxu0 %v1503
      %v1505 = vand.u32 %v960, 4294901760
      %v1506 = vsub.f32 %v960, %v1505
      %1507 = vmatmul.f32.gmra.mxu0 %v1506
      %v1508 = vpop.f32.mrf.mxu0
      %v1509 = vadd.f32 %v1359, %v1508
      %v1510 = vand.u32 %v963, 4294901760
      %v1511 = vsub.f32 %v963, %v1510
      %1512 = vmatmul.f32.gmra.mxu0 %v1511
      %v1513 = vpop.f32.mrf.mxu0
      %v1514 = vadd.f32 %v1363, %v1513
      %v1515 = vand.u32 %v966, 4294901760
      %v1516 = vsub.f32 %v966, %v1515
      %1517 = vmatmul.f32.gmra.mxu0 %v1516
      %v1518 = vpop.f32.mrf.mxu0
      %v1519 = vadd.f32 %v1367, %v1518
      %v1520 = vand.u32 %v969, 4294901760
      %v1521 = vsub.f32 %v969, %v1520
      %1522 = vmatmul.f32.gmra.mxu0 %v1521
      %v1523 = vpop.f32.mrf.mxu0
      %v1524 = vadd.f32 %v1371, %v1523
      %v1525 = vand.u32 %v972, 4294901760
      %v1526 = vsub.f32 %v972, %v1525
      %1527 = vmatmul.f32.gmra.mxu0 %v1526
      %v1528 = vpop.f32.mrf.mxu0
      %v1529 = vadd.f32 %v1375, %v1528
      %v1530 = vand.u32 %v975, 4294901760
      %v1531 = vsub.f32 %v975, %v1530
      %1532 = vmatmul.f32.gmra.mxu0 %v1531
      %v1533 = vpop.f32.mrf.mxu0
      %v1534 = vadd.f32 %v1379, %v1533
      %v1535 = vand.u32 %v978, 4294901760
      %v1536 = vsub.f32 %v978, %v1535
      %1537 = vmatmul.f32.gmra.mxu0 %v1536
      %v1538 = vpop.f32.mrf.mxu0
      %v1539 = vadd.f32 %v1383, %v1538
      %v1540 = vand.u32 %v981, 4294901760
      %v1541 = vsub.f32 %v981, %v1540
      %1542 = vmatmul.f32.gmra.mxu0 %v1541
      %v1543 = vpop.f32.mrf.mxu0
      %v1544 = vadd.f32 %v1387, %v1543
      %v1545 = vand.u32 %v984, 4294901760
      %v1546 = vsub.f32 %v984, %v1545
      %1547 = vmatmul.f32.gmra.mxu0 %v1546
      %v1548 = vpop.f32.mrf.mxu0
      %v1549 = vadd.f32 %v1391, %v1548
      %v1550 = vand.u32 %v987, 4294901760
      %v1551 = vsub.f32 %v987, %v1550
      %1552 = vmatmul.f32.gmra.mxu0 %v1551
      %v1553 = vpop.f32.mrf.mxu0
      %v1554 = vadd.f32 %v1395, %v1553
      %v1555 = vand.u32 %v990, 4294901760
      %v1556 = vsub.f32 %v990, %v1555
      %1557 = vmatmul.f32.gmra.mxu0 %v1556
      %v1558 = vpop.f32.mrf.mxu0
      %v1559 = vadd.f32 %v1399, %v1558
      %v1560 = vand.u32 %v993, 4294901760
      %v1561 = vsub.f32 %v993, %v1560
      %1562 = vmatmul.f32.gmra.mxu0 %v1561
      %v1563 = vpop.f32.mrf.mxu0
      %v1564 = vadd.f32 %v1403, %v1563
      %v1565 = vand.u32 %v996, 4294901760
      %v1566 = vsub.f32 %v996, %v1565
      %1567 = vmatmul.f32.gmra.mxu0 %v1566
      %v1568 = vpop.f32.mrf.mxu0
      %v1569 = vadd.f32 %v1407, %v1568
      %v1570 = vand.u32 %v999, 4294901760
      %v1571 = vsub.f32 %v999, %v1570
      %1572 = vmatmul.f32.gmra.mxu0 %v1571
      %v1573 = vpop.f32.mrf.mxu0
      %v1574 = vadd.f32 %v1411, %v1573
      %v1575 = vand.u32 %v1002, 4294901760
      %v1576 = vsub.f32 %v1002, %v1575
      %1577 = vmatmul.f32.gmra.mxu0 %v1576
      %v1578 = vpop.f32.mrf.mxu0
      %v1579 = vadd.f32 %v1415, %v1578
      %v1580 = vand.u32 %v1005, 4294901760
      %v1581 = vsub.f32 %v1005, %v1580
      %1582 = vmatmul.f32.gmra.mxu0 %v1581
      %v1583 = vpop.f32.mrf.mxu0
      %v1584 = vadd.f32 %v1419, %v1583
      %v1585 = vand.u32 %v1008, 4294901760
      %v1586 = vsub.f32 %v1008, %v1585
      %1587 = vmatmul.f32.gmra.mxu0 %v1586
      %v1588 = vpop.f32.mrf.mxu0
      %v1589 = vadd.f32 %v1423, %v1588
      %v1590 = vand.u32 %v1011, 4294901760
      %v1591 = vsub.f32 %v1011, %v1590
      %1592 = vmatmul.f32.gmra.mxu0 %v1591
      %v1593 = vpop.f32.mrf.mxu0
      %v1594 = vadd.f32 %v1427, %v1593
      %v1595 = vand.u32 %v1014, 4294901760
      %v1596 = vsub.f32 %v1014, %v1595
      %1597 = vmatmul.f32.gmra.mxu0 %v1596
      %v1598 = vpop.f32.mrf.mxu0
      %v1599 = vadd.f32 %v1431, %v1598
      %v1600 = vand.u32 %v1017, 4294901760
      %v1601 = vsub.f32 %v1017, %v1600
      %1602 = vmatmul.f32.gmra.mxu0 %v1601
      %v1603 = vpop.f32.mrf.mxu0
      %v1604 = vadd.f32 %v1435, %v1603
      %v1605 = vand.u32 %v1020, 4294901760
      %v1606 = vsub.f32 %v1020, %v1605
      %1607 = vmatmul.f32.gmra.mxu0 %v1606
      %v1608 = vpop.f32.mrf.mxu0
      %v1609 = vadd.f32 %v1439, %v1608
      %v1610 = vand.u32 %v1023, 4294901760
      %v1611 = vsub.f32 %v1023, %v1610
      %1612 = vmatmul.f32.gmra.mxu0 %v1611
      %v1613 = vpop.f32.mrf.mxu0
      %v1614 = vadd.f32 %v1443, %v1613
      %v1615 = vand.u32 %v1026, 4294901760
      %v1616 = vsub.f32 %v1026, %v1615
      %1617 = vmatmul.f32.gmra.mxu0 %v1616
      %v1618 = vpop.f32.mrf.mxu0
      %v1619 = vadd.f32 %v1447, %v1618
      %v1620 = vand.u32 %v1029, 4294901760
      %v1621 = vsub.f32 %v1029, %v1620
      %1622 = vmatmul.f32.gmra.mxu0 %v1621
      %v1623 = vpop.f32.mrf.mxu0
      %v1624 = vadd.f32 %v1451, %v1623
      %v1625 = vand.u32 %v1032, 4294901760
      %v1626 = vsub.f32 %v1032, %v1625
      %1627 = vmatmul.f32.gmra.mxu0 %v1626
      %v1628 = vpop.f32.mrf.mxu0
      %v1629 = vadd.f32 %v1455, %v1628
      %v1630 = vand.u32 %v1035, 4294901760
      %v1631 = vsub.f32 %v1035, %v1630
      %1632 = vmatmul.f32.gmra.mxu0 %v1631
      %v1633 = vpop.f32.mrf.mxu0
      %v1634 = vadd.f32 %v1459, %v1633
      %v1635 = vand.u32 %v1038, 4294901760
      %v1636 = vsub.f32 %v1038, %v1635
      %1637 = vmatmul.f32.gmra.mxu0 %v1636
      %v1638 = vpop.f32.mrf.mxu0
      %v1639 = vadd.f32 %v1463, %v1638
      %v1640 = vand.u32 %v1041, 4294901760
      %v1641 = vsub.f32 %v1041, %v1640
      %1642 = vmatmul.f32.gmra.mxu0 %v1641
      %v1643 = vpop.f32.mrf.mxu0
      %v1644 = vadd.f32 %v1467, %v1643
      %v1645 = vand.u32 %v1044, 4294901760
      %v1646 = vsub.f32 %v1044, %v1645
      %1647 = vmatmul.f32.gmra.mxu0 %v1646
      %v1648 = vpop.f32.mrf.mxu0
      %v1649 = vadd.f32 %v1471, %v1648
      %v1650 = vand.u32 %v1047, 4294901760
      %v1651 = vsub.f32 %v1047, %v1650
      %1652 = vmatmul.f32.gmra.mxu0 %v1651
      %v1653 = vpop.f32.mrf.mxu0
      %v1654 = vadd.f32 %v1475, %v1653
      %v1655 = vand.u32 %v1050, 4294901760
      %v1656 = vsub.f32 %v1050, %v1655
      %1657 = vmatmul.f32.gmra.mxu0 %v1656
      %v1658 = vpop.f32.mrf.mxu0
      %v1659 = vadd.f32 %v1479, %v1658
      %v1660 = vand.u32 %v1053, 4294901760
      %v1661 = vsub.f32 %v1053, %v1660
      %1662 = vmatmul.f32.gmra.mxu0 %v1661
      %v1663 = vpop.f32.mrf.mxu0
      %v1664 = vadd.f32 %v1483, %v1663
      %1665 = vdwg.mxu0
      %1666 = vmatpush.msra.mxu0 0.0
      %1667 = vmatpush.msra.mxu0 0.0
      %1668 = vmatpush.msra.mxu0 0.0
      %1669 = vmatpush.msra.mxu0 0.0
      %1670 = vmatpush.msra.mxu0 0.0
      %1671 = vmatpush.msra.mxu0 0.0
      %1672 = vmatpush.msra.mxu0 0.0
      %1673 = vmatpush.msra.mxu0 0.0
      %1674 = vmatpush.msra.mxu0 0.0
      %1675 = vmatpush.msra.mxu0 0.0
      %1676 = vmatpush.msra.mxu0 0.0
      %1677 = vmatpush.msra.mxu0 0.0
      %1678 = vmatpush.msra.mxu0 0.0
      %1679 = vmatpush.msra.mxu0 0.0
      %v1680 = vand.u32 %v506, 4294901760
      %1681 = vmatpush.msra.mxu0 %v1680
      %v1682 = vand.u32 %v505, 4294901760
      %1683 = vmatpush.msra.mxu0 %v1682
      %v1684 = vand.u32 %v960, 4294901760
      %v1685 = vsub.f32 %v960, %v1684
      %v1686 = vand.u32 %v1685, 4294901760
      %1687 = vmatmul.f32.gmra.mxu0 %v1686
      %v1688 = vpop.f32.mrf.mxu0
      %v1689 = vadd.f32 %v1509, %v1688
      %v1690 = vand.u32 %v963, 4294901760
      %v1691 = vsub.f32 %v963, %v1690
      %v1692 = vand.u32 %v1691, 4294901760
      %1693 = vmatmul.f32.gmra.mxu0 %v1692
      %v1694 = vpop.f32.mrf.mxu0
      %v1695 = vadd.f32 %v1514, %v1694
      %v1696 = vand.u32 %v966, 4294901760
      %v1697 = vsub.f32 %v966, %v1696
      %v1698 = vand.u32 %v1697, 4294901760
      %1699 = vmatmul.f32.gmra.mxu0 %v1698
      %v1700 = vpop.f32.mrf.mxu0
      %v1701 = vadd.f32 %v1519, %v1700
      %v1702 = vand.u32 %v969, 4294901760
      %v1703 = vsub.f32 %v969, %v1702
      %v1704 = vand.u32 %v1703, 4294901760
      %1705 = vmatmul.f32.gmra.mxu0 %v1704
      %v1706 = vpop.f32.mrf.mxu0
      %v1707 = vadd.f32 %v1524, %v1706
      %v1708 = vand.u32 %v972, 4294901760
      %v1709 = vsub.f32 %v972, %v1708
      %v1710 = vand.u32 %v1709, 4294901760
      %1711 = vmatmul.f32.gmra.mxu0 %v1710
      %v1712 = vpop.f32.mrf.mxu0
      %v1713 = vadd.f32 %v1529, %v1712
      %v1714 = vand.u32 %v975, 4294901760
      %v1715 = vsub.f32 %v975, %v1714
      %v1716 = vand.u32 %v1715, 4294901760
      %1717 = vmatmul.f32.gmra.mxu0 %v1716
      %v1718 = vpop.f32.mrf.mxu0
      %v1719 = vadd.f32 %v1534, %v1718
      %v1720 = vand.u32 %v978, 4294901760
      %v1721 = vsub.f32 %v978, %v1720
      %v1722 = vand.u32 %v1721, 4294901760
      %1723 = vmatmul.f32.gmra.mxu0 %v1722
      %v1724 = vpop.f32.mrf.mxu0
      %v1725 = vadd.f32 %v1539, %v1724
      %v1726 = vand.u32 %v981, 4294901760
      %v1727 = vsub.f32 %v981, %v1726
      %v1728 = vand.u32 %v1727, 4294901760
      %1729 = vmatmul.f32.gmra.mxu0 %v1728
      %v1730 = vpop.f32.mrf.mxu0
      %v1731 = vadd.f32 %v1544, %v1730
      %v1732 = vand.u32 %v984, 4294901760
      %v1733 = vsub.f32 %v984, %v1732
      %v1734 = vand.u32 %v1733, 4294901760
      %1735 = vmatmul.f32.gmra.mxu0 %v1734
      %v1736 = vpop.f32.mrf.mxu0
      %v1737 = vadd.f32 %v1549, %v1736
      %v1738 = vand.u32 %v987, 4294901760
      %v1739 = vsub.f32 %v987, %v1738
      %v1740 = vand.u32 %v1739, 4294901760
      %1741 = vmatmul.f32.gmra.mxu0 %v1740
      %v1742 = vpop.f32.mrf.mxu0
      %v1743 = vadd.f32 %v1554, %v1742
      %v1744 = vand.u32 %v990, 4294901760
      %v1745 = vsub.f32 %v990, %v1744
      %v1746 = vand.u32 %v1745, 4294901760
      %1747 = vmatmul.f32.gmra.mxu0 %v1746
      %v1748 = vpop.f32.mrf.mxu0
      %v1749 = vadd.f32 %v1559, %v1748
      %v1750 = vand.u32 %v993, 4294901760
      %v1751 = vsub.f32 %v993, %v1750
      %v1752 = vand.u32 %v1751, 4294901760
      %1753 = vmatmul.f32.gmra.mxu0 %v1752
      %v1754 = vpop.f32.mrf.mxu0
      %v1755 = vadd.f32 %v1564, %v1754
      %v1756 = vand.u32 %v996, 4294901760
      %v1757 = vsub.f32 %v996, %v1756
      %v1758 = vand.u32 %v1757, 4294901760
      %1759 = vmatmul.f32.gmra.mxu0 %v1758
      %v1760 = vpop.f32.mrf.mxu0
      %v1761 = vadd.f32 %v1569, %v1760
      %v1762 = vand.u32 %v999, 4294901760
      %v1763 = vsub.f32 %v999, %v1762
      %v1764 = vand.u32 %v1763, 4294901760
      %1765 = vmatmul.f32.gmra.mxu0 %v1764
      %v1766 = vpop.f32.mrf.mxu0
      %v1767 = vadd.f32 %v1574, %v1766
      %v1768 = vand.u32 %v1002, 4294901760
      %v1769 = vsub.f32 %v1002, %v1768
      %v1770 = vand.u32 %v1769, 4294901760
      %1771 = vmatmul.f32.gmra.mxu0 %v1770
      %v1772 = vpop.f32.mrf.mxu0
      %v1773 = vadd.f32 %v1579, %v1772
      %v1774 = vand.u32 %v1005, 4294901760
      %v1775 = vsub.f32 %v1005, %v1774
      %v1776 = vand.u32 %v1775, 4294901760
      %1777 = vmatmul.f32.gmra.mxu0 %v1776
      %v1778 = vpop.f32.mrf.mxu0
      %v1779 = vadd.f32 %v1584, %v1778
      %v1780 = vand.u32 %v1008, 4294901760
      %v1781 = vsub.f32 %v1008, %v1780
      %v1782 = vand.u32 %v1781, 4294901760
      %1783 = vmatmul.f32.gmra.mxu0 %v1782
      %v1784 = vpop.f32.mrf.mxu0
      %v1785 = vadd.f32 %v1589, %v1784
      %v1786 = vand.u32 %v1011, 4294901760
      %v1787 = vsub.f32 %v1011, %v1786
      %v1788 = vand.u32 %v1787, 4294901760
      %1789 = vmatmul.f32.gmra.mxu0 %v1788
      %v1790 = vpop.f32.mrf.mxu0
      %v1791 = vadd.f32 %v1594, %v1790
      %v1792 = vand.u32 %v1014, 4294901760
      %v1793 = vsub.f32 %v1014, %v1792
      %v1794 = vand.u32 %v1793, 4294901760
      %1795 = vmatmul.f32.gmra.mxu0 %v1794
      %v1796 = vpop.f32.mrf.mxu0
      %v1797 = vadd.f32 %v1599, %v1796
      %v1798 = vand.u32 %v1017, 4294901760
      %v1799 = vsub.f32 %v1017, %v1798
      %v1800 = vand.u32 %v1799, 4294901760
      %1801 = vmatmul.f32.gmra.mxu0 %v1800
      %v1802 = vpop.f32.mrf.mxu0
      %v1803 = vadd.f32 %v1604, %v1802
      %v1804 = vand.u32 %v1020, 4294901760
      %v1805 = vsub.f32 %v1020, %v1804
      %v1806 = vand.u32 %v1805, 4294901760
      %1807 = vmatmul.f32.gmra.mxu0 %v1806
      %v1808 = vpop.f32.mrf.mxu0
      %v1809 = vadd.f32 %v1609, %v1808
      %v1810 = vand.u32 %v1023, 4294901760
      %v1811 = vsub.f32 %v1023, %v1810
      %v1812 = vand.u32 %v1811, 4294901760
      %1813 = vmatmul.f32.gmra.mxu0 %v1812
      %v1814 = vpop.f32.mrf.mxu0
      %v1815 = vadd.f32 %v1614, %v1814
      %v1816 = vand.u32 %v1026, 4294901760
      %v1817 = vsub.f32 %v1026, %v1816
      %v1818 = vand.u32 %v1817, 4294901760
      %1819 = vmatmul.f32.gmra.mxu0 %v1818
      %v1820 = vpop.f32.mrf.mxu0
      %v1821 = vadd.f32 %v1619, %v1820
      %v1822 = vand.u32 %v1029, 4294901760
      %v1823 = vsub.f32 %v1029, %v1822
      %v1824 = vand.u32 %v1823, 4294901760
      %1825 = vmatmul.f32.gmra.mxu0 %v1824
      %v1826 = vpop.f32.mrf.mxu0
      %v1827 = vadd.f32 %v1624, %v1826
      %v1828 = vand.u32 %v1032, 4294901760
      %v1829 = vsub.f32 %v1032, %v1828
      %v1830 = vand.u32 %v1829, 4294901760
      %1831 = vmatmul.f32.gmra.mxu0 %v1830
      %v1832 = vpop.f32.mrf.mxu0
      %v1833 = vadd.f32 %v1629, %v1832
      %v1834 = vand.u32 %v1035, 4294901760
      %v1835 = vsub.f32 %v1035, %v1834
      %v1836 = vand.u32 %v1835, 4294901760
      %1837 = vmatmul.f32.gmra.mxu0 %v1836
      %v1838 = vpop.f32.mrf.mxu0
      %v1839 = vadd.f32 %v1634, %v1838
      %v1840 = vand.u32 %v1038, 4294901760
      %v1841 = vsub.f32 %v1038, %v1840
      %v1842 = vand.u32 %v1841, 4294901760
      %1843 = vmatmul.f32.gmra.mxu0 %v1842
      %v1844 = vpop.f32.mrf.mxu0
      %v1845 = vadd.f32 %v1639, %v1844
      %v1846 = vand.u32 %v1041, 4294901760
      %v1847 = vsub.f32 %v1041, %v1846
      %v1848 = vand.u32 %v1847, 4294901760
      %1849 = vmatmul.f32.gmra.mxu0 %v1848
      %v1850 = vpop.f32.mrf.mxu0
      %v1851 = vadd.f32 %v1644, %v1850
      %v1852 = vand.u32 %v1044, 4294901760
      %v1853 = vsub.f32 %v1044, %v1852
      %v1854 = vand.u32 %v1853, 4294901760
      %1855 = vmatmul.f32.gmra.mxu0 %v1854
      %v1856 = vpop.f32.mrf.mxu0
      %v1857 = vadd.f32 %v1649, %v1856
      %v1858 = vand.u32 %v1047, 4294901760
      %v1859 = vsub.f32 %v1047, %v1858
      %v1860 = vand.u32 %v1859, 4294901760
      %1861 = vmatmul.f32.gmra.mxu0 %v1860
      %v1862 = vpop.f32.mrf.mxu0
      %v1863 = vadd.f32 %v1654, %v1862
      %v1864 = vand.u32 %v1050, 4294901760
      %v1865 = vsub.f32 %v1050, %v1864
      %v1866 = vand.u32 %v1865, 4294901760
      %1867 = vmatmul.f32.gmra.mxu0 %v1866
      %v1868 = vpop.f32.mrf.mxu0
      %v1869 = vadd.f32 %v1659, %v1868
      %v1870 = vand.u32 %v1053, 4294901760
      %v1871 = vsub.f32 %v1053, %v1870
      %v1872 = vand.u32 %v1871, 4294901760
      %1873 = vmatmul.f32.gmra.mxu0 %v1872
      %v1874 = vpop.f32.mrf.mxu0
      %v1875 = vadd.f32 %v1664, %v1874
      %1876 = vdwg.mxu0
      %1877 = vmatpush.msra.mxu0 0.0
      %1878 = vmatpush.msra.mxu0 0.0
      %1879 = vmatpush.msra.mxu0 0.0
      %1880 = vmatpush.msra.mxu0 0.0
      %1881 = vmatpush.msra.mxu0 0.0
      %1882 = vmatpush.msra.mxu0 0.0
      %1883 = vmatpush.msra.mxu0 0.0
      %1884 = vmatpush.msra.mxu0 0.0
      %1885 = vmatpush.msra.mxu0 0.0
      %1886 = vmatpush.msra.mxu0 0.0
      %1887 = vmatpush.msra.mxu0 0.0
      %1888 = vmatpush.msra.mxu0 0.0
      %1889 = vmatpush.msra.mxu0 0.0
      %1890 = vmatpush.msra.mxu0 0.0
      %v1891 = vand.u32 %v506, 4294901760
      %v1892 = vsub.f32 %v506, %v1891
      %v1893 = vand.u32 %v1892, 4294901760
      %1894 = vmatpush.msra.mxu0 %v1893
      %v1895 = vand.u32 %v505, 4294901760
      %v1896 = vsub.f32 %v505, %v1895
      %v1897 = vand.u32 %v1896, 4294901760
      %1898 = vmatpush.msra.mxu0 %v1897
      %v1899 = vand.u32 %v960, 4294901760
      %1900 = vmatmul.f32.gmra.mxu0 %v1899
      %v1901 = vpop.f32.mrf.mxu0
      %v1902 = vadd.f32 %v1689, %v1901
      %v1903 = vand.u32 %v963, 4294901760
      %1904 = vmatmul.f32.gmra.mxu0 %v1903
      %v1905 = vpop.f32.mrf.mxu0
      %v1906 = vadd.f32 %v1695, %v1905
      %v1907 = vand.u32 %v966, 4294901760
      %1908 = vmatmul.f32.gmra.mxu0 %v1907
      %v1909 = vpop.f32.mrf.mxu0
      %v1910 = vadd.f32 %v1701, %v1909
      %v1911 = vand.u32 %v969, 4294901760
      %1912 = vmatmul.f32.gmra.mxu0 %v1911
      %v1913 = vpop.f32.mrf.mxu0
      %v1914 = vadd.f32 %v1707, %v1913
      %v1915 = vand.u32 %v972, 4294901760
      %1916 = vmatmul.f32.gmra.mxu0 %v1915
      %v1917 = vpop.f32.mrf.mxu0
      %v1918 = vadd.f32 %v1713, %v1917
      %v1919 = vand.u32 %v975, 4294901760
      %1920 = vmatmul.f32.gmra.mxu0 %v1919
      %v1921 = vpop.f32.mrf.mxu0
      %v1922 = vadd.f32 %v1719, %v1921
      %v1923 = vand.u32 %v978, 4294901760
      %1924 = vmatmul.f32.gmra.mxu0 %v1923
      %v1925 = vpop.f32.mrf.mxu0
      %v1926 = vadd.f32 %v1725, %v1925
      %v1927 = vand.u32 %v981, 4294901760
      %1928 = vmatmul.f32.gmra.mxu0 %v1927
      %v1929 = vpop.f32.mrf.mxu0
      %v1930 = vadd.f32 %v1731, %v1929
      %v1931 = vand.u32 %v984, 4294901760
      %1932 = vmatmul.f32.gmra.mxu0 %v1931
      %v1933 = vpop.f32.mrf.mxu0
      %v1934 = vadd.f32 %v1737, %v1933
      %v1935 = vand.u32 %v987, 4294901760
      %1936 = vmatmul.f32.gmra.mxu0 %v1935
      %v1937 = vpop.f32.mrf.mxu0
      %v1938 = vadd.f32 %v1743, %v1937
      %v1939 = vand.u32 %v990, 4294901760
      %1940 = vmatmul.f32.gmra.mxu0 %v1939
      %v1941 = vpop.f32.mrf.mxu0
      %v1942 = vadd.f32 %v1749, %v1941
      %v1943 = vand.u32 %v993, 4294901760
      %1944 = vmatmul.f32.gmra.mxu0 %v1943
      %v1945 = vpop.f32.mrf.mxu0
      %v1946 = vadd.f32 %v1755, %v1945
      %v1947 = vand.u32 %v996, 4294901760
      %1948 = vmatmul.f32.gmra.mxu0 %v1947
      %v1949 = vpop.f32.mrf.mxu0
      %v1950 = vadd.f32 %v1761, %v1949
      %v1951 = vand.u32 %v999, 4294901760
      %1952 = vmatmul.f32.gmra.mxu0 %v1951
      %v1953 = vpop.f32.mrf.mxu0
      %v1954 = vadd.f32 %v1767, %v1953
      %v1955 = vand.u32 %v1002, 4294901760
      %1956 = vmatmul.f32.gmra.mxu0 %v1955
      %v1957 = vpop.f32.mrf.mxu0
      %v1958 = vadd.f32 %v1773, %v1957
      %v1959 = vand.u32 %v1005, 4294901760
      %1960 = vmatmul.f32.gmra.mxu0 %v1959
      %v1961 = vpop.f32.mrf.mxu0
      %v1962 = vadd.f32 %v1779, %v1961
      %v1963 = vand.u32 %v1008, 4294901760
      %1964 = vmatmul.f32.gmra.mxu0 %v1963
      %v1965 = vpop.f32.mrf.mxu0
      %v1966 = vadd.f32 %v1785, %v1965
      %v1967 = vand.u32 %v1011, 4294901760
      %1968 = vmatmul.f32.gmra.mxu0 %v1967
      %v1969 = vpop.f32.mrf.mxu0
      %v1970 = vadd.f32 %v1791, %v1969
      %v1971 = vand.u32 %v1014, 4294901760
      %1972 = vmatmul.f32.gmra.mxu0 %v1971
      %v1973 = vpop.f32.mrf.mxu0
      %v1974 = vadd.f32 %v1797, %v1973
      %v1975 = vand.u32 %v1017, 4294901760
      %1976 = vmatmul.f32.gmra.mxu0 %v1975
      %v1977 = vpop.f32.mrf.mxu0
      %v1978 = vadd.f32 %v1803, %v1977
      %v1979 = vand.u32 %v1020, 4294901760
      %1980 = vmatmul.f32.gmra.mxu0 %v1979
      %v1981 = vpop.f32.mrf.mxu0
      %v1982 = vadd.f32 %v1809, %v1981
      %v1983 = vand.u32 %v1023, 4294901760
      %1984 = vmatmul.f32.gmra.mxu0 %v1983
      %v1985 = vpop.f32.mrf.mxu0
      %v1986 = vadd.f32 %v1815, %v1985
      %v1987 = vand.u32 %v1026, 4294901760
      %1988 = vmatmul.f32.gmra.mxu0 %v1987
      %v1989 = vpop.f32.mrf.mxu0
      %v1990 = vadd.f32 %v1821, %v1989
      %v1991 = vand.u32 %v1029, 4294901760
      %1992 = vmatmul.f32.gmra.mxu0 %v1991
      %v1993 = vpop.f32.mrf.mxu0
      %v1994 = vadd.f32 %v1827, %v1993
      %v1995 = vand.u32 %v1032, 4294901760
      %1996 = vmatmul.f32.gmra.mxu0 %v1995
      %v1997 = vpop.f32.mrf.mxu0
      %v1998 = vadd.f32 %v1833, %v1997
      %v1999 = vand.u32 %v1035, 4294901760
      %2000 = vmatmul.f32.gmra.mxu0 %v1999
      %v2001 = vpop.f32.mrf.mxu0
      %v2002 = vadd.f32 %v1839, %v2001
      %v2003 = vand.u32 %v1038, 4294901760
      %2004 = vmatmul.f32.gmra.mxu0 %v2003
      %v2005 = vpop.f32.mrf.mxu0
      %v2006 = vadd.f32 %v1845, %v2005
      %v2007 = vand.u32 %v1041, 4294901760
      %2008 = vmatmul.f32.gmra.mxu0 %v2007
      %v2009 = vpop.f32.mrf.mxu0
      %v2010 = vadd.f32 %v1851, %v2009
      %v2011 = vand.u32 %v1044, 4294901760
      %2012 = vmatmul.f32.gmra.mxu0 %v2011
      %v2013 = vpop.f32.mrf.mxu0
      %v2014 = vadd.f32 %v1857, %v2013
      %v2015 = vand.u32 %v1047, 4294901760
      %2016 = vmatmul.f32.gmra.mxu0 %v2015
      %v2017 = vpop.f32.mrf.mxu0
      %v2018 = vadd.f32 %v1863, %v2017
      %v2019 = vand.u32 %v1050, 4294901760
      %2020 = vmatmul.f32.gmra.mxu0 %v2019
      %v2021 = vpop.f32.mrf.mxu0
      %v2022 = vadd.f32 %v1869, %v2021
      %v2023 = vand.u32 %v1053, 4294901760
      %2024 = vmatmul.f32.gmra.mxu0 %v2023
      %v2025 = vpop.f32.mrf.mxu0
      %v2026 = vadd.f32 %v1875, %v2025
      %2027 = vdwg.mxu0
      %2028 = vmatpush.msra.mxu0 0.0
      %2029 = vmatpush.msra.mxu0 0.0
      %2030 = vmatpush.msra.mxu0 0.0
      %2031 = vmatpush.msra.mxu0 0.0
      %2032 = vmatpush.msra.mxu0 0.0
      %2033 = vmatpush.msra.mxu0 0.0
      %2034 = vmatpush.msra.mxu0 0.0
      %2035 = vmatpush.msra.mxu0 0.0
      %2036 = vmatpush.msra.mxu0 0.0
      %2037 = vmatpush.msra.mxu0 0.0
      %2038 = vmatpush.msra.mxu0 0.0
      %2039 = vmatpush.msra.mxu0 0.0
      %2040 = vmatpush.msra.mxu0 0.0
      %2041 = vmatpush.msra.mxu0 0.0
      %v2042 = vand.u32 %v506, 4294901760
      %2043 = vmatpush.msra.mxu0 %v2042
      %v2044 = vand.u32 %v505, 4294901760
      %2045 = vmatpush.msra.mxu0 %v2044
      %v2046 = vand.u32 %v960, 4294901760
      %2047 = vmatmul.f32.gmra.mxu0 %v2046
      %v2048 = vpop.f32.mrf.mxu0
      %v2049 = vadd.f32 %v1902, %v2048
      %v2050 = vand.u32 %v963, 4294901760
      %2051 = vmatmul.f32.gmra.mxu0 %v2050
      %v2052 = vpop.f32.mrf.mxu0
      %v2053 = vadd.f32 %v1906, %v2052
      %v2054 = vand.u32 %v966, 4294901760
      %2055 = vmatmul.f32.gmra.mxu0 %v2054
      %v2056 = vpop.f32.mrf.mxu0
      %v2057 = vadd.f32 %v1910, %v2056
      %v2058 = vand.u32 %v969, 4294901760
      %2059 = vmatmul.f32.gmra.mxu0 %v2058
      %v2060 = vpop.f32.mrf.mxu0
      %v2061 = vadd.f32 %v1914, %v2060
      %v2062 = vand.u32 %v972, 4294901760
      %2063 = vmatmul.f32.gmra.mxu0 %v2062
      %v2064 = vpop.f32.mrf.mxu0
      %v2065 = vadd.f32 %v1918, %v2064
      %v2066 = vand.u32 %v975, 4294901760
      %2067 = vmatmul.f32.gmra.mxu0 %v2066
      %v2068 = vpop.f32.mrf.mxu0
      %v2069 = vadd.f32 %v1922, %v2068
      %v2070 = vand.u32 %v978, 4294901760
      %2071 = vmatmul.f32.gmra.mxu0 %v2070
      %v2072 = vpop.f32.mrf.mxu0
      %v2073 = vadd.f32 %v1926, %v2072
      %v2074 = vand.u32 %v981, 4294901760
      %2075 = vmatmul.f32.gmra.mxu0 %v2074
      %v2076 = vpop.f32.mrf.mxu0
      %v2077 = vadd.f32 %v1930, %v2076
      %v2078 = vand.u32 %v984, 4294901760
      %2079 = vmatmul.f32.gmra.mxu0 %v2078
      %v2080 = vpop.f32.mrf.mxu0
      %v2081 = vadd.f32 %v1934, %v2080
      %v2082 = vand.u32 %v987, 4294901760
      %2083 = vmatmul.f32.gmra.mxu0 %v2082
      %v2084 = vpop.f32.mrf.mxu0
      %v2085 = vadd.f32 %v1938, %v2084
      %v2086 = vand.u32 %v990, 4294901760
      %2087 = vmatmul.f32.gmra.mxu0 %v2086
      %v2088 = vpop.f32.mrf.mxu0
      %v2089 = vadd.f32 %v1942, %v2088
      %v2090 = vand.u32 %v993, 4294901760
      %2091 = vmatmul.f32.gmra.mxu0 %v2090
      %v2092 = vpop.f32.mrf.mxu0
      %v2093 = vadd.f32 %v1946, %v2092
      %v2094 = vand.u32 %v996, 4294901760
      %2095 = vmatmul.f32.gmra.mxu0 %v2094
      %v2096 = vpop.f32.mrf.mxu0
      %v2097 = vadd.f32 %v1950, %v2096
      %v2098 = vand.u32 %v999, 4294901760
      %2099 = vmatmul.f32.gmra.mxu0 %v2098
      %v2100 = vpop.f32.mrf.mxu0
      %v2101 = vadd.f32 %v1954, %v2100
      %v2102 = vand.u32 %v1002, 4294901760
      %2103 = vmatmul.f32.gmra.mxu0 %v2102
      %v2104 = vpop.f32.mrf.mxu0
      %v2105 = vadd.f32 %v1958, %v2104
      %v2106 = vand.u32 %v1005, 4294901760
      %2107 = vmatmul.f32.gmra.mxu0 %v2106
      %v2108 = vpop.f32.mrf.mxu0
      %v2109 = vadd.f32 %v1962, %v2108
      %v2110 = vand.u32 %v1008, 4294901760
      %2111 = vmatmul.f32.gmra.mxu0 %v2110
      %v2112 = vpop.f32.mrf.mxu0
      %v2113 = vadd.f32 %v1966, %v2112
      %v2114 = vand.u32 %v1011, 4294901760
      %2115 = vmatmul.f32.gmra.mxu0 %v2114
      %v2116 = vpop.f32.mrf.mxu0
      %v2117 = vadd.f32 %v1970, %v2116
      %v2118 = vand.u32 %v1014, 4294901760
      %2119 = vmatmul.f32.gmra.mxu0 %v2118
      %v2120 = vpop.f32.mrf.mxu0
      %v2121 = vadd.f32 %v1974, %v2120
      %v2122 = vand.u32 %v1017, 4294901760
      %2123 = vmatmul.f32.gmra.mxu0 %v2122
      %v2124 = vpop.f32.mrf.mxu0
      %v2125 = vadd.f32 %v1978, %v2124
      %v2126 = vand.u32 %v1020, 4294901760
      %2127 = vmatmul.f32.gmra.mxu0 %v2126
      %v2128 = vpop.f32.mrf.mxu0
      %v2129 = vadd.f32 %v1982, %v2128
      %v2130 = vand.u32 %v1023, 4294901760
      %2131 = vmatmul.f32.gmra.mxu0 %v2130
      %v2132 = vpop.f32.mrf.mxu0
      %v2133 = vadd.f32 %v1986, %v2132
      %v2134 = vand.u32 %v1026, 4294901760
      %2135 = vmatmul.f32.gmra.mxu0 %v2134
      %v2136 = vpop.f32.mrf.mxu0
      %v2137 = vadd.f32 %v1990, %v2136
      %v2138 = vand.u32 %v1029, 4294901760
      %2139 = vmatmul.f32.gmra.mxu0 %v2138
      %v2140 = vpop.f32.mrf.mxu0
      %v2141 = vadd.f32 %v1994, %v2140
      %v2142 = vand.u32 %v1032, 4294901760
      %2143 = vmatmul.f32.gmra.mxu0 %v2142
      %v2144 = vpop.f32.mrf.mxu0
      %v2145 = vadd.f32 %v1998, %v2144
      %v2146 = vand.u32 %v1035, 4294901760
      %2147 = vmatmul.f32.gmra.mxu0 %v2146
      %v2148 = vpop.f32.mrf.mxu0
      %v2149 = vadd.f32 %v2002, %v2148
      %v2150 = vand.u32 %v1038, 4294901760
      %2151 = vmatmul.f32.gmra.mxu0 %v2150
      %v2152 = vpop.f32.mrf.mxu0
      %v2153 = vadd.f32 %v2006, %v2152
      %v2154 = vand.u32 %v1041, 4294901760
      %2155 = vmatmul.f32.gmra.mxu0 %v2154
      %v2156 = vpop.f32.mrf.mxu0
      %v2157 = vadd.f32 %v2010, %v2156
      %v2158 = vand.u32 %v1044, 4294901760
      %2159 = vmatmul.f32.gmra.mxu0 %v2158
      %v2160 = vpop.f32.mrf.mxu0
      %v2161 = vadd.f32 %v2014, %v2160
      %v2162 = vand.u32 %v1047, 4294901760
      %2163 = vmatmul.f32.gmra.mxu0 %v2162
      %v2164 = vpop.f32.mrf.mxu0
      %v2165 = vadd.f32 %v2018, %v2164
      %v2166 = vand.u32 %v1050, 4294901760
      %2167 = vmatmul.f32.gmra.mxu0 %v2166
      %v2168 = vpop.f32.mrf.mxu0
      %v2169 = vadd.f32 %v2022, %v2168
      %v2170 = vand.u32 %v1053, 4294901760
      %2171 = vmatmul.f32.gmra.mxu0 %v2170
      %v2172 = vpop.f32.mrf.mxu0
      %v2173 = vadd.f32 %v2026, %v2172
      %2174 = vdwg.mxu0
      %v2176 = vsel %vm958, %v926, 0
      %v2179 = vsel %vm958, %v927, 0
      %v2182 = vsel %vm958, %v928, 0
      %v2185 = vsel %vm958, %v929, 0
      %v2188 = vsel %vm958, %v930, 0
      %v2191 = vsel %vm958, %v931, 0
      %v2194 = vsel %vm958, %v932, 0
      %v2197 = vsel %vm958, %v933, 0
      %v2200 = vsel %vm958, %v934, 0
      %v2203 = vsel %vm958, %v935, 0
      %v2206 = vsel %vm958, %v936, 0
      %v2209 = vsel %vm958, %v937, 0
      %v2212 = vsel %vm958, %v938, 0
      %v2215 = vsel %vm958, %v939, 0
      %v2218 = vsel %vm958, %v940, 0
      %v2221 = vsel %vm958, %v941, 0
      %v2224 = vsel %vm958, %v942, 0
      %v2227 = vsel %vm958, %v943, 0
      %v2230 = vsel %vm958, %v944, 0
      %v2233 = vsel %vm958, %v945, 0
      %v2236 = vsel %vm958, %v946, 0
      %v2239 = vsel %vm958, %v947, 0
      %v2242 = vsel %vm958, %v948, 0
      %v2245 = vsel %vm958, %v949, 0
      %v2248 = vsel %vm958, %v950, 0
      %v2251 = vsel %vm958, %v951, 0
      %v2254 = vsel %vm958, %v952, 0
      %v2257 = vsel %vm958, %v953, 0
      %v2260 = vsel %vm958, %v954, 0
      %v2263 = vsel %vm958, %v955, 0
      %v2266 = vsel %vm958, %v956, 0
      %v2269 = vsel %vm958, %v957, 0
      %2271 = vmatpush.msra.mxu0 0.0
      %2272 = vmatpush.msra.mxu0 0.0
      %2273 = vmatpush.msra.mxu0 0.0
      %2274 = vmatpush.msra.mxu0 0.0
      %2275 = vmatpush.msra.mxu0 0.0
      %2276 = vmatpush.msra.mxu0 0.0
      %2277 = vmatpush.msra.mxu0 0.0
      %2278 = vmatpush.msra.mxu0 0.0
      %2279 = vmatpush.msra.mxu0 0.0
      %2280 = vmatpush.msra.mxu0 0.0
      %2281 = vmatpush.msra.mxu0 0.0
      %2282 = vmatpush.msra.mxu0 0.0
      %2283 = vmatpush.msra.mxu0 0.0
      %2284 = vmatpush.msra.mxu0 0.0
      %v2285 = vand.u32 %v506, 4294901760
      %2286 = vmatpush.msra.mxu0 %v2285
      %v2287 = vand.u32 %v505, 4294901760
      %2288 = vmatpush.msra.mxu0 %v2287
      %v2289 = vand.u32 %v2176, 4294901760
      %v2290 = vsub.f32 %v2176, %v2289
      %v2291 = vand.u32 %v2290, 4294901760
      %v2292 = vsub.f32 %v2290, %v2291
      %v2293 = vand.u32 %v2292, 4294901760
      %2294 = vmatmul.f32.gmra.mxu0 %v2293
      %v2295 = vpop.f32.mrf.mxu0
      %v2296 = vadd.f32 0.0, %v2295
      %v2297 = vand.u32 %v2179, 4294901760
      %v2298 = vsub.f32 %v2179, %v2297
      %v2299 = vand.u32 %v2298, 4294901760
      %v2300 = vsub.f32 %v2298, %v2299
      %v2301 = vand.u32 %v2300, 4294901760
      %2302 = vmatmul.f32.gmra.mxu0 %v2301
      %v2303 = vpop.f32.mrf.mxu0
      %v2304 = vadd.f32 0.0, %v2303
      %v2305 = vand.u32 %v2182, 4294901760
      %v2306 = vsub.f32 %v2182, %v2305
      %v2307 = vand.u32 %v2306, 4294901760
      %v2308 = vsub.f32 %v2306, %v2307
      %v2309 = vand.u32 %v2308, 4294901760
      %2310 = vmatmul.f32.gmra.mxu0 %v2309
      %v2311 = vpop.f32.mrf.mxu0
      %v2312 = vadd.f32 0.0, %v2311
      %v2313 = vand.u32 %v2185, 4294901760
      %v2314 = vsub.f32 %v2185, %v2313
      %v2315 = vand.u32 %v2314, 4294901760
      %v2316 = vsub.f32 %v2314, %v2315
      %v2317 = vand.u32 %v2316, 4294901760
      %2318 = vmatmul.f32.gmra.mxu0 %v2317
      %v2319 = vpop.f32.mrf.mxu0
      %v2320 = vadd.f32 0.0, %v2319
      %v2321 = vand.u32 %v2188, 4294901760
      %v2322 = vsub.f32 %v2188, %v2321
      %v2323 = vand.u32 %v2322, 4294901760
      %v2324 = vsub.f32 %v2322, %v2323
      %v2325 = vand.u32 %v2324, 4294901760
      %2326 = vmatmul.f32.gmra.mxu0 %v2325
      %v2327 = vpop.f32.mrf.mxu0
      %v2328 = vadd.f32 0.0, %v2327
      %v2329 = vand.u32 %v2191, 4294901760
      %v2330 = vsub.f32 %v2191, %v2329
      %v2331 = vand.u32 %v2330, 4294901760
      %v2332 = vsub.f32 %v2330, %v2331
      %v2333 = vand.u32 %v2332, 4294901760
      %2334 = vmatmul.f32.gmra.mxu0 %v2333
      %v2335 = vpop.f32.mrf.mxu0
      %v2336 = vadd.f32 0.0, %v2335
      %v2337 = vand.u32 %v2194, 4294901760
      %v2338 = vsub.f32 %v2194, %v2337
      %v2339 = vand.u32 %v2338, 4294901760
      %v2340 = vsub.f32 %v2338, %v2339
      %v2341 = vand.u32 %v2340, 4294901760
      %2342 = vmatmul.f32.gmra.mxu0 %v2341
      %v2343 = vpop.f32.mrf.mxu0
      %v2344 = vadd.f32 0.0, %v2343
      %v2345 = vand.u32 %v2197, 4294901760
      %v2346 = vsub.f32 %v2197, %v2345
      %v2347 = vand.u32 %v2346, 4294901760
      %v2348 = vsub.f32 %v2346, %v2347
      %v2349 = vand.u32 %v2348, 4294901760
      %2350 = vmatmul.f32.gmra.mxu0 %v2349
      %v2351 = vpop.f32.mrf.mxu0
      %v2352 = vadd.f32 0.0, %v2351
      %v2353 = vand.u32 %v2200, 4294901760
      %v2354 = vsub.f32 %v2200, %v2353
      %v2355 = vand.u32 %v2354, 4294901760
      %v2356 = vsub.f32 %v2354, %v2355
      %v2357 = vand.u32 %v2356, 4294901760
      %2358 = vmatmul.f32.gmra.mxu0 %v2357
      %v2359 = vpop.f32.mrf.mxu0
      %v2360 = vadd.f32 0.0, %v2359
      %v2361 = vand.u32 %v2203, 4294901760
      %v2362 = vsub.f32 %v2203, %v2361
      %v2363 = vand.u32 %v2362, 4294901760
      %v2364 = vsub.f32 %v2362, %v2363
      %v2365 = vand.u32 %v2364, 4294901760
      %2366 = vmatmul.f32.gmra.mxu0 %v2365
      %v2367 = vpop.f32.mrf.mxu0
      %v2368 = vadd.f32 0.0, %v2367
      %v2369 = vand.u32 %v2206, 4294901760
      %v2370 = vsub.f32 %v2206, %v2369
      %v2371 = vand.u32 %v2370, 4294901760
      %v2372 = vsub.f32 %v2370, %v2371
      %v2373 = vand.u32 %v2372, 4294901760
      %2374 = vmatmul.f32.gmra.mxu0 %v2373
      %v2375 = vpop.f32.mrf.mxu0
      %v2376 = vadd.f32 0.0, %v2375
      %v2377 = vand.u32 %v2209, 4294901760
      %v2378 = vsub.f32 %v2209, %v2377
      %v2379 = vand.u32 %v2378, 4294901760
      %v2380 = vsub.f32 %v2378, %v2379
      %v2381 = vand.u32 %v2380, 4294901760
      %2382 = vmatmul.f32.gmra.mxu0 %v2381
      %v2383 = vpop.f32.mrf.mxu0
      %v2384 = vadd.f32 0.0, %v2383
      %v2385 = vand.u32 %v2212, 4294901760
      %v2386 = vsub.f32 %v2212, %v2385
      %v2387 = vand.u32 %v2386, 4294901760
      %v2388 = vsub.f32 %v2386, %v2387
      %v2389 = vand.u32 %v2388, 4294901760
      %2390 = vmatmul.f32.gmra.mxu0 %v2389
      %v2391 = vpop.f32.mrf.mxu0
      %v2392 = vadd.f32 0.0, %v2391
      %v2393 = vand.u32 %v2215, 4294901760
      %v2394 = vsub.f32 %v2215, %v2393
      %v2395 = vand.u32 %v2394, 4294901760
      %v2396 = vsub.f32 %v2394, %v2395
      %v2397 = vand.u32 %v2396, 4294901760
      %2398 = vmatmul.f32.gmra.mxu0 %v2397
      %v2399 = vpop.f32.mrf.mxu0
      %v2400 = vadd.f32 0.0, %v2399
      %v2401 = vand.u32 %v2218, 4294901760
      %v2402 = vsub.f32 %v2218, %v2401
      %v2403 = vand.u32 %v2402, 4294901760
      %v2404 = vsub.f32 %v2402, %v2403
      %v2405 = vand.u32 %v2404, 4294901760
      %2406 = vmatmul.f32.gmra.mxu0 %v2405
      %v2407 = vpop.f32.mrf.mxu0
      %v2408 = vadd.f32 0.0, %v2407
      %v2409 = vand.u32 %v2221, 4294901760
      %v2410 = vsub.f32 %v2221, %v2409
      %v2411 = vand.u32 %v2410, 4294901760
      %v2412 = vsub.f32 %v2410, %v2411
      %v2413 = vand.u32 %v2412, 4294901760
      %2414 = vmatmul.f32.gmra.mxu0 %v2413
      %v2415 = vpop.f32.mrf.mxu0
      %v2416 = vadd.f32 0.0, %v2415
      %v2417 = vand.u32 %v2224, 4294901760
      %v2418 = vsub.f32 %v2224, %v2417
      %v2419 = vand.u32 %v2418, 4294901760
      %v2420 = vsub.f32 %v2418, %v2419
      %v2421 = vand.u32 %v2420, 4294901760
      %2422 = vmatmul.f32.gmra.mxu0 %v2421
      %v2423 = vpop.f32.mrf.mxu0
      %v2424 = vadd.f32 0.0, %v2423
      %v2425 = vand.u32 %v2227, 4294901760
      %v2426 = vsub.f32 %v2227, %v2425
      %v2427 = vand.u32 %v2426, 4294901760
      %v2428 = vsub.f32 %v2426, %v2427
      %v2429 = vand.u32 %v2428, 4294901760
      %2430 = vmatmul.f32.gmra.mxu0 %v2429
      %v2431 = vpop.f32.mrf.mxu0
      %v2432 = vadd.f32 0.0, %v2431
      %v2433 = vand.u32 %v2230, 4294901760
      %v2434 = vsub.f32 %v2230, %v2433
      %v2435 = vand.u32 %v2434, 4294901760
      %v2436 = vsub.f32 %v2434, %v2435
      %v2437 = vand.u32 %v2436, 4294901760
      %2438 = vmatmul.f32.gmra.mxu0 %v2437
      %v2439 = vpop.f32.mrf.mxu0
      %v2440 = vadd.f32 0.0, %v2439
      %v2441 = vand.u32 %v2233, 4294901760
      %v2442 = vsub.f32 %v2233, %v2441
      %v2443 = vand.u32 %v2442, 4294901760
      %v2444 = vsub.f32 %v2442, %v2443
      %v2445 = vand.u32 %v2444, 4294901760
      %2446 = vmatmul.f32.gmra.mxu0 %v2445
      %v2447 = vpop.f32.mrf.mxu0
      %v2448 = vadd.f32 0.0, %v2447
      %v2449 = vand.u32 %v2236, 4294901760
      %v2450 = vsub.f32 %v2236, %v2449
      %v2451 = vand.u32 %v2450, 4294901760
      %v2452 = vsub.f32 %v2450, %v2451
      %v2453 = vand.u32 %v2452, 4294901760
      %2454 = vmatmul.f32.gmra.mxu0 %v2453
      %v2455 = vpop.f32.mrf.mxu0
      %v2456 = vadd.f32 0.0, %v2455
      %v2457 = vand.u32 %v2239, 4294901760
      %v2458 = vsub.f32 %v2239, %v2457
      %v2459 = vand.u32 %v2458, 4294901760
      %v2460 = vsub.f32 %v2458, %v2459
      %v2461 = vand.u32 %v2460, 4294901760
      %2462 = vmatmul.f32.gmra.mxu0 %v2461
      %v2463 = vpop.f32.mrf.mxu0
      %v2464 = vadd.f32 0.0, %v2463
      %v2465 = vand.u32 %v2242, 4294901760
      %v2466 = vsub.f32 %v2242, %v2465
      %v2467 = vand.u32 %v2466, 4294901760
      %v2468 = vsub.f32 %v2466, %v2467
      %v2469 = vand.u32 %v2468, 4294901760
      %2470 = vmatmul.f32.gmra.mxu0 %v2469
      %v2471 = vpop.f32.mrf.mxu0
      %v2472 = vadd.f32 0.0, %v2471
      %v2473 = vand.u32 %v2245, 4294901760
      %v2474 = vsub.f32 %v2245, %v2473
      %v2475 = vand.u32 %v2474, 4294901760
      %v2476 = vsub.f32 %v2474, %v2475
      %v2477 = vand.u32 %v2476, 4294901760
      %2478 = vmatmul.f32.gmra.mxu0 %v2477
      %v2479 = vpop.f32.mrf.mxu0
      %v2480 = vadd.f32 0.0, %v2479
      %v2481 = vand.u32 %v2248, 4294901760
      %v2482 = vsub.f32 %v2248, %v2481
      %v2483 = vand.u32 %v2482, 4294901760
      %v2484 = vsub.f32 %v2482, %v2483
      %v2485 = vand.u32 %v2484, 4294901760
      %2486 = vmatmul.f32.gmra.mxu0 %v2485
      %v2487 = vpop.f32.mrf.mxu0
      %v2488 = vadd.f32 0.0, %v2487
      %v2489 = vand.u32 %v2251, 4294901760
      %v2490 = vsub.f32 %v2251, %v2489
      %v2491 = vand.u32 %v2490, 4294901760
      %v2492 = vsub.f32 %v2490, %v2491
      %v2493 = vand.u32 %v2492, 4294901760
      %2494 = vmatmul.f32.gmra.mxu0 %v2493
      %v2495 = vpop.f32.mrf.mxu0
      %v2496 = vadd.f32 0.0, %v2495
      %v2497 = vand.u32 %v2254, 4294901760
      %v2498 = vsub.f32 %v2254, %v2497
      %v2499 = vand.u32 %v2498, 4294901760
      %v2500 = vsub.f32 %v2498, %v2499
      %v2501 = vand.u32 %v2500, 4294901760
      %2502 = vmatmul.f32.gmra.mxu0 %v2501
      %v2503 = vpop.f32.mrf.mxu0
      %v2504 = vadd.f32 0.0, %v2503
      %v2505 = vand.u32 %v2257, 4294901760
      %v2506 = vsub.f32 %v2257, %v2505
      %v2507 = vand.u32 %v2506, 4294901760
      %v2508 = vsub.f32 %v2506, %v2507
      %v2509 = vand.u32 %v2508, 4294901760
      %2510 = vmatmul.f32.gmra.mxu0 %v2509
      %v2511 = vpop.f32.mrf.mxu0
      %v2512 = vadd.f32 0.0, %v2511
      %v2513 = vand.u32 %v2260, 4294901760
      %v2514 = vsub.f32 %v2260, %v2513
      %v2515 = vand.u32 %v2514, 4294901760
      %v2516 = vsub.f32 %v2514, %v2515
      %v2517 = vand.u32 %v2516, 4294901760
      %2518 = vmatmul.f32.gmra.mxu0 %v2517
      %v2519 = vpop.f32.mrf.mxu0
      %v2520 = vadd.f32 0.0, %v2519
      %v2521 = vand.u32 %v2263, 4294901760
      %v2522 = vsub.f32 %v2263, %v2521
      %v2523 = vand.u32 %v2522, 4294901760
      %v2524 = vsub.f32 %v2522, %v2523
      %v2525 = vand.u32 %v2524, 4294901760
      %2526 = vmatmul.f32.gmra.mxu0 %v2525
      %v2527 = vpop.f32.mrf.mxu0
      %v2528 = vadd.f32 0.0, %v2527
      %v2529 = vand.u32 %v2266, 4294901760
      %v2530 = vsub.f32 %v2266, %v2529
      %v2531 = vand.u32 %v2530, 4294901760
      %v2532 = vsub.f32 %v2530, %v2531
      %v2533 = vand.u32 %v2532, 4294901760
      %2534 = vmatmul.f32.gmra.mxu0 %v2533
      %v2535 = vpop.f32.mrf.mxu0
      %v2536 = vadd.f32 0.0, %v2535
      %v2537 = vand.u32 %v2269, 4294901760
      %v2538 = vsub.f32 %v2269, %v2537
      %v2539 = vand.u32 %v2538, 4294901760
      %v2540 = vsub.f32 %v2538, %v2539
      %v2541 = vand.u32 %v2540, 4294901760
      %2542 = vmatmul.f32.gmra.mxu0 %v2541
      %v2543 = vpop.f32.mrf.mxu0
      %v2544 = vadd.f32 0.0, %v2543
      %2545 = vdwg.mxu0
      %2546 = vmatpush.msra.mxu0 0.0
      %2547 = vmatpush.msra.mxu0 0.0
      %2548 = vmatpush.msra.mxu0 0.0
      %2549 = vmatpush.msra.mxu0 0.0
      %2550 = vmatpush.msra.mxu0 0.0
      %2551 = vmatpush.msra.mxu0 0.0
      %2552 = vmatpush.msra.mxu0 0.0
      %2553 = vmatpush.msra.mxu0 0.0
      %2554 = vmatpush.msra.mxu0 0.0
      %2555 = vmatpush.msra.mxu0 0.0
      %2556 = vmatpush.msra.mxu0 0.0
      %2557 = vmatpush.msra.mxu0 0.0
      %2558 = vmatpush.msra.mxu0 0.0
      %2559 = vmatpush.msra.mxu0 0.0
      %v2560 = vand.u32 %v506, 4294901760
      %v2561 = vsub.f32 %v506, %v2560
      %v2562 = vand.u32 %v2561, 4294901760
      %v2563 = vsub.f32 %v2561, %v2562
      %v2564 = vand.u32 %v2563, 4294901760
      %2565 = vmatpush.msra.mxu0 %v2564
      %v2566 = vand.u32 %v505, 4294901760
      %v2567 = vsub.f32 %v505, %v2566
      %v2568 = vand.u32 %v2567, 4294901760
      %v2569 = vsub.f32 %v2567, %v2568
      %v2570 = vand.u32 %v2569, 4294901760
      %2571 = vmatpush.msra.mxu0 %v2570
      %v2572 = vand.u32 %v2176, 4294901760
      %2573 = vmatmul.f32.gmra.mxu0 %v2572
      %v2574 = vpop.f32.mrf.mxu0
      %v2575 = vadd.f32 %v2296, %v2574
      %v2576 = vand.u32 %v2179, 4294901760
      %2577 = vmatmul.f32.gmra.mxu0 %v2576
      %v2578 = vpop.f32.mrf.mxu0
      %v2579 = vadd.f32 %v2304, %v2578
      %v2580 = vand.u32 %v2182, 4294901760
      %2581 = vmatmul.f32.gmra.mxu0 %v2580
      %v2582 = vpop.f32.mrf.mxu0
      %v2583 = vadd.f32 %v2312, %v2582
      %v2584 = vand.u32 %v2185, 4294901760
      %2585 = vmatmul.f32.gmra.mxu0 %v2584
      %v2586 = vpop.f32.mrf.mxu0
      %v2587 = vadd.f32 %v2320, %v2586
      %v2588 = vand.u32 %v2188, 4294901760
      %2589 = vmatmul.f32.gmra.mxu0 %v2588
      %v2590 = vpop.f32.mrf.mxu0
      %v2591 = vadd.f32 %v2328, %v2590
      %v2592 = vand.u32 %v2191, 4294901760
      %2593 = vmatmul.f32.gmra.mxu0 %v2592
      %v2594 = vpop.f32.mrf.mxu0
      %v2595 = vadd.f32 %v2336, %v2594
      %v2596 = vand.u32 %v2194, 4294901760
      %2597 = vmatmul.f32.gmra.mxu0 %v2596
      %v2598 = vpop.f32.mrf.mxu0
      %v2599 = vadd.f32 %v2344, %v2598
      %v2600 = vand.u32 %v2197, 4294901760
      %2601 = vmatmul.f32.gmra.mxu0 %v2600
      %v2602 = vpop.f32.mrf.mxu0
      %v2603 = vadd.f32 %v2352, %v2602
      %v2604 = vand.u32 %v2200, 4294901760
      %2605 = vmatmul.f32.gmra.mxu0 %v2604
      %v2606 = vpop.f32.mrf.mxu0
      %v2607 = vadd.f32 %v2360, %v2606
      %v2608 = vand.u32 %v2203, 4294901760
      %2609 = vmatmul.f32.gmra.mxu0 %v2608
      %v2610 = vpop.f32.mrf.mxu0
      %v2611 = vadd.f32 %v2368, %v2610
      %v2612 = vand.u32 %v2206, 4294901760
      %2613 = vmatmul.f32.gmra.mxu0 %v2612
      %v2614 = vpop.f32.mrf.mxu0
      %v2615 = vadd.f32 %v2376, %v2614
      %v2616 = vand.u32 %v2209, 4294901760
      %2617 = vmatmul.f32.gmra.mxu0 %v2616
      %v2618 = vpop.f32.mrf.mxu0
      %v2619 = vadd.f32 %v2384, %v2618
      %v2620 = vand.u32 %v2212, 4294901760
      %2621 = vmatmul.f32.gmra.mxu0 %v2620
      %v2622 = vpop.f32.mrf.mxu0
      %v2623 = vadd.f32 %v2392, %v2622
      %v2624 = vand.u32 %v2215, 4294901760
      %2625 = vmatmul.f32.gmra.mxu0 %v2624
      %v2626 = vpop.f32.mrf.mxu0
      %v2627 = vadd.f32 %v2400, %v2626
      %v2628 = vand.u32 %v2218, 4294901760
      %2629 = vmatmul.f32.gmra.mxu0 %v2628
      %v2630 = vpop.f32.mrf.mxu0
      %v2631 = vadd.f32 %v2408, %v2630
      %v2632 = vand.u32 %v2221, 4294901760
      %2633 = vmatmul.f32.gmra.mxu0 %v2632
      %v2634 = vpop.f32.mrf.mxu0
      %v2635 = vadd.f32 %v2416, %v2634
      %v2636 = vand.u32 %v2224, 4294901760
      %2637 = vmatmul.f32.gmra.mxu0 %v2636
      %v2638 = vpop.f32.mrf.mxu0
      %v2639 = vadd.f32 %v2424, %v2638
      %v2640 = vand.u32 %v2227, 4294901760
      %2641 = vmatmul.f32.gmra.mxu0 %v2640
      %v2642 = vpop.f32.mrf.mxu0
      %v2643 = vadd.f32 %v2432, %v2642
      %v2644 = vand.u32 %v2230, 4294901760
      %2645 = vmatmul.f32.gmra.mxu0 %v2644
      %v2646 = vpop.f32.mrf.mxu0
      %v2647 = vadd.f32 %v2440, %v2646
      %v2648 = vand.u32 %v2233, 4294901760
      %2649 = vmatmul.f32.gmra.mxu0 %v2648
      %v2650 = vpop.f32.mrf.mxu0
      %v2651 = vadd.f32 %v2448, %v2650
      %v2652 = vand.u32 %v2236, 4294901760
      %2653 = vmatmul.f32.gmra.mxu0 %v2652
      %v2654 = vpop.f32.mrf.mxu0
      %v2655 = vadd.f32 %v2456, %v2654
      %v2656 = vand.u32 %v2239, 4294901760
      %2657 = vmatmul.f32.gmra.mxu0 %v2656
      %v2658 = vpop.f32.mrf.mxu0
      %v2659 = vadd.f32 %v2464, %v2658
      %v2660 = vand.u32 %v2242, 4294901760
      %2661 = vmatmul.f32.gmra.mxu0 %v2660
      %v2662 = vpop.f32.mrf.mxu0
      %v2663 = vadd.f32 %v2472, %v2662
      %v2664 = vand.u32 %v2245, 4294901760
      %2665 = vmatmul.f32.gmra.mxu0 %v2664
      %v2666 = vpop.f32.mrf.mxu0
      %v2667 = vadd.f32 %v2480, %v2666
      %v2668 = vand.u32 %v2248, 4294901760
      %2669 = vmatmul.f32.gmra.mxu0 %v2668
      %v2670 = vpop.f32.mrf.mxu0
      %v2671 = vadd.f32 %v2488, %v2670
      %v2672 = vand.u32 %v2251, 4294901760
      %2673 = vmatmul.f32.gmra.mxu0 %v2672
      %v2674 = vpop.f32.mrf.mxu0
      %v2675 = vadd.f32 %v2496, %v2674
      %v2676 = vand.u32 %v2254, 4294901760
      %2677 = vmatmul.f32.gmra.mxu0 %v2676
      %v2678 = vpop.f32.mrf.mxu0
      %v2679 = vadd.f32 %v2504, %v2678
      %v2680 = vand.u32 %v2257, 4294901760
      %2681 = vmatmul.f32.gmra.mxu0 %v2680
      %v2682 = vpop.f32.mrf.mxu0
      %v2683 = vadd.f32 %v2512, %v2682
      %v2684 = vand.u32 %v2260, 4294901760
      %2685 = vmatmul.f32.gmra.mxu0 %v2684
      %v2686 = vpop.f32.mrf.mxu0
      %v2687 = vadd.f32 %v2520, %v2686
      %v2688 = vand.u32 %v2263, 4294901760
      %2689 = vmatmul.f32.gmra.mxu0 %v2688
      %v2690 = vpop.f32.mrf.mxu0
      %v2691 = vadd.f32 %v2528, %v2690
      %v2692 = vand.u32 %v2266, 4294901760
      %2693 = vmatmul.f32.gmra.mxu0 %v2692
      %v2694 = vpop.f32.mrf.mxu0
      %v2695 = vadd.f32 %v2536, %v2694
      %v2696 = vand.u32 %v2269, 4294901760
      %2697 = vmatmul.f32.gmra.mxu0 %v2696
      %v2698 = vpop.f32.mrf.mxu0
      %v2699 = vadd.f32 %v2544, %v2698
      %2700 = vdwg.mxu0
      %2701 = vmatpush.msra.mxu0 0.0
      %2702 = vmatpush.msra.mxu0 0.0
      %2703 = vmatpush.msra.mxu0 0.0
      %2704 = vmatpush.msra.mxu0 0.0
      %2705 = vmatpush.msra.mxu0 0.0
      %2706 = vmatpush.msra.mxu0 0.0
      %2707 = vmatpush.msra.mxu0 0.0
      %2708 = vmatpush.msra.mxu0 0.0
      %2709 = vmatpush.msra.mxu0 0.0
      %2710 = vmatpush.msra.mxu0 0.0
      %2711 = vmatpush.msra.mxu0 0.0
      %2712 = vmatpush.msra.mxu0 0.0
      %2713 = vmatpush.msra.mxu0 0.0
      %2714 = vmatpush.msra.mxu0 0.0
      %v2715 = vand.u32 %v506, 4294901760
      %v2716 = vsub.f32 %v506, %v2715
      %2717 = vmatpush.msra.mxu0 %v2716
      %v2718 = vand.u32 %v505, 4294901760
      %v2719 = vsub.f32 %v505, %v2718
      %2720 = vmatpush.msra.mxu0 %v2719
      %v2721 = vand.u32 %v2176, 4294901760
      %v2722 = vsub.f32 %v2176, %v2721
      %2723 = vmatmul.f32.gmra.mxu0 %v2722
      %v2724 = vpop.f32.mrf.mxu0
      %v2725 = vadd.f32 %v2575, %v2724
      %v2726 = vand.u32 %v2179, 4294901760
      %v2727 = vsub.f32 %v2179, %v2726
      %2728 = vmatmul.f32.gmra.mxu0 %v2727
      %v2729 = vpop.f32.mrf.mxu0
      %v2730 = vadd.f32 %v2579, %v2729
      %v2731 = vand.u32 %v2182, 4294901760
      %v2732 = vsub.f32 %v2182, %v2731
      %2733 = vmatmul.f32.gmra.mxu0 %v2732
      %v2734 = vpop.f32.mrf.mxu0
      %v2735 = vadd.f32 %v2583, %v2734
      %v2736 = vand.u32 %v2185, 4294901760
      %v2737 = vsub.f32 %v2185, %v2736
      %2738 = vmatmul.f32.gmra.mxu0 %v2737
      %v2739 = vpop.f32.mrf.mxu0
      %v2740 = vadd.f32 %v2587, %v2739
      %v2741 = vand.u32 %v2188, 4294901760
      %v2742 = vsub.f32 %v2188, %v2741
      %2743 = vmatmul.f32.gmra.mxu0 %v2742
      %v2744 = vpop.f32.mrf.mxu0
      %v2745 = vadd.f32 %v2591, %v2744
      %v2746 = vand.u32 %v2191, 4294901760
      %v2747 = vsub.f32 %v2191, %v2746
      %2748 = vmatmul.f32.gmra.mxu0 %v2747
      %v2749 = vpop.f32.mrf.mxu0
      %v2750 = vadd.f32 %v2595, %v2749
      %v2751 = vand.u32 %v2194, 4294901760
      %v2752 = vsub.f32 %v2194, %v2751
      %2753 = vmatmul.f32.gmra.mxu0 %v2752
      %v2754 = vpop.f32.mrf.mxu0
      %v2755 = vadd.f32 %v2599, %v2754
      %v2756 = vand.u32 %v2197, 4294901760
      %v2757 = vsub.f32 %v2197, %v2756
      %2758 = vmatmul.f32.gmra.mxu0 %v2757
      %v2759 = vpop.f32.mrf.mxu0
      %v2760 = vadd.f32 %v2603, %v2759
      %v2761 = vand.u32 %v2200, 4294901760
      %v2762 = vsub.f32 %v2200, %v2761
      %2763 = vmatmul.f32.gmra.mxu0 %v2762
      %v2764 = vpop.f32.mrf.mxu0
      %v2765 = vadd.f32 %v2607, %v2764
      %v2766 = vand.u32 %v2203, 4294901760
      %v2767 = vsub.f32 %v2203, %v2766
      %2768 = vmatmul.f32.gmra.mxu0 %v2767
      %v2769 = vpop.f32.mrf.mxu0
      %v2770 = vadd.f32 %v2611, %v2769
      %v2771 = vand.u32 %v2206, 4294901760
      %v2772 = vsub.f32 %v2206, %v2771
      %2773 = vmatmul.f32.gmra.mxu0 %v2772
      %v2774 = vpop.f32.mrf.mxu0
      %v2775 = vadd.f32 %v2615, %v2774
      %v2776 = vand.u32 %v2209, 4294901760
      %v2777 = vsub.f32 %v2209, %v2776
      %2778 = vmatmul.f32.gmra.mxu0 %v2777
      %v2779 = vpop.f32.mrf.mxu0
      %v2780 = vadd.f32 %v2619, %v2779
      %v2781 = vand.u32 %v2212, 4294901760
      %v2782 = vsub.f32 %v2212, %v2781
      %2783 = vmatmul.f32.gmra.mxu0 %v2782
      %v2784 = vpop.f32.mrf.mxu0
      %v2785 = vadd.f32 %v2623, %v2784
      %v2786 = vand.u32 %v2215, 4294901760
      %v2787 = vsub.f32 %v2215, %v2786
      %2788 = vmatmul.f32.gmra.mxu0 %v2787
      %v2789 = vpop.f32.mrf.mxu0
      %v2790 = vadd.f32 %v2627, %v2789
      %v2791 = vand.u32 %v2218, 4294901760
      %v2792 = vsub.f32 %v2218, %v2791
      %2793 = vmatmul.f32.gmra.mxu0 %v2792
      %v2794 = vpop.f32.mrf.mxu0
      %v2795 = vadd.f32 %v2631, %v2794
      %v2796 = vand.u32 %v2221, 4294901760
      %v2797 = vsub.f32 %v2221, %v2796
      %2798 = vmatmul.f32.gmra.mxu0 %v2797
      %v2799 = vpop.f32.mrf.mxu0
      %v2800 = vadd.f32 %v2635, %v2799
      %v2801 = vand.u32 %v2224, 4294901760
      %v2802 = vsub.f32 %v2224, %v2801
      %2803 = vmatmul.f32.gmra.mxu0 %v2802
      %v2804 = vpop.f32.mrf.mxu0
      %v2805 = vadd.f32 %v2639, %v2804
      %v2806 = vand.u32 %v2227, 4294901760
      %v2807 = vsub.f32 %v2227, %v2806
      %2808 = vmatmul.f32.gmra.mxu0 %v2807
      %v2809 = vpop.f32.mrf.mxu0
      %v2810 = vadd.f32 %v2643, %v2809
      %v2811 = vand.u32 %v2230, 4294901760
      %v2812 = vsub.f32 %v2230, %v2811
      %2813 = vmatmul.f32.gmra.mxu0 %v2812
      %v2814 = vpop.f32.mrf.mxu0
      %v2815 = vadd.f32 %v2647, %v2814
      %v2816 = vand.u32 %v2233, 4294901760
      %v2817 = vsub.f32 %v2233, %v2816
      %2818 = vmatmul.f32.gmra.mxu0 %v2817
      %v2819 = vpop.f32.mrf.mxu0
      %v2820 = vadd.f32 %v2651, %v2819
      %v2821 = vand.u32 %v2236, 4294901760
      %v2822 = vsub.f32 %v2236, %v2821
      %2823 = vmatmul.f32.gmra.mxu0 %v2822
      %v2824 = vpop.f32.mrf.mxu0
      %v2825 = vadd.f32 %v2655, %v2824
      %v2826 = vand.u32 %v2239, 4294901760
      %v2827 = vsub.f32 %v2239, %v2826
      %2828 = vmatmul.f32.gmra.mxu0 %v2827
      %v2829 = vpop.f32.mrf.mxu0
      %v2830 = vadd.f32 %v2659, %v2829
      %v2831 = vand.u32 %v2242, 4294901760
      %v2832 = vsub.f32 %v2242, %v2831
      %2833 = vmatmul.f32.gmra.mxu0 %v2832
      %v2834 = vpop.f32.mrf.mxu0
      %v2835 = vadd.f32 %v2663, %v2834
      %v2836 = vand.u32 %v2245, 4294901760
      %v2837 = vsub.f32 %v2245, %v2836
      %2838 = vmatmul.f32.gmra.mxu0 %v2837
      %v2839 = vpop.f32.mrf.mxu0
      %v2840 = vadd.f32 %v2667, %v2839
      %v2841 = vand.u32 %v2248, 4294901760
      %v2842 = vsub.f32 %v2248, %v2841
      %2843 = vmatmul.f32.gmra.mxu0 %v2842
      %v2844 = vpop.f32.mrf.mxu0
      %v2845 = vadd.f32 %v2671, %v2844
      %v2846 = vand.u32 %v2251, 4294901760
      %v2847 = vsub.f32 %v2251, %v2846
      %2848 = vmatmul.f32.gmra.mxu0 %v2847
      %v2849 = vpop.f32.mrf.mxu0
      %v2850 = vadd.f32 %v2675, %v2849
      %v2851 = vand.u32 %v2254, 4294901760
      %v2852 = vsub.f32 %v2254, %v2851
      %2853 = vmatmul.f32.gmra.mxu0 %v2852
      %v2854 = vpop.f32.mrf.mxu0
      %v2855 = vadd.f32 %v2679, %v2854
      %v2856 = vand.u32 %v2257, 4294901760
      %v2857 = vsub.f32 %v2257, %v2856
      %2858 = vmatmul.f32.gmra.mxu0 %v2857
      %v2859 = vpop.f32.mrf.mxu0
      %v2860 = vadd.f32 %v2683, %v2859
      %v2861 = vand.u32 %v2260, 4294901760
      %v2862 = vsub.f32 %v2260, %v2861
      %2863 = vmatmul.f32.gmra.mxu0 %v2862
      %v2864 = vpop.f32.mrf.mxu0
      %v2865 = vadd.f32 %v2687, %v2864
      %v2866 = vand.u32 %v2263, 4294901760
      %v2867 = vsub.f32 %v2263, %v2866
      %2868 = vmatmul.f32.gmra.mxu0 %v2867
      %v2869 = vpop.f32.mrf.mxu0
      %v2870 = vadd.f32 %v2691, %v2869
      %v2871 = vand.u32 %v2266, 4294901760
      %v2872 = vsub.f32 %v2266, %v2871
      %2873 = vmatmul.f32.gmra.mxu0 %v2872
      %v2874 = vpop.f32.mrf.mxu0
      %v2875 = vadd.f32 %v2695, %v2874
      %v2876 = vand.u32 %v2269, 4294901760
      %v2877 = vsub.f32 %v2269, %v2876
      %2878 = vmatmul.f32.gmra.mxu0 %v2877
      %v2879 = vpop.f32.mrf.mxu0
      %v2880 = vadd.f32 %v2699, %v2879
      %2881 = vdwg.mxu0
      %2882 = vmatpush.msra.mxu0 0.0
      %2883 = vmatpush.msra.mxu0 0.0
      %2884 = vmatpush.msra.mxu0 0.0
      %2885 = vmatpush.msra.mxu0 0.0
      %2886 = vmatpush.msra.mxu0 0.0
      %2887 = vmatpush.msra.mxu0 0.0
      %2888 = vmatpush.msra.mxu0 0.0
      %2889 = vmatpush.msra.mxu0 0.0
      %2890 = vmatpush.msra.mxu0 0.0
      %2891 = vmatpush.msra.mxu0 0.0
      %2892 = vmatpush.msra.mxu0 0.0
      %2893 = vmatpush.msra.mxu0 0.0
      %2894 = vmatpush.msra.mxu0 0.0
      %2895 = vmatpush.msra.mxu0 0.0
      %v2896 = vand.u32 %v506, 4294901760
      %2897 = vmatpush.msra.mxu0 %v2896
      %v2898 = vand.u32 %v505, 4294901760
      %2899 = vmatpush.msra.mxu0 %v2898
      %v2900 = vand.u32 %v2176, 4294901760
      %v2901 = vsub.f32 %v2176, %v2900
      %v2902 = vand.u32 %v2901, 4294901760
      %2903 = vmatmul.f32.gmra.mxu0 %v2902
      %v2904 = vpop.f32.mrf.mxu0
      %v2905 = vadd.f32 %v2725, %v2904
      %v2906 = vand.u32 %v2179, 4294901760
      %v2907 = vsub.f32 %v2179, %v2906
      %v2908 = vand.u32 %v2907, 4294901760
      %2909 = vmatmul.f32.gmra.mxu0 %v2908
      %v2910 = vpop.f32.mrf.mxu0
      %v2911 = vadd.f32 %v2730, %v2910
      %v2912 = vand.u32 %v2182, 4294901760
      %v2913 = vsub.f32 %v2182, %v2912
      %v2914 = vand.u32 %v2913, 4294901760
      %2915 = vmatmul.f32.gmra.mxu0 %v2914
      %v2916 = vpop.f32.mrf.mxu0
      %v2917 = vadd.f32 %v2735, %v2916
      %v2918 = vand.u32 %v2185, 4294901760
      %v2919 = vsub.f32 %v2185, %v2918
      %v2920 = vand.u32 %v2919, 4294901760
      %2921 = vmatmul.f32.gmra.mxu0 %v2920
      %v2922 = vpop.f32.mrf.mxu0
      %v2923 = vadd.f32 %v2740, %v2922
      %v2924 = vand.u32 %v2188, 4294901760
      %v2925 = vsub.f32 %v2188, %v2924
      %v2926 = vand.u32 %v2925, 4294901760
      %2927 = vmatmul.f32.gmra.mxu0 %v2926
      %v2928 = vpop.f32.mrf.mxu0
      %v2929 = vadd.f32 %v2745, %v2928
      %v2930 = vand.u32 %v2191, 4294901760
      %v2931 = vsub.f32 %v2191, %v2930
      %v2932 = vand.u32 %v2931, 4294901760
      %2933 = vmatmul.f32.gmra.mxu0 %v2932
      %v2934 = vpop.f32.mrf.mxu0
      %v2935 = vadd.f32 %v2750, %v2934
      %v2936 = vand.u32 %v2194, 4294901760
      %v2937 = vsub.f32 %v2194, %v2936
      %v2938 = vand.u32 %v2937, 4294901760
      %2939 = vmatmul.f32.gmra.mxu0 %v2938
      %v2940 = vpop.f32.mrf.mxu0
      %v2941 = vadd.f32 %v2755, %v2940
      %v2942 = vand.u32 %v2197, 4294901760
      %v2943 = vsub.f32 %v2197, %v2942
      %v2944 = vand.u32 %v2943, 4294901760
      %2945 = vmatmul.f32.gmra.mxu0 %v2944
      %v2946 = vpop.f32.mrf.mxu0
      %v2947 = vadd.f32 %v2760, %v2946
      %v2948 = vand.u32 %v2200, 4294901760
      %v2949 = vsub.f32 %v2200, %v2948
      %v2950 = vand.u32 %v2949, 4294901760
      %2951 = vmatmul.f32.gmra.mxu0 %v2950
      %v2952 = vpop.f32.mrf.mxu0
      %v2953 = vadd.f32 %v2765, %v2952
      %v2954 = vand.u32 %v2203, 4294901760
      %v2955 = vsub.f32 %v2203, %v2954
      %v2956 = vand.u32 %v2955, 4294901760
      %2957 = vmatmul.f32.gmra.mxu0 %v2956
      %v2958 = vpop.f32.mrf.mxu0
      %v2959 = vadd.f32 %v2770, %v2958
      %v2960 = vand.u32 %v2206, 4294901760
      %v2961 = vsub.f32 %v2206, %v2960
      %v2962 = vand.u32 %v2961, 4294901760
      %2963 = vmatmul.f32.gmra.mxu0 %v2962
      %v2964 = vpop.f32.mrf.mxu0
      %v2965 = vadd.f32 %v2775, %v2964
      %v2966 = vand.u32 %v2209, 4294901760
      %v2967 = vsub.f32 %v2209, %v2966
      %v2968 = vand.u32 %v2967, 4294901760
      %2969 = vmatmul.f32.gmra.mxu0 %v2968
      %v2970 = vpop.f32.mrf.mxu0
      %v2971 = vadd.f32 %v2780, %v2970
      %v2972 = vand.u32 %v2212, 4294901760
      %v2973 = vsub.f32 %v2212, %v2972
      %v2974 = vand.u32 %v2973, 4294901760
      %2975 = vmatmul.f32.gmra.mxu0 %v2974
      %v2976 = vpop.f32.mrf.mxu0
      %v2977 = vadd.f32 %v2785, %v2976
      %v2978 = vand.u32 %v2215, 4294901760
      %v2979 = vsub.f32 %v2215, %v2978
      %v2980 = vand.u32 %v2979, 4294901760
      %2981 = vmatmul.f32.gmra.mxu0 %v2980
      %v2982 = vpop.f32.mrf.mxu0
      %v2983 = vadd.f32 %v2790, %v2982
      %v2984 = vand.u32 %v2218, 4294901760
      %v2985 = vsub.f32 %v2218, %v2984
      %v2986 = vand.u32 %v2985, 4294901760
      %2987 = vmatmul.f32.gmra.mxu0 %v2986
      %v2988 = vpop.f32.mrf.mxu0
      %v2989 = vadd.f32 %v2795, %v2988
      %v2990 = vand.u32 %v2221, 4294901760
      %v2991 = vsub.f32 %v2221, %v2990
      %v2992 = vand.u32 %v2991, 4294901760
      %2993 = vmatmul.f32.gmra.mxu0 %v2992
      %v2994 = vpop.f32.mrf.mxu0
      %v2995 = vadd.f32 %v2800, %v2994
      %v2996 = vand.u32 %v2224, 4294901760
      %v2997 = vsub.f32 %v2224, %v2996
      %v2998 = vand.u32 %v2997, 4294901760
      %2999 = vmatmul.f32.gmra.mxu0 %v2998
      %v3000 = vpop.f32.mrf.mxu0
      %v3001 = vadd.f32 %v2805, %v3000
      %v3002 = vand.u32 %v2227, 4294901760
      %v3003 = vsub.f32 %v2227, %v3002
      %v3004 = vand.u32 %v3003, 4294901760
      %3005 = vmatmul.f32.gmra.mxu0 %v3004
      %v3006 = vpop.f32.mrf.mxu0
      %v3007 = vadd.f32 %v2810, %v3006
      %v3008 = vand.u32 %v2230, 4294901760
      %v3009 = vsub.f32 %v2230, %v3008
      %v3010 = vand.u32 %v3009, 4294901760
      %3011 = vmatmul.f32.gmra.mxu0 %v3010
      %v3012 = vpop.f32.mrf.mxu0
      %v3013 = vadd.f32 %v2815, %v3012
      %v3014 = vand.u32 %v2233, 4294901760
      %v3015 = vsub.f32 %v2233, %v3014
      %v3016 = vand.u32 %v3015, 4294901760
      %3017 = vmatmul.f32.gmra.mxu0 %v3016
      %v3018 = vpop.f32.mrf.mxu0
      %v3019 = vadd.f32 %v2820, %v3018
      %v3020 = vand.u32 %v2236, 4294901760
      %v3021 = vsub.f32 %v2236, %v3020
      %v3022 = vand.u32 %v3021, 4294901760
      %3023 = vmatmul.f32.gmra.mxu0 %v3022
      %v3024 = vpop.f32.mrf.mxu0
      %v3025 = vadd.f32 %v2825, %v3024
      %v3026 = vand.u32 %v2239, 4294901760
      %v3027 = vsub.f32 %v2239, %v3026
      %v3028 = vand.u32 %v3027, 4294901760
      %3029 = vmatmul.f32.gmra.mxu0 %v3028
      %v3030 = vpop.f32.mrf.mxu0
      %v3031 = vadd.f32 %v2830, %v3030
      %v3032 = vand.u32 %v2242, 4294901760
      %v3033 = vsub.f32 %v2242, %v3032
      %v3034 = vand.u32 %v3033, 4294901760
      %3035 = vmatmul.f32.gmra.mxu0 %v3034
      %v3036 = vpop.f32.mrf.mxu0
      %v3037 = vadd.f32 %v2835, %v3036
      %v3038 = vand.u32 %v2245, 4294901760
      %v3039 = vsub.f32 %v2245, %v3038
      %v3040 = vand.u32 %v3039, 4294901760
      %3041 = vmatmul.f32.gmra.mxu0 %v3040
      %v3042 = vpop.f32.mrf.mxu0
      %v3043 = vadd.f32 %v2840, %v3042
      %v3044 = vand.u32 %v2248, 4294901760
      %v3045 = vsub.f32 %v2248, %v3044
      %v3046 = vand.u32 %v3045, 4294901760
      %3047 = vmatmul.f32.gmra.mxu0 %v3046
      %v3048 = vpop.f32.mrf.mxu0
      %v3049 = vadd.f32 %v2845, %v3048
      %v3050 = vand.u32 %v2251, 4294901760
      %v3051 = vsub.f32 %v2251, %v3050
      %v3052 = vand.u32 %v3051, 4294901760
      %3053 = vmatmul.f32.gmra.mxu0 %v3052
      %v3054 = vpop.f32.mrf.mxu0
      %v3055 = vadd.f32 %v2850, %v3054
      %v3056 = vand.u32 %v2254, 4294901760
      %v3057 = vsub.f32 %v2254, %v3056
      %v3058 = vand.u32 %v3057, 4294901760
      %3059 = vmatmul.f32.gmra.mxu0 %v3058
      %v3060 = vpop.f32.mrf.mxu0
      %v3061 = vadd.f32 %v2855, %v3060
      %v3062 = vand.u32 %v2257, 4294901760
      %v3063 = vsub.f32 %v2257, %v3062
      %v3064 = vand.u32 %v3063, 4294901760
      %3065 = vmatmul.f32.gmra.mxu0 %v3064
      %v3066 = vpop.f32.mrf.mxu0
      %v3067 = vadd.f32 %v2860, %v3066
      %v3068 = vand.u32 %v2260, 4294901760
      %v3069 = vsub.f32 %v2260, %v3068
      %v3070 = vand.u32 %v3069, 4294901760
      %3071 = vmatmul.f32.gmra.mxu0 %v3070
      %v3072 = vpop.f32.mrf.mxu0
      %v3073 = vadd.f32 %v2865, %v3072
      %v3074 = vand.u32 %v2263, 4294901760
      %v3075 = vsub.f32 %v2263, %v3074
      %v3076 = vand.u32 %v3075, 4294901760
      %3077 = vmatmul.f32.gmra.mxu0 %v3076
      %v3078 = vpop.f32.mrf.mxu0
      %v3079 = vadd.f32 %v2870, %v3078
      %v3080 = vand.u32 %v2266, 4294901760
      %v3081 = vsub.f32 %v2266, %v3080
      %v3082 = vand.u32 %v3081, 4294901760
      %3083 = vmatmul.f32.gmra.mxu0 %v3082
      %v3084 = vpop.f32.mrf.mxu0
      %v3085 = vadd.f32 %v2875, %v3084
      %v3086 = vand.u32 %v2269, 4294901760
      %v3087 = vsub.f32 %v2269, %v3086
      %v3088 = vand.u32 %v3087, 4294901760
      %3089 = vmatmul.f32.gmra.mxu0 %v3088
      %v3090 = vpop.f32.mrf.mxu0
      %v3091 = vadd.f32 %v2880, %v3090
      %3092 = vdwg.mxu0
      %3093 = vmatpush.msra.mxu0 0.0
      %3094 = vmatpush.msra.mxu0 0.0
      %3095 = vmatpush.msra.mxu0 0.0
      %3096 = vmatpush.msra.mxu0 0.0
      %3097 = vmatpush.msra.mxu0 0.0
      %3098 = vmatpush.msra.mxu0 0.0
      %3099 = vmatpush.msra.mxu0 0.0
      %3100 = vmatpush.msra.mxu0 0.0
      %3101 = vmatpush.msra.mxu0 0.0
      %3102 = vmatpush.msra.mxu0 0.0
      %3103 = vmatpush.msra.mxu0 0.0
      %3104 = vmatpush.msra.mxu0 0.0
      %3105 = vmatpush.msra.mxu0 0.0
      %3106 = vmatpush.msra.mxu0 0.0
      %v3107 = vand.u32 %v506, 4294901760
      %v3108 = vsub.f32 %v506, %v3107
      %v3109 = vand.u32 %v3108, 4294901760
      %3110 = vmatpush.msra.mxu0 %v3109
      %v3111 = vand.u32 %v505, 4294901760
      %v3112 = vsub.f32 %v505, %v3111
      %v3113 = vand.u32 %v3112, 4294901760
      %3114 = vmatpush.msra.mxu0 %v3113
      %v3115 = vand.u32 %v2176, 4294901760
      %3116 = vmatmul.f32.gmra.mxu0 %v3115
      %v3117 = vpop.f32.mrf.mxu0
      %v3118 = vadd.f32 %v2905, %v3117
      %v3119 = vand.u32 %v2179, 4294901760
      %3120 = vmatmul.f32.gmra.mxu0 %v3119
      %v3121 = vpop.f32.mrf.mxu0
      %v3122 = vadd.f32 %v2911, %v3121
      %v3123 = vand.u32 %v2182, 4294901760
      %3124 = vmatmul.f32.gmra.mxu0 %v3123
      %v3125 = vpop.f32.mrf.mxu0
      %v3126 = vadd.f32 %v2917, %v3125
      %v3127 = vand.u32 %v2185, 4294901760
      %3128 = vmatmul.f32.gmra.mxu0 %v3127
      %v3129 = vpop.f32.mrf.mxu0
      %v3130 = vadd.f32 %v2923, %v3129
      %v3131 = vand.u32 %v2188, 4294901760
      %3132 = vmatmul.f32.gmra.mxu0 %v3131
      %v3133 = vpop.f32.mrf.mxu0
      %v3134 = vadd.f32 %v2929, %v3133
      %v3135 = vand.u32 %v2191, 4294901760
      %3136 = vmatmul.f32.gmra.mxu0 %v3135
      %v3137 = vpop.f32.mrf.mxu0
      %v3138 = vadd.f32 %v2935, %v3137
      %v3139 = vand.u32 %v2194, 4294901760
      %3140 = vmatmul.f32.gmra.mxu0 %v3139
      %v3141 = vpop.f32.mrf.mxu0
      %v3142 = vadd.f32 %v2941, %v3141
      %v3143 = vand.u32 %v2197, 4294901760
      %3144 = vmatmul.f32.gmra.mxu0 %v3143
      %v3145 = vpop.f32.mrf.mxu0
      %v3146 = vadd.f32 %v2947, %v3145
      %v3147 = vand.u32 %v2200, 4294901760
      %3148 = vmatmul.f32.gmra.mxu0 %v3147
      %v3149 = vpop.f32.mrf.mxu0
      %v3150 = vadd.f32 %v2953, %v3149
      %v3151 = vand.u32 %v2203, 4294901760
      %3152 = vmatmul.f32.gmra.mxu0 %v3151
      %v3153 = vpop.f32.mrf.mxu0
      %v3154 = vadd.f32 %v2959, %v3153
      %v3155 = vand.u32 %v2206, 4294901760
      %3156 = vmatmul.f32.gmra.mxu0 %v3155
      %v3157 = vpop.f32.mrf.mxu0
      %v3158 = vadd.f32 %v2965, %v3157
      %v3159 = vand.u32 %v2209, 4294901760
      %3160 = vmatmul.f32.gmra.mxu0 %v3159
      %v3161 = vpop.f32.mrf.mxu0
      %v3162 = vadd.f32 %v2971, %v3161
      %v3163 = vand.u32 %v2212, 4294901760
      %3164 = vmatmul.f32.gmra.mxu0 %v3163
      %v3165 = vpop.f32.mrf.mxu0
      %v3166 = vadd.f32 %v2977, %v3165
      %v3167 = vand.u32 %v2215, 4294901760
      %3168 = vmatmul.f32.gmra.mxu0 %v3167
      %v3169 = vpop.f32.mrf.mxu0
      %v3170 = vadd.f32 %v2983, %v3169
      %v3171 = vand.u32 %v2218, 4294901760
      %3172 = vmatmul.f32.gmra.mxu0 %v3171
      %v3173 = vpop.f32.mrf.mxu0
      %v3174 = vadd.f32 %v2989, %v3173
      %v3175 = vand.u32 %v2221, 4294901760
      %3176 = vmatmul.f32.gmra.mxu0 %v3175
      %v3177 = vpop.f32.mrf.mxu0
      %v3178 = vadd.f32 %v2995, %v3177
      %v3179 = vand.u32 %v2224, 4294901760
      %3180 = vmatmul.f32.gmra.mxu0 %v3179
      %v3181 = vpop.f32.mrf.mxu0
      %v3182 = vadd.f32 %v3001, %v3181
      %v3183 = vand.u32 %v2227, 4294901760
      %3184 = vmatmul.f32.gmra.mxu0 %v3183
      %v3185 = vpop.f32.mrf.mxu0
      %v3186 = vadd.f32 %v3007, %v3185
      %v3187 = vand.u32 %v2230, 4294901760
      %3188 = vmatmul.f32.gmra.mxu0 %v3187
      %v3189 = vpop.f32.mrf.mxu0
      %v3190 = vadd.f32 %v3013, %v3189
      %v3191 = vand.u32 %v2233, 4294901760
      %3192 = vmatmul.f32.gmra.mxu0 %v3191
      %v3193 = vpop.f32.mrf.mxu0
      %v3194 = vadd.f32 %v3019, %v3193
      %v3195 = vand.u32 %v2236, 4294901760
      %3196 = vmatmul.f32.gmra.mxu0 %v3195
      %v3197 = vpop.f32.mrf.mxu0
      %v3198 = vadd.f32 %v3025, %v3197
      %v3199 = vand.u32 %v2239, 4294901760
      %3200 = vmatmul.f32.gmra.mxu0 %v3199
      %v3201 = vpop.f32.mrf.mxu0
      %v3202 = vadd.f32 %v3031, %v3201
      %v3203 = vand.u32 %v2242, 4294901760
      %3204 = vmatmul.f32.gmra.mxu0 %v3203
      %v3205 = vpop.f32.mrf.mxu0
      %v3206 = vadd.f32 %v3037, %v3205
      %v3207 = vand.u32 %v2245, 4294901760
      %3208 = vmatmul.f32.gmra.mxu0 %v3207
      %v3209 = vpop.f32.mrf.mxu0
      %v3210 = vadd.f32 %v3043, %v3209
      %v3211 = vand.u32 %v2248, 4294901760
      %3212 = vmatmul.f32.gmra.mxu0 %v3211
      %v3213 = vpop.f32.mrf.mxu0
      %v3214 = vadd.f32 %v3049, %v3213
      %v3215 = vand.u32 %v2251, 4294901760
      %3216 = vmatmul.f32.gmra.mxu0 %v3215
      %v3217 = vpop.f32.mrf.mxu0
      %v3218 = vadd.f32 %v3055, %v3217
      %v3219 = vand.u32 %v2254, 4294901760
      %3220 = vmatmul.f32.gmra.mxu0 %v3219
      %v3221 = vpop.f32.mrf.mxu0
      %v3222 = vadd.f32 %v3061, %v3221
      %v3223 = vand.u32 %v2257, 4294901760
      %3224 = vmatmul.f32.gmra.mxu0 %v3223
      %v3225 = vpop.f32.mrf.mxu0
      %v3226 = vadd.f32 %v3067, %v3225
      %v3227 = vand.u32 %v2260, 4294901760
      %3228 = vmatmul.f32.gmra.mxu0 %v3227
      %v3229 = vpop.f32.mrf.mxu0
      %v3230 = vadd.f32 %v3073, %v3229
      %v3231 = vand.u32 %v2263, 4294901760
      %3232 = vmatmul.f32.gmra.mxu0 %v3231
      %v3233 = vpop.f32.mrf.mxu0
      %v3234 = vadd.f32 %v3079, %v3233
      %v3235 = vand.u32 %v2266, 4294901760
      %3236 = vmatmul.f32.gmra.mxu0 %v3235
      %v3237 = vpop.f32.mrf.mxu0
      %v3238 = vadd.f32 %v3085, %v3237
      %v3239 = vand.u32 %v2269, 4294901760
      %3240 = vmatmul.f32.gmra.mxu0 %v3239
      %v3241 = vpop.f32.mrf.mxu0
      %v3242 = vadd.f32 %v3091, %v3241
      %3243 = vdwg.mxu0
      %3244 = vmatpush.msra.mxu0 0.0
      %3245 = vmatpush.msra.mxu0 0.0
      %3246 = vmatpush.msra.mxu0 0.0
      %3247 = vmatpush.msra.mxu0 0.0
      %3248 = vmatpush.msra.mxu0 0.0
      %3249 = vmatpush.msra.mxu0 0.0
      %3250 = vmatpush.msra.mxu0 0.0
      %3251 = vmatpush.msra.mxu0 0.0
      %3252 = vmatpush.msra.mxu0 0.0
      %3253 = vmatpush.msra.mxu0 0.0
      %3254 = vmatpush.msra.mxu0 0.0
      %3255 = vmatpush.msra.mxu0 0.0
      %3256 = vmatpush.msra.mxu0 0.0
      %3257 = vmatpush.msra.mxu0 0.0
      %v3258 = vand.u32 %v506, 4294901760
      %3259 = vmatpush.msra.mxu0 %v3258
      %v3260 = vand.u32 %v505, 4294901760
      %3261 = vmatpush.msra.mxu0 %v3260
      %v3262 = vand.u32 %v2176, 4294901760
      %3263 = vmatmul.f32.gmra.mxu0 %v3262
      %v3264 = vpop.f32.mrf.mxu0
      %v3265 = vadd.f32 %v3118, %v3264
      %v3266 = vand.u32 %v2179, 4294901760
      %3267 = vmatmul.f32.gmra.mxu0 %v3266
      %v3268 = vpop.f32.mrf.mxu0
      %v3269 = vadd.f32 %v3122, %v3268
      %v3270 = vand.u32 %v2182, 4294901760
      %3271 = vmatmul.f32.gmra.mxu0 %v3270
      %v3272 = vpop.f32.mrf.mxu0
      %v3273 = vadd.f32 %v3126, %v3272
      %v3274 = vand.u32 %v2185, 4294901760
      %3275 = vmatmul.f32.gmra.mxu0 %v3274
      %v3276 = vpop.f32.mrf.mxu0
      %v3277 = vadd.f32 %v3130, %v3276
      %v3278 = vand.u32 %v2188, 4294901760
      %3279 = vmatmul.f32.gmra.mxu0 %v3278
      %v3280 = vpop.f32.mrf.mxu0
      %v3281 = vadd.f32 %v3134, %v3280
      %v3282 = vand.u32 %v2191, 4294901760
      %3283 = vmatmul.f32.gmra.mxu0 %v3282
      %v3284 = vpop.f32.mrf.mxu0
      %v3285 = vadd.f32 %v3138, %v3284
      %v3286 = vand.u32 %v2194, 4294901760
      %3287 = vmatmul.f32.gmra.mxu0 %v3286
      %v3288 = vpop.f32.mrf.mxu0
      %v3289 = vadd.f32 %v3142, %v3288
      %v3290 = vand.u32 %v2197, 4294901760
      %3291 = vmatmul.f32.gmra.mxu0 %v3290
      %v3292 = vpop.f32.mrf.mxu0
      %v3293 = vadd.f32 %v3146, %v3292
      %v3294 = vand.u32 %v2200, 4294901760
      %3295 = vmatmul.f32.gmra.mxu0 %v3294
      %v3296 = vpop.f32.mrf.mxu0
      %v3297 = vadd.f32 %v3150, %v3296
      %v3298 = vand.u32 %v2203, 4294901760
      %3299 = vmatmul.f32.gmra.mxu0 %v3298
      %v3300 = vpop.f32.mrf.mxu0
      %v3301 = vadd.f32 %v3154, %v3300
      %v3302 = vand.u32 %v2206, 4294901760
      %3303 = vmatmul.f32.gmra.mxu0 %v3302
      %v3304 = vpop.f32.mrf.mxu0
      %v3305 = vadd.f32 %v3158, %v3304
      %v3306 = vand.u32 %v2209, 4294901760
      %3307 = vmatmul.f32.gmra.mxu0 %v3306
      %v3308 = vpop.f32.mrf.mxu0
      %v3309 = vadd.f32 %v3162, %v3308
      %v3310 = vand.u32 %v2212, 4294901760
      %3311 = vmatmul.f32.gmra.mxu0 %v3310
      %v3312 = vpop.f32.mrf.mxu0
      %v3313 = vadd.f32 %v3166, %v3312
      %v3314 = vand.u32 %v2215, 4294901760
      %3315 = vmatmul.f32.gmra.mxu0 %v3314
      %v3316 = vpop.f32.mrf.mxu0
      %v3317 = vadd.f32 %v3170, %v3316
      %v3318 = vand.u32 %v2218, 4294901760
      %3319 = vmatmul.f32.gmra.mxu0 %v3318
      %v3320 = vpop.f32.mrf.mxu0
      %v3321 = vadd.f32 %v3174, %v3320
      %v3322 = vand.u32 %v2221, 4294901760
      %3323 = vmatmul.f32.gmra.mxu0 %v3322
      %v3324 = vpop.f32.mrf.mxu0
      %v3325 = vadd.f32 %v3178, %v3324
      %v3326 = vand.u32 %v2224, 4294901760
      %3327 = vmatmul.f32.gmra.mxu0 %v3326
      %v3328 = vpop.f32.mrf.mxu0
      %v3329 = vadd.f32 %v3182, %v3328
      %v3330 = vand.u32 %v2227, 4294901760
      %3331 = vmatmul.f32.gmra.mxu0 %v3330
      %v3332 = vpop.f32.mrf.mxu0
      %v3333 = vadd.f32 %v3186, %v3332
      %v3334 = vand.u32 %v2230, 4294901760
      %3335 = vmatmul.f32.gmra.mxu0 %v3334
      %v3336 = vpop.f32.mrf.mxu0
      %v3337 = vadd.f32 %v3190, %v3336
      %v3338 = vand.u32 %v2233, 4294901760
      %3339 = vmatmul.f32.gmra.mxu0 %v3338
      %v3340 = vpop.f32.mrf.mxu0
      %v3341 = vadd.f32 %v3194, %v3340
      %v3342 = vand.u32 %v2236, 4294901760
      %3343 = vmatmul.f32.gmra.mxu0 %v3342
      %v3344 = vpop.f32.mrf.mxu0
      %v3345 = vadd.f32 %v3198, %v3344
      %v3346 = vand.u32 %v2239, 4294901760
      %3347 = vmatmul.f32.gmra.mxu0 %v3346
      %v3348 = vpop.f32.mrf.mxu0
      %v3349 = vadd.f32 %v3202, %v3348
      %v3350 = vand.u32 %v2242, 4294901760
      %3351 = vmatmul.f32.gmra.mxu0 %v3350
      %v3352 = vpop.f32.mrf.mxu0
      %v3353 = vadd.f32 %v3206, %v3352
      %v3354 = vand.u32 %v2245, 4294901760
      %3355 = vmatmul.f32.gmra.mxu0 %v3354
      %v3356 = vpop.f32.mrf.mxu0
      %v3357 = vadd.f32 %v3210, %v3356
      %v3358 = vand.u32 %v2248, 4294901760
      %3359 = vmatmul.f32.gmra.mxu0 %v3358
      %v3360 = vpop.f32.mrf.mxu0
      %v3361 = vadd.f32 %v3214, %v3360
      %v3362 = vand.u32 %v2251, 4294901760
      %3363 = vmatmul.f32.gmra.mxu0 %v3362
      %v3364 = vpop.f32.mrf.mxu0
      %v3365 = vadd.f32 %v3218, %v3364
      %v3366 = vand.u32 %v2254, 4294901760
      %3367 = vmatmul.f32.gmra.mxu0 %v3366
      %v3368 = vpop.f32.mrf.mxu0
      %v3369 = vadd.f32 %v3222, %v3368
      %v3370 = vand.u32 %v2257, 4294901760
      %3371 = vmatmul.f32.gmra.mxu0 %v3370
      %v3372 = vpop.f32.mrf.mxu0
      %v3373 = vadd.f32 %v3226, %v3372
      %v3374 = vand.u32 %v2260, 4294901760
      %3375 = vmatmul.f32.gmra.mxu0 %v3374
      %v3376 = vpop.f32.mrf.mxu0
      %v3377 = vadd.f32 %v3230, %v3376
      %v3378 = vand.u32 %v2263, 4294901760
      %3379 = vmatmul.f32.gmra.mxu0 %v3378
      %v3380 = vpop.f32.mrf.mxu0
      %v3381 = vadd.f32 %v3234, %v3380
      %v3382 = vand.u32 %v2266, 4294901760
      %3383 = vmatmul.f32.gmra.mxu0 %v3382
      %v3384 = vpop.f32.mrf.mxu0
      %v3385 = vadd.f32 %v3238, %v3384
      %v3386 = vand.u32 %v2269, 4294901760
      %3387 = vmatmul.f32.gmra.mxu0 %v3386
      %v3388 = vpop.f32.mrf.mxu0
      %v3389 = vadd.f32 %v3242, %v3388
      %3390 = vdwg.mxu0
      %3423 = vrot.lane.b32.xlu0 %v3265, 32
      %v3424 = vpop.permute.xlu0 %3423
      %3425 = vrot.lane.b32.xlu0 %v3269, 32
      %v3426 = vpop.permute.xlu0 %3425
      %3427 = vrot.lane.b32.xlu0 %v3273, 32
      %v3428 = vpop.permute.xlu0 %3427
      %3429 = vrot.lane.b32.xlu0 %v3277, 32
      %v3430 = vpop.permute.xlu0 %3429
      %3431 = vrot.lane.b32.xlu0 %v3281, 32
      %v3432 = vpop.permute.xlu0 %3431
      %3433 = vrot.lane.b32.xlu0 %v3285, 32
      %v3434 = vpop.permute.xlu0 %3433
      %3435 = vrot.lane.b32.xlu0 %v3289, 32
      %v3436 = vpop.permute.xlu0 %3435
      %3437 = vrot.lane.b32.xlu0 %v3293, 32
      %v3438 = vpop.permute.xlu0 %3437
      %3439 = vrot.lane.b32.xlu0 %v3297, 32
      %v3440 = vpop.permute.xlu0 %3439
      %3441 = vrot.lane.b32.xlu0 %v3301, 32
      %v3442 = vpop.permute.xlu0 %3441
      %3443 = vrot.lane.b32.xlu0 %v3305, 32
      %v3444 = vpop.permute.xlu0 %3443
      %3445 = vrot.lane.b32.xlu0 %v3309, 32
      %v3446 = vpop.permute.xlu0 %3445
      %3447 = vrot.lane.b32.xlu0 %v3313, 32
      %v3448 = vpop.permute.xlu0 %3447
      %3449 = vrot.lane.b32.xlu0 %v3317, 32
      %v3450 = vpop.permute.xlu0 %3449
      %3451 = vrot.lane.b32.xlu0 %v3321, 32
      %v3452 = vpop.permute.xlu0 %3451
      %3453 = vrot.lane.b32.xlu0 %v3325, 32
      %v3454 = vpop.permute.xlu0 %3453
      %3455 = vrot.lane.b32.xlu0 %v3329, 32
      %v3456 = vpop.permute.xlu0 %3455
      %3457 = vrot.lane.b32.xlu0 %v3333, 32
      %v3458 = vpop.permute.xlu0 %3457
      %3459 = vrot.lane.b32.xlu0 %v3337, 32
      %v3460 = vpop.permute.xlu0 %3459
      %3461 = vrot.lane.b32.xlu0 %v3341, 32
      %v3462 = vpop.permute.xlu0 %3461
      %3463 = vrot.lane.b32.xlu0 %v3345, 32
      %v3464 = vpop.permute.xlu0 %3463
      %3465 = vrot.lane.b32.xlu0 %v3349, 32
      %v3466 = vpop.permute.xlu0 %3465
      %3467 = vrot.lane.b32.xlu0 %v3353, 32
      %v3468 = vpop.permute.xlu0 %3467
      %3469 = vrot.lane.b32.xlu0 %v3357, 32
      %v3470 = vpop.permute.xlu0 %3469
      %3471 = vrot.lane.b32.xlu0 %v3361, 32
      %v3472 = vpop.permute.xlu0 %3471
      %3473 = vrot.lane.b32.xlu0 %v3365, 32
      %v3474 = vpop.permute.xlu0 %3473
      %3475 = vrot.lane.b32.xlu0 %v3369, 32
      %v3476 = vpop.permute.xlu0 %3475
      %3477 = vrot.lane.b32.xlu0 %v3373, 32
      %v3478 = vpop.permute.xlu0 %3477
      %3479 = vrot.lane.b32.xlu0 %v3377, 32
      %v3480 = vpop.permute.xlu0 %3479
      %3481 = vrot.lane.b32.xlu0 %v3381, 32
      %v3482 = vpop.permute.xlu0 %3481
      %3483 = vrot.lane.b32.xlu0 %v3385, 32
      %v3484 = vpop.permute.xlu0 %3483
      %3485 = vrot.lane.b32.xlu0 %v3389, 32
      %v3486 = vpop.permute.xlu0 %3485
      %vm3519 = vcmask 261120
      %v3520 = vsel %vm3519, %v2049, %v3424
      %v3521 = vsel %vm3519, %v2053, %v3426
      %v3522 = vsel %vm3519, %v2057, %v3428
      %v3523 = vsel %vm3519, %v2061, %v3430
      %v3524 = vsel %vm3519, %v2065, %v3432
      %v3525 = vsel %vm3519, %v2069, %v3434
      %v3526 = vsel %vm3519, %v2073, %v3436
      %v3527 = vsel %vm3519, %v2077, %v3438
      %v3528 = vsel %vm3519, %v2081, %v3440
      %v3529 = vsel %vm3519, %v2085, %v3442
      %v3530 = vsel %vm3519, %v2089, %v3444
      %v3531 = vsel %vm3519, %v2093, %v3446
      %v3532 = vsel %vm3519, %v2097, %v3448
      %v3533 = vsel %vm3519, %v2101, %v3450
      %v3534 = vsel %vm3519, %v2105, %v3452
      %v3535 = vsel %vm3519, %v2109, %v3454
      %v3536 = vsel %vm3519, %v2113, %v3456
      %v3537 = vsel %vm3519, %v2117, %v3458
      %v3538 = vsel %vm3519, %v2121, %v3460
      %v3539 = vsel %vm3519, %v2125, %v3462
      %v3540 = vsel %vm3519, %v2129, %v3464
      %v3541 = vsel %vm3519, %v2133, %v3466
      %v3542 = vsel %vm3519, %v2137, %v3468
      %v3543 = vsel %vm3519, %v2141, %v3470
      %v3544 = vsel %vm3519, %v2145, %v3472
      %v3545 = vsel %vm3519, %v2149, %v3474
      %v3546 = vsel %vm3519, %v2153, %v3476
      %v3547 = vsel %vm3519, %v2157, %v3478
      %v3548 = vsel %vm3519, %v2161, %v3480
      %v3549 = vsel %vm3519, %v2165, %v3482
      %v3550 = vsel %vm3519, %v2169, %v3484
      %v3551 = vsel %vm3519, %v2173, %v3486
      %v3552 = vld [vmem:[%s4] sm:$0xff]
      %v3553 = vld [vmem:[%s4 + $0x8] sm:$0xff]
      %v3554 = vld [vmem:[%s4 + $0x10] sm:$0xff]
      %v3555 = vld [vmem:[%s4 + $0x18] sm:$0xff]
      %v3556 = vld [vmem:[%s4 + $0x20] sm:$0xff]
      %v3557 = vld [vmem:[%s4 + $0x28] sm:$0xff]
      %v3558 = vld [vmem:[%s4 + $0x30] sm:$0xff]
      %v3559 = vld [vmem:[%s4 + $0x38] sm:$0xff]
      %v3560 = vld [vmem:[%s5] sm:$0x1]
      %v3562 = vperm.slane %v3560, 0
      %vm3564 = vcmask 523264
      %v3566 = vsel %vm3564, %v3520, 0
      %v3569 = vsel %vm3564, %v3521, 0
      %v3572 = vsel %vm3564, %v3522, 0
      %v3575 = vsel %vm3564, %v3523, 0
      %v3578 = vsel %vm3564, %v3524, 0
      %v3581 = vsel %vm3564, %v3525, 0
      %v3584 = vsel %vm3564, %v3526, 0
      %v3587 = vsel %vm3564, %v3527, 0
      %v3590 = vsel %vm3564, %v3528, 0
      %v3593 = vsel %vm3564, %v3529, 0
      %v3596 = vsel %vm3564, %v3530, 0
      %v3599 = vsel %vm3564, %v3531, 0
      %v3602 = vsel %vm3564, %v3532, 0
      %v3605 = vsel %vm3564, %v3533, 0
      %v3608 = vsel %vm3564, %v3534, 0
      %v3611 = vsel %vm3564, %v3535, 0
      %v3614 = vsel %vm3564, %v3536, 0
      %v3617 = vsel %vm3564, %v3537, 0
      %v3620 = vsel %vm3564, %v3538, 0
      %v3623 = vsel %vm3564, %v3539, 0
      %v3626 = vsel %vm3564, %v3540, 0
      %v3629 = vsel %vm3564, %v3541, 0
      %v3632 = vsel %vm3564, %v3542, 0
      %v3635 = vsel %vm3564, %v3543, 0
      %v3638 = vsel %vm3564, %v3544, 0
      %v3641 = vsel %vm3564, %v3545, 0
      %v3644 = vsel %vm3564, %v3546, 0
      %v3647 = vsel %vm3564, %v3547, 0
      %v3650 = vsel %vm3564, %v3548, 0
      %v3653 = vsel %vm3564, %v3549, 0
      %v3656 = vsel %vm3564, %v3550, 0
      %v3659 = vsel %vm3564, %v3551, 0
      %3661 = vmatpush.msra.mxu0 0.0
      %3662 = vmatpush.msra.mxu0 0.0
      %3663 = vmatpush.msra.mxu0 0.0
      %3664 = vmatpush.msra.mxu0 0.0
      %3665 = vmatpush.msra.mxu0 0.0
      %3666 = vmatpush.msra.mxu0 0.0
      %3667 = vmatpush.msra.mxu0 0.0
      %3668 = vmatpush.msra.mxu0 0.0
      %v3669 = vand.u32 %v3559, 4294901760
      %3670 = vmatpush.msra.mxu0 %v3669
      %v3671 = vand.u32 %v3558, 4294901760
      %3672 = vmatpush.msra.mxu0 %v3671
      %v3673 = vand.u32 %v3557, 4294901760
      %3674 = vmatpush.msra.mxu0 %v3673
      %v3675 = vand.u32 %v3556, 4294901760
      %3676 = vmatpush.msra.mxu0 %v3675
      %v3677 = vand.u32 %v3555, 4294901760
      %3678 = vmatpush.msra.mxu0 %v3677
      %v3679 = vand.u32 %v3554, 4294901760
      %3680 = vmatpush.msra.mxu0 %v3679
      %v3681 = vand.u32 %v3553, 4294901760
      %3682 = vmatpush.msra.mxu0 %v3681
      %v3683 = vand.u32 %v3552, 4294901760
      %3684 = vmatpush.msra.mxu0 %v3683
      %v3685 = vand.u32 %v3566, 4294901760
      %v3686 = vsub.f32 %v3566, %v3685
      %v3687 = vand.u32 %v3686, 4294901760
      %v3688 = vsub.f32 %v3686, %v3687
      %v3689 = vand.u32 %v3688, 4294901760
      %3690 = vmatmul.f32.gmra.mxu0 %v3689
      %v3691 = vpop.f32.mrf.mxu0
      %v3692 = vadd.f32 %v3562, %v3691
      %v3693 = vand.u32 %v3569, 4294901760
      %v3694 = vsub.f32 %v3569, %v3693
      %v3695 = vand.u32 %v3694, 4294901760
      %v3696 = vsub.f32 %v3694, %v3695
      %v3697 = vand.u32 %v3696, 4294901760
      %3698 = vmatmul.f32.gmra.mxu0 %v3697
      %v3699 = vpop.f32.mrf.mxu0
      %v3700 = vadd.f32 %v3562, %v3699
      %v3701 = vand.u32 %v3572, 4294901760
      %v3702 = vsub.f32 %v3572, %v3701
      %v3703 = vand.u32 %v3702, 4294901760
      %v3704 = vsub.f32 %v3702, %v3703
      %v3705 = vand.u32 %v3704, 4294901760
      %3706 = vmatmul.f32.gmra.mxu0 %v3705
      %v3707 = vpop.f32.mrf.mxu0
      %v3708 = vadd.f32 %v3562, %v3707
      %v3709 = vand.u32 %v3575, 4294901760
      %v3710 = vsub.f32 %v3575, %v3709
      %v3711 = vand.u32 %v3710, 4294901760
      %v3712 = vsub.f32 %v3710, %v3711
      %v3713 = vand.u32 %v3712, 4294901760
      %3714 = vmatmul.f32.gmra.mxu0 %v3713
      %v3715 = vpop.f32.mrf.mxu0
      %v3716 = vadd.f32 %v3562, %v3715
      %v3717 = vand.u32 %v3578, 4294901760
      %v3718 = vsub.f32 %v3578, %v3717
      %v3719 = vand.u32 %v3718, 4294901760
      %v3720 = vsub.f32 %v3718, %v3719
      %v3721 = vand.u32 %v3720, 4294901760
      %3722 = vmatmul.f32.gmra.mxu0 %v3721
      %v3723 = vpop.f32.mrf.mxu0
      %v3724 = vadd.f32 %v3562, %v3723
      %v3725 = vand.u32 %v3581, 4294901760
      %v3726 = vsub.f32 %v3581, %v3725
      %v3727 = vand.u32 %v3726, 4294901760
      %v3728 = vsub.f32 %v3726, %v3727
      %v3729 = vand.u32 %v3728, 4294901760
      %3730 = vmatmul.f32.gmra.mxu0 %v3729
      %v3731 = vpop.f32.mrf.mxu0
      %v3732 = vadd.f32 %v3562, %v3731
      %v3733 = vand.u32 %v3584, 4294901760
      %v3734 = vsub.f32 %v3584, %v3733
      %v3735 = vand.u32 %v3734, 4294901760
      %v3736 = vsub.f32 %v3734, %v3735
      %v3737 = vand.u32 %v3736, 4294901760
      %3738 = vmatmul.f32.gmra.mxu0 %v3737
      %v3739 = vpop.f32.mrf.mxu0
      %v3740 = vadd.f32 %v3562, %v3739
      %v3741 = vand.u32 %v3587, 4294901760
      %v3742 = vsub.f32 %v3587, %v3741
      %v3743 = vand.u32 %v3742, 4294901760
      %v3744 = vsub.f32 %v3742, %v3743
      %v3745 = vand.u32 %v3744, 4294901760
      %3746 = vmatmul.f32.gmra.mxu0 %v3745
      %v3747 = vpop.f32.mrf.mxu0
      %v3748 = vadd.f32 %v3562, %v3747
      %v3749 = vand.u32 %v3590, 4294901760
      %v3750 = vsub.f32 %v3590, %v3749
      %v3751 = vand.u32 %v3750, 4294901760
      %v3752 = vsub.f32 %v3750, %v3751
      %v3753 = vand.u32 %v3752, 4294901760
      %3754 = vmatmul.f32.gmra.mxu0 %v3753
      %v3755 = vpop.f32.mrf.mxu0
      %v3756 = vadd.f32 %v3562, %v3755
      %v3757 = vand.u32 %v3593, 4294901760
      %v3758 = vsub.f32 %v3593, %v3757
      %v3759 = vand.u32 %v3758, 4294901760
      %v3760 = vsub.f32 %v3758, %v3759
      %v3761 = vand.u32 %v3760, 4294901760
      %3762 = vmatmul.f32.gmra.mxu0 %v3761
      %v3763 = vpop.f32.mrf.mxu0
      %v3764 = vadd.f32 %v3562, %v3763
      %v3765 = vand.u32 %v3596, 4294901760
      %v3766 = vsub.f32 %v3596, %v3765
      %v3767 = vand.u32 %v3766, 4294901760
      %v3768 = vsub.f32 %v3766, %v3767
      %v3769 = vand.u32 %v3768, 4294901760
      %3770 = vmatmul.f32.gmra.mxu0 %v3769
      %v3771 = vpop.f32.mrf.mxu0
      %v3772 = vadd.f32 %v3562, %v3771
      %v3773 = vand.u32 %v3599, 4294901760
      %v3774 = vsub.f32 %v3599, %v3773
      %v3775 = vand.u32 %v3774, 4294901760
      %v3776 = vsub.f32 %v3774, %v3775
      %v3777 = vand.u32 %v3776, 4294901760
      %3778 = vmatmul.f32.gmra.mxu0 %v3777
      %v3779 = vpop.f32.mrf.mxu0
      %v3780 = vadd.f32 %v3562, %v3779
      %v3781 = vand.u32 %v3602, 4294901760
      %v3782 = vsub.f32 %v3602, %v3781
      %v3783 = vand.u32 %v3782, 4294901760
      %v3784 = vsub.f32 %v3782, %v3783
      %v3785 = vand.u32 %v3784, 4294901760
      %3786 = vmatmul.f32.gmra.mxu0 %v3785
      %v3787 = vpop.f32.mrf.mxu0
      %v3788 = vadd.f32 %v3562, %v3787
      %v3789 = vand.u32 %v3605, 4294901760
      %v3790 = vsub.f32 %v3605, %v3789
      %v3791 = vand.u32 %v3790, 4294901760
      %v3792 = vsub.f32 %v3790, %v3791
      %v3793 = vand.u32 %v3792, 4294901760
      %3794 = vmatmul.f32.gmra.mxu0 %v3793
      %v3795 = vpop.f32.mrf.mxu0
      %v3796 = vadd.f32 %v3562, %v3795
      %v3797 = vand.u32 %v3608, 4294901760
      %v3798 = vsub.f32 %v3608, %v3797
      %v3799 = vand.u32 %v3798, 4294901760
      %v3800 = vsub.f32 %v3798, %v3799
      %v3801 = vand.u32 %v3800, 4294901760
      %3802 = vmatmul.f32.gmra.mxu0 %v3801
      %v3803 = vpop.f32.mrf.mxu0
      %v3804 = vadd.f32 %v3562, %v3803
      %v3805 = vand.u32 %v3611, 4294901760
      %v3806 = vsub.f32 %v3611, %v3805
      %v3807 = vand.u32 %v3806, 4294901760
      %v3808 = vsub.f32 %v3806, %v3807
      %v3809 = vand.u32 %v3808, 4294901760
      %3810 = vmatmul.f32.gmra.mxu0 %v3809
      %v3811 = vpop.f32.mrf.mxu0
      %v3812 = vadd.f32 %v3562, %v3811
      %v3813 = vand.u32 %v3614, 4294901760
      %v3814 = vsub.f32 %v3614, %v3813
      %v3815 = vand.u32 %v3814, 4294901760
      %v3816 = vsub.f32 %v3814, %v3815
      %v3817 = vand.u32 %v3816, 4294901760
      %3818 = vmatmul.f32.gmra.mxu0 %v3817
      %v3819 = vpop.f32.mrf.mxu0
      %v3820 = vadd.f32 %v3562, %v3819
      %v3821 = vand.u32 %v3617, 4294901760
      %v3822 = vsub.f32 %v3617, %v3821
      %v3823 = vand.u32 %v3822, 4294901760
      %v3824 = vsub.f32 %v3822, %v3823
      %v3825 = vand.u32 %v3824, 4294901760
      %3826 = vmatmul.f32.gmra.mxu0 %v3825
      %v3827 = vpop.f32.mrf.mxu0
      %v3828 = vadd.f32 %v3562, %v3827
      %v3829 = vand.u32 %v3620, 4294901760
      %v3830 = vsub.f32 %v3620, %v3829
      %v3831 = vand.u32 %v3830, 4294901760
      %v3832 = vsub.f32 %v3830, %v3831
      %v3833 = vand.u32 %v3832, 4294901760
      %3834 = vmatmul.f32.gmra.mxu0 %v3833
      %v3835 = vpop.f32.mrf.mxu0
      %v3836 = vadd.f32 %v3562, %v3835
      %v3837 = vand.u32 %v3623, 4294901760
      %v3838 = vsub.f32 %v3623, %v3837
      %v3839 = vand.u32 %v3838, 4294901760
      %v3840 = vsub.f32 %v3838, %v3839
      %v3841 = vand.u32 %v3840, 4294901760
      %3842 = vmatmul.f32.gmra.mxu0 %v3841
      %v3843 = vpop.f32.mrf.mxu0
      %v3844 = vadd.f32 %v3562, %v3843
      %v3845 = vand.u32 %v3626, 4294901760
      %v3846 = vsub.f32 %v3626, %v3845
      %v3847 = vand.u32 %v3846, 4294901760
      %v3848 = vsub.f32 %v3846, %v3847
      %v3849 = vand.u32 %v3848, 4294901760
      %3850 = vmatmul.f32.gmra.mxu0 %v3849
      %v3851 = vpop.f32.mrf.mxu0
      %v3852 = vadd.f32 %v3562, %v3851
      %v3853 = vand.u32 %v3629, 4294901760
      %v3854 = vsub.f32 %v3629, %v3853
      %v3855 = vand.u32 %v3854, 4294901760
      %v3856 = vsub.f32 %v3854, %v3855
      %v3857 = vand.u32 %v3856, 4294901760
      %3858 = vmatmul.f32.gmra.mxu0 %v3857
      %v3859 = vpop.f32.mrf.mxu0
      %v3860 = vadd.f32 %v3562, %v3859
      %v3861 = vand.u32 %v3632, 4294901760
      %v3862 = vsub.f32 %v3632, %v3861
      %v3863 = vand.u32 %v3862, 4294901760
      %v3864 = vsub.f32 %v3862, %v3863
      %v3865 = vand.u32 %v3864, 4294901760
      %3866 = vmatmul.f32.gmra.mxu0 %v3865
      %v3867 = vpop.f32.mrf.mxu0
      %v3868 = vadd.f32 %v3562, %v3867
      %v3869 = vand.u32 %v3635, 4294901760
      %v3870 = vsub.f32 %v3635, %v3869
      %v3871 = vand.u32 %v3870, 4294901760
      %v3872 = vsub.f32 %v3870, %v3871
      %v3873 = vand.u32 %v3872, 4294901760
      %3874 = vmatmul.f32.gmra.mxu0 %v3873
      %v3875 = vpop.f32.mrf.mxu0
      %v3876 = vadd.f32 %v3562, %v3875
      %v3877 = vand.u32 %v3638, 4294901760
      %v3878 = vsub.f32 %v3638, %v3877
      %v3879 = vand.u32 %v3878, 4294901760
      %v3880 = vsub.f32 %v3878, %v3879
      %v3881 = vand.u32 %v3880, 4294901760
      %3882 = vmatmul.f32.gmra.mxu0 %v3881
      %v3883 = vpop.f32.mrf.mxu0
      %v3884 = vadd.f32 %v3562, %v3883
      %v3885 = vand.u32 %v3641, 4294901760
      %v3886 = vsub.f32 %v3641, %v3885
      %v3887 = vand.u32 %v3886, 4294901760
      %v3888 = vsub.f32 %v3886, %v3887
      %v3889 = vand.u32 %v3888, 4294901760
      %3890 = vmatmul.f32.gmra.mxu0 %v3889
      %v3891 = vpop.f32.mrf.mxu0
      %v3892 = vadd.f32 %v3562, %v3891
      %v3893 = vand.u32 %v3644, 4294901760
      %v3894 = vsub.f32 %v3644, %v3893
      %v3895 = vand.u32 %v3894, 4294901760
      %v3896 = vsub.f32 %v3894, %v3895
      %v3897 = vand.u32 %v3896, 4294901760
      %3898 = vmatmul.f32.gmra.mxu0 %v3897
      %v3899 = vpop.f32.mrf.mxu0
      %v3900 = vadd.f32 %v3562, %v3899
      %v3901 = vand.u32 %v3647, 4294901760
      %v3902 = vsub.f32 %v3647, %v3901
      %v3903 = vand.u32 %v3902, 4294901760
      %v3904 = vsub.f32 %v3902, %v3903
      %v3905 = vand.u32 %v3904, 4294901760
      %3906 = vmatmul.f32.gmra.mxu0 %v3905
      %v3907 = vpop.f32.mrf.mxu0
      %v3908 = vadd.f32 %v3562, %v3907
      %v3909 = vand.u32 %v3650, 4294901760
      %v3910 = vsub.f32 %v3650, %v3909
      %v3911 = vand.u32 %v3910, 4294901760
      %v3912 = vsub.f32 %v3910, %v3911
      %v3913 = vand.u32 %v3912, 4294901760
      %3914 = vmatmul.f32.gmra.mxu0 %v3913
      %v3915 = vpop.f32.mrf.mxu0
      %v3916 = vadd.f32 %v3562, %v3915
      %v3917 = vand.u32 %v3653, 4294901760
      %v3918 = vsub.f32 %v3653, %v3917
      %v3919 = vand.u32 %v3918, 4294901760
      %v3920 = vsub.f32 %v3918, %v3919
      %v3921 = vand.u32 %v3920, 4294901760
      %3922 = vmatmul.f32.gmra.mxu0 %v3921
      %v3923 = vpop.f32.mrf.mxu0
      %v3924 = vadd.f32 %v3562, %v3923
      %v3925 = vand.u32 %v3656, 4294901760
      %v3926 = vsub.f32 %v3656, %v3925
      %v3927 = vand.u32 %v3926, 4294901760
      %v3928 = vsub.f32 %v3926, %v3927
      %v3929 = vand.u32 %v3928, 4294901760
      %3930 = vmatmul.f32.gmra.mxu0 %v3929
      %v3931 = vpop.f32.mrf.mxu0
      %v3932 = vadd.f32 %v3562, %v3931
      %v3933 = vand.u32 %v3659, 4294901760
      %v3934 = vsub.f32 %v3659, %v3933
      %v3935 = vand.u32 %v3934, 4294901760
      %v3936 = vsub.f32 %v3934, %v3935
      %v3937 = vand.u32 %v3936, 4294901760
      %3938 = vmatmul.f32.gmra.mxu0 %v3937
      %v3939 = vpop.f32.mrf.mxu0
      %v3940 = vadd.f32 %v3562, %v3939
      %3941 = vdwg.mxu0
      %3942 = vmatpush.msra.mxu0 0.0
      %3943 = vmatpush.msra.mxu0 0.0
      %3944 = vmatpush.msra.mxu0 0.0
      %3945 = vmatpush.msra.mxu0 0.0
      %3946 = vmatpush.msra.mxu0 0.0
      %3947 = vmatpush.msra.mxu0 0.0
      %3948 = vmatpush.msra.mxu0 0.0
      %3949 = vmatpush.msra.mxu0 0.0
      %v3950 = vand.u32 %v3559, 4294901760
      %v3951 = vsub.f32 %v3559, %v3950
      %v3952 = vand.u32 %v3951, 4294901760
      %v3953 = vsub.f32 %v3951, %v3952
      %v3954 = vand.u32 %v3953, 4294901760
      %3955 = vmatpush.msra.mxu0 %v3954
      %v3956 = vand.u32 %v3558, 4294901760
      %v3957 = vsub.f32 %v3558, %v3956
      %v3958 = vand.u32 %v3957, 4294901760
      %v3959 = vsub.f32 %v3957, %v3958
      %v3960 = vand.u32 %v3959, 4294901760
      %3961 = vmatpush.msra.mxu0 %v3960
      %v3962 = vand.u32 %v3557, 4294901760
      %v3963 = vsub.f32 %v3557, %v3962
      %v3964 = vand.u32 %v3963, 4294901760
      %v3965 = vsub.f32 %v3963, %v3964
      %v3966 = vand.u32 %v3965, 4294901760
      %3967 = vmatpush.msra.mxu0 %v3966
      %v3968 = vand.u32 %v3556, 4294901760
      %v3969 = vsub.f32 %v3556, %v3968
      %v3970 = vand.u32 %v3969, 4294901760
      %v3971 = vsub.f32 %v3969, %v3970
      %v3972 = vand.u32 %v3971, 4294901760
      %3973 = vmatpush.msra.mxu0 %v3972
      %v3974 = vand.u32 %v3555, 4294901760
      %v3975 = vsub.f32 %v3555, %v3974
      %v3976 = vand.u32 %v3975, 4294901760
      %v3977 = vsub.f32 %v3975, %v3976
      %v3978 = vand.u32 %v3977, 4294901760
      %3979 = vmatpush.msra.mxu0 %v3978
      %v3980 = vand.u32 %v3554, 4294901760
      %v3981 = vsub.f32 %v3554, %v3980
      %v3982 = vand.u32 %v3981, 4294901760
      %v3983 = vsub.f32 %v3981, %v3982
      %v3984 = vand.u32 %v3983, 4294901760
      %3985 = vmatpush.msra.mxu0 %v3984
      %v3986 = vand.u32 %v3553, 4294901760
      %v3987 = vsub.f32 %v3553, %v3986
      %v3988 = vand.u32 %v3987, 4294901760
      %v3989 = vsub.f32 %v3987, %v3988
      %v3990 = vand.u32 %v3989, 4294901760
      %3991 = vmatpush.msra.mxu0 %v3990
      %v3992 = vand.u32 %v3552, 4294901760
      %v3993 = vsub.f32 %v3552, %v3992
      %v3994 = vand.u32 %v3993, 4294901760
      %v3995 = vsub.f32 %v3993, %v3994
      %v3996 = vand.u32 %v3995, 4294901760
      %3997 = vmatpush.msra.mxu0 %v3996
      %v3998 = vand.u32 %v3566, 4294901760
      %3999 = vmatmul.f32.gmra.mxu0 %v3998
      %v4000 = vpop.f32.mrf.mxu0
      %v4001 = vadd.f32 %v3692, %v4000
      %v4002 = vand.u32 %v3569, 4294901760
      %4003 = vmatmul.f32.gmra.mxu0 %v4002
      %v4004 = vpop.f32.mrf.mxu0
      %v4005 = vadd.f32 %v3700, %v4004
      %v4006 = vand.u32 %v3572, 4294901760
      %4007 = vmatmul.f32.gmra.mxu0 %v4006
      %v4008 = vpop.f32.mrf.mxu0
      %v4009 = vadd.f32 %v3708, %v4008
      %v4010 = vand.u32 %v3575, 4294901760
      %4011 = vmatmul.f32.gmra.mxu0 %v4010
      %v4012 = vpop.f32.mrf.mxu0
      %v4013 = vadd.f32 %v3716, %v4012
      %v4014 = vand.u32 %v3578, 4294901760
      %4015 = vmatmul.f32.gmra.mxu0 %v4014
      %v4016 = vpop.f32.mrf.mxu0
      %v4017 = vadd.f32 %v3724, %v4016
      %v4018 = vand.u32 %v3581, 4294901760
      %4019 = vmatmul.f32.gmra.mxu0 %v4018
      %v4020 = vpop.f32.mrf.mxu0
      %v4021 = vadd.f32 %v3732, %v4020
      %v4022 = vand.u32 %v3584, 4294901760
      %4023 = vmatmul.f32.gmra.mxu0 %v4022
      %v4024 = vpop.f32.mrf.mxu0
      %v4025 = vadd.f32 %v3740, %v4024
      %v4026 = vand.u32 %v3587, 4294901760
      %4027 = vmatmul.f32.gmra.mxu0 %v4026
      %v4028 = vpop.f32.mrf.mxu0
      %v4029 = vadd.f32 %v3748, %v4028
      %v4030 = vand.u32 %v3590, 4294901760
      %4031 = vmatmul.f32.gmra.mxu0 %v4030
      %v4032 = vpop.f32.mrf.mxu0
      %v4033 = vadd.f32 %v3756, %v4032
      %v4034 = vand.u32 %v3593, 4294901760
      %4035 = vmatmul.f32.gmra.mxu0 %v4034
      %v4036 = vpop.f32.mrf.mxu0
      %v4037 = vadd.f32 %v3764, %v4036
      %v4038 = vand.u32 %v3596, 4294901760
      %4039 = vmatmul.f32.gmra.mxu0 %v4038
      %v4040 = vpop.f32.mrf.mxu0
      %v4041 = vadd.f32 %v3772, %v4040
      %v4042 = vand.u32 %v3599, 4294901760
      %4043 = vmatmul.f32.gmra.mxu0 %v4042
      %v4044 = vpop.f32.mrf.mxu0
      %v4045 = vadd.f32 %v3780, %v4044
      %v4046 = vand.u32 %v3602, 4294901760
      %4047 = vmatmul.f32.gmra.mxu0 %v4046
      %v4048 = vpop.f32.mrf.mxu0
      %v4049 = vadd.f32 %v3788, %v4048
      %v4050 = vand.u32 %v3605, 4294901760
      %4051 = vmatmul.f32.gmra.mxu0 %v4050
      %v4052 = vpop.f32.mrf.mxu0
      %v4053 = vadd.f32 %v3796, %v4052
      %v4054 = vand.u32 %v3608, 4294901760
      %4055 = vmatmul.f32.gmra.mxu0 %v4054
      %v4056 = vpop.f32.mrf.mxu0
      %v4057 = vadd.f32 %v3804, %v4056
      %v4058 = vand.u32 %v3611, 4294901760
      %4059 = vmatmul.f32.gmra.mxu0 %v4058
      %v4060 = vpop.f32.mrf.mxu0
      %v4061 = vadd.f32 %v3812, %v4060
      %v4062 = vand.u32 %v3614, 4294901760
      %4063 = vmatmul.f32.gmra.mxu0 %v4062
      %v4064 = vpop.f32.mrf.mxu0
      %v4065 = vadd.f32 %v3820, %v4064
      %v4066 = vand.u32 %v3617, 4294901760
      %4067 = vmatmul.f32.gmra.mxu0 %v4066
      %v4068 = vpop.f32.mrf.mxu0
      %v4069 = vadd.f32 %v3828, %v4068
      %v4070 = vand.u32 %v3620, 4294901760
      %4071 = vmatmul.f32.gmra.mxu0 %v4070
      %v4072 = vpop.f32.mrf.mxu0
      %v4073 = vadd.f32 %v3836, %v4072
      %v4074 = vand.u32 %v3623, 4294901760
      %4075 = vmatmul.f32.gmra.mxu0 %v4074
      %v4076 = vpop.f32.mrf.mxu0
      %v4077 = vadd.f32 %v3844, %v4076
      %v4078 = vand.u32 %v3626, 4294901760
      %4079 = vmatmul.f32.gmra.mxu0 %v4078
      %v4080 = vpop.f32.mrf.mxu0
      %v4081 = vadd.f32 %v3852, %v4080
      %v4082 = vand.u32 %v3629, 4294901760
      %4083 = vmatmul.f32.gmra.mxu0 %v4082
      %v4084 = vpop.f32.mrf.mxu0
      %v4085 = vadd.f32 %v3860, %v4084
      %v4086 = vand.u32 %v3632, 4294901760
      %4087 = vmatmul.f32.gmra.mxu0 %v4086
      %v4088 = vpop.f32.mrf.mxu0
      %v4089 = vadd.f32 %v3868, %v4088
      %v4090 = vand.u32 %v3635, 4294901760
      %4091 = vmatmul.f32.gmra.mxu0 %v4090
      %v4092 = vpop.f32.mrf.mxu0
      %v4093 = vadd.f32 %v3876, %v4092
      %v4094 = vand.u32 %v3638, 4294901760
      %4095 = vmatmul.f32.gmra.mxu0 %v4094
      %v4096 = vpop.f32.mrf.mxu0
      %v4097 = vadd.f32 %v3884, %v4096
      %v4098 = vand.u32 %v3641, 4294901760
      %4099 = vmatmul.f32.gmra.mxu0 %v4098
      %v4100 = vpop.f32.mrf.mxu0
      %v4101 = vadd.f32 %v3892, %v4100
      %v4102 = vand.u32 %v3644, 4294901760
      %4103 = vmatmul.f32.gmra.mxu0 %v4102
      %v4104 = vpop.f32.mrf.mxu0
      %v4105 = vadd.f32 %v3900, %v4104
      %v4106 = vand.u32 %v3647, 4294901760
      %4107 = vmatmul.f32.gmra.mxu0 %v4106
      %v4108 = vpop.f32.mrf.mxu0
      %v4109 = vadd.f32 %v3908, %v4108
      %v4110 = vand.u32 %v3650, 4294901760
      %4111 = vmatmul.f32.gmra.mxu0 %v4110
      %v4112 = vpop.f32.mrf.mxu0
      %v4113 = vadd.f32 %v3916, %v4112
      %v4114 = vand.u32 %v3653, 4294901760
      %4115 = vmatmul.f32.gmra.mxu0 %v4114
      %v4116 = vpop.f32.mrf.mxu0
      %v4117 = vadd.f32 %v3924, %v4116
      %v4118 = vand.u32 %v3656, 4294901760
      %4119 = vmatmul.f32.gmra.mxu0 %v4118
      %v4120 = vpop.f32.mrf.mxu0
      %v4121 = vadd.f32 %v3932, %v4120
      %v4122 = vand.u32 %v3659, 4294901760
      %4123 = vmatmul.f32.gmra.mxu0 %v4122
      %v4124 = vpop.f32.mrf.mxu0
      %v4125 = vadd.f32 %v3940, %v4124
      %4126 = vdwg.mxu0
      %4127 = vmatpush.msra.mxu0 0.0
      %4128 = vmatpush.msra.mxu0 0.0
      %4129 = vmatpush.msra.mxu0 0.0
      %4130 = vmatpush.msra.mxu0 0.0
      %4131 = vmatpush.msra.mxu0 0.0
      %4132 = vmatpush.msra.mxu0 0.0
      %4133 = vmatpush.msra.mxu0 0.0
      %4134 = vmatpush.msra.mxu0 0.0
      %v4135 = vand.u32 %v3559, 4294901760
      %v4136 = vsub.f32 %v3559, %v4135
      %4137 = vmatpush.msra.mxu0 %v4136
      %v4138 = vand.u32 %v3558, 4294901760
      %v4139 = vsub.f32 %v3558, %v4138
      %4140 = vmatpush.msra.mxu0 %v4139
      %v4141 = vand.u32 %v3557, 4294901760
      %v4142 = vsub.f32 %v3557, %v4141
      %4143 = vmatpush.msra.mxu0 %v4142
      %v4144 = vand.u32 %v3556, 4294901760
      %v4145 = vsub.f32 %v3556, %v4144
      %4146 = vmatpush.msra.mxu0 %v4145
      %v4147 = vand.u32 %v3555, 4294901760
      %v4148 = vsub.f32 %v3555, %v4147
      %4149 = vmatpush.msra.mxu0 %v4148
      %v4150 = vand.u32 %v3554, 4294901760
      %v4151 = vsub.f32 %v3554, %v4150
      %4152 = vmatpush.msra.mxu0 %v4151
      %v4153 = vand.u32 %v3553, 4294901760
      %v4154 = vsub.f32 %v3553, %v4153
      %4155 = vmatpush.msra.mxu0 %v4154
      %v4156 = vand.u32 %v3552, 4294901760
      %v4157 = vsub.f32 %v3552, %v4156
      %4158 = vmatpush.msra.mxu0 %v4157
      %v4159 = vand.u32 %v3566, 4294901760
      %v4160 = vsub.f32 %v3566, %v4159
      %4161 = vmatmul.f32.gmra.mxu0 %v4160
      %v4162 = vpop.f32.mrf.mxu0
      %v4163 = vadd.f32 %v4001, %v4162
      %v4164 = vand.u32 %v3569, 4294901760
      %v4165 = vsub.f32 %v3569, %v4164
      %4166 = vmatmul.f32.gmra.mxu0 %v4165
      %v4167 = vpop.f32.mrf.mxu0
      %v4168 = vadd.f32 %v4005, %v4167
      %v4169 = vand.u32 %v3572, 4294901760
      %v4170 = vsub.f32 %v3572, %v4169
      %4171 = vmatmul.f32.gmra.mxu0 %v4170
      %v4172 = vpop.f32.mrf.mxu0
      %v4173 = vadd.f32 %v4009, %v4172
      %v4174 = vand.u32 %v3575, 4294901760
      %v4175 = vsub.f32 %v3575, %v4174
      %4176 = vmatmul.f32.gmra.mxu0 %v4175
      %v4177 = vpop.f32.mrf.mxu0
      %v4178 = vadd.f32 %v4013, %v4177
      %v4179 = vand.u32 %v3578, 4294901760
      %v4180 = vsub.f32 %v3578, %v4179
      %4181 = vmatmul.f32.gmra.mxu0 %v4180
      %v4182 = vpop.f32.mrf.mxu0
      %v4183 = vadd.f32 %v4017, %v4182
      %v4184 = vand.u32 %v3581, 4294901760
      %v4185 = vsub.f32 %v3581, %v4184
      %4186 = vmatmul.f32.gmra.mxu0 %v4185
      %v4187 = vpop.f32.mrf.mxu0
      %v4188 = vadd.f32 %v4021, %v4187
      %v4189 = vand.u32 %v3584, 4294901760
      %v4190 = vsub.f32 %v3584, %v4189
      %4191 = vmatmul.f32.gmra.mxu0 %v4190
      %v4192 = vpop.f32.mrf.mxu0
      %v4193 = vadd.f32 %v4025, %v4192
      %v4194 = vand.u32 %v3587, 4294901760
      %v4195 = vsub.f32 %v3587, %v4194
      %4196 = vmatmul.f32.gmra.mxu0 %v4195
      %v4197 = vpop.f32.mrf.mxu0
      %v4198 = vadd.f32 %v4029, %v4197
      %v4199 = vand.u32 %v3590, 4294901760
      %v4200 = vsub.f32 %v3590, %v4199
      %4201 = vmatmul.f32.gmra.mxu0 %v4200
      %v4202 = vpop.f32.mrf.mxu0
      %v4203 = vadd.f32 %v4033, %v4202
      %v4204 = vand.u32 %v3593, 4294901760
      %v4205 = vsub.f32 %v3593, %v4204
      %4206 = vmatmul.f32.gmra.mxu0 %v4205
      %v4207 = vpop.f32.mrf.mxu0
      %v4208 = vadd.f32 %v4037, %v4207
      %v4209 = vand.u32 %v3596, 4294901760
      %v4210 = vsub.f32 %v3596, %v4209
      %4211 = vmatmul.f32.gmra.mxu0 %v4210
      %v4212 = vpop.f32.mrf.mxu0
      %v4213 = vadd.f32 %v4041, %v4212
      %v4214 = vand.u32 %v3599, 4294901760
      %v4215 = vsub.f32 %v3599, %v4214
      %4216 = vmatmul.f32.gmra.mxu0 %v4215
      %v4217 = vpop.f32.mrf.mxu0
      %v4218 = vadd.f32 %v4045, %v4217
      %v4219 = vand.u32 %v3602, 4294901760
      %v4220 = vsub.f32 %v3602, %v4219
      %4221 = vmatmul.f32.gmra.mxu0 %v4220
      %v4222 = vpop.f32.mrf.mxu0
      %v4223 = vadd.f32 %v4049, %v4222
      %v4224 = vand.u32 %v3605, 4294901760
      %v4225 = vsub.f32 %v3605, %v4224
      %4226 = vmatmul.f32.gmra.mxu0 %v4225
      %v4227 = vpop.f32.mrf.mxu0
      %v4228 = vadd.f32 %v4053, %v4227
      %v4229 = vand.u32 %v3608, 4294901760
      %v4230 = vsub.f32 %v3608, %v4229
      %4231 = vmatmul.f32.gmra.mxu0 %v4230
      %v4232 = vpop.f32.mrf.mxu0
      %v4233 = vadd.f32 %v4057, %v4232
      %v4234 = vand.u32 %v3611, 4294901760
      %v4235 = vsub.f32 %v3611, %v4234
      %4236 = vmatmul.f32.gmra.mxu0 %v4235
      %v4237 = vpop.f32.mrf.mxu0
      %v4238 = vadd.f32 %v4061, %v4237
      %v4239 = vand.u32 %v3614, 4294901760
      %v4240 = vsub.f32 %v3614, %v4239
      %4241 = vmatmul.f32.gmra.mxu0 %v4240
      %v4242 = vpop.f32.mrf.mxu0
      %v4243 = vadd.f32 %v4065, %v4242
      %v4244 = vand.u32 %v3617, 4294901760
      %v4245 = vsub.f32 %v3617, %v4244
      %4246 = vmatmul.f32.gmra.mxu0 %v4245
      %v4247 = vpop.f32.mrf.mxu0
      %v4248 = vadd.f32 %v4069, %v4247
      %v4249 = vand.u32 %v3620, 4294901760
      %v4250 = vsub.f32 %v3620, %v4249
      %4251 = vmatmul.f32.gmra.mxu0 %v4250
      %v4252 = vpop.f32.mrf.mxu0
      %v4253 = vadd.f32 %v4073, %v4252
      %v4254 = vand.u32 %v3623, 4294901760
      %v4255 = vsub.f32 %v3623, %v4254
      %4256 = vmatmul.f32.gmra.mxu0 %v4255
      %v4257 = vpop.f32.mrf.mxu0
      %v4258 = vadd.f32 %v4077, %v4257
      %v4259 = vand.u32 %v3626, 4294901760
      %v4260 = vsub.f32 %v3626, %v4259
      %4261 = vmatmul.f32.gmra.mxu0 %v4260
      %v4262 = vpop.f32.mrf.mxu0
      %v4263 = vadd.f32 %v4081, %v4262
      %v4264 = vand.u32 %v3629, 4294901760
      %v4265 = vsub.f32 %v3629, %v4264
      %4266 = vmatmul.f32.gmra.mxu0 %v4265
      %v4267 = vpop.f32.mrf.mxu0
      %v4268 = vadd.f32 %v4085, %v4267
      %v4269 = vand.u32 %v3632, 4294901760
      %v4270 = vsub.f32 %v3632, %v4269
      %4271 = vmatmul.f32.gmra.mxu0 %v4270
      %v4272 = vpop.f32.mrf.mxu0
      %v4273 = vadd.f32 %v4089, %v4272
      %v4274 = vand.u32 %v3635, 4294901760
      %v4275 = vsub.f32 %v3635, %v4274
      %4276 = vmatmul.f32.gmra.mxu0 %v4275
      %v4277 = vpop.f32.mrf.mxu0
      %v4278 = vadd.f32 %v4093, %v4277
      %v4279 = vand.u32 %v3638, 4294901760
      %v4280 = vsub.f32 %v3638, %v4279
      %4281 = vmatmul.f32.gmra.mxu0 %v4280
      %v4282 = vpop.f32.mrf.mxu0
      %v4283 = vadd.f32 %v4097, %v4282
      %v4284 = vand.u32 %v3641, 4294901760
      %v4285 = vsub.f32 %v3641, %v4284
      %4286 = vmatmul.f32.gmra.mxu0 %v4285
      %v4287 = vpop.f32.mrf.mxu0
      %v4288 = vadd.f32 %v4101, %v4287
      %v4289 = vand.u32 %v3644, 4294901760
      %v4290 = vsub.f32 %v3644, %v4289
      %4291 = vmatmul.f32.gmra.mxu0 %v4290
      %v4292 = vpop.f32.mrf.mxu0
      %v4293 = vadd.f32 %v4105, %v4292
      %v4294 = vand.u32 %v3647, 4294901760
      %v4295 = vsub.f32 %v3647, %v4294
      %4296 = vmatmul.f32.gmra.mxu0 %v4295
      %v4297 = vpop.f32.mrf.mxu0
      %v4298 = vadd.f32 %v4109, %v4297
      %v4299 = vand.u32 %v3650, 4294901760
      %v4300 = vsub.f32 %v3650, %v4299
      %4301 = vmatmul.f32.gmra.mxu0 %v4300
      %v4302 = vpop.f32.mrf.mxu0
      %v4303 = vadd.f32 %v4113, %v4302
      %v4304 = vand.u32 %v3653, 4294901760
      %v4305 = vsub.f32 %v3653, %v4304
      %4306 = vmatmul.f32.gmra.mxu0 %v4305
      %v4307 = vpop.f32.mrf.mxu0
      %v4308 = vadd.f32 %v4117, %v4307
      %v4309 = vand.u32 %v3656, 4294901760
      %v4310 = vsub.f32 %v3656, %v4309
      %4311 = vmatmul.f32.gmra.mxu0 %v4310
      %v4312 = vpop.f32.mrf.mxu0
      %v4313 = vadd.f32 %v4121, %v4312
      %v4314 = vand.u32 %v3659, 4294901760
      %v4315 = vsub.f32 %v3659, %v4314
      %4316 = vmatmul.f32.gmra.mxu0 %v4315
      %v4317 = vpop.f32.mrf.mxu0
      %v4318 = vadd.f32 %v4125, %v4317
      %4319 = vdwg.mxu0
      %4320 = vmatpush.msra.mxu0 0.0
      %4321 = vmatpush.msra.mxu0 0.0
      %4322 = vmatpush.msra.mxu0 0.0
      %4323 = vmatpush.msra.mxu0 0.0
      %4324 = vmatpush.msra.mxu0 0.0
      %4325 = vmatpush.msra.mxu0 0.0
      %4326 = vmatpush.msra.mxu0 0.0
      %4327 = vmatpush.msra.mxu0 0.0
      %v4328 = vand.u32 %v3559, 4294901760
      %4329 = vmatpush.msra.mxu0 %v4328
      %v4330 = vand.u32 %v3558, 4294901760
      %4331 = vmatpush.msra.mxu0 %v4330
      %v4332 = vand.u32 %v3557, 4294901760
      %4333 = vmatpush.msra.mxu0 %v4332
      %v4334 = vand.u32 %v3556, 4294901760
      %4335 = vmatpush.msra.mxu0 %v4334
      %v4336 = vand.u32 %v3555, 4294901760
      %4337 = vmatpush.msra.mxu0 %v4336
      %v4338 = vand.u32 %v3554, 4294901760
      %4339 = vmatpush.msra.mxu0 %v4338
      %v4340 = vand.u32 %v3553, 4294901760
      %4341 = vmatpush.msra.mxu0 %v4340
      %v4342 = vand.u32 %v3552, 4294901760
      %4343 = vmatpush.msra.mxu0 %v4342
      %v4344 = vand.u32 %v3566, 4294901760
      %v4345 = vsub.f32 %v3566, %v4344
      %v4346 = vand.u32 %v4345, 4294901760
      %4347 = vmatmul.f32.gmra.mxu0 %v4346
      %v4348 = vpop.f32.mrf.mxu0
      %v4349 = vadd.f32 %v4163, %v4348
      %v4350 = vand.u32 %v3569, 4294901760
      %v4351 = vsub.f32 %v3569, %v4350
      %v4352 = vand.u32 %v4351, 4294901760
      %4353 = vmatmul.f32.gmra.mxu0 %v4352
      %v4354 = vpop.f32.mrf.mxu0
      %v4355 = vadd.f32 %v4168, %v4354
      %v4356 = vand.u32 %v3572, 4294901760
      %v4357 = vsub.f32 %v3572, %v4356
      %v4358 = vand.u32 %v4357, 4294901760
      %4359 = vmatmul.f32.gmra.mxu0 %v4358
      %v4360 = vpop.f32.mrf.mxu0
      %v4361 = vadd.f32 %v4173, %v4360
      %v4362 = vand.u32 %v3575, 4294901760
      %v4363 = vsub.f32 %v3575, %v4362
      %v4364 = vand.u32 %v4363, 4294901760
      %4365 = vmatmul.f32.gmra.mxu0 %v4364
      %v4366 = vpop.f32.mrf.mxu0
      %v4367 = vadd.f32 %v4178, %v4366
      %v4368 = vand.u32 %v3578, 4294901760
      %v4369 = vsub.f32 %v3578, %v4368
      %v4370 = vand.u32 %v4369, 4294901760
      %4371 = vmatmul.f32.gmra.mxu0 %v4370
      %v4372 = vpop.f32.mrf.mxu0
      %v4373 = vadd.f32 %v4183, %v4372
      %v4374 = vand.u32 %v3581, 4294901760
      %v4375 = vsub.f32 %v3581, %v4374
      %v4376 = vand.u32 %v4375, 4294901760
      %4377 = vmatmul.f32.gmra.mxu0 %v4376
      %v4378 = vpop.f32.mrf.mxu0
      %v4379 = vadd.f32 %v4188, %v4378
      %v4380 = vand.u32 %v3584, 4294901760
      %v4381 = vsub.f32 %v3584, %v4380
      %v4382 = vand.u32 %v4381, 4294901760
      %4383 = vmatmul.f32.gmra.mxu0 %v4382
      %v4384 = vpop.f32.mrf.mxu0
      %v4385 = vadd.f32 %v4193, %v4384
      %v4386 = vand.u32 %v3587, 4294901760
      %v4387 = vsub.f32 %v3587, %v4386
      %v4388 = vand.u32 %v4387, 4294901760
      %4389 = vmatmul.f32.gmra.mxu0 %v4388
      %v4390 = vpop.f32.mrf.mxu0
      %v4391 = vadd.f32 %v4198, %v4390
      %v4392 = vand.u32 %v3590, 4294901760
      %v4393 = vsub.f32 %v3590, %v4392
      %v4394 = vand.u32 %v4393, 4294901760
      %4395 = vmatmul.f32.gmra.mxu0 %v4394
      %v4396 = vpop.f32.mrf.mxu0
      %v4397 = vadd.f32 %v4203, %v4396
      %v4398 = vand.u32 %v3593, 4294901760
      %v4399 = vsub.f32 %v3593, %v4398
      %v4400 = vand.u32 %v4399, 4294901760
      %4401 = vmatmul.f32.gmra.mxu0 %v4400
      %v4402 = vpop.f32.mrf.mxu0
      %v4403 = vadd.f32 %v4208, %v4402
      %v4404 = vand.u32 %v3596, 4294901760
      %v4405 = vsub.f32 %v3596, %v4404
      %v4406 = vand.u32 %v4405, 4294901760
      %4407 = vmatmul.f32.gmra.mxu0 %v4406
      %v4408 = vpop.f32.mrf.mxu0
      %v4409 = vadd.f32 %v4213, %v4408
      %v4410 = vand.u32 %v3599, 4294901760
      %v4411 = vsub.f32 %v3599, %v4410
      %v4412 = vand.u32 %v4411, 4294901760
      %4413 = vmatmul.f32.gmra.mxu0 %v4412
      %v4414 = vpop.f32.mrf.mxu0
      %v4415 = vadd.f32 %v4218, %v4414
      %v4416 = vand.u32 %v3602, 4294901760
      %v4417 = vsub.f32 %v3602, %v4416
      %v4418 = vand.u32 %v4417, 4294901760
      %4419 = vmatmul.f32.gmra.mxu0 %v4418
      %v4420 = vpop.f32.mrf.mxu0
      %v4421 = vadd.f32 %v4223, %v4420
      %v4422 = vand.u32 %v3605, 4294901760
      %v4423 = vsub.f32 %v3605, %v4422
      %v4424 = vand.u32 %v4423, 4294901760
      %4425 = vmatmul.f32.gmra.mxu0 %v4424
      %v4426 = vpop.f32.mrf.mxu0
      %v4427 = vadd.f32 %v4228, %v4426
      %v4428 = vand.u32 %v3608, 4294901760
      %v4429 = vsub.f32 %v3608, %v4428
      %v4430 = vand.u32 %v4429, 4294901760
      %4431 = vmatmul.f32.gmra.mxu0 %v4430
      %v4432 = vpop.f32.mrf.mxu0
      %v4433 = vadd.f32 %v4233, %v4432
      %v4434 = vand.u32 %v3611, 4294901760
      %v4435 = vsub.f32 %v3611, %v4434
      %v4436 = vand.u32 %v4435, 4294901760
      %4437 = vmatmul.f32.gmra.mxu0 %v4436
      %v4438 = vpop.f32.mrf.mxu0
      %v4439 = vadd.f32 %v4238, %v4438
      %v4440 = vand.u32 %v3614, 4294901760
      %v4441 = vsub.f32 %v3614, %v4440
      %v4442 = vand.u32 %v4441, 4294901760
      %4443 = vmatmul.f32.gmra.mxu0 %v4442
      %v4444 = vpop.f32.mrf.mxu0
      %v4445 = vadd.f32 %v4243, %v4444
      %v4446 = vand.u32 %v3617, 4294901760
      %v4447 = vsub.f32 %v3617, %v4446
      %v4448 = vand.u32 %v4447, 4294901760
      %4449 = vmatmul.f32.gmra.mxu0 %v4448
      %v4450 = vpop.f32.mrf.mxu0
      %v4451 = vadd.f32 %v4248, %v4450
      %v4452 = vand.u32 %v3620, 4294901760
      %v4453 = vsub.f32 %v3620, %v4452
      %v4454 = vand.u32 %v4453, 4294901760
      %4455 = vmatmul.f32.gmra.mxu0 %v4454
      %v4456 = vpop.f32.mrf.mxu0
      %v4457 = vadd.f32 %v4253, %v4456
      %v4458 = vand.u32 %v3623, 4294901760
      %v4459 = vsub.f32 %v3623, %v4458
      %v4460 = vand.u32 %v4459, 4294901760
      %4461 = vmatmul.f32.gmra.mxu0 %v4460
      %v4462 = vpop.f32.mrf.mxu0
      %v4463 = vadd.f32 %v4258, %v4462
      %v4464 = vand.u32 %v3626, 4294901760
      %v4465 = vsub.f32 %v3626, %v4464
      %v4466 = vand.u32 %v4465, 4294901760
      %4467 = vmatmul.f32.gmra.mxu0 %v4466
      %v4468 = vpop.f32.mrf.mxu0
      %v4469 = vadd.f32 %v4263, %v4468
      %v4470 = vand.u32 %v3629, 4294901760
      %v4471 = vsub.f32 %v3629, %v4470
      %v4472 = vand.u32 %v4471, 4294901760
      %4473 = vmatmul.f32.gmra.mxu0 %v4472
      %v4474 = vpop.f32.mrf.mxu0
      %v4475 = vadd.f32 %v4268, %v4474
      %v4476 = vand.u32 %v3632, 4294901760
      %v4477 = vsub.f32 %v3632, %v4476
      %v4478 = vand.u32 %v4477, 4294901760
      %4479 = vmatmul.f32.gmra.mxu0 %v4478
      %v4480 = vpop.f32.mrf.mxu0
      %v4481 = vadd.f32 %v4273, %v4480
      %v4482 = vand.u32 %v3635, 4294901760
      %v4483 = vsub.f32 %v3635, %v4482
      %v4484 = vand.u32 %v4483, 4294901760
      %4485 = vmatmul.f32.gmra.mxu0 %v4484
      %v4486 = vpop.f32.mrf.mxu0
      %v4487 = vadd.f32 %v4278, %v4486
      %v4488 = vand.u32 %v3638, 4294901760
      %v4489 = vsub.f32 %v3638, %v4488
      %v4490 = vand.u32 %v4489, 4294901760
      %4491 = vmatmul.f32.gmra.mxu0 %v4490
      %v4492 = vpop.f32.mrf.mxu0
      %v4493 = vadd.f32 %v4283, %v4492
      %v4494 = vand.u32 %v3641, 4294901760
      %v4495 = vsub.f32 %v3641, %v4494
      %v4496 = vand.u32 %v4495, 4294901760
      %4497 = vmatmul.f32.gmra.mxu0 %v4496
      %v4498 = vpop.f32.mrf.mxu0
      %v4499 = vadd.f32 %v4288, %v4498
      %v4500 = vand.u32 %v3644, 4294901760
      %v4501 = vsub.f32 %v3644, %v4500
      %v4502 = vand.u32 %v4501, 4294901760
      %4503 = vmatmul.f32.gmra.mxu0 %v4502
      %v4504 = vpop.f32.mrf.mxu0
      %v4505 = vadd.f32 %v4293, %v4504
      %v4506 = vand.u32 %v3647, 4294901760
      %v4507 = vsub.f32 %v3647, %v4506
      %v4508 = vand.u32 %v4507, 4294901760
      %4509 = vmatmul.f32.gmra.mxu0 %v4508
      %v4510 = vpop.f32.mrf.mxu0
      %v4511 = vadd.f32 %v4298, %v4510
      %v4512 = vand.u32 %v3650, 4294901760
      %v4513 = vsub.f32 %v3650, %v4512
      %v4514 = vand.u32 %v4513, 4294901760
      %4515 = vmatmul.f32.gmra.mxu0 %v4514
      %v4516 = vpop.f32.mrf.mxu0
      %v4517 = vadd.f32 %v4303, %v4516
      %v4518 = vand.u32 %v3653, 4294901760
      %v4519 = vsub.f32 %v3653, %v4518
      %v4520 = vand.u32 %v4519, 4294901760
      %4521 = vmatmul.f32.gmra.mxu0 %v4520
      %v4522 = vpop.f32.mrf.mxu0
      %v4523 = vadd.f32 %v4308, %v4522
      %v4524 = vand.u32 %v3656, 4294901760
      %v4525 = vsub.f32 %v3656, %v4524
      %v4526 = vand.u32 %v4525, 4294901760
      %4527 = vmatmul.f32.gmra.mxu0 %v4526
      %v4528 = vpop.f32.mrf.mxu0
      %v4529 = vadd.f32 %v4313, %v4528
      %v4530 = vand.u32 %v3659, 4294901760
      %v4531 = vsub.f32 %v3659, %v4530
      %v4532 = vand.u32 %v4531, 4294901760
      %4533 = vmatmul.f32.gmra.mxu0 %v4532
      %v4534 = vpop.f32.mrf.mxu0
      %v4535 = vadd.f32 %v4318, %v4534
      %4536 = vdwg.mxu0
      %4537 = vmatpush.msra.mxu0 0.0
      %4538 = vmatpush.msra.mxu0 0.0
      %4539 = vmatpush.msra.mxu0 0.0
      %4540 = vmatpush.msra.mxu0 0.0
      %4541 = vmatpush.msra.mxu0 0.0
      %4542 = vmatpush.msra.mxu0 0.0
      %4543 = vmatpush.msra.mxu0 0.0
      %4544 = vmatpush.msra.mxu0 0.0
      %v4545 = vand.u32 %v3559, 4294901760
      %v4546 = vsub.f32 %v3559, %v4545
      %v4547 = vand.u32 %v4546, 4294901760
      %4548 = vmatpush.msra.mxu0 %v4547
      %v4549 = vand.u32 %v3558, 4294901760
      %v4550 = vsub.f32 %v3558, %v4549
      %v4551 = vand.u32 %v4550, 4294901760
      %4552 = vmatpush.msra.mxu0 %v4551
      %v4553 = vand.u32 %v3557, 4294901760
      %v4554 = vsub.f32 %v3557, %v4553
      %v4555 = vand.u32 %v4554, 4294901760
      %4556 = vmatpush.msra.mxu0 %v4555
      %v4557 = vand.u32 %v3556, 4294901760
      %v4558 = vsub.f32 %v3556, %v4557
      %v4559 = vand.u32 %v4558, 4294901760
      %4560 = vmatpush.msra.mxu0 %v4559
      %v4561 = vand.u32 %v3555, 4294901760
      %v4562 = vsub.f32 %v3555, %v4561
      %v4563 = vand.u32 %v4562, 4294901760
      %4564 = vmatpush.msra.mxu0 %v4563
      %v4565 = vand.u32 %v3554, 4294901760
      %v4566 = vsub.f32 %v3554, %v4565
      %v4567 = vand.u32 %v4566, 4294901760
      %4568 = vmatpush.msra.mxu0 %v4567
      %v4569 = vand.u32 %v3553, 4294901760
      %v4570 = vsub.f32 %v3553, %v4569
      %v4571 = vand.u32 %v4570, 4294901760
      %4572 = vmatpush.msra.mxu0 %v4571
      %v4573 = vand.u32 %v3552, 4294901760
      %v4574 = vsub.f32 %v3552, %v4573
      %v4575 = vand.u32 %v4574, 4294901760
      %4576 = vmatpush.msra.mxu0 %v4575
      %v4577 = vand.u32 %v3566, 4294901760
      %4578 = vmatmul.f32.gmra.mxu0 %v4577
      %v4579 = vpop.f32.mrf.mxu0
      %v4580 = vadd.f32 %v4349, %v4579
      %v4581 = vand.u32 %v3569, 4294901760
      %4582 = vmatmul.f32.gmra.mxu0 %v4581
      %v4583 = vpop.f32.mrf.mxu0
      %v4584 = vadd.f32 %v4355, %v4583
      %v4585 = vand.u32 %v3572, 4294901760
      %4586 = vmatmul.f32.gmra.mxu0 %v4585
      %v4587 = vpop.f32.mrf.mxu0
      %v4588 = vadd.f32 %v4361, %v4587
      %v4589 = vand.u32 %v3575, 4294901760
      %4590 = vmatmul.f32.gmra.mxu0 %v4589
      %v4591 = vpop.f32.mrf.mxu0
      %v4592 = vadd.f32 %v4367, %v4591
      %v4593 = vand.u32 %v3578, 4294901760
      %4594 = vmatmul.f32.gmra.mxu0 %v4593
      %v4595 = vpop.f32.mrf.mxu0
      %v4596 = vadd.f32 %v4373, %v4595
      %v4597 = vand.u32 %v3581, 4294901760
      %4598 = vmatmul.f32.gmra.mxu0 %v4597
      %v4599 = vpop.f32.mrf.mxu0
      %v4600 = vadd.f32 %v4379, %v4599
      %v4601 = vand.u32 %v3584, 4294901760
      %4602 = vmatmul.f32.gmra.mxu0 %v4601
      %v4603 = vpop.f32.mrf.mxu0
      %v4604 = vadd.f32 %v4385, %v4603
      %v4605 = vand.u32 %v3587, 4294901760
      %4606 = vmatmul.f32.gmra.mxu0 %v4605
      %v4607 = vpop.f32.mrf.mxu0
      %v4608 = vadd.f32 %v4391, %v4607
      %v4609 = vand.u32 %v3590, 4294901760
      %4610 = vmatmul.f32.gmra.mxu0 %v4609
      %v4611 = vpop.f32.mrf.mxu0
      %v4612 = vadd.f32 %v4397, %v4611
      %v4613 = vand.u32 %v3593, 4294901760
      %4614 = vmatmul.f32.gmra.mxu0 %v4613
      %v4615 = vpop.f32.mrf.mxu0
      %v4616 = vadd.f32 %v4403, %v4615
      %v4617 = vand.u32 %v3596, 4294901760
      %4618 = vmatmul.f32.gmra.mxu0 %v4617
      %v4619 = vpop.f32.mrf.mxu0
      %v4620 = vadd.f32 %v4409, %v4619
      %v4621 = vand.u32 %v3599, 4294901760
      %4622 = vmatmul.f32.gmra.mxu0 %v4621
      %v4623 = vpop.f32.mrf.mxu0
      %v4624 = vadd.f32 %v4415, %v4623
      %v4625 = vand.u32 %v3602, 4294901760
      %4626 = vmatmul.f32.gmra.mxu0 %v4625
      %v4627 = vpop.f32.mrf.mxu0
      %v4628 = vadd.f32 %v4421, %v4627
      %v4629 = vand.u32 %v3605, 4294901760
      %4630 = vmatmul.f32.gmra.mxu0 %v4629
      %v4631 = vpop.f32.mrf.mxu0
      %v4632 = vadd.f32 %v4427, %v4631
      %v4633 = vand.u32 %v3608, 4294901760
      %4634 = vmatmul.f32.gmra.mxu0 %v4633
      %v4635 = vpop.f32.mrf.mxu0
      %v4636 = vadd.f32 %v4433, %v4635
      %v4637 = vand.u32 %v3611, 4294901760
      %4638 = vmatmul.f32.gmra.mxu0 %v4637
      %v4639 = vpop.f32.mrf.mxu0
      %v4640 = vadd.f32 %v4439, %v4639
      %v4641 = vand.u32 %v3614, 4294901760
      %4642 = vmatmul.f32.gmra.mxu0 %v4641
      %v4643 = vpop.f32.mrf.mxu0
      %v4644 = vadd.f32 %v4445, %v4643
      %v4645 = vand.u32 %v3617, 4294901760
      %4646 = vmatmul.f32.gmra.mxu0 %v4645
      %v4647 = vpop.f32.mrf.mxu0
      %v4648 = vadd.f32 %v4451, %v4647
      %v4649 = vand.u32 %v3620, 4294901760
      %4650 = vmatmul.f32.gmra.mxu0 %v4649
      %v4651 = vpop.f32.mrf.mxu0
      %v4652 = vadd.f32 %v4457, %v4651
      %v4653 = vand.u32 %v3623, 4294901760
      %4654 = vmatmul.f32.gmra.mxu0 %v4653
      %v4655 = vpop.f32.mrf.mxu0
      %v4656 = vadd.f32 %v4463, %v4655
      %v4657 = vand.u32 %v3626, 4294901760
      %4658 = vmatmul.f32.gmra.mxu0 %v4657
      %v4659 = vpop.f32.mrf.mxu0
      %v4660 = vadd.f32 %v4469, %v4659
      %v4661 = vand.u32 %v3629, 4294901760
      %4662 = vmatmul.f32.gmra.mxu0 %v4661
      %v4663 = vpop.f32.mrf.mxu0
      %v4664 = vadd.f32 %v4475, %v4663
      %v4665 = vand.u32 %v3632, 4294901760
      %4666 = vmatmul.f32.gmra.mxu0 %v4665
      %v4667 = vpop.f32.mrf.mxu0
      %v4668 = vadd.f32 %v4481, %v4667
      %v4669 = vand.u32 %v3635, 4294901760
      %4670 = vmatmul.f32.gmra.mxu0 %v4669
      %v4671 = vpop.f32.mrf.mxu0
      %v4672 = vadd.f32 %v4487, %v4671
      %v4673 = vand.u32 %v3638, 4294901760
      %4674 = vmatmul.f32.gmra.mxu0 %v4673
      %v4675 = vpop.f32.mrf.mxu0
      %v4676 = vadd.f32 %v4493, %v4675
      %v4677 = vand.u32 %v3641, 4294901760
      %4678 = vmatmul.f32.gmra.mxu0 %v4677
      %v4679 = vpop.f32.mrf.mxu0
      %v4680 = vadd.f32 %v4499, %v4679
      %v4681 = vand.u32 %v3644, 4294901760
      %4682 = vmatmul.f32.gmra.mxu0 %v4681
      %v4683 = vpop.f32.mrf.mxu0
      %v4684 = vadd.f32 %v4505, %v4683
      %v4685 = vand.u32 %v3647, 4294901760
      %4686 = vmatmul.f32.gmra.mxu0 %v4685
      %v4687 = vpop.f32.mrf.mxu0
      %v4688 = vadd.f32 %v4511, %v4687
      %v4689 = vand.u32 %v3650, 4294901760
      %4690 = vmatmul.f32.gmra.mxu0 %v4689
      %v4691 = vpop.f32.mrf.mxu0
      %v4692 = vadd.f32 %v4517, %v4691
      %v4693 = vand.u32 %v3653, 4294901760
      %4694 = vmatmul.f32.gmra.mxu0 %v4693
      %v4695 = vpop.f32.mrf.mxu0
      %v4696 = vadd.f32 %v4523, %v4695
      %v4697 = vand.u32 %v3656, 4294901760
      %4698 = vmatmul.f32.gmra.mxu0 %v4697
      %v4699 = vpop.f32.mrf.mxu0
      %v4700 = vadd.f32 %v4529, %v4699
      %v4701 = vand.u32 %v3659, 4294901760
      %4702 = vmatmul.f32.gmra.mxu0 %v4701
      %v4703 = vpop.f32.mrf.mxu0
      %v4704 = vadd.f32 %v4535, %v4703
      %4705 = vdwg.mxu0
      %4706 = vmatpush.msra.mxu0 0.0
      %4707 = vmatpush.msra.mxu0 0.0
      %4708 = vmatpush.msra.mxu0 0.0
      %4709 = vmatpush.msra.mxu0 0.0
      %4710 = vmatpush.msra.mxu0 0.0
      %4711 = vmatpush.msra.mxu0 0.0
      %4712 = vmatpush.msra.mxu0 0.0
      %4713 = vmatpush.msra.mxu0 0.0
      %v4714 = vand.u32 %v3559, 4294901760
      %4715 = vmatpush.msra.mxu0 %v4714
      %v4716 = vand.u32 %v3558, 4294901760
      %4717 = vmatpush.msra.mxu0 %v4716
      %v4718 = vand.u32 %v3557, 4294901760
      %4719 = vmatpush.msra.mxu0 %v4718
      %v4720 = vand.u32 %v3556, 4294901760
      %4721 = vmatpush.msra.mxu0 %v4720
      %v4722 = vand.u32 %v3555, 4294901760
      %4723 = vmatpush.msra.mxu0 %v4722
      %v4724 = vand.u32 %v3554, 4294901760
      %4725 = vmatpush.msra.mxu0 %v4724
      %v4726 = vand.u32 %v3553, 4294901760
      %4727 = vmatpush.msra.mxu0 %v4726
      %v4728 = vand.u32 %v3552, 4294901760
      %4729 = vmatpush.msra.mxu0 %v4728
      %v4730 = vand.u32 %v3566, 4294901760
      %4731 = vmatmul.f32.gmra.mxu0 %v4730
      %v4732 = vpop.f32.mrf.mxu0
      %v4733 = vadd.f32 %v4580, %v4732
      %v4734 = vand.u32 %v3569, 4294901760
      %4735 = vmatmul.f32.gmra.mxu0 %v4734
      %v4736 = vpop.f32.mrf.mxu0
      %v4737 = vadd.f32 %v4584, %v4736
      %v4738 = vand.u32 %v3572, 4294901760
      %4739 = vmatmul.f32.gmra.mxu0 %v4738
      %v4740 = vpop.f32.mrf.mxu0
      %v4741 = vadd.f32 %v4588, %v4740
      %v4742 = vand.u32 %v3575, 4294901760
      %4743 = vmatmul.f32.gmra.mxu0 %v4742
      %v4744 = vpop.f32.mrf.mxu0
      %v4745 = vadd.f32 %v4592, %v4744
      %v4746 = vand.u32 %v3578, 4294901760
      %4747 = vmatmul.f32.gmra.mxu0 %v4746
      %v4748 = vpop.f32.mrf.mxu0
      %v4749 = vadd.f32 %v4596, %v4748
      %v4750 = vand.u32 %v3581, 4294901760
      %4751 = vmatmul.f32.gmra.mxu0 %v4750
      %v4752 = vpop.f32.mrf.mxu0
      %v4753 = vadd.f32 %v4600, %v4752
      %v4754 = vand.u32 %v3584, 4294901760
      %4755 = vmatmul.f32.gmra.mxu0 %v4754
      %v4756 = vpop.f32.mrf.mxu0
      %v4757 = vadd.f32 %v4604, %v4756
      %v4758 = vand.u32 %v3587, 4294901760
      %4759 = vmatmul.f32.gmra.mxu0 %v4758
      %v4760 = vpop.f32.mrf.mxu0
      %v4761 = vadd.f32 %v4608, %v4760
      %v4762 = vand.u32 %v3590, 4294901760
      %4763 = vmatmul.f32.gmra.mxu0 %v4762
      %v4764 = vpop.f32.mrf.mxu0
      %v4765 = vadd.f32 %v4612, %v4764
      %v4766 = vand.u32 %v3593, 4294901760
      %4767 = vmatmul.f32.gmra.mxu0 %v4766
      %v4768 = vpop.f32.mrf.mxu0
      %v4769 = vadd.f32 %v4616, %v4768
      %v4770 = vand.u32 %v3596, 4294901760
      %4771 = vmatmul.f32.gmra.mxu0 %v4770
      %v4772 = vpop.f32.mrf.mxu0
      %v4773 = vadd.f32 %v4620, %v4772
      %v4774 = vand.u32 %v3599, 4294901760
      %4775 = vmatmul.f32.gmra.mxu0 %v4774
      %v4776 = vpop.f32.mrf.mxu0
      %v4777 = vadd.f32 %v4624, %v4776
      %v4778 = vand.u32 %v3602, 4294901760
      %4779 = vmatmul.f32.gmra.mxu0 %v4778
      %v4780 = vpop.f32.mrf.mxu0
      %v4781 = vadd.f32 %v4628, %v4780
      %v4782 = vand.u32 %v3605, 4294901760
      %4783 = vmatmul.f32.gmra.mxu0 %v4782
      %v4784 = vpop.f32.mrf.mxu0
      %v4785 = vadd.f32 %v4632, %v4784
      %v4786 = vand.u32 %v3608, 4294901760
      %4787 = vmatmul.f32.gmra.mxu0 %v4786
      %v4788 = vpop.f32.mrf.mxu0
      %v4789 = vadd.f32 %v4636, %v4788
      %v4790 = vand.u32 %v3611, 4294901760
      %4791 = vmatmul.f32.gmra.mxu0 %v4790
      %v4792 = vpop.f32.mrf.mxu0
      %v4793 = vadd.f32 %v4640, %v4792
      %v4794 = vand.u32 %v3614, 4294901760
      %4795 = vmatmul.f32.gmra.mxu0 %v4794
      %v4796 = vpop.f32.mrf.mxu0
      %v4797 = vadd.f32 %v4644, %v4796
      %v4798 = vand.u32 %v3617, 4294901760
      %4799 = vmatmul.f32.gmra.mxu0 %v4798
      %v4800 = vpop.f32.mrf.mxu0
      %v4801 = vadd.f32 %v4648, %v4800
      %v4802 = vand.u32 %v3620, 4294901760
      %4803 = vmatmul.f32.gmra.mxu0 %v4802
      %v4804 = vpop.f32.mrf.mxu0
      %v4805 = vadd.f32 %v4652, %v4804
      %v4806 = vand.u32 %v3623, 4294901760
      %4807 = vmatmul.f32.gmra.mxu0 %v4806
      %v4808 = vpop.f32.mrf.mxu0
      %v4809 = vadd.f32 %v4656, %v4808
      %v4810 = vand.u32 %v3626, 4294901760
      %4811 = vmatmul.f32.gmra.mxu0 %v4810
      %v4812 = vpop.f32.mrf.mxu0
      %v4813 = vadd.f32 %v4660, %v4812
      %v4814 = vand.u32 %v3629, 4294901760
      %4815 = vmatmul.f32.gmra.mxu0 %v4814
      %v4816 = vpop.f32.mrf.mxu0
      %v4817 = vadd.f32 %v4664, %v4816
      %v4818 = vand.u32 %v3632, 4294901760
      %4819 = vmatmul.f32.gmra.mxu0 %v4818
      %v4820 = vpop.f32.mrf.mxu0
      %v4821 = vadd.f32 %v4668, %v4820
      %v4822 = vand.u32 %v3635, 4294901760
      %4823 = vmatmul.f32.gmra.mxu0 %v4822
      %v4824 = vpop.f32.mrf.mxu0
      %v4825 = vadd.f32 %v4672, %v4824
      %v4826 = vand.u32 %v3638, 4294901760
      %4827 = vmatmul.f32.gmra.mxu0 %v4826
      %v4828 = vpop.f32.mrf.mxu0
      %v4829 = vadd.f32 %v4676, %v4828
      %v4830 = vand.u32 %v3641, 4294901760
      %4831 = vmatmul.f32.gmra.mxu0 %v4830
      %v4832 = vpop.f32.mrf.mxu0
      %v4833 = vadd.f32 %v4680, %v4832
      %v4834 = vand.u32 %v3644, 4294901760
      %4835 = vmatmul.f32.gmra.mxu0 %v4834
      %v4836 = vpop.f32.mrf.mxu0
      %v4837 = vadd.f32 %v4684, %v4836
      %v4838 = vand.u32 %v3647, 4294901760
      %4839 = vmatmul.f32.gmra.mxu0 %v4838
      %v4840 = vpop.f32.mrf.mxu0
      %v4841 = vadd.f32 %v4688, %v4840
      %v4842 = vand.u32 %v3650, 4294901760
      %4843 = vmatmul.f32.gmra.mxu0 %v4842
      %v4844 = vpop.f32.mrf.mxu0
      %v4845 = vadd.f32 %v4692, %v4844
      %v4846 = vand.u32 %v3653, 4294901760
      %4847 = vmatmul.f32.gmra.mxu0 %v4846
      %v4848 = vpop.f32.mrf.mxu0
      %v4849 = vadd.f32 %v4696, %v4848
      %v4850 = vand.u32 %v3656, 4294901760
      %4851 = vmatmul.f32.gmra.mxu0 %v4850
      %v4852 = vpop.f32.mrf.mxu0
      %v4853 = vadd.f32 %v4700, %v4852
      %v4854 = vand.u32 %v3659, 4294901760
      %4855 = vmatmul.f32.gmra.mxu0 %v4854
      %v4856 = vpop.f32.mrf.mxu0
      %v4857 = vadd.f32 %v4704, %v4856
      %4858 = vdwg.mxu0
      %v4859 = vmax.f32 %v4733, 0.0
      %v4860 = vmax.f32 %v4737, 0.0
      %v4861 = vmax.f32 %v4741, 0.0
      %v4862 = vmax.f32 %v4745, 0.0
      %v4863 = vmax.f32 %v4749, 0.0
      %v4864 = vmax.f32 %v4753, 0.0
      %v4865 = vmax.f32 %v4757, 0.0
      %v4866 = vmax.f32 %v4761, 0.0
      %v4867 = vmax.f32 %v4765, 0.0
      %v4868 = vmax.f32 %v4769, 0.0
      %v4869 = vmax.f32 %v4773, 0.0
      %v4870 = vmax.f32 %v4777, 0.0
      %v4871 = vmax.f32 %v4781, 0.0
      %v4872 = vmax.f32 %v4785, 0.0
      %v4873 = vmax.f32 %v4789, 0.0
      %v4874 = vmax.f32 %v4793, 0.0
      %v4875 = vmax.f32 %v4797, 0.0
      %v4876 = vmax.f32 %v4801, 0.0
      %v4877 = vmax.f32 %v4805, 0.0
      %v4878 = vmax.f32 %v4809, 0.0
      %v4879 = vmax.f32 %v4813, 0.0
      %v4880 = vmax.f32 %v4817, 0.0
      %v4881 = vmax.f32 %v4821, 0.0
      %v4882 = vmax.f32 %v4825, 0.0
      %v4883 = vmax.f32 %v4829, 0.0
      %v4884 = vmax.f32 %v4833, 0.0
      %v4885 = vmax.f32 %v4837, 0.0
      %v4886 = vmax.f32 %v4841, 0.0
      %v4887 = vmax.f32 %v4845, 0.0
      %v4888 = vmax.f32 %v4849, 0.0
      %v4889 = vmax.f32 %v4853, 0.0
      %v4890 = vmax.f32 %v4857, 0.0
      %v4891 = vld [vmem:[%s6] sm:$0xff]
      %v4892 = vld [vmem:[%s6 + $0x8] sm:$0xff]
      %v4893 = vld [vmem:[%s6 + $0x10] sm:$0xff]
      %v4894 = vld [vmem:[%s6 + $0x18] sm:$0xff]
      %v4895 = vld [vmem:[%s6 + $0x20] sm:$0xff]
      %v4896 = vld [vmem:[%s6 + $0x28] sm:$0xff]
      %v4897 = vld [vmem:[%s6 + $0x30] sm:$0xff]
      %v4898 = vld [vmem:[%s6 + $0x38] sm:$0xff]
      %v4899 = vld [vmem:[%s7] sm:$0x1]
      %v4901 = vperm.slane %v4899, 0
      %v4904 = vsel %vm3564, %v4859, 0
      %v4907 = vsel %vm3564, %v4860, 0
      %v4910 = vsel %vm3564, %v4861, 0
      %v4913 = vsel %vm3564, %v4862, 0
      %v4916 = vsel %vm3564, %v4863, 0
      %v4919 = vsel %vm3564, %v4864, 0
      %v4922 = vsel %vm3564, %v4865, 0
      %v4925 = vsel %vm3564, %v4866, 0
      %v4928 = vsel %vm3564, %v4867, 0
      %v4931 = vsel %vm3564, %v4868, 0
      %v4934 = vsel %vm3564, %v4869, 0
      %v4937 = vsel %vm3564, %v4870, 0
      %v4940 = vsel %vm3564, %v4871, 0
      %v4943 = vsel %vm3564, %v4872, 0
      %v4946 = vsel %vm3564, %v4873, 0
      %v4949 = vsel %vm3564, %v4874, 0
      %v4952 = vsel %vm3564, %v4875, 0
      %v4955 = vsel %vm3564, %v4876, 0
      %v4958 = vsel %vm3564, %v4877, 0
      %v4961 = vsel %vm3564, %v4878, 0
      %v4964 = vsel %vm3564, %v4879, 0
      %v4967 = vsel %vm3564, %v4880, 0
      %v4970 = vsel %vm3564, %v4881, 0
      %v4973 = vsel %vm3564, %v4882, 0
      %v4976 = vsel %vm3564, %v4883, 0
      %v4979 = vsel %vm3564, %v4884, 0
      %v4982 = vsel %vm3564, %v4885, 0
      %v4985 = vsel %vm3564, %v4886, 0
      %v4988 = vsel %vm3564, %v4887, 0
      %v4991 = vsel %vm3564, %v4888, 0
      %v4994 = vsel %vm3564, %v4889, 0
      %v4997 = vsel %vm3564, %v4890, 0
      %4999 = vmatpush.msra.mxu0 0.0
      %5000 = vmatpush.msra.mxu0 0.0
      %5001 = vmatpush.msra.mxu0 0.0
      %5002 = vmatpush.msra.mxu0 0.0
      %5003 = vmatpush.msra.mxu0 0.0
      %5004 = vmatpush.msra.mxu0 0.0
      %5005 = vmatpush.msra.mxu0 0.0
      %5006 = vmatpush.msra.mxu0 0.0
      %v5007 = vand.u32 %v4898, 4294901760
      %5008 = vmatpush.msra.mxu0 %v5007
      %v5009 = vand.u32 %v4897, 4294901760
      %5010 = vmatpush.msra.mxu0 %v5009
      %v5011 = vand.u32 %v4896, 4294901760
      %5012 = vmatpush.msra.mxu0 %v5011
      %v5013 = vand.u32 %v4895, 4294901760
      %5014 = vmatpush.msra.mxu0 %v5013
      %v5015 = vand.u32 %v4894, 4294901760
      %5016 = vmatpush.msra.mxu0 %v5015
      %v5017 = vand.u32 %v4893, 4294901760
      %5018 = vmatpush.msra.mxu0 %v5017
      %v5019 = vand.u32 %v4892, 4294901760
      %5020 = vmatpush.msra.mxu0 %v5019
      %v5021 = vand.u32 %v4891, 4294901760
      %5022 = vmatpush.msra.mxu0 %v5021
      %v5023 = vand.u32 %v4904, 4294901760
      %v5024 = vsub.f32 %v4904, %v5023
      %v5025 = vand.u32 %v5024, 4294901760
      %v5026 = vsub.f32 %v5024, %v5025
      %v5027 = vand.u32 %v5026, 4294901760
      %5028 = vmatmul.f32.gmra.mxu0 %v5027
      %v5029 = vpop.f32.mrf.mxu0
      %v5030 = vadd.f32 %v4901, %v5029
      %v5031 = vand.u32 %v4907, 4294901760
      %v5032 = vsub.f32 %v4907, %v5031
      %v5033 = vand.u32 %v5032, 4294901760
      %v5034 = vsub.f32 %v5032, %v5033
      %v5035 = vand.u32 %v5034, 4294901760
      %5036 = vmatmul.f32.gmra.mxu0 %v5035
      %v5037 = vpop.f32.mrf.mxu0
      %v5038 = vadd.f32 %v4901, %v5037
      %v5039 = vand.u32 %v4910, 4294901760
      %v5040 = vsub.f32 %v4910, %v5039
      %v5041 = vand.u32 %v5040, 4294901760
      %v5042 = vsub.f32 %v5040, %v5041
      %v5043 = vand.u32 %v5042, 4294901760
      %5044 = vmatmul.f32.gmra.mxu0 %v5043
      %v5045 = vpop.f32.mrf.mxu0
      %v5046 = vadd.f32 %v4901, %v5045
      %v5047 = vand.u32 %v4913, 4294901760
      %v5048 = vsub.f32 %v4913, %v5047
      %v5049 = vand.u32 %v5048, 4294901760
      %v5050 = vsub.f32 %v5048, %v5049
      %v5051 = vand.u32 %v5050, 4294901760
      %5052 = vmatmul.f32.gmra.mxu0 %v5051
      %v5053 = vpop.f32.mrf.mxu0
      %v5054 = vadd.f32 %v4901, %v5053
      %v5055 = vand.u32 %v4916, 4294901760
      %v5056 = vsub.f32 %v4916, %v5055
      %v5057 = vand.u32 %v5056, 4294901760
      %v5058 = vsub.f32 %v5056, %v5057
      %v5059 = vand.u32 %v5058, 4294901760
      %5060 = vmatmul.f32.gmra.mxu0 %v5059
      %v5061 = vpop.f32.mrf.mxu0
      %v5062 = vadd.f32 %v4901, %v5061
      %v5063 = vand.u32 %v4919, 4294901760
      %v5064 = vsub.f32 %v4919, %v5063
      %v5065 = vand.u32 %v5064, 4294901760
      %v5066 = vsub.f32 %v5064, %v5065
      %v5067 = vand.u32 %v5066, 4294901760
      %5068 = vmatmul.f32.gmra.mxu0 %v5067
      %v5069 = vpop.f32.mrf.mxu0
      %v5070 = vadd.f32 %v4901, %v5069
      %v5071 = vand.u32 %v4922, 4294901760
      %v5072 = vsub.f32 %v4922, %v5071
      %v5073 = vand.u32 %v5072, 4294901760
      %v5074 = vsub.f32 %v5072, %v5073
      %v5075 = vand.u32 %v5074, 4294901760
      %5076 = vmatmul.f32.gmra.mxu0 %v5075
      %v5077 = vpop.f32.mrf.mxu0
      %v5078 = vadd.f32 %v4901, %v5077
      %v5079 = vand.u32 %v4925, 4294901760
      %v5080 = vsub.f32 %v4925, %v5079
      %v5081 = vand.u32 %v5080, 4294901760
      %v5082 = vsub.f32 %v5080, %v5081
      %v5083 = vand.u32 %v5082, 4294901760
      %5084 = vmatmul.f32.gmra.mxu0 %v5083
      %v5085 = vpop.f32.mrf.mxu0
      %v5086 = vadd.f32 %v4901, %v5085
      %v5087 = vand.u32 %v4928, 4294901760
      %v5088 = vsub.f32 %v4928, %v5087
      %v5089 = vand.u32 %v5088, 4294901760
      %v5090 = vsub.f32 %v5088, %v5089
      %v5091 = vand.u32 %v5090, 4294901760
      %5092 = vmatmul.f32.gmra.mxu0 %v5091
      %v5093 = vpop.f32.mrf.mxu0
      %v5094 = vadd.f32 %v4901, %v5093
      %v5095 = vand.u32 %v4931, 4294901760
      %v5096 = vsub.f32 %v4931, %v5095
      %v5097 = vand.u32 %v5096, 4294901760
      %v5098 = vsub.f32 %v5096, %v5097
      %v5099 = vand.u32 %v5098, 4294901760
      %5100 = vmatmul.f32.gmra.mxu0 %v5099
      %v5101 = vpop.f32.mrf.mxu0
      %v5102 = vadd.f32 %v4901, %v5101
      %v5103 = vand.u32 %v4934, 4294901760
      %v5104 = vsub.f32 %v4934, %v5103
      %v5105 = vand.u32 %v5104, 4294901760
      %v5106 = vsub.f32 %v5104, %v5105
      %v5107 = vand.u32 %v5106, 4294901760
      %5108 = vmatmul.f32.gmra.mxu0 %v5107
      %v5109 = vpop.f32.mrf.mxu0
      %v5110 = vadd.f32 %v4901, %v5109
      %v5111 = vand.u32 %v4937, 4294901760
      %v5112 = vsub.f32 %v4937, %v5111
      %v5113 = vand.u32 %v5112, 4294901760
      %v5114 = vsub.f32 %v5112, %v5113
      %v5115 = vand.u32 %v5114, 4294901760
      %5116 = vmatmul.f32.gmra.mxu0 %v5115
      %v5117 = vpop.f32.mrf.mxu0
      %v5118 = vadd.f32 %v4901, %v5117
      %v5119 = vand.u32 %v4940, 4294901760
      %v5120 = vsub.f32 %v4940, %v5119
      %v5121 = vand.u32 %v5120, 4294901760
      %v5122 = vsub.f32 %v5120, %v5121
      %v5123 = vand.u32 %v5122, 4294901760
      %5124 = vmatmul.f32.gmra.mxu0 %v5123
      %v5125 = vpop.f32.mrf.mxu0
      %v5126 = vadd.f32 %v4901, %v5125
      %v5127 = vand.u32 %v4943, 4294901760
      %v5128 = vsub.f32 %v4943, %v5127
      %v5129 = vand.u32 %v5128, 4294901760
      %v5130 = vsub.f32 %v5128, %v5129
      %v5131 = vand.u32 %v5130, 4294901760
      %5132 = vmatmul.f32.gmra.mxu0 %v5131
      %v5133 = vpop.f32.mrf.mxu0
      %v5134 = vadd.f32 %v4901, %v5133
      %v5135 = vand.u32 %v4946, 4294901760
      %v5136 = vsub.f32 %v4946, %v5135
      %v5137 = vand.u32 %v5136, 4294901760
      %v5138 = vsub.f32 %v5136, %v5137
      %v5139 = vand.u32 %v5138, 4294901760
      %5140 = vmatmul.f32.gmra.mxu0 %v5139
      %v5141 = vpop.f32.mrf.mxu0
      %v5142 = vadd.f32 %v4901, %v5141
      %v5143 = vand.u32 %v4949, 4294901760
      %v5144 = vsub.f32 %v4949, %v5143
      %v5145 = vand.u32 %v5144, 4294901760
      %v5146 = vsub.f32 %v5144, %v5145
      %v5147 = vand.u32 %v5146, 4294901760
      %5148 = vmatmul.f32.gmra.mxu0 %v5147
      %v5149 = vpop.f32.mrf.mxu0
      %v5150 = vadd.f32 %v4901, %v5149
      %v5151 = vand.u32 %v4952, 4294901760
      %v5152 = vsub.f32 %v4952, %v5151
      %v5153 = vand.u32 %v5152, 4294901760
      %v5154 = vsub.f32 %v5152, %v5153
      %v5155 = vand.u32 %v5154, 4294901760
      %5156 = vmatmul.f32.gmra.mxu0 %v5155
      %v5157 = vpop.f32.mrf.mxu0
      %v5158 = vadd.f32 %v4901, %v5157
      %v5159 = vand.u32 %v4955, 4294901760
      %v5160 = vsub.f32 %v4955, %v5159
      %v5161 = vand.u32 %v5160, 4294901760
      %v5162 = vsub.f32 %v5160, %v5161
      %v5163 = vand.u32 %v5162, 4294901760
      %5164 = vmatmul.f32.gmra.mxu0 %v5163
      %v5165 = vpop.f32.mrf.mxu0
      %v5166 = vadd.f32 %v4901, %v5165
      %v5167 = vand.u32 %v4958, 4294901760
      %v5168 = vsub.f32 %v4958, %v5167
      %v5169 = vand.u32 %v5168, 4294901760
      %v5170 = vsub.f32 %v5168, %v5169
      %v5171 = vand.u32 %v5170, 4294901760
      %5172 = vmatmul.f32.gmra.mxu0 %v5171
      %v5173 = vpop.f32.mrf.mxu0
      %v5174 = vadd.f32 %v4901, %v5173
      %v5175 = vand.u32 %v4961, 4294901760
      %v5176 = vsub.f32 %v4961, %v5175
      %v5177 = vand.u32 %v5176, 4294901760
      %v5178 = vsub.f32 %v5176, %v5177
      %v5179 = vand.u32 %v5178, 4294901760
      %5180 = vmatmul.f32.gmra.mxu0 %v5179
      %v5181 = vpop.f32.mrf.mxu0
      %v5182 = vadd.f32 %v4901, %v5181
      %v5183 = vand.u32 %v4964, 4294901760
      %v5184 = vsub.f32 %v4964, %v5183
      %v5185 = vand.u32 %v5184, 4294901760
      %v5186 = vsub.f32 %v5184, %v5185
      %v5187 = vand.u32 %v5186, 4294901760
      %5188 = vmatmul.f32.gmra.mxu0 %v5187
      %v5189 = vpop.f32.mrf.mxu0
      %v5190 = vadd.f32 %v4901, %v5189
      %v5191 = vand.u32 %v4967, 4294901760
      %v5192 = vsub.f32 %v4967, %v5191
      %v5193 = vand.u32 %v5192, 4294901760
      %v5194 = vsub.f32 %v5192, %v5193
      %v5195 = vand.u32 %v5194, 4294901760
      %5196 = vmatmul.f32.gmra.mxu0 %v5195
      %v5197 = vpop.f32.mrf.mxu0
      %v5198 = vadd.f32 %v4901, %v5197
      %v5199 = vand.u32 %v4970, 4294901760
      %v5200 = vsub.f32 %v4970, %v5199
      %v5201 = vand.u32 %v5200, 4294901760
      %v5202 = vsub.f32 %v5200, %v5201
      %v5203 = vand.u32 %v5202, 4294901760
      %5204 = vmatmul.f32.gmra.mxu0 %v5203
      %v5205 = vpop.f32.mrf.mxu0
      %v5206 = vadd.f32 %v4901, %v5205
      %v5207 = vand.u32 %v4973, 4294901760
      %v5208 = vsub.f32 %v4973, %v5207
      %v5209 = vand.u32 %v5208, 4294901760
      %v5210 = vsub.f32 %v5208, %v5209
      %v5211 = vand.u32 %v5210, 4294901760
      %5212 = vmatmul.f32.gmra.mxu0 %v5211
      %v5213 = vpop.f32.mrf.mxu0
      %v5214 = vadd.f32 %v4901, %v5213
      %v5215 = vand.u32 %v4976, 4294901760
      %v5216 = vsub.f32 %v4976, %v5215
      %v5217 = vand.u32 %v5216, 4294901760
      %v5218 = vsub.f32 %v5216, %v5217
      %v5219 = vand.u32 %v5218, 4294901760
      %5220 = vmatmul.f32.gmra.mxu0 %v5219
      %v5221 = vpop.f32.mrf.mxu0
      %v5222 = vadd.f32 %v4901, %v5221
      %v5223 = vand.u32 %v4979, 4294901760
      %v5224 = vsub.f32 %v4979, %v5223
      %v5225 = vand.u32 %v5224, 4294901760
      %v5226 = vsub.f32 %v5224, %v5225
      %v5227 = vand.u32 %v5226, 4294901760
      %5228 = vmatmul.f32.gmra.mxu0 %v5227
      %v5229 = vpop.f32.mrf.mxu0
      %v5230 = vadd.f32 %v4901, %v5229
      %v5231 = vand.u32 %v4982, 4294901760
      %v5232 = vsub.f32 %v4982, %v5231
      %v5233 = vand.u32 %v5232, 4294901760
      %v5234 = vsub.f32 %v5232, %v5233
      %v5235 = vand.u32 %v5234, 4294901760
      %5236 = vmatmul.f32.gmra.mxu0 %v5235
      %v5237 = vpop.f32.mrf.mxu0
      %v5238 = vadd.f32 %v4901, %v5237
      %v5239 = vand.u32 %v4985, 4294901760
      %v5240 = vsub.f32 %v4985, %v5239
      %v5241 = vand.u32 %v5240, 4294901760
      %v5242 = vsub.f32 %v5240, %v5241
      %v5243 = vand.u32 %v5242, 4294901760
      %5244 = vmatmul.f32.gmra.mxu0 %v5243
      %v5245 = vpop.f32.mrf.mxu0
      %v5246 = vadd.f32 %v4901, %v5245
      %v5247 = vand.u32 %v4988, 4294901760
      %v5248 = vsub.f32 %v4988, %v5247
      %v5249 = vand.u32 %v5248, 4294901760
      %v5250 = vsub.f32 %v5248, %v5249
      %v5251 = vand.u32 %v5250, 4294901760
      %5252 = vmatmul.f32.gmra.mxu0 %v5251
      %v5253 = vpop.f32.mrf.mxu0
      %v5254 = vadd.f32 %v4901, %v5253
      %v5255 = vand.u32 %v4991, 4294901760
      %v5256 = vsub.f32 %v4991, %v5255
      %v5257 = vand.u32 %v5256, 4294901760
      %v5258 = vsub.f32 %v5256, %v5257
      %v5259 = vand.u32 %v5258, 4294901760
      %5260 = vmatmul.f32.gmra.mxu0 %v5259
      %v5261 = vpop.f32.mrf.mxu0
      %v5262 = vadd.f32 %v4901, %v5261
      %v5263 = vand.u32 %v4994, 4294901760
      %v5264 = vsub.f32 %v4994, %v5263
      %v5265 = vand.u32 %v5264, 4294901760
      %v5266 = vsub.f32 %v5264, %v5265
      %v5267 = vand.u32 %v5266, 4294901760
      %5268 = vmatmul.f32.gmra.mxu0 %v5267
      %v5269 = vpop.f32.mrf.mxu0
      %v5270 = vadd.f32 %v4901, %v5269
      %v5271 = vand.u32 %v4997, 4294901760
      %v5272 = vsub.f32 %v4997, %v5271
      %v5273 = vand.u32 %v5272, 4294901760
      %v5274 = vsub.f32 %v5272, %v5273
      %v5275 = vand.u32 %v5274, 4294901760
      %5276 = vmatmul.f32.gmra.mxu0 %v5275
      %v5277 = vpop.f32.mrf.mxu0
      %v5278 = vadd.f32 %v4901, %v5277
      %5279 = vdwg.mxu0
      %5280 = vmatpush.msra.mxu0 0.0
      %5281 = vmatpush.msra.mxu0 0.0
      %5282 = vmatpush.msra.mxu0 0.0
      %5283 = vmatpush.msra.mxu0 0.0
      %5284 = vmatpush.msra.mxu0 0.0
      %5285 = vmatpush.msra.mxu0 0.0
      %5286 = vmatpush.msra.mxu0 0.0
      %5287 = vmatpush.msra.mxu0 0.0
      %v5288 = vand.u32 %v4898, 4294901760
      %v5289 = vsub.f32 %v4898, %v5288
      %v5290 = vand.u32 %v5289, 4294901760
      %v5291 = vsub.f32 %v5289, %v5290
      %v5292 = vand.u32 %v5291, 4294901760
      %5293 = vmatpush.msra.mxu0 %v5292
      %v5294 = vand.u32 %v4897, 4294901760
      %v5295 = vsub.f32 %v4897, %v5294
      %v5296 = vand.u32 %v5295, 4294901760
      %v5297 = vsub.f32 %v5295, %v5296
      %v5298 = vand.u32 %v5297, 4294901760
      %5299 = vmatpush.msra.mxu0 %v5298
      %v5300 = vand.u32 %v4896, 4294901760
      %v5301 = vsub.f32 %v4896, %v5300
      %v5302 = vand.u32 %v5301, 4294901760
      %v5303 = vsub.f32 %v5301, %v5302
      %v5304 = vand.u32 %v5303, 4294901760
      %5305 = vmatpush.msra.mxu0 %v5304
      %v5306 = vand.u32 %v4895, 4294901760
      %v5307 = vsub.f32 %v4895, %v5306
      %v5308 = vand.u32 %v5307, 4294901760
      %v5309 = vsub.f32 %v5307, %v5308
      %v5310 = vand.u32 %v5309, 4294901760
      %5311 = vmatpush.msra.mxu0 %v5310
      %v5312 = vand.u32 %v4894, 4294901760
      %v5313 = vsub.f32 %v4894, %v5312
      %v5314 = vand.u32 %v5313, 4294901760
      %v5315 = vsub.f32 %v5313, %v5314
      %v5316 = vand.u32 %v5315, 4294901760
      %5317 = vmatpush.msra.mxu0 %v5316
      %v5318 = vand.u32 %v4893, 4294901760
      %v5319 = vsub.f32 %v4893, %v5318
      %v5320 = vand.u32 %v5319, 4294901760
      %v5321 = vsub.f32 %v5319, %v5320
      %v5322 = vand.u32 %v5321, 4294901760
      %5323 = vmatpush.msra.mxu0 %v5322
      %v5324 = vand.u32 %v4892, 4294901760
      %v5325 = vsub.f32 %v4892, %v5324
      %v5326 = vand.u32 %v5325, 4294901760
      %v5327 = vsub.f32 %v5325, %v5326
      %v5328 = vand.u32 %v5327, 4294901760
      %5329 = vmatpush.msra.mxu0 %v5328
      %v5330 = vand.u32 %v4891, 4294901760
      %v5331 = vsub.f32 %v4891, %v5330
      %v5332 = vand.u32 %v5331, 4294901760
      %v5333 = vsub.f32 %v5331, %v5332
      %v5334 = vand.u32 %v5333, 4294901760
      %5335 = vmatpush.msra.mxu0 %v5334
      %v5336 = vand.u32 %v4904, 4294901760
      %5337 = vmatmul.f32.gmra.mxu0 %v5336
      %v5338 = vpop.f32.mrf.mxu0
      %v5339 = vadd.f32 %v5030, %v5338
      %v5340 = vand.u32 %v4907, 4294901760
      %5341 = vmatmul.f32.gmra.mxu0 %v5340
      %v5342 = vpop.f32.mrf.mxu0
      %v5343 = vadd.f32 %v5038, %v5342
      %v5344 = vand.u32 %v4910, 4294901760
      %5345 = vmatmul.f32.gmra.mxu0 %v5344
      %v5346 = vpop.f32.mrf.mxu0
      %v5347 = vadd.f32 %v5046, %v5346
      %v5348 = vand.u32 %v4913, 4294901760
      %5349 = vmatmul.f32.gmra.mxu0 %v5348
      %v5350 = vpop.f32.mrf.mxu0
      %v5351 = vadd.f32 %v5054, %v5350
      %v5352 = vand.u32 %v4916, 4294901760
      %5353 = vmatmul.f32.gmra.mxu0 %v5352
      %v5354 = vpop.f32.mrf.mxu0
      %v5355 = vadd.f32 %v5062, %v5354
      %v5356 = vand.u32 %v4919, 4294901760
      %5357 = vmatmul.f32.gmra.mxu0 %v5356
      %v5358 = vpop.f32.mrf.mxu0
      %v5359 = vadd.f32 %v5070, %v5358
      %v5360 = vand.u32 %v4922, 4294901760
      %5361 = vmatmul.f32.gmra.mxu0 %v5360
      %v5362 = vpop.f32.mrf.mxu0
      %v5363 = vadd.f32 %v5078, %v5362
      %v5364 = vand.u32 %v4925, 4294901760
      %5365 = vmatmul.f32.gmra.mxu0 %v5364
      %v5366 = vpop.f32.mrf.mxu0
      %v5367 = vadd.f32 %v5086, %v5366
      %v5368 = vand.u32 %v4928, 4294901760
      %5369 = vmatmul.f32.gmra.mxu0 %v5368
      %v5370 = vpop.f32.mrf.mxu0
      %v5371 = vadd.f32 %v5094, %v5370
      %v5372 = vand.u32 %v4931, 4294901760
      %5373 = vmatmul.f32.gmra.mxu0 %v5372
      %v5374 = vpop.f32.mrf.mxu0
      %v5375 = vadd.f32 %v5102, %v5374
      %v5376 = vand.u32 %v4934, 4294901760
      %5377 = vmatmul.f32.gmra.mxu0 %v5376
      %v5378 = vpop.f32.mrf.mxu0
      %v5379 = vadd.f32 %v5110, %v5378
      %v5380 = vand.u32 %v4937, 4294901760
      %5381 = vmatmul.f32.gmra.mxu0 %v5380
      %v5382 = vpop.f32.mrf.mxu0
      %v5383 = vadd.f32 %v5118, %v5382
      %v5384 = vand.u32 %v4940, 4294901760
      %5385 = vmatmul.f32.gmra.mxu0 %v5384
      %v5386 = vpop.f32.mrf.mxu0
      %v5387 = vadd.f32 %v5126, %v5386
      %v5388 = vand.u32 %v4943, 4294901760
      %5389 = vmatmul.f32.gmra.mxu0 %v5388
      %v5390 = vpop.f32.mrf.mxu0
      %v5391 = vadd.f32 %v5134, %v5390
      %v5392 = vand.u32 %v4946, 4294901760
      %5393 = vmatmul.f32.gmra.mxu0 %v5392
      %v5394 = vpop.f32.mrf.mxu0
      %v5395 = vadd.f32 %v5142, %v5394
      %v5396 = vand.u32 %v4949, 4294901760
      %5397 = vmatmul.f32.gmra.mxu0 %v5396
      %v5398 = vpop.f32.mrf.mxu0
      %v5399 = vadd.f32 %v5150, %v5398
      %v5400 = vand.u32 %v4952, 4294901760
      %5401 = vmatmul.f32.gmra.mxu0 %v5400
      %v5402 = vpop.f32.mrf.mxu0
      %v5403 = vadd.f32 %v5158, %v5402
      %v5404 = vand.u32 %v4955, 4294901760
      %5405 = vmatmul.f32.gmra.mxu0 %v5404
      %v5406 = vpop.f32.mrf.mxu0
      %v5407 = vadd.f32 %v5166, %v5406
      %v5408 = vand.u32 %v4958, 4294901760
      %5409 = vmatmul.f32.gmra.mxu0 %v5408
      %v5410 = vpop.f32.mrf.mxu0
      %v5411 = vadd.f32 %v5174, %v5410
      %v5412 = vand.u32 %v4961, 4294901760
      %5413 = vmatmul.f32.gmra.mxu0 %v5412
      %v5414 = vpop.f32.mrf.mxu0
      %v5415 = vadd.f32 %v5182, %v5414
      %v5416 = vand.u32 %v4964, 4294901760
      %5417 = vmatmul.f32.gmra.mxu0 %v5416
      %v5418 = vpop.f32.mrf.mxu0
      %v5419 = vadd.f32 %v5190, %v5418
      %v5420 = vand.u32 %v4967, 4294901760
      %5421 = vmatmul.f32.gmra.mxu0 %v5420
      %v5422 = vpop.f32.mrf.mxu0
      %v5423 = vadd.f32 %v5198, %v5422
      %v5424 = vand.u32 %v4970, 4294901760
      %5425 = vmatmul.f32.gmra.mxu0 %v5424
      %v5426 = vpop.f32.mrf.mxu0
      %v5427 = vadd.f32 %v5206, %v5426
      %v5428 = vand.u32 %v4973, 4294901760
      %5429 = vmatmul.f32.gmra.mxu0 %v5428
      %v5430 = vpop.f32.mrf.mxu0
      %v5431 = vadd.f32 %v5214, %v5430
      %v5432 = vand.u32 %v4976, 4294901760
      %5433 = vmatmul.f32.gmra.mxu0 %v5432
      %v5434 = vpop.f32.mrf.mxu0
      %v5435 = vadd.f32 %v5222, %v5434
      %v5436 = vand.u32 %v4979, 4294901760
      %5437 = vmatmul.f32.gmra.mxu0 %v5436
      %v5438 = vpop.f32.mrf.mxu0
      %v5439 = vadd.f32 %v5230, %v5438
      %v5440 = vand.u32 %v4982, 4294901760
      %5441 = vmatmul.f32.gmra.mxu0 %v5440
      %v5442 = vpop.f32.mrf.mxu0
      %v5443 = vadd.f32 %v5238, %v5442
      %v5444 = vand.u32 %v4985, 4294901760
      %5445 = vmatmul.f32.gmra.mxu0 %v5444
      %v5446 = vpop.f32.mrf.mxu0
      %v5447 = vadd.f32 %v5246, %v5446
      %v5448 = vand.u32 %v4988, 4294901760
      %5449 = vmatmul.f32.gmra.mxu0 %v5448
      %v5450 = vpop.f32.mrf.mxu0
      %v5451 = vadd.f32 %v5254, %v5450
      %v5452 = vand.u32 %v4991, 4294901760
      %5453 = vmatmul.f32.gmra.mxu0 %v5452
      %v5454 = vpop.f32.mrf.mxu0
      %v5455 = vadd.f32 %v5262, %v5454
      %v5456 = vand.u32 %v4994, 4294901760
      %5457 = vmatmul.f32.gmra.mxu0 %v5456
      %v5458 = vpop.f32.mrf.mxu0
      %v5459 = vadd.f32 %v5270, %v5458
      %v5460 = vand.u32 %v4997, 4294901760
      %5461 = vmatmul.f32.gmra.mxu0 %v5460
      %v5462 = vpop.f32.mrf.mxu0
      %v5463 = vadd.f32 %v5278, %v5462
      %5464 = vdwg.mxu0
      %5465 = vmatpush.msra.mxu0 0.0
      %5466 = vmatpush.msra.mxu0 0.0
      %5467 = vmatpush.msra.mxu0 0.0
      %5468 = vmatpush.msra.mxu0 0.0
      %5469 = vmatpush.msra.mxu0 0.0
      %5470 = vmatpush.msra.mxu0 0.0
      %5471 = vmatpush.msra.mxu0 0.0
      %5472 = vmatpush.msra.mxu0 0.0
      %v5473 = vand.u32 %v4898, 4294901760
      %v5474 = vsub.f32 %v4898, %v5473
      %5475 = vmatpush.msra.mxu0 %v5474
      %v5476 = vand.u32 %v4897, 4294901760
      %v5477 = vsub.f32 %v4897, %v5476
      %5478 = vmatpush.msra.mxu0 %v5477
      %v5479 = vand.u32 %v4896, 4294901760
      %v5480 = vsub.f32 %v4896, %v5479
      %5481 = vmatpush.msra.mxu0 %v5480
      %v5482 = vand.u32 %v4895, 4294901760
      %v5483 = vsub.f32 %v4895, %v5482
      %5484 = vmatpush.msra.mxu0 %v5483
      %v5485 = vand.u32 %v4894, 4294901760
      %v5486 = vsub.f32 %v4894, %v5485
      %5487 = vmatpush.msra.mxu0 %v5486
      %v5488 = vand.u32 %v4893, 4294901760
      %v5489 = vsub.f32 %v4893, %v5488
      %5490 = vmatpush.msra.mxu0 %v5489
      %v5491 = vand.u32 %v4892, 4294901760
      %v5492 = vsub.f32 %v4892, %v5491
      %5493 = vmatpush.msra.mxu0 %v5492
      %v5494 = vand.u32 %v4891, 4294901760
      %v5495 = vsub.f32 %v4891, %v5494
      %5496 = vmatpush.msra.mxu0 %v5495
      %v5497 = vand.u32 %v4904, 4294901760
      %v5498 = vsub.f32 %v4904, %v5497
      %5499 = vmatmul.f32.gmra.mxu0 %v5498
      %v5500 = vpop.f32.mrf.mxu0
      %v5501 = vadd.f32 %v5339, %v5500
      %v5502 = vand.u32 %v4907, 4294901760
      %v5503 = vsub.f32 %v4907, %v5502
      %5504 = vmatmul.f32.gmra.mxu0 %v5503
      %v5505 = vpop.f32.mrf.mxu0
      %v5506 = vadd.f32 %v5343, %v5505
      %v5507 = vand.u32 %v4910, 4294901760
      %v5508 = vsub.f32 %v4910, %v5507
      %5509 = vmatmul.f32.gmra.mxu0 %v5508
      %v5510 = vpop.f32.mrf.mxu0
      %v5511 = vadd.f32 %v5347, %v5510
      %v5512 = vand.u32 %v4913, 4294901760
      %v5513 = vsub.f32 %v4913, %v5512
      %5514 = vmatmul.f32.gmra.mxu0 %v5513
      %v5515 = vpop.f32.mrf.mxu0
      %v5516 = vadd.f32 %v5351, %v5515
      %v5517 = vand.u32 %v4916, 4294901760
      %v5518 = vsub.f32 %v4916, %v5517
      %5519 = vmatmul.f32.gmra.mxu0 %v5518
      %v5520 = vpop.f32.mrf.mxu0
      %v5521 = vadd.f32 %v5355, %v5520
      %v5522 = vand.u32 %v4919, 4294901760
      %v5523 = vsub.f32 %v4919, %v5522
      %5524 = vmatmul.f32.gmra.mxu0 %v5523
      %v5525 = vpop.f32.mrf.mxu0
      %v5526 = vadd.f32 %v5359, %v5525
      %v5527 = vand.u32 %v4922, 4294901760
      %v5528 = vsub.f32 %v4922, %v5527
      %5529 = vmatmul.f32.gmra.mxu0 %v5528
      %v5530 = vpop.f32.mrf.mxu0
      %v5531 = vadd.f32 %v5363, %v5530
      %v5532 = vand.u32 %v4925, 4294901760
      %v5533 = vsub.f32 %v4925, %v5532
      %5534 = vmatmul.f32.gmra.mxu0 %v5533
      %v5535 = vpop.f32.mrf.mxu0
      %v5536 = vadd.f32 %v5367, %v5535
      %v5537 = vand.u32 %v4928, 4294901760
      %v5538 = vsub.f32 %v4928, %v5537
      %5539 = vmatmul.f32.gmra.mxu0 %v5538
      %v5540 = vpop.f32.mrf.mxu0
      %v5541 = vadd.f32 %v5371, %v5540
      %v5542 = vand.u32 %v4931, 4294901760
      %v5543 = vsub.f32 %v4931, %v5542
      %5544 = vmatmul.f32.gmra.mxu0 %v5543
      %v5545 = vpop.f32.mrf.mxu0
      %v5546 = vadd.f32 %v5375, %v5545
      %v5547 = vand.u32 %v4934, 4294901760
      %v5548 = vsub.f32 %v4934, %v5547
      %5549 = vmatmul.f32.gmra.mxu0 %v5548
      %v5550 = vpop.f32.mrf.mxu0
      %v5551 = vadd.f32 %v5379, %v5550
      %v5552 = vand.u32 %v4937, 4294901760
      %v5553 = vsub.f32 %v4937, %v5552
      %5554 = vmatmul.f32.gmra.mxu0 %v5553
      %v5555 = vpop.f32.mrf.mxu0
      %v5556 = vadd.f32 %v5383, %v5555
      %v5557 = vand.u32 %v4940, 4294901760
      %v5558 = vsub.f32 %v4940, %v5557
      %5559 = vmatmul.f32.gmra.mxu0 %v5558
      %v5560 = vpop.f32.mrf.mxu0
      %v5561 = vadd.f32 %v5387, %v5560
      %v5562 = vand.u32 %v4943, 4294901760
      %v5563 = vsub.f32 %v4943, %v5562
      %5564 = vmatmul.f32.gmra.mxu0 %v5563
      %v5565 = vpop.f32.mrf.mxu0
      %v5566 = vadd.f32 %v5391, %v5565
      %v5567 = vand.u32 %v4946, 4294901760
      %v5568 = vsub.f32 %v4946, %v5567
      %5569 = vmatmul.f32.gmra.mxu0 %v5568
      %v5570 = vpop.f32.mrf.mxu0
      %v5571 = vadd.f32 %v5395, %v5570
      %v5572 = vand.u32 %v4949, 4294901760
      %v5573 = vsub.f32 %v4949, %v5572
      %5574 = vmatmul.f32.gmra.mxu0 %v5573
      %v5575 = vpop.f32.mrf.mxu0
      %v5576 = vadd.f32 %v5399, %v5575
      %v5577 = vand.u32 %v4952, 4294901760
      %v5578 = vsub.f32 %v4952, %v5577
      %5579 = vmatmul.f32.gmra.mxu0 %v5578
      %v5580 = vpop.f32.mrf.mxu0
      %v5581 = vadd.f32 %v5403, %v5580
      %v5582 = vand.u32 %v4955, 4294901760
      %v5583 = vsub.f32 %v4955, %v5582
      %5584 = vmatmul.f32.gmra.mxu0 %v5583
      %v5585 = vpop.f32.mrf.mxu0
      %v5586 = vadd.f32 %v5407, %v5585
      %v5587 = vand.u32 %v4958, 4294901760
      %v5588 = vsub.f32 %v4958, %v5587
      %5589 = vmatmul.f32.gmra.mxu0 %v5588
      %v5590 = vpop.f32.mrf.mxu0
      %v5591 = vadd.f32 %v5411, %v5590
      %v5592 = vand.u32 %v4961, 4294901760
      %v5593 = vsub.f32 %v4961, %v5592
      %5594 = vmatmul.f32.gmra.mxu0 %v5593
      %v5595 = vpop.f32.mrf.mxu0
      %v5596 = vadd.f32 %v5415, %v5595
      %v5597 = vand.u32 %v4964, 4294901760
      %v5598 = vsub.f32 %v4964, %v5597
      %5599 = vmatmul.f32.gmra.mxu0 %v5598
      %v5600 = vpop.f32.mrf.mxu0
      %v5601 = vadd.f32 %v5419, %v5600
      %v5602 = vand.u32 %v4967, 4294901760
      %v5603 = vsub.f32 %v4967, %v5602
      %5604 = vmatmul.f32.gmra.mxu0 %v5603
      %v5605 = vpop.f32.mrf.mxu0
      %v5606 = vadd.f32 %v5423, %v5605
      %v5607 = vand.u32 %v4970, 4294901760
      %v5608 = vsub.f32 %v4970, %v5607
      %5609 = vmatmul.f32.gmra.mxu0 %v5608
      %v5610 = vpop.f32.mrf.mxu0
      %v5611 = vadd.f32 %v5427, %v5610
      %v5612 = vand.u32 %v4973, 4294901760
      %v5613 = vsub.f32 %v4973, %v5612
      %5614 = vmatmul.f32.gmra.mxu0 %v5613
      %v5615 = vpop.f32.mrf.mxu0
      %v5616 = vadd.f32 %v5431, %v5615
      %v5617 = vand.u32 %v4976, 4294901760
      %v5618 = vsub.f32 %v4976, %v5617
      %5619 = vmatmul.f32.gmra.mxu0 %v5618
      %v5620 = vpop.f32.mrf.mxu0
      %v5621 = vadd.f32 %v5435, %v5620
      %v5622 = vand.u32 %v4979, 4294901760
      %v5623 = vsub.f32 %v4979, %v5622
      %5624 = vmatmul.f32.gmra.mxu0 %v5623
      %v5625 = vpop.f32.mrf.mxu0
      %v5626 = vadd.f32 %v5439, %v5625
      %v5627 = vand.u32 %v4982, 4294901760
      %v5628 = vsub.f32 %v4982, %v5627
      %5629 = vmatmul.f32.gmra.mxu0 %v5628
      %v5630 = vpop.f32.mrf.mxu0
      %v5631 = vadd.f32 %v5443, %v5630
      %v5632 = vand.u32 %v4985, 4294901760
      %v5633 = vsub.f32 %v4985, %v5632
      %5634 = vmatmul.f32.gmra.mxu0 %v5633
      %v5635 = vpop.f32.mrf.mxu0
      %v5636 = vadd.f32 %v5447, %v5635
      %v5637 = vand.u32 %v4988, 4294901760
      %v5638 = vsub.f32 %v4988, %v5637
      %5639 = vmatmul.f32.gmra.mxu0 %v5638
      %v5640 = vpop.f32.mrf.mxu0
      %v5641 = vadd.f32 %v5451, %v5640
      %v5642 = vand.u32 %v4991, 4294901760
      %v5643 = vsub.f32 %v4991, %v5642
      %5644 = vmatmul.f32.gmra.mxu0 %v5643
      %v5645 = vpop.f32.mrf.mxu0
      %v5646 = vadd.f32 %v5455, %v5645
      %v5647 = vand.u32 %v4994, 4294901760
      %v5648 = vsub.f32 %v4994, %v5647
      %5649 = vmatmul.f32.gmra.mxu0 %v5648
      %v5650 = vpop.f32.mrf.mxu0
      %v5651 = vadd.f32 %v5459, %v5650
      %v5652 = vand.u32 %v4997, 4294901760
      %v5653 = vsub.f32 %v4997, %v5652
      %5654 = vmatmul.f32.gmra.mxu0 %v5653
      %v5655 = vpop.f32.mrf.mxu0
      %v5656 = vadd.f32 %v5463, %v5655
      %5657 = vdwg.mxu0
      %5658 = vmatpush.msra.mxu0 0.0
      %5659 = vmatpush.msra.mxu0 0.0
      %5660 = vmatpush.msra.mxu0 0.0
      %5661 = vmatpush.msra.mxu0 0.0
      %5662 = vmatpush.msra.mxu0 0.0
      %5663 = vmatpush.msra.mxu0 0.0
      %5664 = vmatpush.msra.mxu0 0.0
      %5665 = vmatpush.msra.mxu0 0.0
      %v5666 = vand.u32 %v4898, 4294901760
      %5667 = vmatpush.msra.mxu0 %v5666
      %v5668 = vand.u32 %v4897, 4294901760
      %5669 = vmatpush.msra.mxu0 %v5668
      %v5670 = vand.u32 %v4896, 4294901760
      %5671 = vmatpush.msra.mxu0 %v5670
      %v5672 = vand.u32 %v4895, 4294901760
      %5673 = vmatpush.msra.mxu0 %v5672
      %v5674 = vand.u32 %v4894, 4294901760
      %5675 = vmatpush.msra.mxu0 %v5674
      %v5676 = vand.u32 %v4893, 4294901760
      %5677 = vmatpush.msra.mxu0 %v5676
      %v5678 = vand.u32 %v4892, 4294901760
      %5679 = vmatpush.msra.mxu0 %v5678
      %v5680 = vand.u32 %v4891, 4294901760
      %5681 = vmatpush.msra.mxu0 %v5680
      %v5682 = vand.u32 %v4904, 4294901760
      %v5683 = vsub.f32 %v4904, %v5682
      %v5684 = vand.u32 %v5683, 4294901760
      %5685 = vmatmul.f32.gmra.mxu0 %v5684
      %v5686 = vpop.f32.mrf.mxu0
      %v5687 = vadd.f32 %v5501, %v5686
      %v5688 = vand.u32 %v4907, 4294901760
      %v5689 = vsub.f32 %v4907, %v5688
      %v5690 = vand.u32 %v5689, 4294901760
      %5691 = vmatmul.f32.gmra.mxu0 %v5690
      %v5692 = vpop.f32.mrf.mxu0
      %v5693 = vadd.f32 %v5506, %v5692
      %v5694 = vand.u32 %v4910, 4294901760
      %v5695 = vsub.f32 %v4910, %v5694
      %v5696 = vand.u32 %v5695, 4294901760
      %5697 = vmatmul.f32.gmra.mxu0 %v5696
      %v5698 = vpop.f32.mrf.mxu0
      %v5699 = vadd.f32 %v5511, %v5698
      %v5700 = vand.u32 %v4913, 4294901760
      %v5701 = vsub.f32 %v4913, %v5700
      %v5702 = vand.u32 %v5701, 4294901760
      %5703 = vmatmul.f32.gmra.mxu0 %v5702
      %v5704 = vpop.f32.mrf.mxu0
      %v5705 = vadd.f32 %v5516, %v5704
      %v5706 = vand.u32 %v4916, 4294901760
      %v5707 = vsub.f32 %v4916, %v5706
      %v5708 = vand.u32 %v5707, 4294901760
      %5709 = vmatmul.f32.gmra.mxu0 %v5708
      %v5710 = vpop.f32.mrf.mxu0
      %v5711 = vadd.f32 %v5521, %v5710
      %v5712 = vand.u32 %v4919, 4294901760
      %v5713 = vsub.f32 %v4919, %v5712
      %v5714 = vand.u32 %v5713, 4294901760
      %5715 = vmatmul.f32.gmra.mxu0 %v5714
      %v5716 = vpop.f32.mrf.mxu0
      %v5717 = vadd.f32 %v5526, %v5716
      %v5718 = vand.u32 %v4922, 4294901760
      %v5719 = vsub.f32 %v4922, %v5718
      %v5720 = vand.u32 %v5719, 4294901760
      %5721 = vmatmul.f32.gmra.mxu0 %v5720
      %v5722 = vpop.f32.mrf.mxu0
      %v5723 = vadd.f32 %v5531, %v5722
      %v5724 = vand.u32 %v4925, 4294901760
      %v5725 = vsub.f32 %v4925, %v5724
      %v5726 = vand.u32 %v5725, 4294901760
      %5727 = vmatmul.f32.gmra.mxu0 %v5726
      %v5728 = vpop.f32.mrf.mxu0
      %v5729 = vadd.f32 %v5536, %v5728
      %v5730 = vand.u32 %v4928, 4294901760
      %v5731 = vsub.f32 %v4928, %v5730
      %v5732 = vand.u32 %v5731, 4294901760
      %5733 = vmatmul.f32.gmra.mxu0 %v5732
      %v5734 = vpop.f32.mrf.mxu0
      %v5735 = vadd.f32 %v5541, %v5734
      %v5736 = vand.u32 %v4931, 4294901760
      %v5737 = vsub.f32 %v4931, %v5736
      %v5738 = vand.u32 %v5737, 4294901760
      %5739 = vmatmul.f32.gmra.mxu0 %v5738
      %v5740 = vpop.f32.mrf.mxu0
      %v5741 = vadd.f32 %v5546, %v5740
      %v5742 = vand.u32 %v4934, 4294901760
      %v5743 = vsub.f32 %v4934, %v5742
      %v5744 = vand.u32 %v5743, 4294901760
      %5745 = vmatmul.f32.gmra.mxu0 %v5744
      %v5746 = vpop.f32.mrf.mxu0
      %v5747 = vadd.f32 %v5551, %v5746
      %v5748 = vand.u32 %v4937, 4294901760
      %v5749 = vsub.f32 %v4937, %v5748
      %v5750 = vand.u32 %v5749, 4294901760
      %5751 = vmatmul.f32.gmra.mxu0 %v5750
      %v5752 = vpop.f32.mrf.mxu0
      %v5753 = vadd.f32 %v5556, %v5752
      %v5754 = vand.u32 %v4940, 4294901760
      %v5755 = vsub.f32 %v4940, %v5754
      %v5756 = vand.u32 %v5755, 4294901760
      %5757 = vmatmul.f32.gmra.mxu0 %v5756
      %v5758 = vpop.f32.mrf.mxu0
      %v5759 = vadd.f32 %v5561, %v5758
      %v5760 = vand.u32 %v4943, 4294901760
      %v5761 = vsub.f32 %v4943, %v5760
      %v5762 = vand.u32 %v5761, 4294901760
      %5763 = vmatmul.f32.gmra.mxu0 %v5762
      %v5764 = vpop.f32.mrf.mxu0
      %v5765 = vadd.f32 %v5566, %v5764
      %v5766 = vand.u32 %v4946, 4294901760
      %v5767 = vsub.f32 %v4946, %v5766
      %v5768 = vand.u32 %v5767, 4294901760
      %5769 = vmatmul.f32.gmra.mxu0 %v5768
      %v5770 = vpop.f32.mrf.mxu0
      %v5771 = vadd.f32 %v5571, %v5770
      %v5772 = vand.u32 %v4949, 4294901760
      %v5773 = vsub.f32 %v4949, %v5772
      %v5774 = vand.u32 %v5773, 4294901760
      %5775 = vmatmul.f32.gmra.mxu0 %v5774
      %v5776 = vpop.f32.mrf.mxu0
      %v5777 = vadd.f32 %v5576, %v5776
      %v5778 = vand.u32 %v4952, 4294901760
      %v5779 = vsub.f32 %v4952, %v5778
      %v5780 = vand.u32 %v5779, 4294901760
      %5781 = vmatmul.f32.gmra.mxu0 %v5780
      %v5782 = vpop.f32.mrf.mxu0
      %v5783 = vadd.f32 %v5581, %v5782
      %v5784 = vand.u32 %v4955, 4294901760
      %v5785 = vsub.f32 %v4955, %v5784
      %v5786 = vand.u32 %v5785, 4294901760
      %5787 = vmatmul.f32.gmra.mxu0 %v5786
      %v5788 = vpop.f32.mrf.mxu0
      %v5789 = vadd.f32 %v5586, %v5788
      %v5790 = vand.u32 %v4958, 4294901760
      %v5791 = vsub.f32 %v4958, %v5790
      %v5792 = vand.u32 %v5791, 4294901760
      %5793 = vmatmul.f32.gmra.mxu0 %v5792
      %v5794 = vpop.f32.mrf.mxu0
      %v5795 = vadd.f32 %v5591, %v5794
      %v5796 = vand.u32 %v4961, 4294901760
      %v5797 = vsub.f32 %v4961, %v5796
      %v5798 = vand.u32 %v5797, 4294901760
      %5799 = vmatmul.f32.gmra.mxu0 %v5798
      %v5800 = vpop.f32.mrf.mxu0
      %v5801 = vadd.f32 %v5596, %v5800
      %v5802 = vand.u32 %v4964, 4294901760
      %v5803 = vsub.f32 %v4964, %v5802
      %v5804 = vand.u32 %v5803, 4294901760
      %5805 = vmatmul.f32.gmra.mxu0 %v5804
      %v5806 = vpop.f32.mrf.mxu0
      %v5807 = vadd.f32 %v5601, %v5806
      %v5808 = vand.u32 %v4967, 4294901760
      %v5809 = vsub.f32 %v4967, %v5808
      %v5810 = vand.u32 %v5809, 4294901760
      %5811 = vmatmul.f32.gmra.mxu0 %v5810
      %v5812 = vpop.f32.mrf.mxu0
      %v5813 = vadd.f32 %v5606, %v5812
      %v5814 = vand.u32 %v4970, 4294901760
      %v5815 = vsub.f32 %v4970, %v5814
      %v5816 = vand.u32 %v5815, 4294901760
      %5817 = vmatmul.f32.gmra.mxu0 %v5816
      %v5818 = vpop.f32.mrf.mxu0
      %v5819 = vadd.f32 %v5611, %v5818
      %v5820 = vand.u32 %v4973, 4294901760
      %v5821 = vsub.f32 %v4973, %v5820
      %v5822 = vand.u32 %v5821, 4294901760
      %5823 = vmatmul.f32.gmra.mxu0 %v5822
      %v5824 = vpop.f32.mrf.mxu0
      %v5825 = vadd.f32 %v5616, %v5824
      %v5826 = vand.u32 %v4976, 4294901760
      %v5827 = vsub.f32 %v4976, %v5826
      %v5828 = vand.u32 %v5827, 4294901760
      %5829 = vmatmul.f32.gmra.mxu0 %v5828
      %v5830 = vpop.f32.mrf.mxu0
      %v5831 = vadd.f32 %v5621, %v5830
      %v5832 = vand.u32 %v4979, 4294901760
      %v5833 = vsub.f32 %v4979, %v5832
      %v5834 = vand.u32 %v5833, 4294901760
      %5835 = vmatmul.f32.gmra.mxu0 %v5834
      %v5836 = vpop.f32.mrf.mxu0
      %v5837 = vadd.f32 %v5626, %v5836
      %v5838 = vand.u32 %v4982, 4294901760
      %v5839 = vsub.f32 %v4982, %v5838
      %v5840 = vand.u32 %v5839, 4294901760
      %5841 = vmatmul.f32.gmra.mxu0 %v5840
      %v5842 = vpop.f32.mrf.mxu0
      %v5843 = vadd.f32 %v5631, %v5842
      %v5844 = vand.u32 %v4985, 4294901760
      %v5845 = vsub.f32 %v4985, %v5844
      %v5846 = vand.u32 %v5845, 4294901760
      %5847 = vmatmul.f32.gmra.mxu0 %v5846
      %v5848 = vpop.f32.mrf.mxu0
      %v5849 = vadd.f32 %v5636, %v5848
      %v5850 = vand.u32 %v4988, 4294901760
      %v5851 = vsub.f32 %v4988, %v5850
      %v5852 = vand.u32 %v5851, 4294901760
      %5853 = vmatmul.f32.gmra.mxu0 %v5852
      %v5854 = vpop.f32.mrf.mxu0
      %v5855 = vadd.f32 %v5641, %v5854
      %v5856 = vand.u32 %v4991, 4294901760
      %v5857 = vsub.f32 %v4991, %v5856
      %v5858 = vand.u32 %v5857, 4294901760
      %5859 = vmatmul.f32.gmra.mxu0 %v5858
      %v5860 = vpop.f32.mrf.mxu0
      %v5861 = vadd.f32 %v5646, %v5860
      %v5862 = vand.u32 %v4994, 4294901760
      %v5863 = vsub.f32 %v4994, %v5862
      %v5864 = vand.u32 %v5863, 4294901760
      %5865 = vmatmul.f32.gmra.mxu0 %v5864
      %v5866 = vpop.f32.mrf.mxu0
      %v5867 = vadd.f32 %v5651, %v5866
      %v5868 = vand.u32 %v4997, 4294901760
      %v5869 = vsub.f32 %v4997, %v5868
      %v5870 = vand.u32 %v5869, 4294901760
      %5871 = vmatmul.f32.gmra.mxu0 %v5870
      %v5872 = vpop.f32.mrf.mxu0
      %v5873 = vadd.f32 %v5656, %v5872
      %5874 = vdwg.mxu0
      %5875 = vmatpush.msra.mxu0 0.0
      %5876 = vmatpush.msra.mxu0 0.0
      %5877 = vmatpush.msra.mxu0 0.0
      %5878 = vmatpush.msra.mxu0 0.0
      %5879 = vmatpush.msra.mxu0 0.0
      %5880 = vmatpush.msra.mxu0 0.0
      %5881 = vmatpush.msra.mxu0 0.0
      %5882 = vmatpush.msra.mxu0 0.0
      %v5883 = vand.u32 %v4898, 4294901760
      %v5884 = vsub.f32 %v4898, %v5883
      %v5885 = vand.u32 %v5884, 4294901760
      %5886 = vmatpush.msra.mxu0 %v5885
      %v5887 = vand.u32 %v4897, 4294901760
      %v5888 = vsub.f32 %v4897, %v5887
      %v5889 = vand.u32 %v5888, 4294901760
      %5890 = vmatpush.msra.mxu0 %v5889
      %v5891 = vand.u32 %v4896, 4294901760
      %v5892 = vsub.f32 %v4896, %v5891
      %v5893 = vand.u32 %v5892, 4294901760
      %5894 = vmatpush.msra.mxu0 %v5893
      %v5895 = vand.u32 %v4895, 4294901760
      %v5896 = vsub.f32 %v4895, %v5895
      %v5897 = vand.u32 %v5896, 4294901760
      %5898 = vmatpush.msra.mxu0 %v5897
      %v5899 = vand.u32 %v4894, 4294901760
      %v5900 = vsub.f32 %v4894, %v5899
      %v5901 = vand.u32 %v5900, 4294901760
      %5902 = vmatpush.msra.mxu0 %v5901
      %v5903 = vand.u32 %v4893, 4294901760
      %v5904 = vsub.f32 %v4893, %v5903
      %v5905 = vand.u32 %v5904, 4294901760
      %5906 = vmatpush.msra.mxu0 %v5905
      %v5907 = vand.u32 %v4892, 4294901760
      %v5908 = vsub.f32 %v4892, %v5907
      %v5909 = vand.u32 %v5908, 4294901760
      %5910 = vmatpush.msra.mxu0 %v5909
      %v5911 = vand.u32 %v4891, 4294901760
      %v5912 = vsub.f32 %v4891, %v5911
      %v5913 = vand.u32 %v5912, 4294901760
      %5914 = vmatpush.msra.mxu0 %v5913
      %v5915 = vand.u32 %v4904, 4294901760
      %5916 = vmatmul.f32.gmra.mxu0 %v5915
      %v5917 = vpop.f32.mrf.mxu0
      %v5918 = vadd.f32 %v5687, %v5917
      %v5919 = vand.u32 %v4907, 4294901760
      %5920 = vmatmul.f32.gmra.mxu0 %v5919
      %v5921 = vpop.f32.mrf.mxu0
      %v5922 = vadd.f32 %v5693, %v5921
      %v5923 = vand.u32 %v4910, 4294901760
      %5924 = vmatmul.f32.gmra.mxu0 %v5923
      %v5925 = vpop.f32.mrf.mxu0
      %v5926 = vadd.f32 %v5699, %v5925
      %v5927 = vand.u32 %v4913, 4294901760
      %5928 = vmatmul.f32.gmra.mxu0 %v5927
      %v5929 = vpop.f32.mrf.mxu0
      %v5930 = vadd.f32 %v5705, %v5929
      %v5931 = vand.u32 %v4916, 4294901760
      %5932 = vmatmul.f32.gmra.mxu0 %v5931
      %v5933 = vpop.f32.mrf.mxu0
      %v5934 = vadd.f32 %v5711, %v5933
      %v5935 = vand.u32 %v4919, 4294901760
      %5936 = vmatmul.f32.gmra.mxu0 %v5935
      %v5937 = vpop.f32.mrf.mxu0
      %v5938 = vadd.f32 %v5717, %v5937
      %v5939 = vand.u32 %v4922, 4294901760
      %5940 = vmatmul.f32.gmra.mxu0 %v5939
      %v5941 = vpop.f32.mrf.mxu0
      %v5942 = vadd.f32 %v5723, %v5941
      %v5943 = vand.u32 %v4925, 4294901760
      %5944 = vmatmul.f32.gmra.mxu0 %v5943
      %v5945 = vpop.f32.mrf.mxu0
      %v5946 = vadd.f32 %v5729, %v5945
      %v5947 = vand.u32 %v4928, 4294901760
      %5948 = vmatmul.f32.gmra.mxu0 %v5947
      %v5949 = vpop.f32.mrf.mxu0
      %v5950 = vadd.f32 %v5735, %v5949
      %v5951 = vand.u32 %v4931, 4294901760
      %5952 = vmatmul.f32.gmra.mxu0 %v5951
      %v5953 = vpop.f32.mrf.mxu0
      %v5954 = vadd.f32 %v5741, %v5953
      %v5955 = vand.u32 %v4934, 4294901760
      %5956 = vmatmul.f32.gmra.mxu0 %v5955
      %v5957 = vpop.f32.mrf.mxu0
      %v5958 = vadd.f32 %v5747, %v5957
      %v5959 = vand.u32 %v4937, 4294901760
      %5960 = vmatmul.f32.gmra.mxu0 %v5959
      %v5961 = vpop.f32.mrf.mxu0
      %v5962 = vadd.f32 %v5753, %v5961
      %v5963 = vand.u32 %v4940, 4294901760
      %5964 = vmatmul.f32.gmra.mxu0 %v5963
      %v5965 = vpop.f32.mrf.mxu0
      %v5966 = vadd.f32 %v5759, %v5965
      %v5967 = vand.u32 %v4943, 4294901760
      %5968 = vmatmul.f32.gmra.mxu0 %v5967
      %v5969 = vpop.f32.mrf.mxu0
      %v5970 = vadd.f32 %v5765, %v5969
      %v5971 = vand.u32 %v4946, 4294901760
      %5972 = vmatmul.f32.gmra.mxu0 %v5971
      %v5973 = vpop.f32.mrf.mxu0
      %v5974 = vadd.f32 %v5771, %v5973
      %v5975 = vand.u32 %v4949, 4294901760
      %5976 = vmatmul.f32.gmra.mxu0 %v5975
      %v5977 = vpop.f32.mrf.mxu0
      %v5978 = vadd.f32 %v5777, %v5977
      %v5979 = vand.u32 %v4952, 4294901760
      %5980 = vmatmul.f32.gmra.mxu0 %v5979
      %v5981 = vpop.f32.mrf.mxu0
      %v5982 = vadd.f32 %v5783, %v5981
      %v5983 = vand.u32 %v4955, 4294901760
      %5984 = vmatmul.f32.gmra.mxu0 %v5983
      %v5985 = vpop.f32.mrf.mxu0
      %v5986 = vadd.f32 %v5789, %v5985
      %v5987 = vand.u32 %v4958, 4294901760
      %5988 = vmatmul.f32.gmra.mxu0 %v5987
      %v5989 = vpop.f32.mrf.mxu0
      %v5990 = vadd.f32 %v5795, %v5989
      %v5991 = vand.u32 %v4961, 4294901760
      %5992 = vmatmul.f32.gmra.mxu0 %v5991
      %v5993 = vpop.f32.mrf.mxu0
      %v5994 = vadd.f32 %v5801, %v5993
      %v5995 = vand.u32 %v4964, 4294901760
      %5996 = vmatmul.f32.gmra.mxu0 %v5995
      %v5997 = vpop.f32.mrf.mxu0
      %v5998 = vadd.f32 %v5807, %v5997
      %v5999 = vand.u32 %v4967, 4294901760
      %6000 = vmatmul.f32.gmra.mxu0 %v5999
      %v6001 = vpop.f32.mrf.mxu0
      %v6002 = vadd.f32 %v5813, %v6001
      %v6003 = vand.u32 %v4970, 4294901760
      %6004 = vmatmul.f32.gmra.mxu0 %v6003
      %v6005 = vpop.f32.mrf.mxu0
      %v6006 = vadd.f32 %v5819, %v6005
      %v6007 = vand.u32 %v4973, 4294901760
      %6008 = vmatmul.f32.gmra.mxu0 %v6007
      %v6009 = vpop.f32.mrf.mxu0
      %v6010 = vadd.f32 %v5825, %v6009
      %v6011 = vand.u32 %v4976, 4294901760
      %6012 = vmatmul.f32.gmra.mxu0 %v6011
      %v6013 = vpop.f32.mrf.mxu0
      %v6014 = vadd.f32 %v5831, %v6013
      %v6015 = vand.u32 %v4979, 4294901760
      %6016 = vmatmul.f32.gmra.mxu0 %v6015
      %v6017 = vpop.f32.mrf.mxu0
      %v6018 = vadd.f32 %v5837, %v6017
      %v6019 = vand.u32 %v4982, 4294901760
      %6020 = vmatmul.f32.gmra.mxu0 %v6019
      %v6021 = vpop.f32.mrf.mxu0
      %v6022 = vadd.f32 %v5843, %v6021
      %v6023 = vand.u32 %v4985, 4294901760
      %6024 = vmatmul.f32.gmra.mxu0 %v6023
      %v6025 = vpop.f32.mrf.mxu0
      %v6026 = vadd.f32 %v5849, %v6025
      %v6027 = vand.u32 %v4988, 4294901760
      %6028 = vmatmul.f32.gmra.mxu0 %v6027
      %v6029 = vpop.f32.mrf.mxu0
      %v6030 = vadd.f32 %v5855, %v6029
      %v6031 = vand.u32 %v4991, 4294901760
      %6032 = vmatmul.f32.gmra.mxu0 %v6031
      %v6033 = vpop.f32.mrf.mxu0
      %v6034 = vadd.f32 %v5861, %v6033
      %v6035 = vand.u32 %v4994, 4294901760
      %6036 = vmatmul.f32.gmra.mxu0 %v6035
      %v6037 = vpop.f32.mrf.mxu0
      %v6038 = vadd.f32 %v5867, %v6037
      %v6039 = vand.u32 %v4997, 4294901760
      %6040 = vmatmul.f32.gmra.mxu0 %v6039
      %v6041 = vpop.f32.mrf.mxu0
      %v6042 = vadd.f32 %v5873, %v6041
      %6043 = vdwg.mxu0
      %6044 = vmatpush.msra.mxu0 0.0
      %6045 = vmatpush.msra.mxu0 0.0
      %6046 = vmatpush.msra.mxu0 0.0
      %6047 = vmatpush.msra.mxu0 0.0
      %6048 = vmatpush.msra.mxu0 0.0
      %6049 = vmatpush.msra.mxu0 0.0
      %6050 = vmatpush.msra.mxu0 0.0
      %6051 = vmatpush.msra.mxu0 0.0
      %v6052 = vand.u32 %v4898, 4294901760
      %6053 = vmatpush.msra.mxu0 %v6052
      %v6054 = vand.u32 %v4897, 4294901760
      %6055 = vmatpush.msra.mxu0 %v6054
      %v6056 = vand.u32 %v4896, 4294901760
      %6057 = vmatpush.msra.mxu0 %v6056
      %v6058 = vand.u32 %v4895, 4294901760
      %6059 = vmatpush.msra.mxu0 %v6058
      %v6060 = vand.u32 %v4894, 4294901760
      %6061 = vmatpush.msra.mxu0 %v6060
      %v6062 = vand.u32 %v4893, 4294901760
      %6063 = vmatpush.msra.mxu0 %v6062
      %v6064 = vand.u32 %v4892, 4294901760
      %6065 = vmatpush.msra.mxu0 %v6064
      %v6066 = vand.u32 %v4891, 4294901760
      %6067 = vmatpush.msra.mxu0 %v6066
      %v6068 = vand.u32 %v4904, 4294901760
      %6069 = vmatmul.f32.gmra.mxu0 %v6068
      %v6070 = vpop.f32.mrf.mxu0
      %v6071 = vadd.f32 %v5918, %v6070
      %v6072 = vand.u32 %v4907, 4294901760
      %6073 = vmatmul.f32.gmra.mxu0 %v6072
      %v6074 = vpop.f32.mrf.mxu0
      %v6075 = vadd.f32 %v5922, %v6074
      %v6076 = vand.u32 %v4910, 4294901760
      %6077 = vmatmul.f32.gmra.mxu0 %v6076
      %v6078 = vpop.f32.mrf.mxu0
      %v6079 = vadd.f32 %v5926, %v6078
      %v6080 = vand.u32 %v4913, 4294901760
      %6081 = vmatmul.f32.gmra.mxu0 %v6080
      %v6082 = vpop.f32.mrf.mxu0
      %v6083 = vadd.f32 %v5930, %v6082
      %v6084 = vand.u32 %v4916, 4294901760
      %6085 = vmatmul.f32.gmra.mxu0 %v6084
      %v6086 = vpop.f32.mrf.mxu0
      %v6087 = vadd.f32 %v5934, %v6086
      %v6088 = vand.u32 %v4919, 4294901760
      %6089 = vmatmul.f32.gmra.mxu0 %v6088
      %v6090 = vpop.f32.mrf.mxu0
      %v6091 = vadd.f32 %v5938, %v6090
      %v6092 = vand.u32 %v4922, 4294901760
      %6093 = vmatmul.f32.gmra.mxu0 %v6092
      %v6094 = vpop.f32.mrf.mxu0
      %v6095 = vadd.f32 %v5942, %v6094
      %v6096 = vand.u32 %v4925, 4294901760
      %6097 = vmatmul.f32.gmra.mxu0 %v6096
      %v6098 = vpop.f32.mrf.mxu0
      %v6099 = vadd.f32 %v5946, %v6098
      %v6100 = vand.u32 %v4928, 4294901760
      %6101 = vmatmul.f32.gmra.mxu0 %v6100
      %v6102 = vpop.f32.mrf.mxu0
      %v6103 = vadd.f32 %v5950, %v6102
      %v6104 = vand.u32 %v4931, 4294901760
      %6105 = vmatmul.f32.gmra.mxu0 %v6104
      %v6106 = vpop.f32.mrf.mxu0
      %v6107 = vadd.f32 %v5954, %v6106
      %v6108 = vand.u32 %v4934, 4294901760
      %6109 = vmatmul.f32.gmra.mxu0 %v6108
      %v6110 = vpop.f32.mrf.mxu0
      %v6111 = vadd.f32 %v5958, %v6110
      %v6112 = vand.u32 %v4937, 4294901760
      %6113 = vmatmul.f32.gmra.mxu0 %v6112
      %v6114 = vpop.f32.mrf.mxu0
      %v6115 = vadd.f32 %v5962, %v6114
      %v6116 = vand.u32 %v4940, 4294901760
      %6117 = vmatmul.f32.gmra.mxu0 %v6116
      %v6118 = vpop.f32.mrf.mxu0
      %v6119 = vadd.f32 %v5966, %v6118
      %v6120 = vand.u32 %v4943, 4294901760
      %6121 = vmatmul.f32.gmra.mxu0 %v6120
      %v6122 = vpop.f32.mrf.mxu0
      %v6123 = vadd.f32 %v5970, %v6122
      %v6124 = vand.u32 %v4946, 4294901760
      %6125 = vmatmul.f32.gmra.mxu0 %v6124
      %v6126 = vpop.f32.mrf.mxu0
      %v6127 = vadd.f32 %v5974, %v6126
      %v6128 = vand.u32 %v4949, 4294901760
      %6129 = vmatmul.f32.gmra.mxu0 %v6128
      %v6130 = vpop.f32.mrf.mxu0
      %v6131 = vadd.f32 %v5978, %v6130
      %v6132 = vand.u32 %v4952, 4294901760
      %6133 = vmatmul.f32.gmra.mxu0 %v6132
      %v6134 = vpop.f32.mrf.mxu0
      %v6135 = vadd.f32 %v5982, %v6134
      %v6136 = vand.u32 %v4955, 4294901760
      %6137 = vmatmul.f32.gmra.mxu0 %v6136
      %v6138 = vpop.f32.mrf.mxu0
      %v6139 = vadd.f32 %v5986, %v6138
      %v6140 = vand.u32 %v4958, 4294901760
      %6141 = vmatmul.f32.gmra.mxu0 %v6140
      %v6142 = vpop.f32.mrf.mxu0
      %v6143 = vadd.f32 %v5990, %v6142
      %v6144 = vand.u32 %v4961, 4294901760
      %6145 = vmatmul.f32.gmra.mxu0 %v6144
      %v6146 = vpop.f32.mrf.mxu0
      %v6147 = vadd.f32 %v5994, %v6146
      %v6148 = vand.u32 %v4964, 4294901760
      %6149 = vmatmul.f32.gmra.mxu0 %v6148
      %v6150 = vpop.f32.mrf.mxu0
      %v6151 = vadd.f32 %v5998, %v6150
      %v6152 = vand.u32 %v4967, 4294901760
      %6153 = vmatmul.f32.gmra.mxu0 %v6152
      %v6154 = vpop.f32.mrf.mxu0
      %v6155 = vadd.f32 %v6002, %v6154
      %v6156 = vand.u32 %v4970, 4294901760
      %6157 = vmatmul.f32.gmra.mxu0 %v6156
      %v6158 = vpop.f32.mrf.mxu0
      %v6159 = vadd.f32 %v6006, %v6158
      %v6160 = vand.u32 %v4973, 4294901760
      %6161 = vmatmul.f32.gmra.mxu0 %v6160
      %v6162 = vpop.f32.mrf.mxu0
      %v6163 = vadd.f32 %v6010, %v6162
      %v6164 = vand.u32 %v4976, 4294901760
      %6165 = vmatmul.f32.gmra.mxu0 %v6164
      %v6166 = vpop.f32.mrf.mxu0
      %v6167 = vadd.f32 %v6014, %v6166
      %v6168 = vand.u32 %v4979, 4294901760
      %6169 = vmatmul.f32.gmra.mxu0 %v6168
      %v6170 = vpop.f32.mrf.mxu0
      %v6171 = vadd.f32 %v6018, %v6170
      %v6172 = vand.u32 %v4982, 4294901760
      %6173 = vmatmul.f32.gmra.mxu0 %v6172
      %v6174 = vpop.f32.mrf.mxu0
      %v6175 = vadd.f32 %v6022, %v6174
      %v6176 = vand.u32 %v4985, 4294901760
      %6177 = vmatmul.f32.gmra.mxu0 %v6176
      %v6178 = vpop.f32.mrf.mxu0
      %v6179 = vadd.f32 %v6026, %v6178
      %v6180 = vand.u32 %v4988, 4294901760
      %6181 = vmatmul.f32.gmra.mxu0 %v6180
      %v6182 = vpop.f32.mrf.mxu0
      %v6183 = vadd.f32 %v6030, %v6182
      %v6184 = vand.u32 %v4991, 4294901760
      %6185 = vmatmul.f32.gmra.mxu0 %v6184
      %v6186 = vpop.f32.mrf.mxu0
      %v6187 = vadd.f32 %v6034, %v6186
      %v6188 = vand.u32 %v4994, 4294901760
      %6189 = vmatmul.f32.gmra.mxu0 %v6188
      %v6190 = vpop.f32.mrf.mxu0
      %v6191 = vadd.f32 %v6038, %v6190
      %v6192 = vand.u32 %v4997, 4294901760
      %6193 = vmatmul.f32.gmra.mxu0 %v6192
      %v6194 = vpop.f32.mrf.mxu0
      %v6195 = vadd.f32 %v6042, %v6194
      %6196 = vdwg.mxu0
      %v6197 = vmax.f32 %v6071, 0.0
      %v6198 = vmax.f32 %v6075, 0.0
      %v6199 = vmax.f32 %v6079, 0.0
      %v6200 = vmax.f32 %v6083, 0.0
      %v6201 = vmax.f32 %v6087, 0.0
      %v6202 = vmax.f32 %v6091, 0.0
      %v6203 = vmax.f32 %v6095, 0.0
      %v6204 = vmax.f32 %v6099, 0.0
      %v6205 = vmax.f32 %v6103, 0.0
      %v6206 = vmax.f32 %v6107, 0.0
      %v6207 = vmax.f32 %v6111, 0.0
      %v6208 = vmax.f32 %v6115, 0.0
      %v6209 = vmax.f32 %v6119, 0.0
      %v6210 = vmax.f32 %v6123, 0.0
      %v6211 = vmax.f32 %v6127, 0.0
      %v6212 = vmax.f32 %v6131, 0.0
      %v6213 = vmax.f32 %v6135, 0.0
      %v6214 = vmax.f32 %v6139, 0.0
      %v6215 = vmax.f32 %v6143, 0.0
      %v6216 = vmax.f32 %v6147, 0.0
      %v6217 = vmax.f32 %v6151, 0.0
      %v6218 = vmax.f32 %v6155, 0.0
      %v6219 = vmax.f32 %v6159, 0.0
      %v6220 = vmax.f32 %v6163, 0.0
      %v6221 = vmax.f32 %v6167, 0.0
      %v6222 = vmax.f32 %v6171, 0.0
      %v6223 = vmax.f32 %v6175, 0.0
      %v6224 = vmax.f32 %v6179, 0.0
      %v6225 = vmax.f32 %v6183, 0.0
      %v6226 = vmax.f32 %v6187, 0.0
      %v6227 = vmax.f32 %v6191, 0.0
      %v6228 = vmax.f32 %v6195, 0.0
      %vm6229 = vcmp.lt.s32.totalorder %v573, 32
      %v6230 = vsel %vm6229, 1, 0
      %v6231 = vcvt.s32.f32 %v6230
      %v6232 = vld [vmem:[%s8] sm:$0x1]
      %v6234 = vperm.slane %v6232, 0
      %v6236 = vmul.f32 %v6197, %v6234
      %v6237 = vmul.f32 %v6198, %v6234
      %v6238 = vmul.f32 %v6199, %v6234
      %v6239 = vmul.f32 %v6200, %v6234
      %v6240 = vmul.f32 %v6201, %v6234
      %v6241 = vmul.f32 %v6202, %v6234
      %v6242 = vmul.f32 %v6203, %v6234
      %v6243 = vmul.f32 %v6204, %v6234
      %v6244 = vmul.f32 %v6205, %v6234
      %v6245 = vmul.f32 %v6206, %v6234
      %v6246 = vmul.f32 %v6207, %v6234
      %v6247 = vmul.f32 %v6208, %v6234
      %v6248 = vmul.f32 %v6209, %v6234
      %v6249 = vmul.f32 %v6210, %v6234
      %v6250 = vmul.f32 %v6211, %v6234
      %v6251 = vmul.f32 %v6212, %v6234
      %v6252 = vmul.f32 %v6213, %v6234
      %v6253 = vmul.f32 %v6214, %v6234
      %v6254 = vmul.f32 %v6215, %v6234
      %v6255 = vmul.f32 %v6216, %v6234
      %v6256 = vmul.f32 %v6217, %v6234
      %v6257 = vmul.f32 %v6218, %v6234
      %v6258 = vmul.f32 %v6219, %v6234
      %v6259 = vmul.f32 %v6220, %v6234
      %v6260 = vmul.f32 %v6221, %v6234
      %v6261 = vmul.f32 %v6222, %v6234
      %v6262 = vmul.f32 %v6223, %v6234
      %v6263 = vmul.f32 %v6224, %v6234
      %v6264 = vmul.f32 %v6225, %v6234
      %v6265 = vmul.f32 %v6226, %v6234
      %v6266 = vmul.f32 %v6227, %v6234
      %v6267 = vmul.f32 %v6228, %v6234
      %v6268 = vmul.f32 %v6236, %v6231
      %v6269 = vmul.f32 %v6237, %v6231
      %v6270 = vmul.f32 %v6238, %v6231
      %v6271 = vmul.f32 %v6239, %v6231
      %v6272 = vmul.f32 %v6240, %v6231
      %v6273 = vmul.f32 %v6241, %v6231
      %v6274 = vmul.f32 %v6242, %v6231
      %v6275 = vmul.f32 %v6243, %v6231
      %v6276 = vmul.f32 %v6244, %v6231
      %v6277 = vmul.f32 %v6245, %v6231
      %v6278 = vmul.f32 %v6246, %v6231
      %v6279 = vmul.f32 %v6247, %v6231
      %v6280 = vmul.f32 %v6248, %v6231
      %v6281 = vmul.f32 %v6249, %v6231
      %v6282 = vmul.f32 %v6250, %v6231
      %v6283 = vmul.f32 %v6251, %v6231
      %v6284 = vmul.f32 %v6252, %v6231
      %v6285 = vmul.f32 %v6253, %v6231
      %v6286 = vmul.f32 %v6254, %v6231
      %v6287 = vmul.f32 %v6255, %v6231
      %v6288 = vmul.f32 %v6256, %v6231
      %v6289 = vmul.f32 %v6257, %v6231
      %v6290 = vmul.f32 %v6258, %v6231
      %v6291 = vmul.f32 %v6259, %v6231
      %v6292 = vmul.f32 %v6260, %v6231
      %v6293 = vmul.f32 %v6261, %v6231
      %v6294 = vmul.f32 %v6262, %v6231
      %v6295 = vmul.f32 %v6263, %v6231
      %v6296 = vmul.f32 %v6264, %v6231
      %v6297 = vmul.f32 %v6265, %v6231
      %v6298 = vmul.f32 %v6266, %v6231
      %v6299 = vmul.f32 %v6267, %v6231
      %v6300 = vsel %vm3564, %v6268, 0.0
      %6301 = vadd.xlane.f32.xlu0 %v6300
      %v6302 = vpop.xlane.xlu0 %6301
      %v6303 = vsel %vm3564, %v6269, 0.0
      %6304 = vadd.xlane.f32.xlu0 %v6303
      %v6305 = vpop.xlane.xlu0 %6304
      %v6306 = vsel %vm3564, %v6270, 0.0
      %6307 = vadd.xlane.f32.xlu0 %v6306
      %v6308 = vpop.xlane.xlu0 %6307
      %v6309 = vsel %vm3564, %v6271, 0.0
      %6310 = vadd.xlane.f32.xlu0 %v6309
      %v6311 = vpop.xlane.xlu0 %6310
      %v6312 = vsel %vm3564, %v6272, 0.0
      %6313 = vadd.xlane.f32.xlu0 %v6312
      %v6314 = vpop.xlane.xlu0 %6313
      %v6315 = vsel %vm3564, %v6273, 0.0
      %6316 = vadd.xlane.f32.xlu0 %v6315
      %v6317 = vpop.xlane.xlu0 %6316
      %v6318 = vsel %vm3564, %v6274, 0.0
      %6319 = vadd.xlane.f32.xlu0 %v6318
      %v6320 = vpop.xlane.xlu0 %6319
      %v6321 = vsel %vm3564, %v6275, 0.0
      %6322 = vadd.xlane.f32.xlu0 %v6321
      %v6323 = vpop.xlane.xlu0 %6322
      %v6324 = vsel %vm3564, %v6276, 0.0
      %6325 = vadd.xlane.f32.xlu0 %v6324
      %v6326 = vpop.xlane.xlu0 %6325
      %v6327 = vsel %vm3564, %v6277, 0.0
      %6328 = vadd.xlane.f32.xlu0 %v6327
      %v6329 = vpop.xlane.xlu0 %6328
      %v6330 = vsel %vm3564, %v6278, 0.0
      %6331 = vadd.xlane.f32.xlu0 %v6330
      %v6332 = vpop.xlane.xlu0 %6331
      %v6333 = vsel %vm3564, %v6279, 0.0
      %6334 = vadd.xlane.f32.xlu0 %v6333
      %v6335 = vpop.xlane.xlu0 %6334
      %v6336 = vsel %vm3564, %v6280, 0.0
      %6337 = vadd.xlane.f32.xlu0 %v6336
      %v6338 = vpop.xlane.xlu0 %6337
      %v6339 = vsel %vm3564, %v6281, 0.0
      %6340 = vadd.xlane.f32.xlu0 %v6339
      %v6341 = vpop.xlane.xlu0 %6340
      %v6342 = vsel %vm3564, %v6282, 0.0
      %6343 = vadd.xlane.f32.xlu0 %v6342
      %v6344 = vpop.xlane.xlu0 %6343
      %v6345 = vsel %vm3564, %v6283, 0.0
      %6346 = vadd.xlane.f32.xlu0 %v6345
      %v6347 = vpop.xlane.xlu0 %6346
      %v6348 = vsel %vm3564, %v6284, 0.0
      %6349 = vadd.xlane.f32.xlu0 %v6348
      %v6350 = vpop.xlane.xlu0 %6349
      %v6351 = vsel %vm3564, %v6285, 0.0
      %6352 = vadd.xlane.f32.xlu0 %v6351
      %v6353 = vpop.xlane.xlu0 %6352
      %v6354 = vsel %vm3564, %v6286, 0.0
      %6355 = vadd.xlane.f32.xlu0 %v6354
      %v6356 = vpop.xlane.xlu0 %6355
      %v6357 = vsel %vm3564, %v6287, 0.0
      %6358 = vadd.xlane.f32.xlu0 %v6357
      %v6359 = vpop.xlane.xlu0 %6358
      %v6360 = vsel %vm3564, %v6288, 0.0
      %6361 = vadd.xlane.f32.xlu0 %v6360
      %v6362 = vpop.xlane.xlu0 %6361
      %v6363 = vsel %vm3564, %v6289, 0.0
      %6364 = vadd.xlane.f32.xlu0 %v6363
      %v6365 = vpop.xlane.xlu0 %6364
      %v6366 = vsel %vm3564, %v6290, 0.0
      %6367 = vadd.xlane.f32.xlu0 %v6366
      %v6368 = vpop.xlane.xlu0 %6367
      %v6369 = vsel %vm3564, %v6291, 0.0
      %6370 = vadd.xlane.f32.xlu0 %v6369
      %v6371 = vpop.xlane.xlu0 %6370
      %v6372 = vsel %vm3564, %v6292, 0.0
      %6373 = vadd.xlane.f32.xlu0 %v6372
      %v6374 = vpop.xlane.xlu0 %6373
      %v6375 = vsel %vm3564, %v6293, 0.0
      %6376 = vadd.xlane.f32.xlu0 %v6375
      %v6377 = vpop.xlane.xlu0 %6376
      %v6378 = vsel %vm3564, %v6294, 0.0
      %6379 = vadd.xlane.f32.xlu0 %v6378
      %v6380 = vpop.xlane.xlu0 %6379
      %v6381 = vsel %vm3564, %v6295, 0.0
      %6382 = vadd.xlane.f32.xlu0 %v6381
      %v6383 = vpop.xlane.xlu0 %6382
      %v6384 = vsel %vm3564, %v6296, 0.0
      %6385 = vadd.xlane.f32.xlu0 %v6384
      %v6386 = vpop.xlane.xlu0 %6385
      %v6387 = vsel %vm3564, %v6297, 0.0
      %6388 = vadd.xlane.f32.xlu0 %v6387
      %v6389 = vpop.xlane.xlu0 %6388
      %v6390 = vsel %vm3564, %v6298, 0.0
      %6391 = vadd.xlane.f32.xlu0 %v6390
      %v6392 = vpop.xlane.xlu0 %6391
      %v6393 = vsel %vm3564, %v6299, 0.0
      %6394 = vadd.xlane.f32.xlu0 %v6393
      %v6395 = vpop.xlane.xlu0 %6394
      %v6396 = vld [vmem:[#allocation3] sm:$0x1]
      %v6398 = vperm.slane %v6396, 0
      %v6400 = vadd.f32 %v6302, %v6398
      %v6401 = vadd.f32 %v6305, %v6398
      %v6402 = vadd.f32 %v6308, %v6398
      %v6403 = vadd.f32 %v6311, %v6398
      %v6404 = vadd.f32 %v6314, %v6398
      %v6405 = vadd.f32 %v6317, %v6398
      %v6406 = vadd.f32 %v6320, %v6398
      %v6407 = vadd.f32 %v6323, %v6398
      %v6408 = vadd.f32 %v6326, %v6398
      %v6409 = vadd.f32 %v6329, %v6398
      %v6410 = vadd.f32 %v6332, %v6398
      %v6411 = vadd.f32 %v6335, %v6398
      %v6412 = vadd.f32 %v6338, %v6398
      %v6413 = vadd.f32 %v6341, %v6398
      %v6414 = vadd.f32 %v6344, %v6398
      %v6415 = vadd.f32 %v6347, %v6398
      %v6416 = vadd.f32 %v6350, %v6398
      %v6417 = vadd.f32 %v6353, %v6398
      %v6418 = vadd.f32 %v6356, %v6398
      %v6419 = vadd.f32 %v6359, %v6398
      %v6420 = vadd.f32 %v6362, %v6398
      %v6421 = vadd.f32 %v6365, %v6398
      %v6422 = vadd.f32 %v6368, %v6398
      %v6423 = vadd.f32 %v6371, %v6398
      %v6424 = vadd.f32 %v6374, %v6398
      %v6425 = vadd.f32 %v6377, %v6398
      %v6426 = vadd.f32 %v6380, %v6398
      %v6427 = vadd.f32 %v6383, %v6398
      %v6428 = vadd.f32 %v6386, %v6398
      %v6429 = vadd.f32 %v6389, %v6398
      %v6430 = vadd.f32 %v6392, %v6398
      %v6431 = vadd.f32 %v6395, %v6398
      %v6432 = vxor.u32 %v6400, 2147483648
      %v6433 = vxor.u32 %v6401, 2147483648
      %v6434 = vxor.u32 %v6402, 2147483648
      %v6435 = vxor.u32 %v6403, 2147483648
      %v6436 = vxor.u32 %v6404, 2147483648
      %v6437 = vxor.u32 %v6405, 2147483648
      %v6438 = vxor.u32 %v6406, 2147483648
      %v6439 = vxor.u32 %v6407, 2147483648
      %v6440 = vxor.u32 %v6408, 2147483648
      %v6441 = vxor.u32 %v6409, 2147483648
      %v6442 = vxor.u32 %v6410, 2147483648
      %v6443 = vxor.u32 %v6411, 2147483648
      %v6444 = vxor.u32 %v6412, 2147483648
      %v6445 = vxor.u32 %v6413, 2147483648
      %v6446 = vxor.u32 %v6414, 2147483648
      %v6447 = vxor.u32 %v6415, 2147483648
      %v6448 = vxor.u32 %v6416, 2147483648
      %v6449 = vxor.u32 %v6417, 2147483648
      %v6450 = vxor.u32 %v6418, 2147483648
      %v6451 = vxor.u32 %v6419, 2147483648
      %v6452 = vxor.u32 %v6420, 2147483648
      %v6453 = vxor.u32 %v6421, 2147483648
      %v6454 = vxor.u32 %v6422, 2147483648
      %v6455 = vxor.u32 %v6423, 2147483648
      %v6456 = vxor.u32 %v6424, 2147483648
      %v6457 = vxor.u32 %v6425, 2147483648
      %v6458 = vxor.u32 %v6426, 2147483648
      %v6459 = vxor.u32 %v6427, 2147483648
      %v6460 = vxor.u32 %v6428, 2147483648
      %v6461 = vxor.u32 %v6429, 2147483648
      %v6462 = vxor.u32 %v6430, 2147483648
      %v6463 = vxor.u32 %v6431, 2147483648
      %v6464 = vmul.f32 %v6432, 1.442695
      %v6465 = vpow.pop %v6464
      %v6466 = vmul.f32 %v6433, 1.442695
      %v6467 = vpow.pop %v6466
      %v6468 = vmul.f32 %v6434, 1.442695
      %v6469 = vpow.pop %v6468
      %v6470 = vmul.f32 %v6435, 1.442695
      %v6471 = vpow.pop %v6470
      %v6472 = vmul.f32 %v6436, 1.442695
      %v6473 = vpow.pop %v6472
      %v6474 = vmul.f32 %v6437, 1.442695
      %v6475 = vpow.pop %v6474
      %v6476 = vmul.f32 %v6438, 1.442695
      %v6477 = vpow.pop %v6476
      %v6478 = vmul.f32 %v6439, 1.442695
      %v6479 = vpow.pop %v6478
      %v6480 = vmul.f32 %v6440, 1.442695
      %v6481 = vpow.pop %v6480
      %v6482 = vmul.f32 %v6441, 1.442695
      %v6483 = vpow.pop %v6482
      %v6484 = vmul.f32 %v6442, 1.442695
      %v6485 = vpow.pop %v6484
      %v6486 = vmul.f32 %v6443, 1.442695
      %v6487 = vpow.pop %v6486
      %v6488 = vmul.f32 %v6444, 1.442695
      %v6489 = vpow.pop %v6488
      %v6490 = vmul.f32 %v6445, 1.442695
      %v6491 = vpow.pop %v6490
      %v6492 = vmul.f32 %v6446, 1.442695
      %v6493 = vpow.pop %v6492
      %v6494 = vmul.f32 %v6447, 1.442695
      %v6495 = vpow.pop %v6494
      %v6496 = vmul.f32 %v6448, 1.442695
      %v6497 = vpow.pop %v6496
      %v6498 = vmul.f32 %v6449, 1.442695
      %v6499 = vpow.pop %v6498
      %v6500 = vmul.f32 %v6450, 1.442695
      %v6501 = vpow.pop %v6500
      %v6502 = vmul.f32 %v6451, 1.442695
      %v6503 = vpow.pop %v6502
      %v6504 = vmul.f32 %v6452, 1.442695
      %v6505 = vpow.pop %v6504
      %v6506 = vmul.f32 %v6453, 1.442695
      %v6507 = vpow.pop %v6506
      %v6508 = vmul.f32 %v6454, 1.442695
      %v6509 = vpow.pop %v6508
      %v6510 = vmul.f32 %v6455, 1.442695
      %v6511 = vpow.pop %v6510
      %v6512 = vmul.f32 %v6456, 1.442695
      %v6513 = vpow.pop %v6512
      %v6514 = vmul.f32 %v6457, 1.442695
      %v6515 = vpow.pop %v6514
      %v6516 = vmul.f32 %v6458, 1.442695
      %v6517 = vpow.pop %v6516
      %v6518 = vmul.f32 %v6459, 1.442695
      %v6519 = vpow.pop %v6518
      %v6520 = vmul.f32 %v6460, 1.442695
      %v6521 = vpow.pop %v6520
      %v6522 = vmul.f32 %v6461, 1.442695
      %v6523 = vpow.pop %v6522
      %v6524 = vmul.f32 %v6462, 1.442695
      %v6525 = vpow.pop %v6524
      %v6526 = vmul.f32 %v6463, 1.442695
      %v6527 = vpow.pop %v6526
      %v6528 = vadd.f32 %v6465, 1.0
      %v6529 = vadd.f32 %v6467, 1.0
      %v6530 = vadd.f32 %v6469, 1.0
      %v6531 = vadd.f32 %v6471, 1.0
      %v6532 = vadd.f32 %v6473, 1.0
      %v6533 = vadd.f32 %v6475, 1.0
      %v6534 = vadd.f32 %v6477, 1.0
      %v6535 = vadd.f32 %v6479, 1.0
      %v6536 = vadd.f32 %v6481, 1.0
      %v6537 = vadd.f32 %v6483, 1.0
      %v6538 = vadd.f32 %v6485, 1.0
      %v6539 = vadd.f32 %v6487, 1.0
      %v6540 = vadd.f32 %v6489, 1.0
      %v6541 = vadd.f32 %v6491, 1.0
      %v6542 = vadd.f32 %v6493, 1.0
      %v6543 = vadd.f32 %v6495, 1.0
      %v6544 = vadd.f32 %v6497, 1.0
      %v6545 = vadd.f32 %v6499, 1.0
      %v6546 = vadd.f32 %v6501, 1.0
      %v6547 = vadd.f32 %v6503, 1.0
      %v6548 = vadd.f32 %v6505, 1.0
      %v6549 = vadd.f32 %v6507, 1.0
      %v6550 = vadd.f32 %v6509, 1.0
      %v6551 = vadd.f32 %v6511, 1.0
      %v6552 = vadd.f32 %v6513, 1.0
      %v6553 = vadd.f32 %v6515, 1.0
      %v6554 = vadd.f32 %v6517, 1.0
      %v6555 = vadd.f32 %v6519, 1.0
      %v6556 = vadd.f32 %v6521, 1.0
      %v6557 = vadd.f32 %v6523, 1.0
      %v6558 = vadd.f32 %v6525, 1.0
      %v6559 = vadd.f32 %v6527, 1.0
      %v6560 = vrcp.pop %v6528
      %v6561 = vmul.f32 %v6528, %v6560
      %v6562 = vsub.f32 1.0, %v6561
      %v6563 = vmul.f32 %v6560, %v6562
      %v6564 = vadd.f32 %v6560, %v6563
      %vm6565 = vweird.f32 %v6528
      %vm6566 = vweird.f32 %v6560
      %vm6567 = vmor %vm6565, %vm6566
      %v6568 = vsel %vm6567, %v6560, %v6564
      %v6569 = vand.u32 2147483647, %v6528
      %vm6570 = vcmp.eq.f32.partialorder %v6569, 8.507059e+37
      %v6571 = vand.u32 %v6528, 2147483648
      %v6572 = vor.u32 1.1754944e-38, %v6571
      %v6573 = vsel %vm6570, %v6572, %v6568
      %v6574 = vmul.f32 1.0, %v6573
      %v6575 = vrcp.pop %v6529
      %v6576 = vmul.f32 %v6529, %v6575
      %v6577 = vsub.f32 1.0, %v6576
      %v6578 = vmul.f32 %v6575, %v6577
      %v6579 = vadd.f32 %v6575, %v6578
      %vm6580 = vweird.f32 %v6529
      %vm6581 = vweird.f32 %v6575
      %vm6582 = vmor %vm6580, %vm6581
      %v6583 = vsel %vm6582, %v6575, %v6579
      %v6584 = vand.u32 2147483647, %v6529
      %vm6585 = vcmp.eq.f32.partialorder %v6584, 8.507059e+37
      %v6586 = vand.u32 %v6529, 2147483648
      %v6587 = vor.u32 1.1754944e-38, %v6586
      %v6588 = vsel %vm6585, %v6587, %v6583
      %v6589 = vmul.f32 1.0, %v6588
      %v6590 = vrcp.pop %v6530
      %v6591 = vmul.f32 %v6530, %v6590
      %v6592 = vsub.f32 1.0, %v6591
      %v6593 = vmul.f32 %v6590, %v6592
      %v6594 = vadd.f32 %v6590, %v6593
      %vm6595 = vweird.f32 %v6530
      %vm6596 = vweird.f32 %v6590
      %vm6597 = vmor %vm6595, %vm6596
      %v6598 = vsel %vm6597, %v6590, %v6594
      %v6599 = vand.u32 2147483647, %v6530
      %vm6600 = vcmp.eq.f32.partialorder %v6599, 8.507059e+37
      %v6601 = vand.u32 %v6530, 2147483648
      %v6602 = vor.u32 1.1754944e-38, %v6601
      %v6603 = vsel %vm6600, %v6602, %v6598
      %v6604 = vmul.f32 1.0, %v6603
      %v6605 = vrcp.pop %v6531
      %v6606 = vmul.f32 %v6531, %v6605
      %v6607 = vsub.f32 1.0, %v6606
      %v6608 = vmul.f32 %v6605, %v6607
      %v6609 = vadd.f32 %v6605, %v6608
      %vm6610 = vweird.f32 %v6531
      %vm6611 = vweird.f32 %v6605
      %vm6612 = vmor %vm6610, %vm6611
      %v6613 = vsel %vm6612, %v6605, %v6609
      %v6614 = vand.u32 2147483647, %v6531
      %vm6615 = vcmp.eq.f32.partialorder %v6614, 8.507059e+37
      %v6616 = vand.u32 %v6531, 2147483648
      %v6617 = vor.u32 1.1754944e-38, %v6616
      %v6618 = vsel %vm6615, %v6617, %v6613
      %v6619 = vmul.f32 1.0, %v6618
      %v6620 = vrcp.pop %v6532
      %v6621 = vmul.f32 %v6532, %v6620
      %v6622 = vsub.f32 1.0, %v6621
      %v6623 = vmul.f32 %v6620, %v6622
      %v6624 = vadd.f32 %v6620, %v6623
      %vm6625 = vweird.f32 %v6532
      %vm6626 = vweird.f32 %v6620
      %vm6627 = vmor %vm6625, %vm6626
      %v6628 = vsel %vm6627, %v6620, %v6624
      %v6629 = vand.u32 2147483647, %v6532
      %vm6630 = vcmp.eq.f32.partialorder %v6629, 8.507059e+37
      %v6631 = vand.u32 %v6532, 2147483648
      %v6632 = vor.u32 1.1754944e-38, %v6631
      %v6633 = vsel %vm6630, %v6632, %v6628
      %v6634 = vmul.f32 1.0, %v6633
      %v6635 = vrcp.pop %v6533
      %v6636 = vmul.f32 %v6533, %v6635
      %v6637 = vsub.f32 1.0, %v6636
      %v6638 = vmul.f32 %v6635, %v6637
      %v6639 = vadd.f32 %v6635, %v6638
      %vm6640 = vweird.f32 %v6533
      %vm6641 = vweird.f32 %v6635
      %vm6642 = vmor %vm6640, %vm6641
      %v6643 = vsel %vm6642, %v6635, %v6639
      %v6644 = vand.u32 2147483647, %v6533
      %vm6645 = vcmp.eq.f32.partialorder %v6644, 8.507059e+37
      %v6646 = vand.u32 %v6533, 2147483648
      %v6647 = vor.u32 1.1754944e-38, %v6646
      %v6648 = vsel %vm6645, %v6647, %v6643
      %v6649 = vmul.f32 1.0, %v6648
      %v6650 = vrcp.pop %v6534
      %v6651 = vmul.f32 %v6534, %v6650
      %v6652 = vsub.f32 1.0, %v6651
      %v6653 = vmul.f32 %v6650, %v6652
      %v6654 = vadd.f32 %v6650, %v6653
      %vm6655 = vweird.f32 %v6534
      %vm6656 = vweird.f32 %v6650
      %vm6657 = vmor %vm6655, %vm6656
      %v6658 = vsel %vm6657, %v6650, %v6654
      %v6659 = vand.u32 2147483647, %v6534
      %vm6660 = vcmp.eq.f32.partialorder %v6659, 8.507059e+37
      %v6661 = vand.u32 %v6534, 2147483648
      %v6662 = vor.u32 1.1754944e-38, %v6661
      %v6663 = vsel %vm6660, %v6662, %v6658
      %v6664 = vmul.f32 1.0, %v6663
      %v6665 = vrcp.pop %v6535
      %v6666 = vmul.f32 %v6535, %v6665
      %v6667 = vsub.f32 1.0, %v6666
      %v6668 = vmul.f32 %v6665, %v6667
      %v6669 = vadd.f32 %v6665, %v6668
      %vm6670 = vweird.f32 %v6535
      %vm6671 = vweird.f32 %v6665
      %vm6672 = vmor %vm6670, %vm6671
      %v6673 = vsel %vm6672, %v6665, %v6669
      %v6674 = vand.u32 2147483647, %v6535
      %vm6675 = vcmp.eq.f32.partialorder %v6674, 8.507059e+37
      %v6676 = vand.u32 %v6535, 2147483648
      %v6677 = vor.u32 1.1754944e-38, %v6676
      %v6678 = vsel %vm6675, %v6677, %v6673
      %v6679 = vmul.f32 1.0, %v6678
      %v6680 = vrcp.pop %v6536
      %v6681 = vmul.f32 %v6536, %v6680
      %v6682 = vsub.f32 1.0, %v6681
      %v6683 = vmul.f32 %v6680, %v6682
      %v6684 = vadd.f32 %v6680, %v6683
      %vm6685 = vweird.f32 %v6536
      %vm6686 = vweird.f32 %v6680
      %vm6687 = vmor %vm6685, %vm6686
      %v6688 = vsel %vm6687, %v6680, %v6684
      %v6689 = vand.u32 2147483647, %v6536
      %vm6690 = vcmp.eq.f32.partialorder %v6689, 8.507059e+37
      %v6691 = vand.u32 %v6536, 2147483648
      %v6692 = vor.u32 1.1754944e-38, %v6691
      %v6693 = vsel %vm6690, %v6692, %v6688
      %v6694 = vmul.f32 1.0, %v6693
      %v6695 = vrcp.pop %v6537
      %v6696 = vmul.f32 %v6537, %v6695
      %v6697 = vsub.f32 1.0, %v6696
      %v6698 = vmul.f32 %v6695, %v6697
      %v6699 = vadd.f32 %v6695, %v6698
      %vm6700 = vweird.f32 %v6537
      %vm6701 = vweird.f32 %v6695
      %vm6702 = vmor %vm6700, %vm6701
      %v6703 = vsel %vm6702, %v6695, %v6699
      %v6704 = vand.u32 2147483647, %v6537
      %vm6705 = vcmp.eq.f32.partialorder %v6704, 8.507059e+37
      %v6706 = vand.u32 %v6537, 2147483648
      %v6707 = vor.u32 1.1754944e-38, %v6706
      %v6708 = vsel %vm6705, %v6707, %v6703
      %v6709 = vmul.f32 1.0, %v6708
      %v6710 = vrcp.pop %v6538
      %v6711 = vmul.f32 %v6538, %v6710
      %v6712 = vsub.f32 1.0, %v6711
      %v6713 = vmul.f32 %v6710, %v6712
      %v6714 = vadd.f32 %v6710, %v6713
      %vm6715 = vweird.f32 %v6538
      %vm6716 = vweird.f32 %v6710
      %vm6717 = vmor %vm6715, %vm6716
      %v6718 = vsel %vm6717, %v6710, %v6714
      %v6719 = vand.u32 2147483647, %v6538
      %vm6720 = vcmp.eq.f32.partialorder %v6719, 8.507059e+37
      %v6721 = vand.u32 %v6538, 2147483648
      %v6722 = vor.u32 1.1754944e-38, %v6721
      %v6723 = vsel %vm6720, %v6722, %v6718
      %v6724 = vmul.f32 1.0, %v6723
      %v6725 = vrcp.pop %v6539
      %v6726 = vmul.f32 %v6539, %v6725
      %v6727 = vsub.f32 1.0, %v6726
      %v6728 = vmul.f32 %v6725, %v6727
      %v6729 = vadd.f32 %v6725, %v6728
      %vm6730 = vweird.f32 %v6539
      %vm6731 = vweird.f32 %v6725
      %vm6732 = vmor %vm6730, %vm6731
      %v6733 = vsel %vm6732, %v6725, %v6729
      %v6734 = vand.u32 2147483647, %v6539
      %vm6735 = vcmp.eq.f32.partialorder %v6734, 8.507059e+37
      %v6736 = vand.u32 %v6539, 2147483648
      %v6737 = vor.u32 1.1754944e-38, %v6736
      %v6738 = vsel %vm6735, %v6737, %v6733
      %v6739 = vmul.f32 1.0, %v6738
      %v6740 = vrcp.pop %v6540
      %v6741 = vmul.f32 %v6540, %v6740
      %v6742 = vsub.f32 1.0, %v6741
      %v6743 = vmul.f32 %v6740, %v6742
      %v6744 = vadd.f32 %v6740, %v6743
      %vm6745 = vweird.f32 %v6540
      %vm6746 = vweird.f32 %v6740
      %vm6747 = vmor %vm6745, %vm6746
      %v6748 = vsel %vm6747, %v6740, %v6744
      %v6749 = vand.u32 2147483647, %v6540
      %vm6750 = vcmp.eq.f32.partialorder %v6749, 8.507059e+37
      %v6751 = vand.u32 %v6540, 2147483648
      %v6752 = vor.u32 1.1754944e-38, %v6751
      %v6753 = vsel %vm6750, %v6752, %v6748
      %v6754 = vmul.f32 1.0, %v6753
      %v6755 = vrcp.pop %v6541
      %v6756 = vmul.f32 %v6541, %v6755
      %v6757 = vsub.f32 1.0, %v6756
      %v6758 = vmul.f32 %v6755, %v6757
      %v6759 = vadd.f32 %v6755, %v6758
      %vm6760 = vweird.f32 %v6541
      %vm6761 = vweird.f32 %v6755
      %vm6762 = vmor %vm6760, %vm6761
      %v6763 = vsel %vm6762, %v6755, %v6759
      %v6764 = vand.u32 2147483647, %v6541
      %vm6765 = vcmp.eq.f32.partialorder %v6764, 8.507059e+37
      %v6766 = vand.u32 %v6541, 2147483648
      %v6767 = vor.u32 1.1754944e-38, %v6766
      %v6768 = vsel %vm6765, %v6767, %v6763
      %v6769 = vmul.f32 1.0, %v6768
      %v6770 = vrcp.pop %v6542
      %v6771 = vmul.f32 %v6542, %v6770
      %v6772 = vsub.f32 1.0, %v6771
      %v6773 = vmul.f32 %v6770, %v6772
      %v6774 = vadd.f32 %v6770, %v6773
      %vm6775 = vweird.f32 %v6542
      %vm6776 = vweird.f32 %v6770
      %vm6777 = vmor %vm6775, %vm6776
      %v6778 = vsel %vm6777, %v6770, %v6774
      %v6779 = vand.u32 2147483647, %v6542
      %vm6780 = vcmp.eq.f32.partialorder %v6779, 8.507059e+37
      %v6781 = vand.u32 %v6542, 2147483648
      %v6782 = vor.u32 1.1754944e-38, %v6781
      %v6783 = vsel %vm6780, %v6782, %v6778
      %v6784 = vmul.f32 1.0, %v6783
      %v6785 = vrcp.pop %v6543
      %v6786 = vmul.f32 %v6543, %v6785
      %v6787 = vsub.f32 1.0, %v6786
      %v6788 = vmul.f32 %v6785, %v6787
      %v6789 = vadd.f32 %v6785, %v6788
      %vm6790 = vweird.f32 %v6543
      %vm6791 = vweird.f32 %v6785
      %vm6792 = vmor %vm6790, %vm6791
      %v6793 = vsel %vm6792, %v6785, %v6789
      %v6794 = vand.u32 2147483647, %v6543
      %vm6795 = vcmp.eq.f32.partialorder %v6794, 8.507059e+37
      %v6796 = vand.u32 %v6543, 2147483648
      %v6797 = vor.u32 1.1754944e-38, %v6796
      %v6798 = vsel %vm6795, %v6797, %v6793
      %v6799 = vmul.f32 1.0, %v6798
      %v6800 = vrcp.pop %v6544
      %v6801 = vmul.f32 %v6544, %v6800
      %v6802 = vsub.f32 1.0, %v6801
      %v6803 = vmul.f32 %v6800, %v6802
      %v6804 = vadd.f32 %v6800, %v6803
      %vm6805 = vweird.f32 %v6544
      %vm6806 = vweird.f32 %v6800
      %vm6807 = vmor %vm6805, %vm6806
      %v6808 = vsel %vm6807, %v6800, %v6804
      %v6809 = vand.u32 2147483647, %v6544
      %vm6810 = vcmp.eq.f32.partialorder %v6809, 8.507059e+37
      %v6811 = vand.u32 %v6544, 2147483648
      %v6812 = vor.u32 1.1754944e-38, %v6811
      %v6813 = vsel %vm6810, %v6812, %v6808
      %v6814 = vmul.f32 1.0, %v6813
      %v6815 = vrcp.pop %v6545
      %v6816 = vmul.f32 %v6545, %v6815
      %v6817 = vsub.f32 1.0, %v6816
      %v6818 = vmul.f32 %v6815, %v6817
      %v6819 = vadd.f32 %v6815, %v6818
      %vm6820 = vweird.f32 %v6545
      %vm6821 = vweird.f32 %v6815
      %vm6822 = vmor %vm6820, %vm6821
      %v6823 = vsel %vm6822, %v6815, %v6819
      %v6824 = vand.u32 2147483647, %v6545
      %vm6825 = vcmp.eq.f32.partialorder %v6824, 8.507059e+37
      %v6826 = vand.u32 %v6545, 2147483648
      %v6827 = vor.u32 1.1754944e-38, %v6826
      %v6828 = vsel %vm6825, %v6827, %v6823
      %v6829 = vmul.f32 1.0, %v6828
      %v6830 = vrcp.pop %v6546
      %v6831 = vmul.f32 %v6546, %v6830
      %v6832 = vsub.f32 1.0, %v6831
      %v6833 = vmul.f32 %v6830, %v6832
      %v6834 = vadd.f32 %v6830, %v6833
      %vm6835 = vweird.f32 %v6546
      %vm6836 = vweird.f32 %v6830
      %vm6837 = vmor %vm6835, %vm6836
      %v6838 = vsel %vm6837, %v6830, %v6834
      %v6839 = vand.u32 2147483647, %v6546
      %vm6840 = vcmp.eq.f32.partialorder %v6839, 8.507059e+37
      %v6841 = vand.u32 %v6546, 2147483648
      %v6842 = vor.u32 1.1754944e-38, %v6841
      %v6843 = vsel %vm6840, %v6842, %v6838
      %v6844 = vmul.f32 1.0, %v6843
      %v6845 = vrcp.pop %v6547
      %v6846 = vmul.f32 %v6547, %v6845
      %v6847 = vsub.f32 1.0, %v6846
      %v6848 = vmul.f32 %v6845, %v6847
      %v6849 = vadd.f32 %v6845, %v6848
      %vm6850 = vweird.f32 %v6547
      %vm6851 = vweird.f32 %v6845
      %vm6852 = vmor %vm6850, %vm6851
      %v6853 = vsel %vm6852, %v6845, %v6849
      %v6854 = vand.u32 2147483647, %v6547
      %vm6855 = vcmp.eq.f32.partialorder %v6854, 8.507059e+37
      %v6856 = vand.u32 %v6547, 2147483648
      %v6857 = vor.u32 1.1754944e-38, %v6856
      %v6858 = vsel %vm6855, %v6857, %v6853
      %v6859 = vmul.f32 1.0, %v6858
      %v6860 = vrcp.pop %v6548
      %v6861 = vmul.f32 %v6548, %v6860
      %v6862 = vsub.f32 1.0, %v6861
      %v6863 = vmul.f32 %v6860, %v6862
      %v6864 = vadd.f32 %v6860, %v6863
      %vm6865 = vweird.f32 %v6548
      %vm6866 = vweird.f32 %v6860
      %vm6867 = vmor %vm6865, %vm6866
      %v6868 = vsel %vm6867, %v6860, %v6864
      %v6869 = vand.u32 2147483647, %v6548
      %vm6870 = vcmp.eq.f32.partialorder %v6869, 8.507059e+37
      %v6871 = vand.u32 %v6548, 2147483648
      %v6872 = vor.u32 1.1754944e-38, %v6871
      %v6873 = vsel %vm6870, %v6872, %v6868
      %v6874 = vmul.f32 1.0, %v6873
      %v6875 = vrcp.pop %v6549
      %v6876 = vmul.f32 %v6549, %v6875
      %v6877 = vsub.f32 1.0, %v6876
      %v6878 = vmul.f32 %v6875, %v6877
      %v6879 = vadd.f32 %v6875, %v6878
      %vm6880 = vweird.f32 %v6549
      %vm6881 = vweird.f32 %v6875
      %vm6882 = vmor %vm6880, %vm6881
      %v6883 = vsel %vm6882, %v6875, %v6879
      %v6884 = vand.u32 2147483647, %v6549
      %vm6885 = vcmp.eq.f32.partialorder %v6884, 8.507059e+37
      %v6886 = vand.u32 %v6549, 2147483648
      %v6887 = vor.u32 1.1754944e-38, %v6886
      %v6888 = vsel %vm6885, %v6887, %v6883
      %v6889 = vmul.f32 1.0, %v6888
      %v6890 = vrcp.pop %v6550
      %v6891 = vmul.f32 %v6550, %v6890
      %v6892 = vsub.f32 1.0, %v6891
      %v6893 = vmul.f32 %v6890, %v6892
      %v6894 = vadd.f32 %v6890, %v6893
      %vm6895 = vweird.f32 %v6550
      %vm6896 = vweird.f32 %v6890
      %vm6897 = vmor %vm6895, %vm6896
      %v6898 = vsel %vm6897, %v6890, %v6894
      %v6899 = vand.u32 2147483647, %v6550
      %vm6900 = vcmp.eq.f32.partialorder %v6899, 8.507059e+37
      %v6901 = vand.u32 %v6550, 2147483648
      %v6902 = vor.u32 1.1754944e-38, %v6901
      %v6903 = vsel %vm6900, %v6902, %v6898
      %v6904 = vmul.f32 1.0, %v6903
      %v6905 = vrcp.pop %v6551
      %v6906 = vmul.f32 %v6551, %v6905
      %v6907 = vsub.f32 1.0, %v6906
      %v6908 = vmul.f32 %v6905, %v6907
      %v6909 = vadd.f32 %v6905, %v6908
      %vm6910 = vweird.f32 %v6551
      %vm6911 = vweird.f32 %v6905
      %vm6912 = vmor %vm6910, %vm6911
      %v6913 = vsel %vm6912, %v6905, %v6909
      %v6914 = vand.u32 2147483647, %v6551
      %vm6915 = vcmp.eq.f32.partialorder %v6914, 8.507059e+37
      %v6916 = vand.u32 %v6551, 2147483648
      %v6917 = vor.u32 1.1754944e-38, %v6916
      %v6918 = vsel %vm6915, %v6917, %v6913
      %v6919 = vmul.f32 1.0, %v6918
      %v6920 = vrcp.pop %v6552
      %v6921 = vmul.f32 %v6552, %v6920
      %v6922 = vsub.f32 1.0, %v6921
      %v6923 = vmul.f32 %v6920, %v6922
      %v6924 = vadd.f32 %v6920, %v6923
      %vm6925 = vweird.f32 %v6552
      %vm6926 = vweird.f32 %v6920
      %vm6927 = vmor %vm6925, %vm6926
      %v6928 = vsel %vm6927, %v6920, %v6924
      %v6929 = vand.u32 2147483647, %v6552
      %vm6930 = vcmp.eq.f32.partialorder %v6929, 8.507059e+37
      %v6931 = vand.u32 %v6552, 2147483648
      %v6932 = vor.u32 1.1754944e-38, %v6931
      %v6933 = vsel %vm6930, %v6932, %v6928
      %v6934 = vmul.f32 1.0, %v6933
      %v6935 = vrcp.pop %v6553
      %v6936 = vmul.f32 %v6553, %v6935
      %v6937 = vsub.f32 1.0, %v6936
      %v6938 = vmul.f32 %v6935, %v6937
      %v6939 = vadd.f32 %v6935, %v6938
      %vm6940 = vweird.f32 %v6553
      %vm6941 = vweird.f32 %v6935
      %vm6942 = vmor %vm6940, %vm6941
      %v6943 = vsel %vm6942, %v6935, %v6939
      %v6944 = vand.u32 2147483647, %v6553
      %vm6945 = vcmp.eq.f32.partialorder %v6944, 8.507059e+37
      %v6946 = vand.u32 %v6553, 2147483648
      %v6947 = vor.u32 1.1754944e-38, %v6946
      %v6948 = vsel %vm6945, %v6947, %v6943
      %v6949 = vmul.f32 1.0, %v6948
      %v6950 = vrcp.pop %v6554
      %v6951 = vmul.f32 %v6554, %v6950
      %v6952 = vsub.f32 1.0, %v6951
      %v6953 = vmul.f32 %v6950, %v6952
      %v6954 = vadd.f32 %v6950, %v6953
      %vm6955 = vweird.f32 %v6554
      %vm6956 = vweird.f32 %v6950
      %vm6957 = vmor %vm6955, %vm6956
      %v6958 = vsel %vm6957, %v6950, %v6954
      %v6959 = vand.u32 2147483647, %v6554
      %vm6960 = vcmp.eq.f32.partialorder %v6959, 8.507059e+37
      %v6961 = vand.u32 %v6554, 2147483648
      %v6962 = vor.u32 1.1754944e-38, %v6961
      %v6963 = vsel %vm6960, %v6962, %v6958
      %v6964 = vmul.f32 1.0, %v6963
      %v6965 = vrcp.pop %v6555
      %v6966 = vmul.f32 %v6555, %v6965
      %v6967 = vsub.f32 1.0, %v6966
      %v6968 = vmul.f32 %v6965, %v6967
      %v6969 = vadd.f32 %v6965, %v6968
      %vm6970 = vweird.f32 %v6555
      %vm6971 = vweird.f32 %v6965
      %vm6972 = vmor %vm6970, %vm6971
      %v6973 = vsel %vm6972, %v6965, %v6969
      %v6974 = vand.u32 2147483647, %v6555
      %vm6975 = vcmp.eq.f32.partialorder %v6974, 8.507059e+37
      %v6976 = vand.u32 %v6555, 2147483648
      %v6977 = vor.u32 1.1754944e-38, %v6976
      %v6978 = vsel %vm6975, %v6977, %v6973
      %v6979 = vmul.f32 1.0, %v6978
      %v6980 = vrcp.pop %v6556
      %v6981 = vmul.f32 %v6556, %v6980
      %v6982 = vsub.f32 1.0, %v6981
      %v6983 = vmul.f32 %v6980, %v6982
      %v6984 = vadd.f32 %v6980, %v6983
      %vm6985 = vweird.f32 %v6556
      %vm6986 = vweird.f32 %v6980
      %vm6987 = vmor %vm6985, %vm6986
      %v6988 = vsel %vm6987, %v6980, %v6984
      %v6989 = vand.u32 2147483647, %v6556
      %vm6990 = vcmp.eq.f32.partialorder %v6989, 8.507059e+37
      %v6991 = vand.u32 %v6556, 2147483648
      %v6992 = vor.u32 1.1754944e-38, %v6991
      %v6993 = vsel %vm6990, %v6992, %v6988
      %v6994 = vmul.f32 1.0, %v6993
      %v6995 = vrcp.pop %v6557
      %v6996 = vmul.f32 %v6557, %v6995
      %v6997 = vsub.f32 1.0, %v6996
      %v6998 = vmul.f32 %v6995, %v6997
      %v6999 = vadd.f32 %v6995, %v6998
      %vm7000 = vweird.f32 %v6557
      %vm7001 = vweird.f32 %v6995
      %vm7002 = vmor %vm7000, %vm7001
      %v7003 = vsel %vm7002, %v6995, %v6999
      %v7004 = vand.u32 2147483647, %v6557
      %vm7005 = vcmp.eq.f32.partialorder %v7004, 8.507059e+37
      %v7006 = vand.u32 %v6557, 2147483648
      %v7007 = vor.u32 1.1754944e-38, %v7006
      %v7008 = vsel %vm7005, %v7007, %v7003
      %v7009 = vmul.f32 1.0, %v7008
      %v7010 = vrcp.pop %v6558
      %v7011 = vmul.f32 %v6558, %v7010
      %v7012 = vsub.f32 1.0, %v7011
      %v7013 = vmul.f32 %v7010, %v7012
      %v7014 = vadd.f32 %v7010, %v7013
      %vm7015 = vweird.f32 %v6558
      %vm7016 = vweird.f32 %v7010
      %vm7017 = vmor %vm7015, %vm7016
      %v7018 = vsel %vm7017, %v7010, %v7014
      %v7019 = vand.u32 2147483647, %v6558
      %vm7020 = vcmp.eq.f32.partialorder %v7019, 8.507059e+37
      %v7021 = vand.u32 %v6558, 2147483648
      %v7022 = vor.u32 1.1754944e-38, %v7021
      %v7023 = vsel %vm7020, %v7022, %v7018
      %v7024 = vmul.f32 1.0, %v7023
      %v7025 = vrcp.pop %v6559
      %v7026 = vmul.f32 %v6559, %v7025
      %v7027 = vsub.f32 1.0, %v7026
      %v7028 = vmul.f32 %v7025, %v7027
      %v7029 = vadd.f32 %v7025, %v7028
      %vm7030 = vweird.f32 %v6559
      %vm7031 = vweird.f32 %v7025
      %vm7032 = vmor %vm7030, %vm7031
      %v7033 = vsel %vm7032, %v7025, %v7029
      %v7034 = vand.u32 2147483647, %v6559
      %vm7035 = vcmp.eq.f32.partialorder %v7034, 8.507059e+37
      %v7036 = vand.u32 %v6559, 2147483648
      %v7037 = vor.u32 1.1754944e-38, %v7036
      %v7038 = vsel %vm7035, %v7037, %v7033
      %v7039 = vmul.f32 1.0, %v7038
      %v7040 = vsub.f32 1.0, %v6231
      %v7041 = vmul.f32 %v6236, %v7040
      %v7042 = vmul.f32 %v6237, %v7040
      %v7043 = vmul.f32 %v6238, %v7040
      %v7044 = vmul.f32 %v6239, %v7040
      %v7045 = vmul.f32 %v6240, %v7040
      %v7046 = vmul.f32 %v6241, %v7040
      %v7047 = vmul.f32 %v6242, %v7040
      %v7048 = vmul.f32 %v6243, %v7040
      %v7049 = vmul.f32 %v6244, %v7040
      %v7050 = vmul.f32 %v6245, %v7040
      %v7051 = vmul.f32 %v6246, %v7040
      %v7052 = vmul.f32 %v6247, %v7040
      %v7053 = vmul.f32 %v6248, %v7040
      %v7054 = vmul.f32 %v6249, %v7040
      %v7055 = vmul.f32 %v6250, %v7040
      %v7056 = vmul.f32 %v6251, %v7040
      %v7057 = vmul.f32 %v6252, %v7040
      %v7058 = vmul.f32 %v6253, %v7040
      %v7059 = vmul.f32 %v6254, %v7040
      %v7060 = vmul.f32 %v6255, %v7040
      %v7061 = vmul.f32 %v6256, %v7040
      %v7062 = vmul.f32 %v6257, %v7040
      %v7063 = vmul.f32 %v6258, %v7040
      %v7064 = vmul.f32 %v6259, %v7040
      %v7065 = vmul.f32 %v6260, %v7040
      %v7066 = vmul.f32 %v6261, %v7040
      %v7067 = vmul.f32 %v6262, %v7040
      %v7068 = vmul.f32 %v6263, %v7040
      %v7069 = vmul.f32 %v6264, %v7040
      %v7070 = vmul.f32 %v6265, %v7040
      %v7071 = vmul.f32 %v6266, %v7040
      %v7072 = vmul.f32 %v6267, %v7040
      %v7073 = vsel %vm3564, %v7041, 0.0
      %7074 = vadd.xlane.f32.xlu0 %v7073
      %v7075 = vpop.xlane.xlu0 %7074
      %v7076 = vsel %vm3564, %v7042, 0.0
      %7077 = vadd.xlane.f32.xlu0 %v7076
      %v7078 = vpop.xlane.xlu0 %7077
      %v7079 = vsel %vm3564, %v7043, 0.0
      %7080 = vadd.xlane.f32.xlu0 %v7079
      %v7081 = vpop.xlane.xlu0 %7080
      %v7082 = vsel %vm3564, %v7044, 0.0
      %7083 = vadd.xlane.f32.xlu0 %v7082
      %v7084 = vpop.xlane.xlu0 %7083
      %v7085 = vsel %vm3564, %v7045, 0.0
      %7086 = vadd.xlane.f32.xlu0 %v7085
      %v7087 = vpop.xlane.xlu0 %7086
      %v7088 = vsel %vm3564, %v7046, 0.0
      %7089 = vadd.xlane.f32.xlu0 %v7088
      %v7090 = vpop.xlane.xlu0 %7089
      %v7091 = vsel %vm3564, %v7047, 0.0
      %7092 = vadd.xlane.f32.xlu0 %v7091
      %v7093 = vpop.xlane.xlu0 %7092
      %v7094 = vsel %vm3564, %v7048, 0.0
      %7095 = vadd.xlane.f32.xlu0 %v7094
      %v7096 = vpop.xlane.xlu0 %7095
      %v7097 = vsel %vm3564, %v7049, 0.0
      %7098 = vadd.xlane.f32.xlu0 %v7097
      %v7099 = vpop.xlane.xlu0 %7098
      %v7100 = vsel %vm3564, %v7050, 0.0
      %7101 = vadd.xlane.f32.xlu0 %v7100
      %v7102 = vpop.xlane.xlu0 %7101
      %v7103 = vsel %vm3564, %v7051, 0.0
      %7104 = vadd.xlane.f32.xlu0 %v7103
      %v7105 = vpop.xlane.xlu0 %7104
      %v7106 = vsel %vm3564, %v7052, 0.0
      %7107 = vadd.xlane.f32.xlu0 %v7106
      %v7108 = vpop.xlane.xlu0 %7107
      %v7109 = vsel %vm3564, %v7053, 0.0
      %7110 = vadd.xlane.f32.xlu0 %v7109
      %v7111 = vpop.xlane.xlu0 %7110
      %v7112 = vsel %vm3564, %v7054, 0.0
      %7113 = vadd.xlane.f32.xlu0 %v7112
      %v7114 = vpop.xlane.xlu0 %7113
      %v7115 = vsel %vm3564, %v7055, 0.0
      %7116 = vadd.xlane.f32.xlu0 %v7115
      %v7117 = vpop.xlane.xlu0 %7116
      %v7118 = vsel %vm3564, %v7056, 0.0
      %7119 = vadd.xlane.f32.xlu0 %v7118
      %v7120 = vpop.xlane.xlu0 %7119
      %v7121 = vsel %vm3564, %v7057, 0.0
      %7122 = vadd.xlane.f32.xlu0 %v7121
      %v7123 = vpop.xlane.xlu0 %7122
      %v7124 = vsel %vm3564, %v7058, 0.0
      %7125 = vadd.xlane.f32.xlu0 %v7124
      %v7126 = vpop.xlane.xlu0 %7125
      %v7127 = vsel %vm3564, %v7059, 0.0
      %7128 = vadd.xlane.f32.xlu0 %v7127
      %v7129 = vpop.xlane.xlu0 %7128
      %v7130 = vsel %vm3564, %v7060, 0.0
      %7131 = vadd.xlane.f32.xlu0 %v7130
      %v7132 = vpop.xlane.xlu0 %7131
      %v7133 = vsel %vm3564, %v7061, 0.0
      %7134 = vadd.xlane.f32.xlu0 %v7133
      %v7135 = vpop.xlane.xlu0 %7134
      %v7136 = vsel %vm3564, %v7062, 0.0
      %7137 = vadd.xlane.f32.xlu0 %v7136
      %v7138 = vpop.xlane.xlu0 %7137
      %v7139 = vsel %vm3564, %v7063, 0.0
      %7140 = vadd.xlane.f32.xlu0 %v7139
      %v7141 = vpop.xlane.xlu0 %7140
      %v7142 = vsel %vm3564, %v7064, 0.0
      %7143 = vadd.xlane.f32.xlu0 %v7142
      %v7144 = vpop.xlane.xlu0 %7143
      %v7145 = vsel %vm3564, %v7065, 0.0
      %7146 = vadd.xlane.f32.xlu0 %v7145
      %v7147 = vpop.xlane.xlu0 %7146
      %v7148 = vsel %vm3564, %v7066, 0.0
      %7149 = vadd.xlane.f32.xlu0 %v7148
      %v7150 = vpop.xlane.xlu0 %7149
      %v7151 = vsel %vm3564, %v7067, 0.0
      %7152 = vadd.xlane.f32.xlu0 %v7151
      %v7153 = vpop.xlane.xlu0 %7152
      %v7154 = vsel %vm3564, %v7068, 0.0
      %7155 = vadd.xlane.f32.xlu0 %v7154
      %v7156 = vpop.xlane.xlu0 %7155
      %v7157 = vsel %vm3564, %v7069, 0.0
      %7158 = vadd.xlane.f32.xlu0 %v7157
      %v7159 = vpop.xlane.xlu0 %7158
      %v7160 = vsel %vm3564, %v7070, 0.0
      %7161 = vadd.xlane.f32.xlu0 %v7160
      %v7162 = vpop.xlane.xlu0 %7161
      %v7163 = vsel %vm3564, %v7071, 0.0
      %7164 = vadd.xlane.f32.xlu0 %v7163
      %v7165 = vpop.xlane.xlu0 %7164
      %v7166 = vsel %vm3564, %v7072, 0.0
      %7167 = vadd.xlane.f32.xlu0 %v7166
      %v7168 = vpop.xlane.xlu0 %7167
      %v7169 = vadd.f32 %v7075, %v6398
      %v7170 = vadd.f32 %v7078, %v6398
      %v7171 = vadd.f32 %v7081, %v6398
      %v7172 = vadd.f32 %v7084, %v6398
      %v7173 = vadd.f32 %v7087, %v6398
      %v7174 = vadd.f32 %v7090, %v6398
      %v7175 = vadd.f32 %v7093, %v6398
      %v7176 = vadd.f32 %v7096, %v6398
      %v7177 = vadd.f32 %v7099, %v6398
      %v7178 = vadd.f32 %v7102, %v6398
      %v7179 = vadd.f32 %v7105, %v6398
      %v7180 = vadd.f32 %v7108, %v6398
      %v7181 = vadd.f32 %v7111, %v6398
      %v7182 = vadd.f32 %v7114, %v6398
      %v7183 = vadd.f32 %v7117, %v6398
      %v7184 = vadd.f32 %v7120, %v6398
      %v7185 = vadd.f32 %v7123, %v6398
      %v7186 = vadd.f32 %v7126, %v6398
      %v7187 = vadd.f32 %v7129, %v6398
      %v7188 = vadd.f32 %v7132, %v6398
      %v7189 = vadd.f32 %v7135, %v6398
      %v7190 = vadd.f32 %v7138, %v6398
      %v7191 = vadd.f32 %v7141, %v6398
      %v7192 = vadd.f32 %v7144, %v6398
      %v7193 = vadd.f32 %v7147, %v6398
      %v7194 = vadd.f32 %v7150, %v6398
      %v7195 = vadd.f32 %v7153, %v6398
      %v7196 = vadd.f32 %v7156, %v6398
      %v7197 = vadd.f32 %v7159, %v6398
      %v7198 = vadd.f32 %v7162, %v6398
      %v7199 = vadd.f32 %v7165, %v6398
      %v7200 = vadd.f32 %v7168, %v6398
      %v7201 = vxor.u32 %v7169, 2147483648
      %v7202 = vxor.u32 %v7170, 2147483648
      %v7203 = vxor.u32 %v7171, 2147483648
      %v7204 = vxor.u32 %v7172, 2147483648
      %v7205 = vxor.u32 %v7173, 2147483648
      %v7206 = vxor.u32 %v7174, 2147483648
      %v7207 = vxor.u32 %v7175, 2147483648
      %v7208 = vxor.u32 %v7176, 2147483648
      %v7209 = vxor.u32 %v7177, 2147483648
      %v7210 = vxor.u32 %v7178, 2147483648
      %v7211 = vxor.u32 %v7179, 2147483648
      %v7212 = vxor.u32 %v7180, 2147483648
      %v7213 = vxor.u32 %v7181, 2147483648
      %v7214 = vxor.u32 %v7182, 2147483648
      %v7215 = vxor.u32 %v7183, 2147483648
      %v7216 = vxor.u32 %v7184, 2147483648
      %v7217 = vxor.u32 %v7185, 2147483648
      %v7218 = vxor.u32 %v7186, 2147483648
      %v7219 = vxor.u32 %v7187, 2147483648
      %v7220 = vxor.u32 %v7188, 2147483648
      %v7221 = vxor.u32 %v7189, 2147483648
      %v7222 = vxor.u32 %v7190, 2147483648
      %v7223 = vxor.u32 %v7191, 2147483648
      %v7224 = vxor.u32 %v7192, 2147483648
      %v7225 = vxor.u32 %v7193, 2147483648
      %v7226 = vxor.u32 %v7194, 2147483648
      %v7227 = vxor.u32 %v7195, 2147483648
      %v7228 = vxor.u32 %v7196, 2147483648
      %v7229 = vxor.u32 %v7197, 2147483648
      %v7230 = vxor.u32 %v7198, 2147483648
      %v7231 = vxor.u32 %v7199, 2147483648
      %v7232 = vxor.u32 %v7200, 2147483648
      %v7233 = vmul.f32 %v7201, 1.442695
      %v7234 = vpow.pop %v7233
      %v7235 = vmul.f32 %v7202, 1.442695
      %v7236 = vpow.pop %v7235
      %v7237 = vmul.f32 %v7203, 1.442695
      %v7238 = vpow.pop %v7237
      %v7239 = vmul.f32 %v7204, 1.442695
      %v7240 = vpow.pop %v7239
      %v7241 = vmul.f32 %v7205, 1.442695
      %v7242 = vpow.pop %v7241
      %v7243 = vmul.f32 %v7206, 1.442695
      %v7244 = vpow.pop %v7243
      %v7245 = vmul.f32 %v7207, 1.442695
      %v7246 = vpow.pop %v7245
      %v7247 = vmul.f32 %v7208, 1.442695
      %v7248 = vpow.pop %v7247
      %v7249 = vmul.f32 %v7209, 1.442695
      %v7250 = vpow.pop %v7249
      %v7251 = vmul.f32 %v7210, 1.442695
      %v7252 = vpow.pop %v7251
      %v7253 = vmul.f32 %v7211, 1.442695
      %v7254 = vpow.pop %v7253
      %v7255 = vmul.f32 %v7212, 1.442695
      %v7256 = vpow.pop %v7255
      %v7257 = vmul.f32 %v7213, 1.442695
      %v7258 = vpow.pop %v7257
      %v7259 = vmul.f32 %v7214, 1.442695
      %v7260 = vpow.pop %v7259
      %v7261 = vmul.f32 %v7215, 1.442695
      %v7262 = vpow.pop %v7261
      %v7263 = vmul.f32 %v7216, 1.442695
      %v7264 = vpow.pop %v7263
      %v7265 = vmul.f32 %v7217, 1.442695
      %v7266 = vpow.pop %v7265
      %v7267 = vmul.f32 %v7218, 1.442695
      %v7268 = vpow.pop %v7267
      %v7269 = vmul.f32 %v7219, 1.442695
      %v7270 = vpow.pop %v7269
      %v7271 = vmul.f32 %v7220, 1.442695
      %v7272 = vpow.pop %v7271
      %v7273 = vmul.f32 %v7221, 1.442695
      %v7274 = vpow.pop %v7273
      %v7275 = vmul.f32 %v7222, 1.442695
      %v7276 = vpow.pop %v7275
      %v7277 = vmul.f32 %v7223, 1.442695
      %v7278 = vpow.pop %v7277
      %v7279 = vmul.f32 %v7224, 1.442695
      %v7280 = vpow.pop %v7279
      %v7281 = vmul.f32 %v7225, 1.442695
      %v7282 = vpow.pop %v7281
      %v7283 = vmul.f32 %v7226, 1.442695
      %v7284 = vpow.pop %v7283
      %v7285 = vmul.f32 %v7227, 1.442695
      %v7286 = vpow.pop %v7285
      %v7287 = vmul.f32 %v7228, 1.442695
      %v7288 = vpow.pop %v7287
      %v7289 = vmul.f32 %v7229, 1.442695
      %v7290 = vpow.pop %v7289
      %v7291 = vmul.f32 %v7230, 1.442695
      %v7292 = vpow.pop %v7291
      %v7293 = vmul.f32 %v7231, 1.442695
      %v7294 = vpow.pop %v7293
      %v7295 = vmul.f32 %v7232, 1.442695
      %v7296 = vpow.pop %v7295
      %v7297 = vadd.f32 %v7234, 1.0
      %v7298 = vadd.f32 %v7236, 1.0
      %v7299 = vadd.f32 %v7238, 1.0
      %v7300 = vadd.f32 %v7240, 1.0
      %v7301 = vadd.f32 %v7242, 1.0
      %v7302 = vadd.f32 %v7244, 1.0
      %v7303 = vadd.f32 %v7246, 1.0
      %v7304 = vadd.f32 %v7248, 1.0
      %v7305 = vadd.f32 %v7250, 1.0
      %v7306 = vadd.f32 %v7252, 1.0
      %v7307 = vadd.f32 %v7254, 1.0
      %v7308 = vadd.f32 %v7256, 1.0
      %v7309 = vadd.f32 %v7258, 1.0
      %v7310 = vadd.f32 %v7260, 1.0
      %v7311 = vadd.f32 %v7262, 1.0
      %v7312 = vadd.f32 %v7264, 1.0
      %v7313 = vadd.f32 %v7266, 1.0
      %v7314 = vadd.f32 %v7268, 1.0
      %v7315 = vadd.f32 %v7270, 1.0
      %v7316 = vadd.f32 %v7272, 1.0
      %v7317 = vadd.f32 %v7274, 1.0
      %v7318 = vadd.f32 %v7276, 1.0
      %v7319 = vadd.f32 %v7278, 1.0
      %v7320 = vadd.f32 %v7280, 1.0
      %v7321 = vadd.f32 %v7282, 1.0
      %v7322 = vadd.f32 %v7284, 1.0
      %v7323 = vadd.f32 %v7286, 1.0
      %v7324 = vadd.f32 %v7288, 1.0
      %v7325 = vadd.f32 %v7290, 1.0
      %v7326 = vadd.f32 %v7292, 1.0
      %v7327 = vadd.f32 %v7294, 1.0
      %v7328 = vadd.f32 %v7296, 1.0
      %v7329 = vrcp.pop %v7297
      %v7330 = vmul.f32 %v7297, %v7329
      %v7331 = vsub.f32 1.0, %v7330
      %v7332 = vmul.f32 %v7329, %v7331
      %v7333 = vadd.f32 %v7329, %v7332
      %vm7334 = vweird.f32 %v7297
      %vm7335 = vweird.f32 %v7329
      %vm7336 = vmor %vm7334, %vm7335
      %v7337 = vsel %vm7336, %v7329, %v7333
      %v7338 = vand.u32 2147483647, %v7297
      %vm7339 = vcmp.eq.f32.partialorder %v7338, 8.507059e+37
      %v7340 = vand.u32 %v7297, 2147483648
      %v7341 = vor.u32 1.1754944e-38, %v7340
      %v7342 = vsel %vm7339, %v7341, %v7337
      %v7343 = vmul.f32 1.0, %v7342
      %v7344 = vrcp.pop %v7298
      %v7345 = vmul.f32 %v7298, %v7344
      %v7346 = vsub.f32 1.0, %v7345
      %v7347 = vmul.f32 %v7344, %v7346
      %v7348 = vadd.f32 %v7344, %v7347
      %vm7349 = vweird.f32 %v7298
      %vm7350 = vweird.f32 %v7344
      %vm7351 = vmor %vm7349, %vm7350
      %v7352 = vsel %vm7351, %v7344, %v7348
      %v7353 = vand.u32 2147483647, %v7298
      %vm7354 = vcmp.eq.f32.partialorder %v7353, 8.507059e+37
      %v7355 = vand.u32 %v7298, 2147483648
      %v7356 = vor.u32 1.1754944e-38, %v7355
      %v7357 = vsel %vm7354, %v7356, %v7352
      %v7358 = vmul.f32 1.0, %v7357
      %v7359 = vrcp.pop %v7299
      %v7360 = vmul.f32 %v7299, %v7359
      %v7361 = vsub.f32 1.0, %v7360
      %v7362 = vmul.f32 %v7359, %v7361
      %v7363 = vadd.f32 %v7359, %v7362
      %vm7364 = vweird.f32 %v7299
      %vm7365 = vweird.f32 %v7359
      %vm7366 = vmor %vm7364, %vm7365
      %v7367 = vsel %vm7366, %v7359, %v7363
      %v7368 = vand.u32 2147483647, %v7299
      %vm7369 = vcmp.eq.f32.partialorder %v7368, 8.507059e+37
      %v7370 = vand.u32 %v7299, 2147483648
      %v7371 = vor.u32 1.1754944e-38, %v7370
      %v7372 = vsel %vm7369, %v7371, %v7367
      %v7373 = vmul.f32 1.0, %v7372
      %v7374 = vrcp.pop %v7300
      %v7375 = vmul.f32 %v7300, %v7374
      %v7376 = vsub.f32 1.0, %v7375
      %v7377 = vmul.f32 %v7374, %v7376
      %v7378 = vadd.f32 %v7374, %v7377
      %vm7379 = vweird.f32 %v7300
      %vm7380 = vweird.f32 %v7374
      %vm7381 = vmor %vm7379, %vm7380
      %v7382 = vsel %vm7381, %v7374, %v7378
      %v7383 = vand.u32 2147483647, %v7300
      %vm7384 = vcmp.eq.f32.partialorder %v7383, 8.507059e+37
      %v7385 = vand.u32 %v7300, 2147483648
      %v7386 = vor.u32 1.1754944e-38, %v7385
      %v7387 = vsel %vm7384, %v7386, %v7382
      %v7388 = vmul.f32 1.0, %v7387
      %v7389 = vrcp.pop %v7301
      %v7390 = vmul.f32 %v7301, %v7389
      %v7391 = vsub.f32 1.0, %v7390
      %v7392 = vmul.f32 %v7389, %v7391
      %v7393 = vadd.f32 %v7389, %v7392
      %vm7394 = vweird.f32 %v7301
      %vm7395 = vweird.f32 %v7389
      %vm7396 = vmor %vm7394, %vm7395
      %v7397 = vsel %vm7396, %v7389, %v7393
      %v7398 = vand.u32 2147483647, %v7301
      %vm7399 = vcmp.eq.f32.partialorder %v7398, 8.507059e+37
      %v7400 = vand.u32 %v7301, 2147483648
      %v7401 = vor.u32 1.1754944e-38, %v7400
      %v7402 = vsel %vm7399, %v7401, %v7397
      %v7403 = vmul.f32 1.0, %v7402
      %v7404 = vrcp.pop %v7302
      %v7405 = vmul.f32 %v7302, %v7404
      %v7406 = vsub.f32 1.0, %v7405
      %v7407 = vmul.f32 %v7404, %v7406
      %v7408 = vadd.f32 %v7404, %v7407
      %vm7409 = vweird.f32 %v7302
      %vm7410 = vweird.f32 %v7404
      %vm7411 = vmor %vm7409, %vm7410
      %v7412 = vsel %vm7411, %v7404, %v7408
      %v7413 = vand.u32 2147483647, %v7302
      %vm7414 = vcmp.eq.f32.partialorder %v7413, 8.507059e+37
      %v7415 = vand.u32 %v7302, 2147483648
      %v7416 = vor.u32 1.1754944e-38, %v7415
      %v7417 = vsel %vm7414, %v7416, %v7412
      %v7418 = vmul.f32 1.0, %v7417
      %v7419 = vrcp.pop %v7303
      %v7420 = vmul.f32 %v7303, %v7419
      %v7421 = vsub.f32 1.0, %v7420
      %v7422 = vmul.f32 %v7419, %v7421
      %v7423 = vadd.f32 %v7419, %v7422
      %vm7424 = vweird.f32 %v7303
      %vm7425 = vweird.f32 %v7419
      %vm7426 = vmor %vm7424, %vm7425
      %v7427 = vsel %vm7426, %v7419, %v7423
      %v7428 = vand.u32 2147483647, %v7303
      %vm7429 = vcmp.eq.f32.partialorder %v7428, 8.507059e+37
      %v7430 = vand.u32 %v7303, 2147483648
      %v7431 = vor.u32 1.1754944e-38, %v7430
      %v7432 = vsel %vm7429, %v7431, %v7427
      %v7433 = vmul.f32 1.0, %v7432
      %v7434 = vrcp.pop %v7304
      %v7435 = vmul.f32 %v7304, %v7434
      %v7436 = vsub.f32 1.0, %v7435
      %v7437 = vmul.f32 %v7434, %v7436
      %v7438 = vadd.f32 %v7434, %v7437
      %vm7439 = vweird.f32 %v7304
      %vm7440 = vweird.f32 %v7434
      %vm7441 = vmor %vm7439, %vm7440
      %v7442 = vsel %vm7441, %v7434, %v7438
      %v7443 = vand.u32 2147483647, %v7304
      %vm7444 = vcmp.eq.f32.partialorder %v7443, 8.507059e+37
      %v7445 = vand.u32 %v7304, 2147483648
      %v7446 = vor.u32 1.1754944e-38, %v7445
      %v7447 = vsel %vm7444, %v7446, %v7442
      %v7448 = vmul.f32 1.0, %v7447
      %v7449 = vrcp.pop %v7305
      %v7450 = vmul.f32 %v7305, %v7449
      %v7451 = vsub.f32 1.0, %v7450
      %v7452 = vmul.f32 %v7449, %v7451
      %v7453 = vadd.f32 %v7449, %v7452
      %vm7454 = vweird.f32 %v7305
      %vm7455 = vweird.f32 %v7449
      %vm7456 = vmor %vm7454, %vm7455
      %v7457 = vsel %vm7456, %v7449, %v7453
      %v7458 = vand.u32 2147483647, %v7305
      %vm7459 = vcmp.eq.f32.partialorder %v7458, 8.507059e+37
      %v7460 = vand.u32 %v7305, 2147483648
      %v7461 = vor.u32 1.1754944e-38, %v7460
      %v7462 = vsel %vm7459, %v7461, %v7457
      %v7463 = vmul.f32 1.0, %v7462
      %v7464 = vrcp.pop %v7306
      %v7465 = vmul.f32 %v7306, %v7464
      %v7466 = vsub.f32 1.0, %v7465
      %v7467 = vmul.f32 %v7464, %v7466
      %v7468 = vadd.f32 %v7464, %v7467
      %vm7469 = vweird.f32 %v7306
      %vm7470 = vweird.f32 %v7464
      %vm7471 = vmor %vm7469, %vm7470
      %v7472 = vsel %vm7471, %v7464, %v7468
      %v7473 = vand.u32 2147483647, %v7306
      %vm7474 = vcmp.eq.f32.partialorder %v7473, 8.507059e+37
      %v7475 = vand.u32 %v7306, 2147483648
      %v7476 = vor.u32 1.1754944e-38, %v7475
      %v7477 = vsel %vm7474, %v7476, %v7472
      %v7478 = vmul.f32 1.0, %v7477
      %v7479 = vrcp.pop %v7307
      %v7480 = vmul.f32 %v7307, %v7479
      %v7481 = vsub.f32 1.0, %v7480
      %v7482 = vmul.f32 %v7479, %v7481
      %v7483 = vadd.f32 %v7479, %v7482
      %vm7484 = vweird.f32 %v7307
      %vm7485 = vweird.f32 %v7479
      %vm7486 = vmor %vm7484, %vm7485
      %v7487 = vsel %vm7486, %v7479, %v7483
      %v7488 = vand.u32 2147483647, %v7307
      %vm7489 = vcmp.eq.f32.partialorder %v7488, 8.507059e+37
      %v7490 = vand.u32 %v7307, 2147483648
      %v7491 = vor.u32 1.1754944e-38, %v7490
      %v7492 = vsel %vm7489, %v7491, %v7487
      %v7493 = vmul.f32 1.0, %v7492
      %v7494 = vrcp.pop %v7308
      %v7495 = vmul.f32 %v7308, %v7494
      %v7496 = vsub.f32 1.0, %v7495
      %v7497 = vmul.f32 %v7494, %v7496
      %v7498 = vadd.f32 %v7494, %v7497
      %vm7499 = vweird.f32 %v7308
      %vm7500 = vweird.f32 %v7494
      %vm7501 = vmor %vm7499, %vm7500
      %v7502 = vsel %vm7501, %v7494, %v7498
      %v7503 = vand.u32 2147483647, %v7308
      %vm7504 = vcmp.eq.f32.partialorder %v7503, 8.507059e+37
      %v7505 = vand.u32 %v7308, 2147483648
      %v7506 = vor.u32 1.1754944e-38, %v7505
      %v7507 = vsel %vm7504, %v7506, %v7502
      %v7508 = vmul.f32 1.0, %v7507
      %v7509 = vrcp.pop %v7309
      %v7510 = vmul.f32 %v7309, %v7509
      %v7511 = vsub.f32 1.0, %v7510
      %v7512 = vmul.f32 %v7509, %v7511
      %v7513 = vadd.f32 %v7509, %v7512
      %vm7514 = vweird.f32 %v7309
      %vm7515 = vweird.f32 %v7509
      %vm7516 = vmor %vm7514, %vm7515
      %v7517 = vsel %vm7516, %v7509, %v7513
      %v7518 = vand.u32 2147483647, %v7309
      %vm7519 = vcmp.eq.f32.partialorder %v7518, 8.507059e+37
      %v7520 = vand.u32 %v7309, 2147483648
      %v7521 = vor.u32 1.1754944e-38, %v7520
      %v7522 = vsel %vm7519, %v7521, %v7517
      %v7523 = vmul.f32 1.0, %v7522
      %v7524 = vrcp.pop %v7310
      %v7525 = vmul.f32 %v7310, %v7524
      %v7526 = vsub.f32 1.0, %v7525
      %v7527 = vmul.f32 %v7524, %v7526
      %v7528 = vadd.f32 %v7524, %v7527
      %vm7529 = vweird.f32 %v7310
      %vm7530 = vweird.f32 %v7524
      %vm7531 = vmor %vm7529, %vm7530
      %v7532 = vsel %vm7531, %v7524, %v7528
      %v7533 = vand.u32 2147483647, %v7310
      %vm7534 = vcmp.eq.f32.partialorder %v7533, 8.507059e+37
      %v7535 = vand.u32 %v7310, 2147483648
      %v7536 = vor.u32 1.1754944e-38, %v7535
      %v7537 = vsel %vm7534, %v7536, %v7532
      %v7538 = vmul.f32 1.0, %v7537
      %v7539 = vrcp.pop %v7311
      %v7540 = vmul.f32 %v7311, %v7539
      %v7541 = vsub.f32 1.0, %v7540
      %v7542 = vmul.f32 %v7539, %v7541
      %v7543 = vadd.f32 %v7539, %v7542
      %vm7544 = vweird.f32 %v7311
      %vm7545 = vweird.f32 %v7539
      %vm7546 = vmor %vm7544, %vm7545
      %v7547 = vsel %vm7546, %v7539, %v7543
      %v7548 = vand.u32 2147483647, %v7311
      %vm7549 = vcmp.eq.f32.partialorder %v7548, 8.507059e+37
      %v7550 = vand.u32 %v7311, 2147483648
      %v7551 = vor.u32 1.1754944e-38, %v7550
      %v7552 = vsel %vm7549, %v7551, %v7547
      %v7553 = vmul.f32 1.0, %v7552
      %v7554 = vrcp.pop %v7312
      %v7555 = vmul.f32 %v7312, %v7554
      %v7556 = vsub.f32 1.0, %v7555
      %v7557 = vmul.f32 %v7554, %v7556
      %v7558 = vadd.f32 %v7554, %v7557
      %vm7559 = vweird.f32 %v7312
      %vm7560 = vweird.f32 %v7554
      %vm7561 = vmor %vm7559, %vm7560
      %v7562 = vsel %vm7561, %v7554, %v7558
      %v7563 = vand.u32 2147483647, %v7312
      %vm7564 = vcmp.eq.f32.partialorder %v7563, 8.507059e+37
      %v7565 = vand.u32 %v7312, 2147483648
      %v7566 = vor.u32 1.1754944e-38, %v7565
      %v7567 = vsel %vm7564, %v7566, %v7562
      %v7568 = vmul.f32 1.0, %v7567
      %v7569 = vrcp.pop %v7313
      %v7570 = vmul.f32 %v7313, %v7569
      %v7571 = vsub.f32 1.0, %v7570
      %v7572 = vmul.f32 %v7569, %v7571
      %v7573 = vadd.f32 %v7569, %v7572
      %vm7574 = vweird.f32 %v7313
      %vm7575 = vweird.f32 %v7569
      %vm7576 = vmor %vm7574, %vm7575
      %v7577 = vsel %vm7576, %v7569, %v7573
      %v7578 = vand.u32 2147483647, %v7313
      %vm7579 = vcmp.eq.f32.partialorder %v7578, 8.507059e+37
      %v7580 = vand.u32 %v7313, 2147483648
      %v7581 = vor.u32 1.1754944e-38, %v7580
      %v7582 = vsel %vm7579, %v7581, %v7577
      %v7583 = vmul.f32 1.0, %v7582
      %v7584 = vrcp.pop %v7314
      %v7585 = vmul.f32 %v7314, %v7584
      %v7586 = vsub.f32 1.0, %v7585
      %v7587 = vmul.f32 %v7584, %v7586
      %v7588 = vadd.f32 %v7584, %v7587
      %vm7589 = vweird.f32 %v7314
      %vm7590 = vweird.f32 %v7584
      %vm7591 = vmor %vm7589, %vm7590
      %v7592 = vsel %vm7591, %v7584, %v7588
      %v7593 = vand.u32 2147483647, %v7314
      %vm7594 = vcmp.eq.f32.partialorder %v7593, 8.507059e+37
      %v7595 = vand.u32 %v7314, 2147483648
      %v7596 = vor.u32 1.1754944e-38, %v7595
      %v7597 = vsel %vm7594, %v7596, %v7592
      %v7598 = vmul.f32 1.0, %v7597
      %v7599 = vrcp.pop %v7315
      %v7600 = vmul.f32 %v7315, %v7599
      %v7601 = vsub.f32 1.0, %v7600
      %v7602 = vmul.f32 %v7599, %v7601
      %v7603 = vadd.f32 %v7599, %v7602
      %vm7604 = vweird.f32 %v7315
      %vm7605 = vweird.f32 %v7599
      %vm7606 = vmor %vm7604, %vm7605
      %v7607 = vsel %vm7606, %v7599, %v7603
      %v7608 = vand.u32 2147483647, %v7315
      %vm7609 = vcmp.eq.f32.partialorder %v7608, 8.507059e+37
      %v7610 = vand.u32 %v7315, 2147483648
      %v7611 = vor.u32 1.1754944e-38, %v7610
      %v7612 = vsel %vm7609, %v7611, %v7607
      %v7613 = vmul.f32 1.0, %v7612
      %v7614 = vrcp.pop %v7316
      %v7615 = vmul.f32 %v7316, %v7614
      %v7616 = vsub.f32 1.0, %v7615
      %v7617 = vmul.f32 %v7614, %v7616
      %v7618 = vadd.f32 %v7614, %v7617
      %vm7619 = vweird.f32 %v7316
      %vm7620 = vweird.f32 %v7614
      %vm7621 = vmor %vm7619, %vm7620
      %v7622 = vsel %vm7621, %v7614, %v7618
      %v7623 = vand.u32 2147483647, %v7316
      %vm7624 = vcmp.eq.f32.partialorder %v7623, 8.507059e+37
      %v7625 = vand.u32 %v7316, 2147483648
      %v7626 = vor.u32 1.1754944e-38, %v7625
      %v7627 = vsel %vm7624, %v7626, %v7622
      %v7628 = vmul.f32 1.0, %v7627
      %v7629 = vrcp.pop %v7317
      %v7630 = vmul.f32 %v7317, %v7629
      %v7631 = vsub.f32 1.0, %v7630
      %v7632 = vmul.f32 %v7629, %v7631
      %v7633 = vadd.f32 %v7629, %v7632
      %vm7634 = vweird.f32 %v7317
      %vm7635 = vweird.f32 %v7629
      %vm7636 = vmor %vm7634, %vm7635
      %v7637 = vsel %vm7636, %v7629, %v7633
      %v7638 = vand.u32 2147483647, %v7317
      %vm7639 = vcmp.eq.f32.partialorder %v7638, 8.507059e+37
      %v7640 = vand.u32 %v7317, 2147483648
      %v7641 = vor.u32 1.1754944e-38, %v7640
      %v7642 = vsel %vm7639, %v7641, %v7637
      %v7643 = vmul.f32 1.0, %v7642
      %v7644 = vrcp.pop %v7318
      %v7645 = vmul.f32 %v7318, %v7644
      %v7646 = vsub.f32 1.0, %v7645
      %v7647 = vmul.f32 %v7644, %v7646
      %v7648 = vadd.f32 %v7644, %v7647
      %vm7649 = vweird.f32 %v7318
      %vm7650 = vweird.f32 %v7644
      %vm7651 = vmor %vm7649, %vm7650
      %v7652 = vsel %vm7651, %v7644, %v7648
      %v7653 = vand.u32 2147483647, %v7318
      %vm7654 = vcmp.eq.f32.partialorder %v7653, 8.507059e+37
      %v7655 = vand.u32 %v7318, 2147483648
      %v7656 = vor.u32 1.1754944e-38, %v7655
      %v7657 = vsel %vm7654, %v7656, %v7652
      %v7658 = vmul.f32 1.0, %v7657
      %v7659 = vrcp.pop %v7319
      %v7660 = vmul.f32 %v7319, %v7659
      %v7661 = vsub.f32 1.0, %v7660
      %v7662 = vmul.f32 %v7659, %v7661
      %v7663 = vadd.f32 %v7659, %v7662
      %vm7664 = vweird.f32 %v7319
      %vm7665 = vweird.f32 %v7659
      %vm7666 = vmor %vm7664, %vm7665
      %v7667 = vsel %vm7666, %v7659, %v7663
      %v7668 = vand.u32 2147483647, %v7319
      %vm7669 = vcmp.eq.f32.partialorder %v7668, 8.507059e+37
      %v7670 = vand.u32 %v7319, 2147483648
      %v7671 = vor.u32 1.1754944e-38, %v7670
      %v7672 = vsel %vm7669, %v7671, %v7667
      %v7673 = vmul.f32 1.0, %v7672
      %v7674 = vrcp.pop %v7320
      %v7675 = vmul.f32 %v7320, %v7674
      %v7676 = vsub.f32 1.0, %v7675
      %v7677 = vmul.f32 %v7674, %v7676
      %v7678 = vadd.f32 %v7674, %v7677
      %vm7679 = vweird.f32 %v7320
      %vm7680 = vweird.f32 %v7674
      %vm7681 = vmor %vm7679, %vm7680
      %v7682 = vsel %vm7681, %v7674, %v7678
      %v7683 = vand.u32 2147483647, %v7320
      %vm7684 = vcmp.eq.f32.partialorder %v7683, 8.507059e+37
      %v7685 = vand.u32 %v7320, 2147483648
      %v7686 = vor.u32 1.1754944e-38, %v7685
      %v7687 = vsel %vm7684, %v7686, %v7682
      %v7688 = vmul.f32 1.0, %v7687
      %v7689 = vrcp.pop %v7321
      %v7690 = vmul.f32 %v7321, %v7689
      %v7691 = vsub.f32 1.0, %v7690
      %v7692 = vmul.f32 %v7689, %v7691
      %v7693 = vadd.f32 %v7689, %v7692
      %vm7694 = vweird.f32 %v7321
      %vm7695 = vweird.f32 %v7689
      %vm7696 = vmor %vm7694, %vm7695
      %v7697 = vsel %vm7696, %v7689, %v7693
      %v7698 = vand.u32 2147483647, %v7321
      %vm7699 = vcmp.eq.f32.partialorder %v7698, 8.507059e+37
      %v7700 = vand.u32 %v7321, 2147483648
      %v7701 = vor.u32 1.1754944e-38, %v7700
      %v7702 = vsel %vm7699, %v7701, %v7697
      %v7703 = vmul.f32 1.0, %v7702
      %v7704 = vrcp.pop %v7322
      %v7705 = vmul.f32 %v7322, %v7704
      %v7706 = vsub.f32 1.0, %v7705
      %v7707 = vmul.f32 %v7704, %v7706
      %v7708 = vadd.f32 %v7704, %v7707
      %vm7709 = vweird.f32 %v7322
      %vm7710 = vweird.f32 %v7704
      %vm7711 = vmor %vm7709, %vm7710
      %v7712 = vsel %vm7711, %v7704, %v7708
      %v7713 = vand.u32 2147483647, %v7322
      %vm7714 = vcmp.eq.f32.partialorder %v7713, 8.507059e+37
      %v7715 = vand.u32 %v7322, 2147483648
      %v7716 = vor.u32 1.1754944e-38, %v7715
      %v7717 = vsel %vm7714, %v7716, %v7712
      %v7718 = vmul.f32 1.0, %v7717
      %v7719 = vrcp.pop %v7323
      %v7720 = vmul.f32 %v7323, %v7719
      %v7721 = vsub.f32 1.0, %v7720
      %v7722 = vmul.f32 %v7719, %v7721
      %v7723 = vadd.f32 %v7719, %v7722
      %vm7724 = vweird.f32 %v7323
      %vm7725 = vweird.f32 %v7719
      %vm7726 = vmor %vm7724, %vm7725
      %v7727 = vsel %vm7726, %v7719, %v7723
      %v7728 = vand.u32 2147483647, %v7323
      %vm7729 = vcmp.eq.f32.partialorder %v7728, 8.507059e+37
      %v7730 = vand.u32 %v7323, 2147483648
      %v7731 = vor.u32 1.1754944e-38, %v7730
      %v7732 = vsel %vm7729, %v7731, %v7727
      %v7733 = vmul.f32 1.0, %v7732
      %v7734 = vrcp.pop %v7324
      %v7735 = vmul.f32 %v7324, %v7734
      %v7736 = vsub.f32 1.0, %v7735
      %v7737 = vmul.f32 %v7734, %v7736
      %v7738 = vadd.f32 %v7734, %v7737
      %vm7739 = vweird.f32 %v7324
      %vm7740 = vweird.f32 %v7734
      %vm7741 = vmor %vm7739, %vm7740
      %v7742 = vsel %vm7741, %v7734, %v7738
      %v7743 = vand.u32 2147483647, %v7324
      %vm7744 = vcmp.eq.f32.partialorder %v7743, 8.507059e+37
      %v7745 = vand.u32 %v7324, 2147483648
      %v7746 = vor.u32 1.1754944e-38, %v7745
      %v7747 = vsel %vm7744, %v7746, %v7742
      %v7748 = vmul.f32 1.0, %v7747
      %v7749 = vrcp.pop %v7325
      %v7750 = vmul.f32 %v7325, %v7749
      %v7751 = vsub.f32 1.0, %v7750
      %v7752 = vmul.f32 %v7749, %v7751
      %v7753 = vadd.f32 %v7749, %v7752
      %vm7754 = vweird.f32 %v7325
      %vm7755 = vweird.f32 %v7749
      %vm7756 = vmor %vm7754, %vm7755
      %v7757 = vsel %vm7756, %v7749, %v7753
      %v7758 = vand.u32 2147483647, %v7325
      %vm7759 = vcmp.eq.f32.partialorder %v7758, 8.507059e+37
      %v7760 = vand.u32 %v7325, 2147483648
      %v7761 = vor.u32 1.1754944e-38, %v7760
      %v7762 = vsel %vm7759, %v7761, %v7757
      %v7763 = vmul.f32 1.0, %v7762
      %v7764 = vrcp.pop %v7326
      %v7765 = vmul.f32 %v7326, %v7764
      %v7766 = vsub.f32 1.0, %v7765
      %v7767 = vmul.f32 %v7764, %v7766
      %v7768 = vadd.f32 %v7764, %v7767
      %vm7769 = vweird.f32 %v7326
      %vm7770 = vweird.f32 %v7764
      %vm7771 = vmor %vm7769, %vm7770
      %v7772 = vsel %vm7771, %v7764, %v7768
      %v7773 = vand.u32 2147483647, %v7326
      %vm7774 = vcmp.eq.f32.partialorder %v7773, 8.507059e+37
      %v7775 = vand.u32 %v7326, 2147483648
      %v7776 = vor.u32 1.1754944e-38, %v7775
      %v7777 = vsel %vm7774, %v7776, %v7772
      %v7778 = vmul.f32 1.0, %v7777
      %v7779 = vrcp.pop %v7327
      %v7780 = vmul.f32 %v7327, %v7779
      %v7781 = vsub.f32 1.0, %v7780
      %v7782 = vmul.f32 %v7779, %v7781
      %v7783 = vadd.f32 %v7779, %v7782
      %vm7784 = vweird.f32 %v7327
      %vm7785 = vweird.f32 %v7779
      %vm7786 = vmor %vm7784, %vm7785
      %v7787 = vsel %vm7786, %v7779, %v7783
      %v7788 = vand.u32 2147483647, %v7327
      %vm7789 = vcmp.eq.f32.partialorder %v7788, 8.507059e+37
      %v7790 = vand.u32 %v7327, 2147483648
      %v7791 = vor.u32 1.1754944e-38, %v7790
      %v7792 = vsel %vm7789, %v7791, %v7787
      %v7793 = vmul.f32 1.0, %v7792
      %v7794 = vrcp.pop %v7328
      %v7795 = vmul.f32 %v7328, %v7794
      %v7796 = vsub.f32 1.0, %v7795
      %v7797 = vmul.f32 %v7794, %v7796
      %v7798 = vadd.f32 %v7794, %v7797
      %vm7799 = vweird.f32 %v7328
      %vm7800 = vweird.f32 %v7794
      %vm7801 = vmor %vm7799, %vm7800
      %v7802 = vsel %vm7801, %v7794, %v7798
      %v7803 = vand.u32 2147483647, %v7328
      %vm7804 = vcmp.eq.f32.partialorder %v7803, 8.507059e+37
      %v7805 = vand.u32 %v7328, 2147483648
      %v7806 = vor.u32 1.1754944e-38, %v7805
      %v7807 = vsel %vm7804, %v7806, %v7802
      %v7808 = vmul.f32 1.0, %v7807
      %7810 = vset.pattern.permute.xlu0 0
      %7811 = vperm.xlu0 %7810, %v6574
      %v7812 = vpop.permute.xlu0 %7811
      %7815 = vset.pattern.permute.xlu0 0
      %7816 = vperm.xlu0 %7815, %v6589
      %v7817 = vpop.permute.xlu0 %7816
      %7820 = vset.pattern.permute.xlu0 0
      %7821 = vperm.xlu0 %7820, %v6604
      %v7822 = vpop.permute.xlu0 %7821
      %7825 = vset.pattern.permute.xlu0 0
      %7826 = vperm.xlu0 %7825, %v6619
      %v7827 = vpop.permute.xlu0 %7826
      %7830 = vset.pattern.permute.xlu0 0
      %7831 = vperm.xlu0 %7830, %v6634
      %v7832 = vpop.permute.xlu0 %7831
      %7835 = vset.pattern.permute.xlu0 0
      %7836 = vperm.xlu0 %7835, %v6649
      %v7837 = vpop.permute.xlu0 %7836
      %7840 = vset.pattern.permute.xlu0 0
      %7841 = vperm.xlu0 %7840, %v6664
      %v7842 = vpop.permute.xlu0 %7841
      %7845 = vset.pattern.permute.xlu0 0
      %7846 = vperm.xlu0 %7845, %v6679
      %v7847 = vpop.permute.xlu0 %7846
      %7850 = vset.pattern.permute.xlu0 0
      %7851 = vperm.xlu0 %7850, %v6694
      %v7852 = vpop.permute.xlu0 %7851
      %7855 = vset.pattern.permute.xlu0 0
      %7856 = vperm.xlu0 %7855, %v6709
      %v7857 = vpop.permute.xlu0 %7856
      %7860 = vset.pattern.permute.xlu0 0
      %7861 = vperm.xlu0 %7860, %v6724
      %v7862 = vpop.permute.xlu0 %7861
      %7865 = vset.pattern.permute.xlu0 0
      %7866 = vperm.xlu0 %7865, %v6739
      %v7867 = vpop.permute.xlu0 %7866
      %7870 = vset.pattern.permute.xlu0 0
      %7871 = vperm.xlu0 %7870, %v6754
      %v7872 = vpop.permute.xlu0 %7871
      %7875 = vset.pattern.permute.xlu0 0
      %7876 = vperm.xlu0 %7875, %v6769
      %v7877 = vpop.permute.xlu0 %7876
      %7880 = vset.pattern.permute.xlu0 0
      %7881 = vperm.xlu0 %7880, %v6784
      %v7882 = vpop.permute.xlu0 %7881
      %7885 = vset.pattern.permute.xlu0 0
      %7886 = vperm.xlu0 %7885, %v6799
      %v7887 = vpop.permute.xlu0 %7886
      %7890 = vset.pattern.permute.xlu0 0
      %7891 = vperm.xlu0 %7890, %v6814
      %v7892 = vpop.permute.xlu0 %7891
      %7895 = vset.pattern.permute.xlu0 0
      %7896 = vperm.xlu0 %7895, %v6829
      %v7897 = vpop.permute.xlu0 %7896
      %7900 = vset.pattern.permute.xlu0 0
      %7901 = vperm.xlu0 %7900, %v6844
      %v7902 = vpop.permute.xlu0 %7901
      %7905 = vset.pattern.permute.xlu0 0
      %7906 = vperm.xlu0 %7905, %v6859
      %v7907 = vpop.permute.xlu0 %7906
      %7910 = vset.pattern.permute.xlu0 0
      %7911 = vperm.xlu0 %7910, %v6874
      %v7912 = vpop.permute.xlu0 %7911
      %7915 = vset.pattern.permute.xlu0 0
      %7916 = vperm.xlu0 %7915, %v6889
      %v7917 = vpop.permute.xlu0 %7916
      %7920 = vset.pattern.permute.xlu0 0
      %7921 = vperm.xlu0 %7920, %v6904
      %v7922 = vpop.permute.xlu0 %7921
      %7925 = vset.pattern.permute.xlu0 0
      %7926 = vperm.xlu0 %7925, %v6919
      %v7927 = vpop.permute.xlu0 %7926
      %7930 = vset.pattern.permute.xlu0 0
      %7931 = vperm.xlu0 %7930, %v6934
      %v7932 = vpop.permute.xlu0 %7931
      %7935 = vset.pattern.permute.xlu0 0
      %7936 = vperm.xlu0 %7935, %v6949
      %v7937 = vpop.permute.xlu0 %7936
      %7940 = vset.pattern.permute.xlu0 0
      %7941 = vperm.xlu0 %7940, %v6964
      %v7942 = vpop.permute.xlu0 %7941
      %7945 = vset.pattern.permute.xlu0 0
      %7946 = vperm.xlu0 %7945, %v6979
      %v7947 = vpop.permute.xlu0 %7946
      %7950 = vset.pattern.permute.xlu0 0
      %7951 = vperm.xlu0 %7950, %v6994
      %v7952 = vpop.permute.xlu0 %7951
      %7955 = vset.pattern.permute.xlu0 0
      %7956 = vperm.xlu0 %7955, %v7009
      %v7957 = vpop.permute.xlu0 %7956
      %7960 = vset.pattern.permute.xlu0 0
      %7961 = vperm.xlu0 %7960, %v7024
      %v7962 = vpop.permute.xlu0 %7961
      %7965 = vset.pattern.permute.xlu0 0
      %7966 = vperm.xlu0 %7965, %v7039
      %v7967 = vpop.permute.xlu0 %7966
      %v7969 = vmul.f32 %v7812, %v6231
      %v7970 = vmul.f32 %v7817, %v6231
      %v7971 = vmul.f32 %v7822, %v6231
      %v7972 = vmul.f32 %v7827, %v6231
      %v7973 = vmul.f32 %v7832, %v6231
      %v7974 = vmul.f32 %v7837, %v6231
      %v7975 = vmul.f32 %v7842, %v6231
      %v7976 = vmul.f32 %v7847, %v6231
      %v7977 = vmul.f32 %v7852, %v6231
      %v7978 = vmul.f32 %v7857, %v6231
      %v7979 = vmul.f32 %v7862, %v6231
      %v7980 = vmul.f32 %v7867, %v6231
      %v7981 = vmul.f32 %v7872, %v6231
      %v7982 = vmul.f32 %v7877, %v6231
      %v7983 = vmul.f32 %v7882, %v6231
      %v7984 = vmul.f32 %v7887, %v6231
      %v7985 = vmul.f32 %v7892, %v6231
      %v7986 = vmul.f32 %v7897, %v6231
      %v7987 = vmul.f32 %v7902, %v6231
      %v7988 = vmul.f32 %v7907, %v6231
      %v7989 = vmul.f32 %v7912, %v6231
      %v7990 = vmul.f32 %v7917, %v6231
      %v7991 = vmul.f32 %v7922, %v6231
      %v7992 = vmul.f32 %v7927, %v6231
      %v7993 = vmul.f32 %v7932, %v6231
      %v7994 = vmul.f32 %v7937, %v6231
      %v7995 = vmul.f32 %v7942, %v6231
      %v7996 = vmul.f32 %v7947, %v6231
      %v7997 = vmul.f32 %v7952, %v6231
      %v7998 = vmul.f32 %v7957, %v6231
      %v7999 = vmul.f32 %v7962, %v6231
      %v8000 = vmul.f32 %v7967, %v6231
      %8002 = vset.pattern.permute.xlu0 0
      %8003 = vperm.xlu0 %8002, %v7343
      %v8004 = vpop.permute.xlu0 %8003
      %8007 = vset.pattern.permute.xlu0 0
      %8008 = vperm.xlu0 %8007, %v7358
      %v8009 = vpop.permute.xlu0 %8008
      %8012 = vset.pattern.permute.xlu0 0
      %8013 = vperm.xlu0 %8012, %v7373
      %v8014 = vpop.permute.xlu0 %8013
      %8017 = vset.pattern.permute.xlu0 0
      %8018 = vperm.xlu0 %8017, %v7388
      %v8019 = vpop.permute.xlu0 %8018
      %8022 = vset.pattern.permute.xlu0 0
      %8023 = vperm.xlu0 %8022, %v7403
      %v8024 = vpop.permute.xlu0 %8023
      %8027 = vset.pattern.permute.xlu0 0
      %8028 = vperm.xlu0 %8027, %v7418
      %v8029 = vpop.permute.xlu0 %8028
      %8032 = vset.pattern.permute.xlu0 0
      %8033 = vperm.xlu0 %8032, %v7433
      %v8034 = vpop.permute.xlu0 %8033
      %8037 = vset.pattern.permute.xlu0 0
      %8038 = vperm.xlu0 %8037, %v7448
      %v8039 = vpop.permute.xlu0 %8038
      %8042 = vset.pattern.permute.xlu0 0
      %8043 = vperm.xlu0 %8042, %v7463
      %v8044 = vpop.permute.xlu0 %8043
      %8047 = vset.pattern.permute.xlu0 0
      %8048 = vperm.xlu0 %8047, %v7478
      %v8049 = vpop.permute.xlu0 %8048
      %8052 = vset.pattern.permute.xlu0 0
      %8053 = vperm.xlu0 %8052, %v7493
      %v8054 = vpop.permute.xlu0 %8053
      %8057 = vset.pattern.permute.xlu0 0
      %8058 = vperm.xlu0 %8057, %v7508
      %v8059 = vpop.permute.xlu0 %8058
      %8062 = vset.pattern.permute.xlu0 0
      %8063 = vperm.xlu0 %8062, %v7523
      %v8064 = vpop.permute.xlu0 %8063
      %8067 = vset.pattern.permute.xlu0 0
      %8068 = vperm.xlu0 %8067, %v7538
      %v8069 = vpop.permute.xlu0 %8068
      %8072 = vset.pattern.permute.xlu0 0
      %8073 = vperm.xlu0 %8072, %v7553
      %v8074 = vpop.permute.xlu0 %8073
      %8077 = vset.pattern.permute.xlu0 0
      %8078 = vperm.xlu0 %8077, %v7568
      %v8079 = vpop.permute.xlu0 %8078
      %8082 = vset.pattern.permute.xlu0 0
      %8083 = vperm.xlu0 %8082, %v7583
      %v8084 = vpop.permute.xlu0 %8083
      %8087 = vset.pattern.permute.xlu0 0
      %8088 = vperm.xlu0 %8087, %v7598
      %v8089 = vpop.permute.xlu0 %8088
      %8092 = vset.pattern.permute.xlu0 0
      %8093 = vperm.xlu0 %8092, %v7613
      %v8094 = vpop.permute.xlu0 %8093
      %8097 = vset.pattern.permute.xlu0 0
      %8098 = vperm.xlu0 %8097, %v7628
      %v8099 = vpop.permute.xlu0 %8098
      %8102 = vset.pattern.permute.xlu0 0
      %8103 = vperm.xlu0 %8102, %v7643
      %v8104 = vpop.permute.xlu0 %8103
      %8107 = vset.pattern.permute.xlu0 0
      %8108 = vperm.xlu0 %8107, %v7658
      %v8109 = vpop.permute.xlu0 %8108
      %8112 = vset.pattern.permute.xlu0 0
      %8113 = vperm.xlu0 %8112, %v7673
      %v8114 = vpop.permute.xlu0 %8113
      %8117 = vset.pattern.permute.xlu0 0
      %8118 = vperm.xlu0 %8117, %v7688
      %v8119 = vpop.permute.xlu0 %8118
      %8122 = vset.pattern.permute.xlu0 0
      %8123 = vperm.xlu0 %8122, %v7703
      %v8124 = vpop.permute.xlu0 %8123
      %8127 = vset.pattern.permute.xlu0 0
      %8128 = vperm.xlu0 %8127, %v7718
      %v8129 = vpop.permute.xlu0 %8128
      %8132 = vset.pattern.permute.xlu0 0
      %8133 = vperm.xlu0 %8132, %v7733
      %v8134 = vpop.permute.xlu0 %8133
      %8137 = vset.pattern.permute.xlu0 0
      %8138 = vperm.xlu0 %8137, %v7748
      %v8139 = vpop.permute.xlu0 %8138
      %8142 = vset.pattern.permute.xlu0 0
      %8143 = vperm.xlu0 %8142, %v7763
      %v8144 = vpop.permute.xlu0 %8143
      %8147 = vset.pattern.permute.xlu0 0
      %8148 = vperm.xlu0 %8147, %v7778
      %v8149 = vpop.permute.xlu0 %8148
      %8152 = vset.pattern.permute.xlu0 0
      %8153 = vperm.xlu0 %8152, %v7793
      %v8154 = vpop.permute.xlu0 %8153
      %8157 = vset.pattern.permute.xlu0 0
      %8158 = vperm.xlu0 %8157, %v7808
      %v8159 = vpop.permute.xlu0 %8158
      %v8161 = vmul.f32 %v8004, %v7040
      %v8162 = vmul.f32 %v8009, %v7040
      %v8163 = vmul.f32 %v8014, %v7040
      %v8164 = vmul.f32 %v8019, %v7040
      %v8165 = vmul.f32 %v8024, %v7040
      %v8166 = vmul.f32 %v8029, %v7040
      %v8167 = vmul.f32 %v8034, %v7040
      %v8168 = vmul.f32 %v8039, %v7040
      %v8169 = vmul.f32 %v8044, %v7040
      %v8170 = vmul.f32 %v8049, %v7040
      %v8171 = vmul.f32 %v8054, %v7040
      %v8172 = vmul.f32 %v8059, %v7040
      %v8173 = vmul.f32 %v8064, %v7040
      %v8174 = vmul.f32 %v8069, %v7040
      %v8175 = vmul.f32 %v8074, %v7040
      %v8176 = vmul.f32 %v8079, %v7040
      %v8177 = vmul.f32 %v8084, %v7040
      %v8178 = vmul.f32 %v8089, %v7040
      %v8179 = vmul.f32 %v8094, %v7040
      %v8180 = vmul.f32 %v8099, %v7040
      %v8181 = vmul.f32 %v8104, %v7040
      %v8182 = vmul.f32 %v8109, %v7040
      %v8183 = vmul.f32 %v8114, %v7040
      %v8184 = vmul.f32 %v8119, %v7040
      %v8185 = vmul.f32 %v8124, %v7040
      %v8186 = vmul.f32 %v8129, %v7040
      %v8187 = vmul.f32 %v8134, %v7040
      %v8188 = vmul.f32 %v8139, %v7040
      %v8189 = vmul.f32 %v8144, %v7040
      %v8190 = vmul.f32 %v8149, %v7040
      %v8191 = vmul.f32 %v8154, %v7040
      %v8192 = vmul.f32 %v8159, %v7040
      %v8193 = vadd.f32 %v7969, %v8161
      %v8194 = vadd.f32 %v7970, %v8162
      %v8195 = vadd.f32 %v7971, %v8163
      %v8196 = vadd.f32 %v7972, %v8164
      %v8197 = vadd.f32 %v7973, %v8165
      %v8198 = vadd.f32 %v7974, %v8166
      %v8199 = vadd.f32 %v7975, %v8167
      %v8200 = vadd.f32 %v7976, %v8168
      %v8201 = vadd.f32 %v7977, %v8169
      %v8202 = vadd.f32 %v7978, %v8170
      %v8203 = vadd.f32 %v7979, %v8171
      %v8204 = vadd.f32 %v7980, %v8172
      %v8205 = vadd.f32 %v7981, %v8173
      %v8206 = vadd.f32 %v7982, %v8174
      %v8207 = vadd.f32 %v7983, %v8175
      %v8208 = vadd.f32 %v7984, %v8176
      %v8209 = vadd.f32 %v7985, %v8177
      %v8210 = vadd.f32 %v7986, %v8178
      %v8211 = vadd.f32 %v7987, %v8179
      %v8212 = vadd.f32 %v7988, %v8180
      %v8213 = vadd.f32 %v7989, %v8181
      %v8214 = vadd.f32 %v7990, %v8182
      %v8215 = vadd.f32 %v7991, %v8183
      %v8216 = vadd.f32 %v7992, %v8184
      %v8217 = vadd.f32 %v7993, %v8185
      %v8218 = vadd.f32 %v7994, %v8186
      %v8219 = vadd.f32 %v7995, %v8187
      %v8220 = vadd.f32 %v7996, %v8188
      %v8221 = vadd.f32 %v7997, %v8189
      %v8222 = vadd.f32 %v7998, %v8190
      %v8223 = vadd.f32 %v7999, %v8191
      %v8224 = vadd.f32 %v8000, %v8192
      %v8225 = vmul.f32 %v6197, %v8193
      %v8226 = vmul.f32 %v6198, %v8194
      %v8227 = vmul.f32 %v6199, %v8195
      %v8228 = vmul.f32 %v6200, %v8196
      %v8229 = vmul.f32 %v6201, %v8197
      %v8230 = vmul.f32 %v6202, %v8198
      %v8231 = vmul.f32 %v6203, %v8199
      %v8232 = vmul.f32 %v6204, %v8200
      %v8233 = vmul.f32 %v6205, %v8201
      %v8234 = vmul.f32 %v6206, %v8202
      %v8235 = vmul.f32 %v6207, %v8203
      %v8236 = vmul.f32 %v6208, %v8204
      %v8237 = vmul.f32 %v6209, %v8205
      %v8238 = vmul.f32 %v6210, %v8206
      %v8239 = vmul.f32 %v6211, %v8207
      %v8240 = vmul.f32 %v6212, %v8208
      %v8241 = vmul.f32 %v6213, %v8209
      %v8242 = vmul.f32 %v6214, %v8210
      %v8243 = vmul.f32 %v6215, %v8211
      %v8244 = vmul.f32 %v6216, %v8212
      %v8245 = vmul.f32 %v6217, %v8213
      %v8246 = vmul.f32 %v6218, %v8214
      %v8247 = vmul.f32 %v6219, %v8215
      %v8248 = vmul.f32 %v6220, %v8216
      %v8249 = vmul.f32 %v6221, %v8217
      %v8250 = vmul.f32 %v6222, %v8218
      %v8251 = vmul.f32 %v6223, %v8219
      %v8252 = vmul.f32 %v6224, %v8220
      %v8253 = vmul.f32 %v6225, %v8221
      %v8254 = vmul.f32 %v6226, %v8222
      %v8255 = vmul.f32 %v6227, %v8223
      %v8256 = vmul.f32 %v6228, %v8224
      %v8257 = vlaneseq
      %v8258 = vshrl.u32 %v8257, 7
      %v8259 = vadd.s32 %v8258, 8
      %v8260 = vperm.slane %v571, 0
      %v8261 = vperm.slane %v571, 1
      %vm8262 = vcmp.eq.s32.totalorder %v8260, %v8258
      %vm8263 = vcmp.eq.s32.totalorder %v8261, %v8258
      %vm8264 = vcmp.eq.s32.totalorder %v8260, %v8259
      %vm8265 = vcmp.eq.s32.totalorder %v8261, %v8259
      %v8266 = vsel %vm8262, 1, 0
      %v8267 = vsel %vm8263, 1, 0
      %v8268 = vsel %vm8264, 1, 0
      %v8269 = vsel %vm8265, 1, 0
      %v8270 = vcvt.s32.f32 %v8266
      %v8271 = vcvt.s32.f32 %v8267
      %v8272 = vcvt.s32.f32 %v8268
      %v8273 = vcvt.s32.f32 %v8269
      %v8274 = vld [vmem:[#allocation2] sm:$0xff]
      %v8275 = vld [vmem:[#allocation2 + $0x8] sm:$0xff]
      %v8276 = vand.u32 %v8240, 4294901760
      %8277 = vmatpush.msra.mxu0 %v8276
      %v8278 = vand.u32 %v8239, 4294901760
      %8279 = vmatpush.msra.mxu0 %v8278
      %v8280 = vand.u32 %v8238, 4294901760
      %8281 = vmatpush.msra.mxu0 %v8280
      %v8282 = vand.u32 %v8237, 4294901760
      %8283 = vmatpush.msra.mxu0 %v8282
      %v8284 = vand.u32 %v8236, 4294901760
      %8285 = vmatpush.msra.mxu0 %v8284
      %v8286 = vand.u32 %v8235, 4294901760
      %8287 = vmatpush.msra.mxu0 %v8286
      %v8288 = vand.u32 %v8234, 4294901760
      %8289 = vmatpush.msra.mxu0 %v8288
      %v8290 = vand.u32 %v8233, 4294901760
      %8291 = vmatpush.msra.mxu0 %v8290
      %v8292 = vand.u32 %v8232, 4294901760
      %8293 = vmatpush.msra.mxu0 %v8292
      %v8294 = vand.u32 %v8231, 4294901760
      %8295 = vmatpush.msra.mxu0 %v8294
      %v8296 = vand.u32 %v8230, 4294901760
      %8297 = vmatpush.msra.mxu0 %v8296
      %v8298 = vand.u32 %v8229, 4294901760
      %8299 = vmatpush.msra.mxu0 %v8298
      %v8300 = vand.u32 %v8228, 4294901760
      %8301 = vmatpush.msra.mxu0 %v8300
      %v8302 = vand.u32 %v8227, 4294901760
      %8303 = vmatpush.msra.mxu0 %v8302
      %v8304 = vand.u32 %v8226, 4294901760
      %8305 = vmatpush.msra.mxu0 %v8304
      %v8306 = vand.u32 %v8225, 4294901760
      %8307 = vmatpush.msra.mxu0 %v8306
      %v8308 = vand.u32 %v8270, 4294901760
      %v8309 = vsub.f32 %v8270, %v8308
      %v8310 = vand.u32 %v8309, 4294901760
      %v8311 = vsub.f32 %v8309, %v8310
      %v8312 = vand.u32 %v8311, 4294901760
      %8313 = vmatmul.f32.gmra.mxu0 %v8312
      %v8314 = vpop.f32.mrf.mxu0
      %v8315 = vadd.f32 0.0, %v8314
      %v8316 = vand.u32 %v8272, 4294901760
      %v8317 = vsub.f32 %v8272, %v8316
      %v8318 = vand.u32 %v8317, 4294901760
      %v8319 = vsub.f32 %v8317, %v8318
      %v8320 = vand.u32 %v8319, 4294901760
      %8321 = vmatmul.f32.gmra.mxu0 %v8320
      %v8322 = vpop.f32.mrf.mxu0
      %v8323 = vadd.f32 0.0, %v8322
      %8324 = vdwg.mxu0
      %v8325 = vand.u32 %v8240, 4294901760
      %v8326 = vsub.f32 %v8240, %v8325
      %v8327 = vand.u32 %v8326, 4294901760
      %v8328 = vsub.f32 %v8326, %v8327
      %v8329 = vand.u32 %v8328, 4294901760
      %8330 = vmatpush.msra.mxu0 %v8329
      %v8331 = vand.u32 %v8239, 4294901760
      %v8332 = vsub.f32 %v8239, %v8331
      %v8333 = vand.u32 %v8332, 4294901760
      %v8334 = vsub.f32 %v8332, %v8333
      %v8335 = vand.u32 %v8334, 4294901760
      %8336 = vmatpush.msra.mxu0 %v8335
      %v8337 = vand.u32 %v8238, 4294901760
      %v8338 = vsub.f32 %v8238, %v8337
      %v8339 = vand.u32 %v8338, 4294901760
      %v8340 = vsub.f32 %v8338, %v8339
      %v8341 = vand.u32 %v8340, 4294901760
      %8342 = vmatpush.msra.mxu0 %v8341
      %v8343 = vand.u32 %v8237, 4294901760
      %v8344 = vsub.f32 %v8237, %v8343
      %v8345 = vand.u32 %v8344, 4294901760
      %v8346 = vsub.f32 %v8344, %v8345
      %v8347 = vand.u32 %v8346, 4294901760
      %8348 = vmatpush.msra.mxu0 %v8347
      %v8349 = vand.u32 %v8236, 4294901760
      %v8350 = vsub.f32 %v8236, %v8349
      %v8351 = vand.u32 %v8350, 4294901760
      %v8352 = vsub.f32 %v8350, %v8351
      %v8353 = vand.u32 %v8352, 4294901760
      %8354 = vmatpush.msra.mxu0 %v8353
      %v8355 = vand.u32 %v8235, 4294901760
      %v8356 = vsub.f32 %v8235, %v8355
      %v8357 = vand.u32 %v8356, 4294901760
      %v8358 = vsub.f32 %v8356, %v8357
      %v8359 = vand.u32 %v8358, 4294901760
      %8360 = vmatpush.msra.mxu0 %v8359
      %v8361 = vand.u32 %v8234, 4294901760
      %v8362 = vsub.f32 %v8234, %v8361
      %v8363 = vand.u32 %v8362, 4294901760
      %v8364 = vsub.f32 %v8362, %v8363
      %v8365 = vand.u32 %v8364, 4294901760
      %8366 = vmatpush.msra.mxu0 %v8365
      %v8367 = vand.u32 %v8233, 4294901760
      %v8368 = vsub.f32 %v8233, %v8367
      %v8369 = vand.u32 %v8368, 4294901760
      %v8370 = vsub.f32 %v8368, %v8369
      %v8371 = vand.u32 %v8370, 4294901760
      %8372 = vmatpush.msra.mxu0 %v8371
      %v8373 = vand.u32 %v8232, 4294901760
      %v8374 = vsub.f32 %v8232, %v8373
      %v8375 = vand.u32 %v8374, 4294901760
      %v8376 = vsub.f32 %v8374, %v8375
      %v8377 = vand.u32 %v8376, 4294901760
      %8378 = vmatpush.msra.mxu0 %v8377
      %v8379 = vand.u32 %v8231, 4294901760
      %v8380 = vsub.f32 %v8231, %v8379
      %v8381 = vand.u32 %v8380, 4294901760
      %v8382 = vsub.f32 %v8380, %v8381
      %v8383 = vand.u32 %v8382, 4294901760
      %8384 = vmatpush.msra.mxu0 %v8383
      %v8385 = vand.u32 %v8230, 4294901760
      %v8386 = vsub.f32 %v8230, %v8385
      %v8387 = vand.u32 %v8386, 4294901760
      %v8388 = vsub.f32 %v8386, %v8387
      %v8389 = vand.u32 %v8388, 4294901760
      %8390 = vmatpush.msra.mxu0 %v8389
      %v8391 = vand.u32 %v8229, 4294901760
      %v8392 = vsub.f32 %v8229, %v8391
      %v8393 = vand.u32 %v8392, 4294901760
      %v8394 = vsub.f32 %v8392, %v8393
      %v8395 = vand.u32 %v8394, 4294901760
      %8396 = vmatpush.msra.mxu0 %v8395
      %v8397 = vand.u32 %v8228, 4294901760
      %v8398 = vsub.f32 %v8228, %v8397
      %v8399 = vand.u32 %v8398, 4294901760
      %v8400 = vsub.f32 %v8398, %v8399
      %v8401 = vand.u32 %v8400, 4294901760
      %8402 = vmatpush.msra.mxu0 %v8401
      %v8403 = vand.u32 %v8227, 4294901760
      %v8404 = vsub.f32 %v8227, %v8403
      %v8405 = vand.u32 %v8404, 4294901760
      %v8406 = vsub.f32 %v8404, %v8405
      %v8407 = vand.u32 %v8406, 4294901760
      %8408 = vmatpush.msra.mxu0 %v8407
      %v8409 = vand.u32 %v8226, 4294901760
      %v8410 = vsub.f32 %v8226, %v8409
      %v8411 = vand.u32 %v8410, 4294901760
      %v8412 = vsub.f32 %v8410, %v8411
      %v8413 = vand.u32 %v8412, 4294901760
      %8414 = vmatpush.msra.mxu0 %v8413
      %v8415 = vand.u32 %v8225, 4294901760
      %v8416 = vsub.f32 %v8225, %v8415
      %v8417 = vand.u32 %v8416, 4294901760
      %v8418 = vsub.f32 %v8416, %v8417
      %v8419 = vand.u32 %v8418, 4294901760
      %8420 = vmatpush.msra.mxu0 %v8419
      %v8421 = vand.u32 %v8270, 4294901760
      %8422 = vmatmul.f32.gmra.mxu0 %v8421
      %v8423 = vpop.f32.mrf.mxu0
      %v8424 = vadd.f32 %v8315, %v8423
      %v8425 = vand.u32 %v8272, 4294901760
      %8426 = vmatmul.f32.gmra.mxu0 %v8425
      %v8427 = vpop.f32.mrf.mxu0
      %v8428 = vadd.f32 %v8323, %v8427
      %8429 = vdwg.mxu0
      %v8430 = vand.u32 %v8240, 4294901760
      %v8431 = vsub.f32 %v8240, %v8430
      %8432 = vmatpush.msra.mxu0 %v8431
      %v8433 = vand.u32 %v8239, 4294901760
      %v8434 = vsub.f32 %v8239, %v8433
      %8435 = vmatpush.msra.mxu0 %v8434
      %v8436 = vand.u32 %v8238, 4294901760
      %v8437 = vsub.f32 %v8238, %v8436
      %8438 = vmatpush.msra.mxu0 %v8437
      %v8439 = vand.u32 %v8237, 4294901760
      %v8440 = vsub.f32 %v8237, %v8439
      %8441 = vmatpush.msra.mxu0 %v8440
      %v8442 = vand.u32 %v8236, 4294901760
      %v8443 = vsub.f32 %v8236, %v8442
      %8444 = vmatpush.msra.mxu0 %v8443
      %v8445 = vand.u32 %v8235, 4294901760
      %v8446 = vsub.f32 %v8235, %v8445
      %8447 = vmatpush.msra.mxu0 %v8446
      %v8448 = vand.u32 %v8234, 4294901760
      %v8449 = vsub.f32 %v8234, %v8448
      %8450 = vmatpush.msra.mxu0 %v8449
      %v8451 = vand.u32 %v8233, 4294901760
      %v8452 = vsub.f32 %v8233, %v8451
      %8453 = vmatpush.msra.mxu0 %v8452
      %v8454 = vand.u32 %v8232, 4294901760
      %v8455 = vsub.f32 %v8232, %v8454
      %8456 = vmatpush.msra.mxu0 %v8455
      %v8457 = vand.u32 %v8231, 4294901760
      %v8458 = vsub.f32 %v8231, %v8457
      %8459 = vmatpush.msra.mxu0 %v8458
      %v8460 = vand.u32 %v8230, 4294901760
      %v8461 = vsub.f32 %v8230, %v8460
      %8462 = vmatpush.msra.mxu0 %v8461
      %v8463 = vand.u32 %v8229, 4294901760
      %v8464 = vsub.f32 %v8229, %v8463
      %8465 = vmatpush.msra.mxu0 %v8464
      %v8466 = vand.u32 %v8228, 4294901760
      %v8467 = vsub.f32 %v8228, %v8466
      %8468 = vmatpush.msra.mxu0 %v8467
      %v8469 = vand.u32 %v8227, 4294901760
      %v8470 = vsub.f32 %v8227, %v8469
      %8471 = vmatpush.msra.mxu0 %v8470
      %v8472 = vand.u32 %v8226, 4294901760
      %v8473 = vsub.f32 %v8226, %v8472
      %8474 = vmatpush.msra.mxu0 %v8473
      %v8475 = vand.u32 %v8225, 4294901760
      %v8476 = vsub.f32 %v8225, %v8475
      %8477 = vmatpush.msra.mxu0 %v8476
      %v8478 = vand.u32 %v8270, 4294901760
      %v8479 = vsub.f32 %v8270, %v8478
      %8480 = vmatmul.f32.gmra.mxu0 %v8479
      %v8481 = vpop.f32.mrf.mxu0
      %v8482 = vadd.f32 %v8424, %v8481
      %v8483 = vand.u32 %v8272, 4294901760
      %v8484 = vsub.f32 %v8272, %v8483
      %8485 = vmatmul.f32.gmra.mxu0 %v8484
      %v8486 = vpop.f32.mrf.mxu0
      %v8487 = vadd.f32 %v8428, %v8486
      %8488 = vdwg.mxu0
      %v8489 = vand.u32 %v8240, 4294901760
      %8490 = vmatpush.msra.mxu0 %v8489
      %v8491 = vand.u32 %v8239, 4294901760
      %8492 = vmatpush.msra.mxu0 %v8491
      %v8493 = vand.u32 %v8238, 4294901760
      %8494 = vmatpush.msra.mxu0 %v8493
      %v8495 = vand.u32 %v8237, 4294901760
      %8496 = vmatpush.msra.mxu0 %v8495
      %v8497 = vand.u32 %v8236, 4294901760
      %8498 = vmatpush.msra.mxu0 %v8497
      %v8499 = vand.u32 %v8235, 4294901760
      %8500 = vmatpush.msra.mxu0 %v8499
      %v8501 = vand.u32 %v8234, 4294901760
      %8502 = vmatpush.msra.mxu0 %v8501
      %v8503 = vand.u32 %v8233, 4294901760
      %8504 = vmatpush.msra.mxu0 %v8503
      %v8505 = vand.u32 %v8232, 4294901760
      %8506 = vmatpush.msra.mxu0 %v8505
      %v8507 = vand.u32 %v8231, 4294901760
      %8508 = vmatpush.msra.mxu0 %v8507
      %v8509 = vand.u32 %v8230, 4294901760
      %8510 = vmatpush.msra.mxu0 %v8509
      %v8511 = vand.u32 %v8229, 4294901760
      %8512 = vmatpush.msra.mxu0 %v8511
      %v8513 = vand.u32 %v8228, 4294901760
      %8514 = vmatpush.msra.mxu0 %v8513
      %v8515 = vand.u32 %v8227, 4294901760
      %8516 = vmatpush.msra.mxu0 %v8515
      %v8517 = vand.u32 %v8226, 4294901760
      %8518 = vmatpush.msra.mxu0 %v8517
      %v8519 = vand.u32 %v8225, 4294901760
      %8520 = vmatpush.msra.mxu0 %v8519
      %v8521 = vand.u32 %v8270, 4294901760
      %v8522 = vsub.f32 %v8270, %v8521
      %v8523 = vand.u32 %v8522, 4294901760
      %8524 = vmatmul.f32.gmra.mxu0 %v8523
      %v8525 = vpop.f32.mrf.mxu0
      %v8526 = vadd.f32 %v8482, %v8525
      %v8527 = vand.u32 %v8272, 4294901760
      %v8528 = vsub.f32 %v8272, %v8527
      %v8529 = vand.u32 %v8528, 4294901760
      %8530 = vmatmul.f32.gmra.mxu0 %v8529
      %v8531 = vpop.f32.mrf.mxu0
      %v8532 = vadd.f32 %v8487, %v8531
      %8533 = vdwg.mxu0
      %v8534 = vand.u32 %v8240, 4294901760
      %v8535 = vsub.f32 %v8240, %v8534
      %v8536 = vand.u32 %v8535, 4294901760
      %8537 = vmatpush.msra.mxu0 %v8536
      %v8538 = vand.u32 %v8239, 4294901760
      %v8539 = vsub.f32 %v8239, %v8538
      %v8540 = vand.u32 %v8539, 4294901760
      %8541 = vmatpush.msra.mxu0 %v8540
      %v8542 = vand.u32 %v8238, 4294901760
      %v8543 = vsub.f32 %v8238, %v8542
      %v8544 = vand.u32 %v8543, 4294901760
      %8545 = vmatpush.msra.mxu0 %v8544
      %v8546 = vand.u32 %v8237, 4294901760
      %v8547 = vsub.f32 %v8237, %v8546
      %v8548 = vand.u32 %v8547, 4294901760
      %8549 = vmatpush.msra.mxu0 %v8548
      %v8550 = vand.u32 %v8236, 4294901760
      %v8551 = vsub.f32 %v8236, %v8550
      %v8552 = vand.u32 %v8551, 4294901760
      %8553 = vmatpush.msra.mxu0 %v8552
      %v8554 = vand.u32 %v8235, 4294901760
      %v8555 = vsub.f32 %v8235, %v8554
      %v8556 = vand.u32 %v8555, 4294901760
      %8557 = vmatpush.msra.mxu0 %v8556
      %v8558 = vand.u32 %v8234, 4294901760
      %v8559 = vsub.f32 %v8234, %v8558
      %v8560 = vand.u32 %v8559, 4294901760
      %8561 = vmatpush.msra.mxu0 %v8560
      %v8562 = vand.u32 %v8233, 4294901760
      %v8563 = vsub.f32 %v8233, %v8562
      %v8564 = vand.u32 %v8563, 4294901760
      %8565 = vmatpush.msra.mxu0 %v8564
      %v8566 = vand.u32 %v8232, 4294901760
      %v8567 = vsub.f32 %v8232, %v8566
      %v8568 = vand.u32 %v8567, 4294901760
      %8569 = vmatpush.msra.mxu0 %v8568
      %v8570 = vand.u32 %v8231, 4294901760
      %v8571 = vsub.f32 %v8231, %v8570
      %v8572 = vand.u32 %v8571, 4294901760
      %8573 = vmatpush.msra.mxu0 %v8572
      %v8574 = vand.u32 %v8230, 4294901760
      %v8575 = vsub.f32 %v8230, %v8574
      %v8576 = vand.u32 %v8575, 4294901760
      %8577 = vmatpush.msra.mxu0 %v8576
      %v8578 = vand.u32 %v8229, 4294901760
      %v8579 = vsub.f32 %v8229, %v8578
      %v8580 = vand.u32 %v8579, 4294901760
      %8581 = vmatpush.msra.mxu0 %v8580
      %v8582 = vand.u32 %v8228, 4294901760
      %v8583 = vsub.f32 %v8228, %v8582
      %v8584 = vand.u32 %v8583, 4294901760
      %8585 = vmatpush.msra.mxu0 %v8584
      %v8586 = vand.u32 %v8227, 4294901760
      %v8587 = vsub.f32 %v8227, %v8586
      %v8588 = vand.u32 %v8587, 4294901760
      %8589 = vmatpush.msra.mxu0 %v8588
      %v8590 = vand.u32 %v8226, 4294901760
      %v8591 = vsub.f32 %v8226, %v8590
      %v8592 = vand.u32 %v8591, 4294901760
      %8593 = vmatpush.msra.mxu0 %v8592
      %v8594 = vand.u32 %v8225, 4294901760
      %v8595 = vsub.f32 %v8225, %v8594
      %v8596 = vand.u32 %v8595, 4294901760
      %8597 = vmatpush.msra.mxu0 %v8596
      %v8598 = vand.u32 %v8270, 4294901760
      %8599 = vmatmul.f32.gmra.mxu0 %v8598
      %v8600 = vpop.f32.mrf.mxu0
      %v8601 = vadd.f32 %v8526, %v8600
      %v8602 = vand.u32 %v8272, 4294901760
      %8603 = vmatmul.f32.gmra.mxu0 %v8602
      %v8604 = vpop.f32.mrf.mxu0
      %v8605 = vadd.f32 %v8532, %v8604
      %8606 = vdwg.mxu0
      %v8607 = vand.u32 %v8240, 4294901760
      %8608 = vmatpush.msra.mxu0 %v8607
      %v8609 = vand.u32 %v8239, 4294901760
      %8610 = vmatpush.msra.mxu0 %v8609
      %v8611 = vand.u32 %v8238, 4294901760
      %8612 = vmatpush.msra.mxu0 %v8611
      %v8613 = vand.u32 %v8237, 4294901760
      %8614 = vmatpush.msra.mxu0 %v8613
      %v8615 = vand.u32 %v8236, 4294901760
      %8616 = vmatpush.msra.mxu0 %v8615
      %v8617 = vand.u32 %v8235, 4294901760
      %8618 = vmatpush.msra.mxu0 %v8617
      %v8619 = vand.u32 %v8234, 4294901760
      %8620 = vmatpush.msra.mxu0 %v8619
      %v8621 = vand.u32 %v8233, 4294901760
      %8622 = vmatpush.msra.mxu0 %v8621
      %v8623 = vand.u32 %v8232, 4294901760
      %8624 = vmatpush.msra.mxu0 %v8623
      %v8625 = vand.u32 %v8231, 4294901760
      %8626 = vmatpush.msra.mxu0 %v8625
      %v8627 = vand.u32 %v8230, 4294901760
      %8628 = vmatpush.msra.mxu0 %v8627
      %v8629 = vand.u32 %v8229, 4294901760
      %8630 = vmatpush.msra.mxu0 %v8629
      %v8631 = vand.u32 %v8228, 4294901760
      %8632 = vmatpush.msra.mxu0 %v8631
      %v8633 = vand.u32 %v8227, 4294901760
      %8634 = vmatpush.msra.mxu0 %v8633
      %v8635 = vand.u32 %v8226, 4294901760
      %8636 = vmatpush.msra.mxu0 %v8635
      %v8637 = vand.u32 %v8225, 4294901760
      %8638 = vmatpush.msra.mxu0 %v8637
      %v8639 = vand.u32 %v8270, 4294901760
      %8640 = vmatmul.f32.gmra.mxu0 %v8639
      %v8641 = vpop.f32.mrf.mxu0
      %v8642 = vadd.f32 %v8601, %v8641
      %v8643 = vand.u32 %v8272, 4294901760
      %8644 = vmatmul.f32.gmra.mxu0 %v8643
      %v8645 = vpop.f32.mrf.mxu0
      %v8646 = vadd.f32 %v8605, %v8645
      %8647 = vdwg.mxu0
      %v8648 = vand.u32 %v8256, 4294901760
      %8649 = vmatpush.msra.mxu0 %v8648
      %v8650 = vand.u32 %v8255, 4294901760
      %8651 = vmatpush.msra.mxu0 %v8650
      %v8652 = vand.u32 %v8254, 4294901760
      %8653 = vmatpush.msra.mxu0 %v8652
      %v8654 = vand.u32 %v8253, 4294901760
      %8655 = vmatpush.msra.mxu0 %v8654
      %v8656 = vand.u32 %v8252, 4294901760
      %8657 = vmatpush.msra.mxu0 %v8656
      %v8658 = vand.u32 %v8251, 4294901760
      %8659 = vmatpush.msra.mxu0 %v8658
      %v8660 = vand.u32 %v8250, 4294901760
      %8661 = vmatpush.msra.mxu0 %v8660
      %v8662 = vand.u32 %v8249, 4294901760
      %8663 = vmatpush.msra.mxu0 %v8662
      %v8664 = vand.u32 %v8248, 4294901760
      %8665 = vmatpush.msra.mxu0 %v8664
      %v8666 = vand.u32 %v8247, 4294901760
      %8667 = vmatpush.msra.mxu0 %v8666
      %v8668 = vand.u32 %v8246, 4294901760
      %8669 = vmatpush.msra.mxu0 %v8668
      %v8670 = vand.u32 %v8245, 4294901760
      %8671 = vmatpush.msra.mxu0 %v8670
      %v8672 = vand.u32 %v8244, 4294901760
      %8673 = vmatpush.msra.mxu0 %v8672
      %v8674 = vand.u32 %v8243, 4294901760
      %8675 = vmatpush.msra.mxu0 %v8674
      %v8676 = vand.u32 %v8242, 4294901760
      %8677 = vmatpush.msra.mxu0 %v8676
      %v8678 = vand.u32 %v8241, 4294901760
      %8679 = vmatpush.msra.mxu0 %v8678
      %v8680 = vand.u32 %v8271, 4294901760
      %v8681 = vsub.f32 %v8271, %v8680
      %v8682 = vand.u32 %v8681, 4294901760
      %v8683 = vsub.f32 %v8681, %v8682
      %v8684 = vand.u32 %v8683, 4294901760
      %8685 = vmatmul.f32.gmra.mxu0 %v8684
      %v8686 = vpop.f32.mrf.mxu0
      %v8687 = vadd.f32 %v8642, %v8686
      %v8688 = vand.u32 %v8273, 4294901760
      %v8689 = vsub.f32 %v8273, %v8688
      %v8690 = vand.u32 %v8689, 4294901760
      %v8691 = vsub.f32 %v8689, %v8690
      %v8692 = vand.u32 %v8691, 4294901760
      %8693 = vmatmul.f32.gmra.mxu0 %v8692
      %v8694 = vpop.f32.mrf.mxu0
      %v8695 = vadd.f32 %v8646, %v8694
      %8696 = vdwg.mxu0
      %v8697 = vand.u32 %v8256, 4294901760
      %v8698 = vsub.f32 %v8256, %v8697
      %v8699 = vand.u32 %v8698, 4294901760
      %v8700 = vsub.f32 %v8698, %v8699
      %v8701 = vand.u32 %v8700, 4294901760
      %8702 = vmatpush.msra.mxu0 %v8701
      %v8703 = vand.u32 %v8255, 4294901760
      %v8704 = vsub.f32 %v8255, %v8703
      %v8705 = vand.u32 %v8704, 4294901760
      %v8706 = vsub.f32 %v8704, %v8705
      %v8707 = vand.u32 %v8706, 4294901760
      %8708 = vmatpush.msra.mxu0 %v8707
      %v8709 = vand.u32 %v8254, 4294901760
      %v8710 = vsub.f32 %v8254, %v8709
      %v8711 = vand.u32 %v8710, 4294901760
      %v8712 = vsub.f32 %v8710, %v8711
      %v8713 = vand.u32 %v8712, 4294901760
      %8714 = vmatpush.msra.mxu0 %v8713
      %v8715 = vand.u32 %v8253, 4294901760
      %v8716 = vsub.f32 %v8253, %v8715
      %v8717 = vand.u32 %v8716, 4294901760
      %v8718 = vsub.f32 %v8716, %v8717
      %v8719 = vand.u32 %v8718, 4294901760
      %8720 = vmatpush.msra.mxu0 %v8719
      %v8721 = vand.u32 %v8252, 4294901760
      %v8722 = vsub.f32 %v8252, %v8721
      %v8723 = vand.u32 %v8722, 4294901760
      %v8724 = vsub.f32 %v8722, %v8723
      %v8725 = vand.u32 %v8724, 4294901760
      %8726 = vmatpush.msra.mxu0 %v8725
      %v8727 = vand.u32 %v8251, 4294901760
      %v8728 = vsub.f32 %v8251, %v8727
      %v8729 = vand.u32 %v8728, 4294901760
      %v8730 = vsub.f32 %v8728, %v8729
      %v8731 = vand.u32 %v8730, 4294901760
      %8732 = vmatpush.msra.mxu0 %v8731
      %v8733 = vand.u32 %v8250, 4294901760
      %v8734 = vsub.f32 %v8250, %v8733
      %v8735 = vand.u32 %v8734, 4294901760
      %v8736 = vsub.f32 %v8734, %v8735
      %v8737 = vand.u32 %v8736, 4294901760
      %8738 = vmatpush.msra.mxu0 %v8737
      %v8739 = vand.u32 %v8249, 4294901760
      %v8740 = vsub.f32 %v8249, %v8739
      %v8741 = vand.u32 %v8740, 4294901760
      %v8742 = vsub.f32 %v8740, %v8741
      %v8743 = vand.u32 %v8742, 4294901760
      %8744 = vmatpush.msra.mxu0 %v8743
      %v8745 = vand.u32 %v8248, 4294901760
      %v8746 = vsub.f32 %v8248, %v8745
      %v8747 = vand.u32 %v8746, 4294901760
      %v8748 = vsub.f32 %v8746, %v8747
      %v8749 = vand.u32 %v8748, 4294901760
      %8750 = vmatpush.msra.mxu0 %v8749
      %v8751 = vand.u32 %v8247, 4294901760
      %v8752 = vsub.f32 %v8247, %v8751
      %v8753 = vand.u32 %v8752, 4294901760
      %v8754 = vsub.f32 %v8752, %v8753
      %v8755 = vand.u32 %v8754, 4294901760
      %8756 = vmatpush.msra.mxu0 %v8755
      %v8757 = vand.u32 %v8246, 4294901760
      %v8758 = vsub.f32 %v8246, %v8757
      %v8759 = vand.u32 %v8758, 4294901760
      %v8760 = vsub.f32 %v8758, %v8759
      %v8761 = vand.u32 %v8760, 4294901760
      %8762 = vmatpush.msra.mxu0 %v8761
      %v8763 = vand.u32 %v8245, 4294901760
      %v8764 = vsub.f32 %v8245, %v8763
      %v8765 = vand.u32 %v8764, 4294901760
      %v8766 = vsub.f32 %v8764, %v8765
      %v8767 = vand.u32 %v8766, 4294901760
      %8768 = vmatpush.msra.mxu0 %v8767
      %v8769 = vand.u32 %v8244, 4294901760
      %v8770 = vsub.f32 %v8244, %v8769
      %v8771 = vand.u32 %v8770, 4294901760
      %v8772 = vsub.f32 %v8770, %v8771
      %v8773 = vand.u32 %v8772, 4294901760
      %8774 = vmatpush.msra.mxu0 %v8773
      %v8775 = vand.u32 %v8243, 4294901760
      %v8776 = vsub.f32 %v8243, %v8775
      %v8777 = vand.u32 %v8776, 4294901760
      %v8778 = vsub.f32 %v8776, %v8777
      %v8779 = vand.u32 %v8778, 4294901760
      %8780 = vmatpush.msra.mxu0 %v8779
      %v8781 = vand.u32 %v8242, 4294901760
      %v8782 = vsub.f32 %v8242, %v8781
      %v8783 = vand.u32 %v8782, 4294901760
      %v8784 = vsub.f32 %v8782, %v8783
      %v8785 = vand.u32 %v8784, 4294901760
      %8786 = vmatpush.msra.mxu0 %v8785
      %v8787 = vand.u32 %v8241, 4294901760
      %v8788 = vsub.f32 %v8241, %v8787
      %v8789 = vand.u32 %v8788, 4294901760
      %v8790 = vsub.f32 %v8788, %v8789
      %v8791 = vand.u32 %v8790, 4294901760
      %8792 = vmatpush.msra.mxu0 %v8791
      %v8793 = vand.u32 %v8271, 4294901760
      %8794 = vmatmul.f32.gmra.mxu0 %v8793
      %v8795 = vpop.f32.mrf.mxu0
      %v8796 = vadd.f32 %v8687, %v8795
      %v8797 = vand.u32 %v8273, 4294901760
      %8798 = vmatmul.f32.gmra.mxu0 %v8797
      %v8799 = vpop.f32.mrf.mxu0
      %v8800 = vadd.f32 %v8695, %v8799
      %8801 = vdwg.mxu0
      %v8802 = vand.u32 %v8256, 4294901760
      %v8803 = vsub.f32 %v8256, %v8802
      %8804 = vmatpush.msra.mxu0 %v8803
      %v8805 = vand.u32 %v8255, 4294901760
      %v8806 = vsub.f32 %v8255, %v8805
      %8807 = vmatpush.msra.mxu0 %v8806
      %v8808 = vand.u32 %v8254, 4294901760
      %v8809 = vsub.f32 %v8254, %v8808
      %8810 = vmatpush.msra.mxu0 %v8809
      %v8811 = vand.u32 %v8253, 4294901760
      %v8812 = vsub.f32 %v8253, %v8811
      %8813 = vmatpush.msra.mxu0 %v8812
      %v8814 = vand.u32 %v8252, 4294901760
      %v8815 = vsub.f32 %v8252, %v8814
      %8816 = vmatpush.msra.mxu0 %v8815
      %v8817 = vand.u32 %v8251, 4294901760
      %v8818 = vsub.f32 %v8251, %v8817
      %8819 = vmatpush.msra.mxu0 %v8818
      %v8820 = vand.u32 %v8250, 4294901760
      %v8821 = vsub.f32 %v8250, %v8820
      %8822 = vmatpush.msra.mxu0 %v8821
      %v8823 = vand.u32 %v8249, 4294901760
      %v8824 = vsub.f32 %v8249, %v8823
      %8825 = vmatpush.msra.mxu0 %v8824
      %v8826 = vand.u32 %v8248, 4294901760
      %v8827 = vsub.f32 %v8248, %v8826
      %8828 = vmatpush.msra.mxu0 %v8827
      %v8829 = vand.u32 %v8247, 4294901760
      %v8830 = vsub.f32 %v8247, %v8829
      %8831 = vmatpush.msra.mxu0 %v8830
      %v8832 = vand.u32 %v8246, 4294901760
      %v8833 = vsub.f32 %v8246, %v8832
      %8834 = vmatpush.msra.mxu0 %v8833
      %v8835 = vand.u32 %v8245, 4294901760
      %v8836 = vsub.f32 %v8245, %v8835
      %8837 = vmatpush.msra.mxu0 %v8836
      %v8838 = vand.u32 %v8244, 4294901760
      %v8839 = vsub.f32 %v8244, %v8838
      %8840 = vmatpush.msra.mxu0 %v8839
      %v8841 = vand.u32 %v8243, 4294901760
      %v8842 = vsub.f32 %v8243, %v8841
      %8843 = vmatpush.msra.mxu0 %v8842
      %v8844 = vand.u32 %v8242, 4294901760
      %v8845 = vsub.f32 %v8242, %v8844
      %8846 = vmatpush.msra.mxu0 %v8845
      %v8847 = vand.u32 %v8241, 4294901760
      %v8848 = vsub.f32 %v8241, %v8847
      %8849 = vmatpush.msra.mxu0 %v8848
      %v8850 = vand.u32 %v8271, 4294901760
      %v8851 = vsub.f32 %v8271, %v8850
      %8852 = vmatmul.f32.gmra.mxu0 %v8851
      %v8853 = vpop.f32.mrf.mxu0
      %v8854 = vadd.f32 %v8796, %v8853
      %v8855 = vand.u32 %v8273, 4294901760
      %v8856 = vsub.f32 %v8273, %v8855
      %8857 = vmatmul.f32.gmra.mxu0 %v8856
      %v8858 = vpop.f32.mrf.mxu0
      %v8859 = vadd.f32 %v8800, %v8858
      %8860 = vdwg.mxu0
      %v8861 = vand.u32 %v8256, 4294901760
      %8862 = vmatpush.msra.mxu0 %v8861
      %v8863 = vand.u32 %v8255, 4294901760
      %8864 = vmatpush.msra.mxu0 %v8863
      %v8865 = vand.u32 %v8254, 4294901760
      %8866 = vmatpush.msra.mxu0 %v8865
      %v8867 = vand.u32 %v8253, 4294901760
      %8868 = vmatpush.msra.mxu0 %v8867
      %v8869 = vand.u32 %v8252, 4294901760
      %8870 = vmatpush.msra.mxu0 %v8869
      %v8871 = vand.u32 %v8251, 4294901760
      %8872 = vmatpush.msra.mxu0 %v8871
      %v8873 = vand.u32 %v8250, 4294901760
      %8874 = vmatpush.msra.mxu0 %v8873
      %v8875 = vand.u32 %v8249, 4294901760
      %8876 = vmatpush.msra.mxu0 %v8875
      %v8877 = vand.u32 %v8248, 4294901760
      %8878 = vmatpush.msra.mxu0 %v8877
      %v8879 = vand.u32 %v8247, 4294901760
      %8880 = vmatpush.msra.mxu0 %v8879
      %v8881 = vand.u32 %v8246, 4294901760
      %8882 = vmatpush.msra.mxu0 %v8881
      %v8883 = vand.u32 %v8245, 4294901760
      %8884 = vmatpush.msra.mxu0 %v8883
      %v8885 = vand.u32 %v8244, 4294901760
      %8886 = vmatpush.msra.mxu0 %v8885
      %v8887 = vand.u32 %v8243, 4294901760
      %8888 = vmatpush.msra.mxu0 %v8887
      %v8889 = vand.u32 %v8242, 4294901760
      %8890 = vmatpush.msra.mxu0 %v8889
      %v8891 = vand.u32 %v8241, 4294901760
      %8892 = vmatpush.msra.mxu0 %v8891
      %v8893 = vand.u32 %v8271, 4294901760
      %v8894 = vsub.f32 %v8271, %v8893
      %v8895 = vand.u32 %v8894, 4294901760
      %8896 = vmatmul.f32.gmra.mxu0 %v8895
      %v8897 = vpop.f32.mrf.mxu0
      %v8898 = vadd.f32 %v8854, %v8897
      %v8899 = vand.u32 %v8273, 4294901760
      %v8900 = vsub.f32 %v8273, %v8899
      %v8901 = vand.u32 %v8900, 4294901760
      %8902 = vmatmul.f32.gmra.mxu0 %v8901
      %v8903 = vpop.f32.mrf.mxu0
      %v8904 = vadd.f32 %v8859, %v8903
      %8905 = vdwg.mxu0
      %v8906 = vand.u32 %v8256, 4294901760
      %v8907 = vsub.f32 %v8256, %v8906
      %v8908 = vand.u32 %v8907, 4294901760
      %8909 = vmatpush.msra.mxu0 %v8908
      %v8910 = vand.u32 %v8255, 4294901760
      %v8911 = vsub.f32 %v8255, %v8910
      %v8912 = vand.u32 %v8911, 4294901760
      %8913 = vmatpush.msra.mxu0 %v8912
      %v8914 = vand.u32 %v8254, 4294901760
      %v8915 = vsub.f32 %v8254, %v8914
      %v8916 = vand.u32 %v8915, 4294901760
      %8917 = vmatpush.msra.mxu0 %v8916
      %v8918 = vand.u32 %v8253, 4294901760
      %v8919 = vsub.f32 %v8253, %v8918
      %v8920 = vand.u32 %v8919, 4294901760
      %8921 = vmatpush.msra.mxu0 %v8920
      %v8922 = vand.u32 %v8252, 4294901760
      %v8923 = vsub.f32 %v8252, %v8922
      %v8924 = vand.u32 %v8923, 4294901760
      %8925 = vmatpush.msra.mxu0 %v8924
      %v8926 = vand.u32 %v8251, 4294901760
      %v8927 = vsub.f32 %v8251, %v8926
      %v8928 = vand.u32 %v8927, 4294901760
      %8929 = vmatpush.msra.mxu0 %v8928
      %v8930 = vand.u32 %v8250, 4294901760
      %v8931 = vsub.f32 %v8250, %v8930
      %v8932 = vand.u32 %v8931, 4294901760
      %8933 = vmatpush.msra.mxu0 %v8932
      %v8934 = vand.u32 %v8249, 4294901760
      %v8935 = vsub.f32 %v8249, %v8934
      %v8936 = vand.u32 %v8935, 4294901760
      %8937 = vmatpush.msra.mxu0 %v8936
      %v8938 = vand.u32 %v8248, 4294901760
      %v8939 = vsub.f32 %v8248, %v8938
      %v8940 = vand.u32 %v8939, 4294901760
      %8941 = vmatpush.msra.mxu0 %v8940
      %v8942 = vand.u32 %v8247, 4294901760
      %v8943 = vsub.f32 %v8247, %v8942
      %v8944 = vand.u32 %v8943, 4294901760
      %8945 = vmatpush.msra.mxu0 %v8944
      %v8946 = vand.u32 %v8246, 4294901760
      %v8947 = vsub.f32 %v8246, %v8946
      %v8948 = vand.u32 %v8947, 4294901760
      %8949 = vmatpush.msra.mxu0 %v8948
      %v8950 = vand.u32 %v8245, 4294901760
      %v8951 = vsub.f32 %v8245, %v8950
      %v8952 = vand.u32 %v8951, 4294901760
      %8953 = vmatpush.msra.mxu0 %v8952
      %v8954 = vand.u32 %v8244, 4294901760
      %v8955 = vsub.f32 %v8244, %v8954
      %v8956 = vand.u32 %v8955, 4294901760
      %8957 = vmatpush.msra.mxu0 %v8956
      %v8958 = vand.u32 %v8243, 4294901760
      %v8959 = vsub.f32 %v8243, %v8958
      %v8960 = vand.u32 %v8959, 4294901760
      %8961 = vmatpush.msra.mxu0 %v8960
      %v8962 = vand.u32 %v8242, 4294901760
      %v8963 = vsub.f32 %v8242, %v8962
      %v8964 = vand.u32 %v8963, 4294901760
      %8965 = vmatpush.msra.mxu0 %v8964
      %v8966 = vand.u32 %v8241, 4294901760
      %v8967 = vsub.f32 %v8241, %v8966
      %v8968 = vand.u32 %v8967, 4294901760
      %8969 = vmatpush.msra.mxu0 %v8968
      %v8970 = vand.u32 %v8271, 4294901760
      %8971 = vmatmul.f32.gmra.mxu0 %v8970
      %v8972 = vpop.f32.mrf.mxu0
      %v8973 = vadd.f32 %v8898, %v8972
      %v8974 = vand.u32 %v8273, 4294901760
      %8975 = vmatmul.f32.gmra.mxu0 %v8974
      %v8976 = vpop.f32.mrf.mxu0
      %v8977 = vadd.f32 %v8904, %v8976
      %8978 = vdwg.mxu0
      %v8979 = vand.u32 %v8256, 4294901760
      %8980 = vmatpush.msra.mxu0 %v8979
      %v8981 = vand.u32 %v8255, 4294901760
      %8982 = vmatpush.msra.mxu0 %v8981
      %v8983 = vand.u32 %v8254, 4294901760
      %8984 = vmatpush.msra.mxu0 %v8983
      %v8985 = vand.u32 %v8253, 4294901760
      %8986 = vmatpush.msra.mxu0 %v8985
      %v8987 = vand.u32 %v8252, 4294901760
      %8988 = vmatpush.msra.mxu0 %v8987
      %v8989 = vand.u32 %v8251, 4294901760
      %8990 = vmatpush.msra.mxu0 %v8989
      %v8991 = vand.u32 %v8250, 4294901760
      %8992 = vmatpush.msra.mxu0 %v8991
      %v8993 = vand.u32 %v8249, 4294901760
      %8994 = vmatpush.msra.mxu0 %v8993
      %v8995 = vand.u32 %v8248, 4294901760
      %8996 = vmatpush.msra.mxu0 %v8995
      %v8997 = vand.u32 %v8247, 4294901760
      %8998 = vmatpush.msra.mxu0 %v8997
      %v8999 = vand.u32 %v8246, 4294901760
      %9000 = vmatpush.msra.mxu0 %v8999
      %v9001 = vand.u32 %v8245, 4294901760
      %9002 = vmatpush.msra.mxu0 %v9001
      %v9003 = vand.u32 %v8244, 4294901760
      %9004 = vmatpush.msra.mxu0 %v9003
      %v9005 = vand.u32 %v8243, 4294901760
      %9006 = vmatpush.msra.mxu0 %v9005
      %v9007 = vand.u32 %v8242, 4294901760
      %9008 = vmatpush.msra.mxu0 %v9007
      %v9009 = vand.u32 %v8241, 4294901760
      %9010 = vmatpush.msra.mxu0 %v9009
      %v9011 = vand.u32 %v8271, 4294901760
      %9012 = vmatmul.f32.gmra.mxu0 %v9011
      %v9013 = vpop.f32.mrf.mxu0
      %v9014 = vadd.f32 %v8973, %v9013
      %v9015 = vand.u32 %v8273, 4294901760
      %9016 = vmatmul.f32.gmra.mxu0 %v9015
      %v9017 = vpop.f32.mrf.mxu0
      %v9018 = vadd.f32 %v8977, %v9017
      %9019 = vdwg.mxu0
      %v9020 = vadd.f32 %v8274, %v9014
      %v9021 = vadd.f32 %v8275, %v9018
      %9022 = vst.msk [vmem:[#allocation2] sm:$0xff] %vm3564, %v9020
      %9023 = vst.msk [vmem:[#allocation2 + $0x8] sm:$0xff] %vm3564, %v9021
      %p9024 = scmp.eq.s32.totalorder %s27, 1
      // Predicated region
      $region81: #{en_base_layer_forward.1} parent=75 // pred_check
        %p9025 = pneg %p9024
      $region82: #{en_base_layer_forward.1} parent=75 // pred_check_branch
        %9027 = sbr.rel (%p9025) target = $region84
      $region83: #{en_base_layer_forward.1} parent=75 // pred_region
        %v9028 = vld [vmem:[#allocation2] sm:$0xff]
        %v9029 = vld [vmem:[#allocation2 + $0x8] sm:$0xff]
        %9032 = vrot.lane.b32.xlu0 %v505, 64
        %v9033 = vpop.permute.xlu0 %9032
        %9034 = vrot.lane.b32.xlu0 %v506, 64
        %v9035 = vpop.permute.xlu0 %9034
        %v9038 = vsel %vm3564, %v9028, %v9033
        %v9039 = vsel %vm3564, %v9029, %v9035
        %v9040 = vld [vmem:[%s10] sm:$0xff]
        %v9041 = vld [vmem:[%s10 + $0x8] sm:$0xff]
        %v9042 = vld [vmem:[%s10 + $0x10] sm:$0xff]
        %v9043 = vld [vmem:[%s10 + $0x18] sm:$0xff]
        %v9044 = vld [vmem:[%s10 + $0x20] sm:$0xff]
        %v9045 = vld [vmem:[%s10 + $0x28] sm:$0xff]
        %v9046 = vld [vmem:[%s10 + $0x30] sm:$0xff]
        %v9047 = vld [vmem:[%s10 + $0x38] sm:$0xff]
        %v9048 = vld [vmem:[%s10 + $0x40] sm:$0xff]
        %v9049 = vld [vmem:[%s10 + $0x48] sm:$0xff]
        %v9050 = vld [vmem:[%s10 + $0x50] sm:$0xff]
        %v9051 = vld [vmem:[%s10 + $0x58] sm:$0xff]
        %v9052 = vld [vmem:[%s11] sm:$0x1]
        %v9054 = vperm.slane %v9052, 0
        %vm9056 = vcmask 785408
        %v9058 = vsel %vm9056, %v9038, 0
        %v9061 = vsel %vm9056, %v9039, 0
        %9063 = vmatpush.msra.mxu0 0.0
        %9064 = vmatpush.msra.mxu0 0.0
        %9065 = vmatpush.msra.mxu0 0.0
        %9066 = vmatpush.msra.mxu0 0.0
        %v9067 = vand.u32 %v9051, 4294901760
        %9068 = vmatpush.msra.mxu0 %v9067
        %v9069 = vand.u32 %v9050, 4294901760
        %9070 = vmatpush.msra.mxu0 %v9069
        %v9071 = vand.u32 %v9049, 4294901760
        %9072 = vmatpush.msra.mxu0 %v9071
        %v9073 = vand.u32 %v9048, 4294901760
        %9074 = vmatpush.msra.mxu0 %v9073
        %v9075 = vand.u32 %v9047, 4294901760
        %9076 = vmatpush.msra.mxu0 %v9075
        %v9077 = vand.u32 %v9046, 4294901760
        %9078 = vmatpush.msra.mxu0 %v9077
        %v9079 = vand.u32 %v9045, 4294901760
        %9080 = vmatpush.msra.mxu0 %v9079
        %v9081 = vand.u32 %v9044, 4294901760
        %9082 = vmatpush.msra.mxu0 %v9081
        %v9083 = vand.u32 %v9043, 4294901760
        %9084 = vmatpush.msra.mxu0 %v9083
        %v9085 = vand.u32 %v9042, 4294901760
        %9086 = vmatpush.msra.mxu0 %v9085
        %v9087 = vand.u32 %v9041, 4294901760
        %9088 = vmatpush.msra.mxu0 %v9087
        %v9089 = vand.u32 %v9040, 4294901760
        %9090 = vmatpush.msra.mxu0 %v9089
        %v9091 = vand.u32 %v9058, 4294901760
        %v9092 = vsub.f32 %v9058, %v9091
        %v9093 = vand.u32 %v9092, 4294901760
        %v9094 = vsub.f32 %v9092, %v9093
        %v9095 = vand.u32 %v9094, 4294901760
        %9096 = vmatmul.f32.gmra.mxu0 %v9095
        %v9097 = vpop.f32.mrf.mxu0
        %v9098 = vadd.f32 %v9054, %v9097
        %v9099 = vand.u32 %v9061, 4294901760
        %v9100 = vsub.f32 %v9061, %v9099
        %v9101 = vand.u32 %v9100, 4294901760
        %v9102 = vsub.f32 %v9100, %v9101
        %v9103 = vand.u32 %v9102, 4294901760
        %9104 = vmatmul.f32.gmra.mxu0 %v9103
        %v9105 = vpop.f32.mrf.mxu0
        %v9106 = vadd.f32 %v9054, %v9105
        %9107 = vdwg.mxu0
        %9108 = vmatpush.msra.mxu0 0.0
        %9109 = vmatpush.msra.mxu0 0.0
        %9110 = vmatpush.msra.mxu0 0.0
        %9111 = vmatpush.msra.mxu0 0.0
        %v9112 = vand.u32 %v9051, 4294901760
        %v9113 = vsub.f32 %v9051, %v9112
        %v9114 = vand.u32 %v9113, 4294901760
        %v9115 = vsub.f32 %v9113, %v9114
        %v9116 = vand.u32 %v9115, 4294901760
        %9117 = vmatpush.msra.mxu0 %v9116
        %v9118 = vand.u32 %v9050, 4294901760
        %v9119 = vsub.f32 %v9050, %v9118
        %v9120 = vand.u32 %v9119, 4294901760
        %v9121 = vsub.f32 %v9119, %v9120
        %v9122 = vand.u32 %v9121, 4294901760
        %9123 = vmatpush.msra.mxu0 %v9122
        %v9124 = vand.u32 %v9049, 4294901760
        %v9125 = vsub.f32 %v9049, %v9124
        %v9126 = vand.u32 %v9125, 4294901760
        %v9127 = vsub.f32 %v9125, %v9126
        %v9128 = vand.u32 %v9127, 4294901760
        %9129 = vmatpush.msra.mxu0 %v9128
        %v9130 = vand.u32 %v9048, 4294901760
        %v9131 = vsub.f32 %v9048, %v9130
        %v9132 = vand.u32 %v9131, 4294901760
        %v9133 = vsub.f32 %v9131, %v9132
        %v9134 = vand.u32 %v9133, 4294901760
        %9135 = vmatpush.msra.mxu0 %v9134
        %v9136 = vand.u32 %v9047, 4294901760
        %v9137 = vsub.f32 %v9047, %v9136
        %v9138 = vand.u32 %v9137, 4294901760
        %v9139 = vsub.f32 %v9137, %v9138
        %v9140 = vand.u32 %v9139, 4294901760
        %9141 = vmatpush.msra.mxu0 %v9140
        %v9142 = vand.u32 %v9046, 4294901760
        %v9143 = vsub.f32 %v9046, %v9142
        %v9144 = vand.u32 %v9143, 4294901760
        %v9145 = vsub.f32 %v9143, %v9144
        %v9146 = vand.u32 %v9145, 4294901760
        %9147 = vmatpush.msra.mxu0 %v9146
        %v9148 = vand.u32 %v9045, 4294901760
        %v9149 = vsub.f32 %v9045, %v9148
        %v9150 = vand.u32 %v9149, 4294901760
        %v9151 = vsub.f32 %v9149, %v9150
        %v9152 = vand.u32 %v9151, 4294901760
        %9153 = vmatpush.msra.mxu0 %v9152
        %v9154 = vand.u32 %v9044, 4294901760
        %v9155 = vsub.f32 %v9044, %v9154
        %v9156 = vand.u32 %v9155, 4294901760
        %v9157 = vsub.f32 %v9155, %v9156
        %v9158 = vand.u32 %v9157, 4294901760
        %9159 = vmatpush.msra.mxu0 %v9158
        %v9160 = vand.u32 %v9043, 4294901760
        %v9161 = vsub.f32 %v9043, %v9160
        %v9162 = vand.u32 %v9161, 4294901760
        %v9163 = vsub.f32 %v9161, %v9162
        %v9164 = vand.u32 %v9163, 4294901760
        %9165 = vmatpush.msra.mxu0 %v9164
        %v9166 = vand.u32 %v9042, 4294901760
        %v9167 = vsub.f32 %v9042, %v9166
        %v9168 = vand.u32 %v9167, 4294901760
        %v9169 = vsub.f32 %v9167, %v9168
        %v9170 = vand.u32 %v9169, 4294901760
        %9171 = vmatpush.msra.mxu0 %v9170
        %v9172 = vand.u32 %v9041, 4294901760
        %v9173 = vsub.f32 %v9041, %v9172
        %v9174 = vand.u32 %v9173, 4294901760
        %v9175 = vsub.f32 %v9173, %v9174
        %v9176 = vand.u32 %v9175, 4294901760
        %9177 = vmatpush.msra.mxu0 %v9176
        %v9178 = vand.u32 %v9040, 4294901760
        %v9179 = vsub.f32 %v9040, %v9178
        %v9180 = vand.u32 %v9179, 4294901760
        %v9181 = vsub.f32 %v9179, %v9180
        %v9182 = vand.u32 %v9181, 4294901760
        %9183 = vmatpush.msra.mxu0 %v9182
        %v9184 = vand.u32 %v9058, 4294901760
        %9185 = vmatmul.f32.gmra.mxu0 %v9184
        %v9186 = vpop.f32.mrf.mxu0
        %v9187 = vadd.f32 %v9098, %v9186
        %v9188 = vand.u32 %v9061, 4294901760
        %9189 = vmatmul.f32.gmra.mxu0 %v9188
        %v9190 = vpop.f32.mrf.mxu0
        %v9191 = vadd.f32 %v9106, %v9190
        %9192 = vdwg.mxu0
        %9193 = vmatpush.msra.mxu0 0.0
        %9194 = vmatpush.msra.mxu0 0.0
        %9195 = vmatpush.msra.mxu0 0.0
        %9196 = vmatpush.msra.mxu0 0.0
        %v9197 = vand.u32 %v9051, 4294901760
        %v9198 = vsub.f32 %v9051, %v9197
        %9199 = vmatpush.msra.mxu0 %v9198
        %v9200 = vand.u32 %v9050, 4294901760
        %v9201 = vsub.f32 %v9050, %v9200
        %9202 = vmatpush.msra.mxu0 %v9201
        %v9203 = vand.u32 %v9049, 4294901760
        %v9204 = vsub.f32 %v9049, %v9203
        %9205 = vmatpush.msra.mxu0 %v9204
        %v9206 = vand.u32 %v9048, 4294901760
        %v9207 = vsub.f32 %v9048, %v9206
        %9208 = vmatpush.msra.mxu0 %v9207
        %v9209 = vand.u32 %v9047, 4294901760
        %v9210 = vsub.f32 %v9047, %v9209
        %9211 = vmatpush.msra.mxu0 %v9210
        %v9212 = vand.u32 %v9046, 4294901760
        %v9213 = vsub.f32 %v9046, %v9212
        %9214 = vmatpush.msra.mxu0 %v9213
        %v9215 = vand.u32 %v9045, 4294901760
        %v9216 = vsub.f32 %v9045, %v9215
        %9217 = vmatpush.msra.mxu0 %v9216
        %v9218 = vand.u32 %v9044, 4294901760
        %v9219 = vsub.f32 %v9044, %v9218
        %9220 = vmatpush.msra.mxu0 %v9219
        %v9221 = vand.u32 %v9043, 4294901760
        %v9222 = vsub.f32 %v9043, %v9221
        %9223 = vmatpush.msra.mxu0 %v9222
        %v9224 = vand.u32 %v9042, 4294901760
        %v9225 = vsub.f32 %v9042, %v9224
        %9226 = vmatpush.msra.mxu0 %v9225
        %v9227 = vand.u32 %v9041, 4294901760
        %v9228 = vsub.f32 %v9041, %v9227
        %9229 = vmatpush.msra.mxu0 %v9228
        %v9230 = vand.u32 %v9040, 4294901760
        %v9231 = vsub.f32 %v9040, %v9230
        %9232 = vmatpush.msra.mxu0 %v9231
        %v9233 = vand.u32 %v9058, 4294901760
        %v9234 = vsub.f32 %v9058, %v9233
        %9235 = vmatmul.f32.gmra.mxu0 %v9234
        %v9236 = vpop.f32.mrf.mxu0
        %v9237 = vadd.f32 %v9187, %v9236
        %v9238 = vand.u32 %v9061, 4294901760
        %v9239 = vsub.f32 %v9061, %v9238
        %9240 = vmatmul.f32.gmra.mxu0 %v9239
        %v9241 = vpop.f32.mrf.mxu0
        %v9242 = vadd.f32 %v9191, %v9241
        %9243 = vdwg.mxu0
        %9244 = vmatpush.msra.mxu0 0.0
        %9245 = vmatpush.msra.mxu0 0.0
        %9246 = vmatpush.msra.mxu0 0.0
        %9247 = vmatpush.msra.mxu0 0.0
        %v9248 = vand.u32 %v9051, 4294901760
        %9249 = vmatpush.msra.mxu0 %v9248
        %v9250 = vand.u32 %v9050, 4294901760
        %9251 = vmatpush.msra.mxu0 %v9250
        %v9252 = vand.u32 %v9049, 4294901760
        %9253 = vmatpush.msra.mxu0 %v9252
        %v9254 = vand.u32 %v9048, 4294901760
        %9255 = vmatpush.msra.mxu0 %v9254
        %v9256 = vand.u32 %v9047, 4294901760
        %9257 = vmatpush.msra.mxu0 %v9256
        %v9258 = vand.u32 %v9046, 4294901760
        %9259 = vmatpush.msra.mxu0 %v9258
        %v9260 = vand.u32 %v9045, 4294901760
        %9261 = vmatpush.msra.mxu0 %v9260
        %v9262 = vand.u32 %v9044, 4294901760
        %9263 = vmatpush.msra.mxu0 %v9262
        %v9264 = vand.u32 %v9043, 4294901760
        %9265 = vmatpush.msra.mxu0 %v9264
        %v9266 = vand.u32 %v9042, 4294901760
        %9267 = vmatpush.msra.mxu0 %v9266
        %v9268 = vand.u32 %v9041, 4294901760
        %9269 = vmatpush.msra.mxu0 %v9268
        %v9270 = vand.u32 %v9040, 4294901760
        %9271 = vmatpush.msra.mxu0 %v9270
        %v9272 = vand.u32 %v9058, 4294901760
        %v9273 = vsub.f32 %v9058, %v9272
        %v9274 = vand.u32 %v9273, 4294901760
        %9275 = vmatmul.f32.gmra.mxu0 %v9274
        %v9276 = vpop.f32.mrf.mxu0
        %v9277 = vadd.f32 %v9237, %v9276
        %v9278 = vand.u32 %v9061, 4294901760
        %v9279 = vsub.f32 %v9061, %v9278
        %v9280 = vand.u32 %v9279, 4294901760
        %9281 = vmatmul.f32.gmra.mxu0 %v9280
        %v9282 = vpop.f32.mrf.mxu0
        %v9283 = vadd.f32 %v9242, %v9282
        %9284 = vdwg.mxu0
        %9285 = vmatpush.msra.mxu0 0.0
        %9286 = vmatpush.msra.mxu0 0.0
        %9287 = vmatpush.msra.mxu0 0.0
        %9288 = vmatpush.msra.mxu0 0.0
        %v9289 = vand.u32 %v9051, 4294901760
        %v9290 = vsub.f32 %v9051, %v9289
        %v9291 = vand.u32 %v9290, 4294901760
        %9292 = vmatpush.msra.mxu0 %v9291
        %v9293 = vand.u32 %v9050, 4294901760
        %v9294 = vsub.f32 %v9050, %v9293
        %v9295 = vand.u32 %v9294, 4294901760
        %9296 = vmatpush.msra.mxu0 %v9295
        %v9297 = vand.u32 %v9049, 4294901760
        %v9298 = vsub.f32 %v9049, %v9297
        %v9299 = vand.u32 %v9298, 4294901760
        %9300 = vmatpush.msra.mxu0 %v9299
        %v9301 = vand.u32 %v9048, 4294901760
        %v9302 = vsub.f32 %v9048, %v9301
        %v9303 = vand.u32 %v9302, 4294901760
        %9304 = vmatpush.msra.mxu0 %v9303
        %v9305 = vand.u32 %v9047, 4294901760
        %v9306 = vsub.f32 %v9047, %v9305
        %v9307 = vand.u32 %v9306, 4294901760
        %9308 = vmatpush.msra.mxu0 %v9307
        %v9309 = vand.u32 %v9046, 4294901760
        %v9310 = vsub.f32 %v9046, %v9309
        %v9311 = vand.u32 %v9310, 4294901760
        %9312 = vmatpush.msra.mxu0 %v9311
        %v9313 = vand.u32 %v9045, 4294901760
        %v9314 = vsub.f32 %v9045, %v9313
        %v9315 = vand.u32 %v9314, 4294901760
        %9316 = vmatpush.msra.mxu0 %v9315
        %v9317 = vand.u32 %v9044, 4294901760
        %v9318 = vsub.f32 %v9044, %v9317
        %v9319 = vand.u32 %v9318, 4294901760
        %9320 = vmatpush.msra.mxu0 %v9319
        %v9321 = vand.u32 %v9043, 4294901760
        %v9322 = vsub.f32 %v9043, %v9321
        %v9323 = vand.u32 %v9322, 4294901760
        %9324 = vmatpush.msra.mxu0 %v9323
        %v9325 = vand.u32 %v9042, 4294901760
        %v9326 = vsub.f32 %v9042, %v9325
        %v9327 = vand.u32 %v9326, 4294901760
        %9328 = vmatpush.msra.mxu0 %v9327
        %v9329 = vand.u32 %v9041, 4294901760
        %v9330 = vsub.f32 %v9041, %v9329
        %v9331 = vand.u32 %v9330, 4294901760
        %9332 = vmatpush.msra.mxu0 %v9331
        %v9333 = vand.u32 %v9040, 4294901760
        %v9334 = vsub.f32 %v9040, %v9333
        %v9335 = vand.u32 %v9334, 4294901760
        %9336 = vmatpush.msra.mxu0 %v9335
        %v9337 = vand.u32 %v9058, 4294901760
        %9338 = vmatmul.f32.gmra.mxu0 %v9337
        %v9339 = vpop.f32.mrf.mxu0
        %v9340 = vadd.f32 %v9277, %v9339
        %v9341 = vand.u32 %v9061, 4294901760
        %9342 = vmatmul.f32.gmra.mxu0 %v9341
        %v9343 = vpop.f32.mrf.mxu0
        %v9344 = vadd.f32 %v9283, %v9343
        %9345 = vdwg.mxu0
        %9346 = vmatpush.msra.mxu0 0.0
        %9347 = vmatpush.msra.mxu0 0.0
        %9348 = vmatpush.msra.mxu0 0.0
        %9349 = vmatpush.msra.mxu0 0.0
        %v9350 = vand.u32 %v9051, 4294901760
        %9351 = vmatpush.msra.mxu0 %v9350
        %v9352 = vand.u32 %v9050, 4294901760
        %9353 = vmatpush.msra.mxu0 %v9352
        %v9354 = vand.u32 %v9049, 4294901760
        %9355 = vmatpush.msra.mxu0 %v9354
        %v9356 = vand.u32 %v9048, 4294901760
        %9357 = vmatpush.msra.mxu0 %v9356
        %v9358 = vand.u32 %v9047, 4294901760
        %9359 = vmatpush.msra.mxu0 %v9358
        %v9360 = vand.u32 %v9046, 4294901760
        %9361 = vmatpush.msra.mxu0 %v9360
        %v9362 = vand.u32 %v9045, 4294901760
        %9363 = vmatpush.msra.mxu0 %v9362
        %v9364 = vand.u32 %v9044, 4294901760
        %9365 = vmatpush.msra.mxu0 %v9364
        %v9366 = vand.u32 %v9043, 4294901760
        %9367 = vmatpush.msra.mxu0 %v9366
        %v9368 = vand.u32 %v9042, 4294901760
        %9369 = vmatpush.msra.mxu0 %v9368
        %v9370 = vand.u32 %v9041, 4294901760
        %9371 = vmatpush.msra.mxu0 %v9370
        %v9372 = vand.u32 %v9040, 4294901760
        %9373 = vmatpush.msra.mxu0 %v9372
        %v9374 = vand.u32 %v9058, 4294901760
        %9375 = vmatmul.f32.gmra.mxu0 %v9374
        %v9376 = vpop.f32.mrf.mxu0
        %v9377 = vadd.f32 %v9340, %v9376
        %v9378 = vand.u32 %v9061, 4294901760
        %9379 = vmatmul.f32.gmra.mxu0 %v9378
        %v9380 = vpop.f32.mrf.mxu0
        %v9381 = vadd.f32 %v9344, %v9380
        %9382 = vdwg.mxu0
        %v9383 = vmax.f32 %v9377, 0.0
        %v9384 = vmax.f32 %v9381, 0.0
        %v9385 = vld [vmem:[%s12] sm:$0xff]
        %v9386 = vld [vmem:[%s12 + $0x8] sm:$0xff]
        %v9387 = vld [vmem:[%s12 + $0x10] sm:$0xff]
        %v9388 = vld [vmem:[%s12 + $0x18] sm:$0xff]
        %v9389 = vld [vmem:[%s12 + $0x20] sm:$0xff]
        %v9390 = vld [vmem:[%s12 + $0x28] sm:$0xff]
        %v9391 = vld [vmem:[%s12 + $0x30] sm:$0xff]
        %v9392 = vld [vmem:[%s12 + $0x38] sm:$0xff]
        %v9393 = vld [vmem:[%s12 + $0x40] sm:$0xff]
        %v9394 = vld [vmem:[%s12 + $0x48] sm:$0xff]
        %v9395 = vld [vmem:[%s12 + $0x50] sm:$0xff]
        %v9396 = vld [vmem:[%s12 + $0x58] sm:$0xff]
        %v9397 = vld [vmem:[%s13] sm:$0x1]
        %v9399 = vperm.slane %v9397, 0
        %v9402 = vsel %vm9056, %v9383, 0
        %v9405 = vsel %vm9056, %v9384, 0
        %9407 = vmatpush.msra.mxu0 0.0
        %9408 = vmatpush.msra.mxu0 0.0
        %9409 = vmatpush.msra.mxu0 0.0
        %9410 = vmatpush.msra.mxu0 0.0
        %v9411 = vand.u32 %v9396, 4294901760
        %9412 = vmatpush.msra.mxu0 %v9411
        %v9413 = vand.u32 %v9395, 4294901760
        %9414 = vmatpush.msra.mxu0 %v9413
        %v9415 = vand.u32 %v9394, 4294901760
        %9416 = vmatpush.msra.mxu0 %v9415
        %v9417 = vand.u32 %v9393, 4294901760
        %9418 = vmatpush.msra.mxu0 %v9417
        %v9419 = vand.u32 %v9392, 4294901760
        %9420 = vmatpush.msra.mxu0 %v9419
        %v9421 = vand.u32 %v9391, 4294901760
        %9422 = vmatpush.msra.mxu0 %v9421
        %v9423 = vand.u32 %v9390, 4294901760
        %9424 = vmatpush.msra.mxu0 %v9423
        %v9425 = vand.u32 %v9389, 4294901760
        %9426 = vmatpush.msra.mxu0 %v9425
        %v9427 = vand.u32 %v9388, 4294901760
        %9428 = vmatpush.msra.mxu0 %v9427
        %v9429 = vand.u32 %v9387, 4294901760
        %9430 = vmatpush.msra.mxu0 %v9429
        %v9431 = vand.u32 %v9386, 4294901760
        %9432 = vmatpush.msra.mxu0 %v9431
        %v9433 = vand.u32 %v9385, 4294901760
        %9434 = vmatpush.msra.mxu0 %v9433
        %v9435 = vand.u32 %v9402, 4294901760
        %v9436 = vsub.f32 %v9402, %v9435
        %v9437 = vand.u32 %v9436, 4294901760
        %v9438 = vsub.f32 %v9436, %v9437
        %v9439 = vand.u32 %v9438, 4294901760
        %9440 = vmatmul.f32.gmra.mxu0 %v9439
        %v9441 = vpop.f32.mrf.mxu0
        %v9442 = vadd.f32 %v9399, %v9441
        %v9443 = vand.u32 %v9405, 4294901760
        %v9444 = vsub.f32 %v9405, %v9443
        %v9445 = vand.u32 %v9444, 4294901760
        %v9446 = vsub.f32 %v9444, %v9445
        %v9447 = vand.u32 %v9446, 4294901760
        %9448 = vmatmul.f32.gmra.mxu0 %v9447
        %v9449 = vpop.f32.mrf.mxu0
        %v9450 = vadd.f32 %v9399, %v9449
        %9451 = vdwg.mxu0
        %9452 = vmatpush.msra.mxu0 0.0
        %9453 = vmatpush.msra.mxu0 0.0
        %9454 = vmatpush.msra.mxu0 0.0
        %9455 = vmatpush.msra.mxu0 0.0
        %v9456 = vand.u32 %v9396, 4294901760
        %v9457 = vsub.f32 %v9396, %v9456
        %v9458 = vand.u32 %v9457, 4294901760
        %v9459 = vsub.f32 %v9457, %v9458
        %v9460 = vand.u32 %v9459, 4294901760
        %9461 = vmatpush.msra.mxu0 %v9460
        %v9462 = vand.u32 %v9395, 4294901760
        %v9463 = vsub.f32 %v9395, %v9462
        %v9464 = vand.u32 %v9463, 4294901760
        %v9465 = vsub.f32 %v9463, %v9464
        %v9466 = vand.u32 %v9465, 4294901760
        %9467 = vmatpush.msra.mxu0 %v9466
        %v9468 = vand.u32 %v9394, 4294901760
        %v9469 = vsub.f32 %v9394, %v9468
        %v9470 = vand.u32 %v9469, 4294901760
        %v9471 = vsub.f32 %v9469, %v9470
        %v9472 = vand.u32 %v9471, 4294901760
        %9473 = vmatpush.msra.mxu0 %v9472
        %v9474 = vand.u32 %v9393, 4294901760
        %v9475 = vsub.f32 %v9393, %v9474
        %v9476 = vand.u32 %v9475, 4294901760
        %v9477 = vsub.f32 %v9475, %v9476
        %v9478 = vand.u32 %v9477, 4294901760
        %9479 = vmatpush.msra.mxu0 %v9478
        %v9480 = vand.u32 %v9392, 4294901760
        %v9481 = vsub.f32 %v9392, %v9480
        %v9482 = vand.u32 %v9481, 4294901760
        %v9483 = vsub.f32 %v9481, %v9482
        %v9484 = vand.u32 %v9483, 4294901760
        %9485 = vmatpush.msra.mxu0 %v9484
        %v9486 = vand.u32 %v9391, 4294901760
        %v9487 = vsub.f32 %v9391, %v9486
        %v9488 = vand.u32 %v9487, 4294901760
        %v9489 = vsub.f32 %v9487, %v9488
        %v9490 = vand.u32 %v9489, 4294901760
        %9491 = vmatpush.msra.mxu0 %v9490
        %v9492 = vand.u32 %v9390, 4294901760
        %v9493 = vsub.f32 %v9390, %v9492
        %v9494 = vand.u32 %v9493, 4294901760
        %v9495 = vsub.f32 %v9493, %v9494
        %v9496 = vand.u32 %v9495, 4294901760
        %9497 = vmatpush.msra.mxu0 %v9496
        %v9498 = vand.u32 %v9389, 4294901760
        %v9499 = vsub.f32 %v9389, %v9498
        %v9500 = vand.u32 %v9499, 4294901760
        %v9501 = vsub.f32 %v9499, %v9500
        %v9502 = vand.u32 %v9501, 4294901760
        %9503 = vmatpush.msra.mxu0 %v9502
        %v9504 = vand.u32 %v9388, 4294901760
        %v9505 = vsub.f32 %v9388, %v9504
        %v9506 = vand.u32 %v9505, 4294901760
        %v9507 = vsub.f32 %v9505, %v9506
        %v9508 = vand.u32 %v9507, 4294901760
        %9509 = vmatpush.msra.mxu0 %v9508
        %v9510 = vand.u32 %v9387, 4294901760
        %v9511 = vsub.f32 %v9387, %v9510
        %v9512 = vand.u32 %v9511, 4294901760
        %v9513 = vsub.f32 %v9511, %v9512
        %v9514 = vand.u32 %v9513, 4294901760
        %9515 = vmatpush.msra.mxu0 %v9514
        %v9516 = vand.u32 %v9386, 4294901760
        %v9517 = vsub.f32 %v9386, %v9516
        %v9518 = vand.u32 %v9517, 4294901760
        %v9519 = vsub.f32 %v9517, %v9518
        %v9520 = vand.u32 %v9519, 4294901760
        %9521 = vmatpush.msra.mxu0 %v9520
        %v9522 = vand.u32 %v9385, 4294901760
        %v9523 = vsub.f32 %v9385, %v9522
        %v9524 = vand.u32 %v9523, 4294901760
        %v9525 = vsub.f32 %v9523, %v9524
        %v9526 = vand.u32 %v9525, 4294901760
        %9527 = vmatpush.msra.mxu0 %v9526
        %v9528 = vand.u32 %v9402, 4294901760
        %9529 = vmatmul.f32.gmra.mxu0 %v9528
        %v9530 = vpop.f32.mrf.mxu0
        %v9531 = vadd.f32 %v9442, %v9530
        %v9532 = vand.u32 %v9405, 4294901760
        %9533 = vmatmul.f32.gmra.mxu0 %v9532
        %v9534 = vpop.f32.mrf.mxu0
        %v9535 = vadd.f32 %v9450, %v9534
        %9536 = vdwg.mxu0
        %9537 = vmatpush.msra.mxu0 0.0
        %9538 = vmatpush.msra.mxu0 0.0
        %9539 = vmatpush.msra.mxu0 0.0
        %9540 = vmatpush.msra.mxu0 0.0
        %v9541 = vand.u32 %v9396, 4294901760
        %v9542 = vsub.f32 %v9396, %v9541
        %9543 = vmatpush.msra.mxu0 %v9542
        %v9544 = vand.u32 %v9395, 4294901760
        %v9545 = vsub.f32 %v9395, %v9544
        %9546 = vmatpush.msra.mxu0 %v9545
        %v9547 = vand.u32 %v9394, 4294901760
        %v9548 = vsub.f32 %v9394, %v9547
        %9549 = vmatpush.msra.mxu0 %v9548
        %v9550 = vand.u32 %v9393, 4294901760
        %v9551 = vsub.f32 %v9393, %v9550
        %9552 = vmatpush.msra.mxu0 %v9551
        %v9553 = vand.u32 %v9392, 4294901760
        %v9554 = vsub.f32 %v9392, %v9553
        %9555 = vmatpush.msra.mxu0 %v9554
        %v9556 = vand.u32 %v9391, 4294901760
        %v9557 = vsub.f32 %v9391, %v9556
        %9558 = vmatpush.msra.mxu0 %v9557
        %v9559 = vand.u32 %v9390, 4294901760
        %v9560 = vsub.f32 %v9390, %v9559
        %9561 = vmatpush.msra.mxu0 %v9560
        %v9562 = vand.u32 %v9389, 4294901760
        %v9563 = vsub.f32 %v9389, %v9562
        %9564 = vmatpush.msra.mxu0 %v9563
        %v9565 = vand.u32 %v9388, 4294901760
        %v9566 = vsub.f32 %v9388, %v9565
        %9567 = vmatpush.msra.mxu0 %v9566
        %v9568 = vand.u32 %v9387, 4294901760
        %v9569 = vsub.f32 %v9387, %v9568
        %9570 = vmatpush.msra.mxu0 %v9569
        %v9571 = vand.u32 %v9386, 4294901760
        %v9572 = vsub.f32 %v9386, %v9571
        %9573 = vmatpush.msra.mxu0 %v9572
        %v9574 = vand.u32 %v9385, 4294901760
        %v9575 = vsub.f32 %v9385, %v9574
        %9576 = vmatpush.msra.mxu0 %v9575
        %v9577 = vand.u32 %v9402, 4294901760
        %v9578 = vsub.f32 %v9402, %v9577
        %9579 = vmatmul.f32.gmra.mxu0 %v9578
        %v9580 = vpop.f32.mrf.mxu0
        %v9581 = vadd.f32 %v9531, %v9580
        %v9582 = vand.u32 %v9405, 4294901760
        %v9583 = vsub.f32 %v9405, %v9582
        %9584 = vmatmul.f32.gmra.mxu0 %v9583
        %v9585 = vpop.f32.mrf.mxu0
        %v9586 = vadd.f32 %v9535, %v9585
        %9587 = vdwg.mxu0
        %9588 = vmatpush.msra.mxu0 0.0
        %9589 = vmatpush.msra.mxu0 0.0
        %9590 = vmatpush.msra.mxu0 0.0
        %9591 = vmatpush.msra.mxu0 0.0
        %v9592 = vand.u32 %v9396, 4294901760
        %9593 = vmatpush.msra.mxu0 %v9592
        %v9594 = vand.u32 %v9395, 4294901760
        %9595 = vmatpush.msra.mxu0 %v9594
        %v9596 = vand.u32 %v9394, 4294901760
        %9597 = vmatpush.msra.mxu0 %v9596
        %v9598 = vand.u32 %v9393, 4294901760
        %9599 = vmatpush.msra.mxu0 %v9598
        %v9600 = vand.u32 %v9392, 4294901760
        %9601 = vmatpush.msra.mxu0 %v9600
        %v9602 = vand.u32 %v9391, 4294901760
        %9603 = vmatpush.msra.mxu0 %v9602
        %v9604 = vand.u32 %v9390, 4294901760
        %9605 = vmatpush.msra.mxu0 %v9604
        %v9606 = vand.u32 %v9389, 4294901760
        %9607 = vmatpush.msra.mxu0 %v9606
        %v9608 = vand.u32 %v9388, 4294901760
        %9609 = vmatpush.msra.mxu0 %v9608
        %v9610 = vand.u32 %v9387, 4294901760
        %9611 = vmatpush.msra.mxu0 %v9610
        %v9612 = vand.u32 %v9386, 4294901760
        %9613 = vmatpush.msra.mxu0 %v9612
        %v9614 = vand.u32 %v9385, 4294901760
        %9615 = vmatpush.msra.mxu0 %v9614
        %v9616 = vand.u32 %v9402, 4294901760
        %v9617 = vsub.f32 %v9402, %v9616
        %v9618 = vand.u32 %v9617, 4294901760
        %9619 = vmatmul.f32.gmra.mxu0 %v9618
        %v9620 = vpop.f32.mrf.mxu0
        %v9621 = vadd.f32 %v9581, %v9620
        %v9622 = vand.u32 %v9405, 4294901760
        %v9623 = vsub.f32 %v9405, %v9622
        %v9624 = vand.u32 %v9623, 4294901760
        %9625 = vmatmul.f32.gmra.mxu0 %v9624
        %v9626 = vpop.f32.mrf.mxu0
        %v9627 = vadd.f32 %v9586, %v9626
        %9628 = vdwg.mxu0
        %9629 = vmatpush.msra.mxu0 0.0
        %9630 = vmatpush.msra.mxu0 0.0
        %9631 = vmatpush.msra.mxu0 0.0
        %9632 = vmatpush.msra.mxu0 0.0
        %v9633 = vand.u32 %v9396, 4294901760
        %v9634 = vsub.f32 %v9396, %v9633
        %v9635 = vand.u32 %v9634, 4294901760
        %9636 = vmatpush.msra.mxu0 %v9635
        %v9637 = vand.u32 %v9395, 4294901760
        %v9638 = vsub.f32 %v9395, %v9637
        %v9639 = vand.u32 %v9638, 4294901760
        %9640 = vmatpush.msra.mxu0 %v9639
        %v9641 = vand.u32 %v9394, 4294901760
        %v9642 = vsub.f32 %v9394, %v9641
        %v9643 = vand.u32 %v9642, 4294901760
        %9644 = vmatpush.msra.mxu0 %v9643
        %v9645 = vand.u32 %v9393, 4294901760
        %v9646 = vsub.f32 %v9393, %v9645
        %v9647 = vand.u32 %v9646, 4294901760
        %9648 = vmatpush.msra.mxu0 %v9647
        %v9649 = vand.u32 %v9392, 4294901760
        %v9650 = vsub.f32 %v9392, %v9649
        %v9651 = vand.u32 %v9650, 4294901760
        %9652 = vmatpush.msra.mxu0 %v9651
        %v9653 = vand.u32 %v9391, 4294901760
        %v9654 = vsub.f32 %v9391, %v9653
        %v9655 = vand.u32 %v9654, 4294901760
        %9656 = vmatpush.msra.mxu0 %v9655
        %v9657 = vand.u32 %v9390, 4294901760
        %v9658 = vsub.f32 %v9390, %v9657
        %v9659 = vand.u32 %v9658, 4294901760
        %9660 = vmatpush.msra.mxu0 %v9659
        %v9661 = vand.u32 %v9389, 4294901760
        %v9662 = vsub.f32 %v9389, %v9661
        %v9663 = vand.u32 %v9662, 4294901760
        %9664 = vmatpush.msra.mxu0 %v9663
        %v9665 = vand.u32 %v9388, 4294901760
        %v9666 = vsub.f32 %v9388, %v9665
        %v9667 = vand.u32 %v9666, 4294901760
        %9668 = vmatpush.msra.mxu0 %v9667
        %v9669 = vand.u32 %v9387, 4294901760
        %v9670 = vsub.f32 %v9387, %v9669
        %v9671 = vand.u32 %v9670, 4294901760
        %9672 = vmatpush.msra.mxu0 %v9671
        %v9673 = vand.u32 %v9386, 4294901760
        %v9674 = vsub.f32 %v9386, %v9673
        %v9675 = vand.u32 %v9674, 4294901760
        %9676 = vmatpush.msra.mxu0 %v9675
        %v9677 = vand.u32 %v9385, 4294901760
        %v9678 = vsub.f32 %v9385, %v9677
        %v9679 = vand.u32 %v9678, 4294901760
        %9680 = vmatpush.msra.mxu0 %v9679
        %v9681 = vand.u32 %v9402, 4294901760
        %9682 = vmatmul.f32.gmra.mxu0 %v9681
        %v9683 = vpop.f32.mrf.mxu0
        %v9684 = vadd.f32 %v9621, %v9683
        %v9685 = vand.u32 %v9405, 4294901760
        %9686 = vmatmul.f32.gmra.mxu0 %v9685
        %v9687 = vpop.f32.mrf.mxu0
        %v9688 = vadd.f32 %v9627, %v9687
        %9689 = vdwg.mxu0
        %9690 = vmatpush.msra.mxu0 0.0
        %9691 = vmatpush.msra.mxu0 0.0
        %9692 = vmatpush.msra.mxu0 0.0
        %9693 = vmatpush.msra.mxu0 0.0
        %v9694 = vand.u32 %v9396, 4294901760
        %9695 = vmatpush.msra.mxu0 %v9694
        %v9696 = vand.u32 %v9395, 4294901760
        %9697 = vmatpush.msra.mxu0 %v9696
        %v9698 = vand.u32 %v9394, 4294901760
        %9699 = vmatpush.msra.mxu0 %v9698
        %v9700 = vand.u32 %v9393, 4294901760
        %9701 = vmatpush.msra.mxu0 %v9700
        %v9702 = vand.u32 %v9392, 4294901760
        %9703 = vmatpush.msra.mxu0 %v9702
        %v9704 = vand.u32 %v9391, 4294901760
        %9705 = vmatpush.msra.mxu0 %v9704
        %v9706 = vand.u32 %v9390, 4294901760
        %9707 = vmatpush.msra.mxu0 %v9706
        %v9708 = vand.u32 %v9389, 4294901760
        %9709 = vmatpush.msra.mxu0 %v9708
        %v9710 = vand.u32 %v9388, 4294901760
        %9711 = vmatpush.msra.mxu0 %v9710
        %v9712 = vand.u32 %v9387, 4294901760
        %9713 = vmatpush.msra.mxu0 %v9712
        %v9714 = vand.u32 %v9386, 4294901760
        %9715 = vmatpush.msra.mxu0 %v9714
        %v9716 = vand.u32 %v9385, 4294901760
        %9717 = vmatpush.msra.mxu0 %v9716
        %v9718 = vand.u32 %v9402, 4294901760
        %9719 = vmatmul.f32.gmra.mxu0 %v9718
        %v9720 = vpop.f32.mrf.mxu0
        %v9721 = vadd.f32 %v9684, %v9720
        %v9722 = vand.u32 %v9405, 4294901760
        %9723 = vmatmul.f32.gmra.mxu0 %v9722
        %v9724 = vpop.f32.mrf.mxu0
        %v9725 = vadd.f32 %v9688, %v9724
        %9726 = vdwg.mxu0
        %9727 = vrot.lane.b32.xlu0 %v505, 32
        %v9728 = vpop.permute.xlu0 %9727
        %9729 = vrot.lane.b32.xlu0 %v506, 32
        %v9730 = vpop.permute.xlu0 %9729
        %v9733 = vsel %vm3519, %v505, %v9728
        %v9734 = vsel %vm3519, %v506, %v9730
        %v9735 = vsel %vm3564, %v9733, %v9033
        %v9736 = vsel %vm3564, %v9734, %v9035
        %v9737 = vadd.f32 %v9735, %v9721
        %v9738 = vadd.f32 %v9736, %v9725
        %9739 = vst.msk [vmem:[%s14] sm:$0xff] %vm9056, %v9737
        %9740 = vst.msk [vmem:[%s14 + $0x8] sm:$0xff] %vm9056, %v9738
      $region84: #{en_base_layer_forward.1} parent=75 // pred_fallthru
        _
      // Predicated region
      $region85: #{en_base_layer_forward.1} parent=75 // pred_check
        %p9741 = pneg %p349
      $region86: #{en_base_layer_forward.1} parent=75 // pred_check_branch
        %9743 = sbr.rel (%p9741) target = $region88
      $region87: #{en_base_layer_forward.1} parent=75 // pred_region
        _
      $region88: #{en_base_layer_forward.1} parent=75 // pred_fallthru
        _
      // Predicated region
      $region89: #{en_base_layer_forward.1} parent=75 // pred_check
        %p9744 = pneg %p349
      $region90: #{en_base_layer_forward.1} parent=75 // pred_check_branch
        %9746 = sbr.rel (%p9744) target = $region92
      $region91: #{en_base_layer_forward.1} parent=75 // pred_region
        _
      $region92: #{en_base_layer_forward.1} parent=75 // pred_fallthru
        _
    $region76: #{en_base_layer_forward.1} parent=5 // pred_fallthru
      _
    %p9747 = scmp.le.s32.totalorder 2, %s22
    // Predicated region
    $region93: #{en_base_layer_forward.1} parent=5 // pred_check
      %p9748 = pneg %p9747
    $region94: #{en_base_layer_forward.1} parent=5 // pred_check_branch
      %9750 = sbr.rel (%p9748) target = $region96
    $region95: #{en_base_layer_forward.1} parent=5 // pred_region
      %s9751 = ssub.s32 %s22, 2
    $region96: #{en_base_layer_forward.1} parent=5 // pred_fallthru
      _
  $region6: #{en_base_layer_forward.1} parent=0 // loop_footer
    %s26 = sadd.s32 1, %s22
  $region7: #{en_base_layer_forward.1} parent=0 // loop_footer_branch
    %21 = sbr.rel target = $region3
  $region8: #{en_base_layer_forward.1} parent=0 // loop_exit
    _

</llo_original>
